<compile_context>
chip_gen: v6e
topology: v6e:2x2x1
jax: 0.10.0
libtpu: 0.0.40
codegen_flags: <defaults>
</compile_context>

<pallas_src>
import functools

import numpy as np

import jax
import jax.numpy as jnp
from jax import lax
from jax.experimental import pallas as pl
from jax.experimental.pallas import tpu as pltpu

# 1-D kernel whose outer product is exactly the reference lowPassFilter.
K5 = (0.05, 0.25, 0.4, 0.25, 0.05)

# Reference 5x5 filter constants (used by the pure-JAX check in __main__).
LOW_PASS = (
    (0.0025, 0.0125, 0.02, 0.0125, 0.0025),
    (0.0125, 0.0625, 0.10, 0.0625, 0.0125),
    (0.0200, 0.1000, 0.16, 0.1000, 0.0200),
    (0.0125, 0.0625, 0.10, 0.0625, 0.0125),
    (0.0025, 0.0125, 0.02, 0.0125, 0.0025),
)
P_FILTER = (
    (0.04, 0.04, 0.05, 0.04, 0.04),
    (0.04, 0.03, 0.04, 0.03, 0.04),
    (0.05, 0.04, 0.05, 0.04, 0.05),
    (0.04, 0.03, 0.04, 0.03, 0.04),
    (0.04, 0.04, 0.05, 0.04, 0.04),
)


# --------------------- wrapper-side constant resample matrices ---------------------
def _lowpass_band_np(n):
    """(n, n) banded Toeplitz L with L[i, i+d] = K5[d+2]; L@x / x@L = zero-pad conv."""
    L = np.zeros((n, n), np.float32)
    for d in range(-2, 3):
        i = np.arange(max(0, -d), min(n, n - d))
        L[i, i + d] = K5[d + 2]
    return L


def _down_np(n):
    """(n/2, n): bilinear 0.5x, align_corners=False == pair averaging."""
    D = np.zeros((n // 2, n), np.float32)
    o = np.arange(n // 2)
    D[o, 2 * o] = 0.5
    D[o, 2 * o + 1] = 0.5
    return D


def _up_np(n):
    """(2n, n): bilinear 2x, align_corners=False, edge clamp."""
    U = np.zeros((2 * n, n), np.float32)
    c = np.arange(n)
    U[2 * c, c] += 0.75
    U[2 * c, np.maximum(c - 1, 0)] += 0.25
    U[2 * c + 1, c] += 0.75
    U[2 * c + 1, np.minimum(c + 1, n - 1)] += 0.25
    return U


@functools.lru_cache(maxsize=None)
def _resample_mats(h, w):
    """Low-pass folded into the resample matrices (built once per (H, W))."""
    lh = _lowpass_band_np(h)
    lw = _lowpass_band_np(w)
    dr = (_down_np(h) @ lh).astype(np.float32)           # (h/2, h)
    dc = (lw @ _down_np(w).T).astype(np.float32)         # (w, w/2)
    ur = (lh @ _up_np(h // 2)).astype(np.float32)        # (h, h/2)
    uc = (_up_np(w // 2).T @ lw).astype(np.float32)      # (w/2, w)
    return dr, dc, ur, uc


def _vmem_limit_bytes(h, w):
    plane = 4 * h * w
    need = 24 * plane + 16 * (h * h + w * w) + (4 << 20)
    return int(min(max(need, 32 << 20), 64 << 20))


# ------------------------------ in-kernel helpers ------------------------------
def _shift(x, s, axis):
    """result[.., i, ..] = x[.., i - s, ..], zero-filled outside (conv halo).

    Fast path: pltpu.roll (XLU) + an inline iota compare (mask hides under the
    roll).  Tile-unaligned dims fall back to a static slice + zero-slab concat.
    """
    if s == 0:
        return x
    n = x.shape[axis]
    tile = 128 if axis == x.ndim - 1 else 8
    if n % tile == 0:
        idx = lax.broadcasted_iota(jnp.int32, x.shape, axis)
        keep = (idx >= s) if s > 0 else (idx < n + s)
        return jnp.where(keep, pltpu.roll(x, shift=s % n, axis=axis), 0.0)
    # Fallback for tile-unaligned dims (avoid by keeping H%8==0, W%128==0).
    pad_shape = list(x.shape)
    pad_shape[axis] = abs(s)
    zeros = jnp.zeros(pad_shape, x.dtype)
    if s > 0:
        kept = lax.slice_in_dim(x, 0, n - s, axis=axis)
        return jnp.concatenate([zeros, kept], axis=axis)
    kept = lax.slice_in_dim(x, -s, n, axis=axis)
    return jnp.concatenate([kept, zeros], axis=axis)


def _pfilter5(a):
    """5x5 'same' conv with P_FILTER, grouped by its 3 distinct row filters (VPU)."""
    s_odd = _shift(a, 1, 1) + _shift(a, -1, 1)     # |dx| == 1
    s_even = _shift(a, 2, 1) + _shift(a, -2, 1)    # |dx| == 2
    r0 = 0.05 * (a + s_even) + 0.04 * s_odd        # dy == 0   row [.05,.04,.05,.04,.05]
    r1 = 0.04 * (a + s_even) + 0.03 * s_odd        # |dy| == 1 row [.04,.03,.04,.03,.04]
    r2 = 0.05 * a + 0.04 * (s_odd + s_even)        # |dy| == 2 row [.04,.04,.05,.04,.04]
    return (r0
            + _shift(r1, 1, 0) + _shift(r1, -1, 0)
            + _shift(r2, 2, 0) + _shift(r2, -2, 0))


def _mm(a, b):
    # Pallas TPU dot_general only supports Precision.{DEFAULT, HIGHEST}; HIGHEST's
    # extra MXU passes hide under the VPU-bound P_FILTER/normalization phase.
    return jnp.dot(a, b, preferred_element_type=jnp.float32,
                   precision=lax.Precision.HIGHEST)


# ------------------------------ fused level kernel ------------------------------
def _level_kernel(xa_ref, xb_ref, dr_ref, dc_ref, ur_ref, uc_ref,
                  xad_ref, xbd_ref, loss_ref):
    _, H, W = xa_ref.shape
    xa = xa_ref[0]                     # (H, W)
    xb = xb_ref[0]
    dr = dr_ref[...]                   # (H/2, H)  = D_H @ L_H
    dc = dc_ref[...]                   # (W, W/2)  = L_W @ D_W^T
    ur = ur_ref[...]                   # (H, H/2)  = L_H @ U_H
    uc = uc_ref[...]                   # (W/2, W)  = U_W^T @ L_W

    # (1) low-pass + bilinear 0.5x downsample, fully on the MXU.
    #     Association order chosen statically to minimize MACs (shrink the
    #     smaller axis first when the plane is wide, and vice versa).
    if W >= H:
        xad = _mm(_mm(dr, xa), dc)
        xbd = _mm(_mm(dr, xb), dc)
    else:
        xad = _mm(dr, _mm(xa, dc))
        xbd = _mm(dr, _mm(xb, dc))
    xad_ref[0] = xad
    xbd_ref[0] = xbd

    # (2) reconstruction u = lowpass(up2(xad)), fully on the MXU.
    #     Reference quirk: the SAME xad-based u is used for both residuals.
    if W >= H:
        u = _mm(ur, _mm(xad, uc))
    else:
        u = _mm(_mm(ur, xad), uc)

    # (3) P_FILTER local-contrast normalization (+ plane mean).  Ordered so the
    #     za/fa temporaries die before zb/fb are built (lower peak liveness);
    #     divides go to the EUP via approx reciprocal.
    za = xa - u
    fa = _pfilter5(jnp.abs(za))
    fa = fa + jnp.mean(fa)
    ya = za * pl.reciprocal(fa, approx=True)

    zb = xb - u
    fb = _pfilter5(jnp.abs(zb))
    fb = fb + jnp.mean(fb)
    d = ya - zb * pl.reciprocal(fb, approx=True)

    loss_ref[0] = jnp.full((8, 128), jnp.sum(d * d), dtype=jnp.float32)


def _pyramid_level(xak, xbk):
    """One Laplacian-pyramid level, fully fused in a single pallas_call.

    Returns (next xak, next xbk, sum over batch & space of (yak - ybk)^2).
    """
    B, H, W = xak.shape
    H2, W2 = H // 2, W // 2
    dr, dc, ur, uc = _resample_mats(H, W)

    plane_spec = pl.BlockSpec((1, H, W), lambda b: (b, 0, 0))
    def mat_spec(m):
        return pl.BlockSpec(m.shape, lambda b: (0, 0))   # batch-invariant: DMA'd once

    xad, xbd, loss_parts = pl.pallas_call(
        _level_kernel,
        grid=(B,),
        in_specs=[plane_spec, plane_spec,
                  mat_spec(dr), mat_spec(dc), mat_spec(ur), mat_spec(uc)],
        out_specs=(pl.BlockSpec((1, H2, W2), lambda b: (b, 0, 0)),
                   pl.BlockSpec((1, H2, W2), lambda b: (b, 0, 0)),
                   pl.BlockSpec((1, 8, 128), lambda b: (b, 0, 0))),
        out_shape=(jax.ShapeDtypeStruct((B, H2, W2), jnp.float32),
                   jax.ShapeDtypeStruct((B, H2, W2), jnp.float32),
                   jax.ShapeDtypeStruct((B, 8, 128), jnp.float32)),
        compiler_params=pltpu.CompilerParams(
            dimension_semantics=("parallel",),         # batch splits across TCs
            vmem_limit_bytes=_vmem_limit_bytes(H, W)),
    )(xak, xbk, dr, dc, ur, uc)
    return xad, xbd, loss_parts[:, 0, 0].sum()


# ---------------------------------- forward pass ----------------------------------
def nlp_distance_loss(ima, imb, lp_level):
    """ima, imb: (B, 1, H, W) float32 (NCHW, single channel). Returns shape (1,).

    Best performance when H / 2^k stays a multiple of 8 and W / 2^k a multiple
    of 128 for every level k (otherwise _shift falls back to slice+concat).
    """
    B, C, H0, W0 = ima.shape
    assert C == 1, "reference conv filters are (1,1,5,5): single-channel input"
    assert H0 % (2 ** lp_level) == 0 and W0 % (2 ** lp_level) == 0, \
        "H and W must be divisible by 2**lp_level"
    xak, xbk = ima[:, 0], imb[:, 0]
    ret = jnp.zeros((1,), jnp.float32)
    for _ in range(lp_level):
        H = xak.shape[1]
        Ns = jnp.float32(H * W0)        # reference quirk: current H * ORIGINAL W
        xak, xbk, lvl = _pyramid_level(xak, xbk)
        ret = ret + lvl / jnp.sqrt(Ns)
    return ret / lp_level / B


# ---------------- pure-JAX reference (mirrors the PyTorch module op-for-op) --------
def _ref_conv5(x, filt):
    B, H, W = x.shape
    xp = jnp.pad(x, ((0, 0), (2, 2), (2, 2)))
    acc = jnp.zeros_like(x)
    for dy in range(5):
        for dx in range(5):
            acc = acc + filt[dy][dx] * xp[:, dy:dy + H, dx:dx + W]
    return acc


def _ref_down2(x):
    B, H, W = x.shape
    return x.reshape(B, H // 2, 2, W // 2, 2).mean(axis=(2, 4))


def _ref_up2_axis(x, axis):
    n = x.shape[axis]
    idx = jnp.arange(n)
    xm = jnp.take(x, jnp.maximum(idx - 1, 0), axis=axis)
    xp = jnp.take(x, jnp.minimum(idx + 1, n - 1), axis=axis)
    even = 0.25 * xm + 0.75 * x
    odd = 0.75 * x + 0.25 * xp
    stacked = jnp.stack([even, odd], axis=axis + 1)
    shape = list(x.shape)
    shape[axis] = 2 * n
    return stacked.reshape(shape)


def _ref_up2(x):
    return _ref_up2_axis(_ref_up2_axis(x, 1), 2)


def _reference_loss(ima, imb, lp_level):
    B, C, H0, W0 = ima.shape
    xak, xbk = ima[:, 0], imb[:, 0]
    ret = jnp.zeros((1,), jnp.float32)
    for _ in range(lp_level):
        H = xak.shape[1]
        Ns = jnp.float32(H * W0)
        xak_ = _ref_down2(_ref_conv5(xak, LOW_PASS))
        xbk_ = _ref_down2(_ref_conv5(xbk, LOW_PASS))
        u = _ref_conv5(_ref_up2(xak_), LOW_PASS)
        zak, zbk = xak - u, xbk - u
        fak = _ref_conv5(jnp.abs(zak), P_FILTER)
        fbk = _ref_conv5(jnp.abs(zbk), P_FILTER)
        fak = fak + fak.mean(axis=(1, 2), keepdims=True)
        fbk = fbk + fbk.mean(axis=(1, 2), keepdims=True)
        d = zak / fak - zbk / fbk
        ret = ret + jnp.sum(d * d) / jnp.sqrt(Ns)
        xak, xbk = xak_, xbk_
    return ret / lp_level / B


if __name__ == "__main__":
    key = jax.random.PRNGKey(0)
    k1, k2 = jax.random.split(key)
    # W a multiple of 128 * 2**(lp_level-1) keeps every rolled plane lane-aligned.
    B, C, H, W = 2, 1, 32, 256
    lp_level = 2
    ima = jax.random.normal(k1, (B, C, H, W), jnp.float32)
    imb = jax.random.normal(k2, (B, C, H, W), jnp.float32)

    loss_fn = jax.jit(nlp_distance_loss, static_argnums=2)
    out = loss_fn(ima, imb, lp_level)
    jax.block_until_ready(out)
    assert out.shape == (1,) and bool(jnp.isfinite(out).all())

    # numerical check vs a plain-JAX mirror of the PyTorch module
    ref = jax.jit(_reference_loss, static_argnums=2)(ima, imb, lp_level)
    jax.block_until_ready(ref)
    rel = abs(float(out[0]) - float(ref[0])) / max(abs(float(ref[0])), 1e-6)
    assert rel < 2e-2, f"mismatch vs reference: {float(out[0])} vs {float(ref[0])} (rel={rel})"

    print("KERNEL_OK")
</pallas_src>

<mosaic_0001>
module attributes {stable_mosaic.version = 11 : i64} {
  func.func @_level_kernel(%arg0: i32, %arg1: memref<1x32x256xf32, #tpu.memory_space<vmem>>, %arg2: memref<1x32x256xf32, #tpu.memory_space<vmem>>, %arg3: memref<16x32xf32, #tpu.memory_space<vmem>>, %arg4: memref<256x128xf32, #tpu.memory_space<vmem>>, %arg5: memref<32x16xf32, #tpu.memory_space<vmem>>, %arg6: memref<128x256xf32, #tpu.memory_space<vmem>>, %arg7: memref<1x16x128xf32, #tpu.memory_space<vmem>>, %arg8: memref<1x16x128xf32, #tpu.memory_space<vmem>>, %arg9: memref<1x8x128xf32, #tpu.memory_space<vmem>>) attributes {dimension_semantics = [#tpu.dimension_semantics<parallel>], iteration_bounds = array<i64: 2>, scalar_prefetch = 0 : i64, scratch_operands = 0 : i64, tpu.core_type = #tpu.core_type<tc>, window_params = [{transform_indices = @transform_0, window_bounds = array<i64: 1, 32, 256>}, {transform_indices = @transform_1, window_bounds = array<i64: 1, 32, 256>}, {pipeline_mode = #tpu.pipeline_mode<synchronous>, transform_indices = @transform_2, window_bounds = array<i64: 16, 32>}, {pipeline_mode = #tpu.pipeline_mode<synchronous>, transform_indices = @transform_3, window_bounds = array<i64: 256, 128>}, {pipeline_mode = #tpu.pipeline_mode<synchronous>, transform_indices = @transform_4, window_bounds = array<i64: 32, 16>}, {pipeline_mode = #tpu.pipeline_mode<synchronous>, transform_indices = @transform_5, window_bounds = array<i64: 128, 256>}, {transform_indices = @transform_6, window_bounds = array<i64: 1, 16, 128>}, {transform_indices = @transform_7, window_bounds = array<i64: 1, 16, 128>}, {transform_indices = @transform_8, window_bounds = array<i64: 1, 8, 128>}]} {
    %c0 = arith.constant 0 : index
    %c0_0 = arith.constant 0 : index
    %c0_1 = arith.constant 0 : index
    %0 = vector.load %arg1[%c0, %c0_0, %c0_1] : memref<1x32x256xf32, #tpu.memory_space<vmem>>, vector<1x32x256xf32>
    %1 = vector.shape_cast %0 : vector<1x32x256xf32> to vector<32x256xf32>
    %c0_2 = arith.constant 0 : index
    %c0_3 = arith.constant 0 : index
    %c0_4 = arith.constant 0 : index
    %2 = vector.load %arg2[%c0_2, %c0_3, %c0_4] : memref<1x32x256xf32, #tpu.memory_space<vmem>>, vector<1x32x256xf32>
    %3 = vector.shape_cast %2 : vector<1x32x256xf32> to vector<32x256xf32>
    %c0_5 = arith.constant 0 : index
    %c0_6 = arith.constant 0 : index
    %4 = vector.load %arg3[%c0_5, %c0_6] : memref<16x32xf32, #tpu.memory_space<vmem>>, vector<16x32xf32>
    %c0_7 = arith.constant 0 : index
    %c0_8 = arith.constant 0 : index
    %5 = vector.load %arg4[%c0_7, %c0_8] : memref<256x128xf32, #tpu.memory_space<vmem>>, vector<256x128xf32>
    %c0_9 = arith.constant 0 : index
    %c0_10 = arith.constant 0 : index
    %6 = vector.load %arg5[%c0_9, %c0_10] : memref<32x16xf32, #tpu.memory_space<vmem>>, vector<32x16xf32>
    %c0_11 = arith.constant 0 : index
    %c0_12 = arith.constant 0 : index
    %7 = vector.load %arg6[%c0_11, %c0_12] : memref<128x256xf32, #tpu.memory_space<vmem>>, vector<128x256xf32>
    %cst = arith.constant dense<0.000000e+00> : vector<16x256xf32>
    %8 = tpu.matmul %4, %1, %cst {dimension_numbers = #tpu.dot_dimension_numbers<[1], [0], [0], [1], [0, 0, 1, 1], [], []>, precision = #tpu.contract_precision<fp32>} : vector<16x32xf32>, vector<32x256xf32>, vector<16x256xf32> -> vector<16x256xf32>
    %cst_13 = arith.constant dense<0.000000e+00> : vector<16x128xf32>
    %9 = tpu.matmul %8, %5, %cst_13 {dimension_numbers = #tpu.dot_dimension_numbers<[1], [0], [0], [1], [0, 0, 1, 1], [], []>, precision = #tpu.contract_precision<fp32>} : vector<16x256xf32>, vector<256x128xf32>, vector<16x128xf32> -> vector<16x128xf32>
    %cst_14 = arith.constant dense<0.000000e+00> : vector<16x256xf32>
    %10 = tpu.matmul %4, %3, %cst_14 {dimension_numbers = #tpu.dot_dimension_numbers<[1], [0], [0], [1], [0, 0, 1, 1], [], []>, precision = #tpu.contract_precision<fp32>} : vector<16x32xf32>, vector<32x256xf32>, vector<16x256xf32> -> vector<16x256xf32>
    %cst_15 = arith.constant dense<0.000000e+00> : vector<16x128xf32>
    %11 = tpu.matmul %10, %5, %cst_15 {dimension_numbers = #tpu.dot_dimension_numbers<[1], [0], [0], [1], [0, 0, 1, 1], [], []>, precision = #tpu.contract_precision<fp32>} : vector<16x256xf32>, vector<256x128xf32>, vector<16x128xf32> -> vector<16x128xf32>
    %c0_16 = arith.constant 0 : index
    %c0_17 = arith.constant 0 : index
    %c0_18 = arith.constant 0 : index
    %12 = vector.load %arg7[%c0_16, %c0_17, %c0_18] : memref<1x16x128xf32, #tpu.memory_space<vmem>>, vector<1x16x128xf32>
    %13 = vector.shape_cast %12 : vector<1x16x128xf32> to vector<16x128xf32>
    %14 = vector.shape_cast %9 : vector<16x128xf32> to vector<1x16x128xf32>
    tpu.vector_store %arg7[%c0_16, %c0_17, %c0_18], %14 {strides = array<i32>} : memref<1x16x128xf32, #tpu.memory_space<vmem>>, vector<1x16x128xf32>,
    %c0_19 = arith.constant 0 : index
    %c0_20 = arith.constant 0 : index
    %c0_21 = arith.constant 0 : index
    %15 = vector.load %arg8[%c0_19, %c0_20, %c0_21] : memref<1x16x128xf32, #tpu.memory_space<vmem>>, vector<1x16x128xf32>
    %16 = vector.shape_cast %15 : vector<1x16x128xf32> to vector<16x128xf32>
    %17 = vector.shape_cast %11 : vector<16x128xf32> to vector<1x16x128xf32>
    tpu.vector_store %arg8[%c0_19, %c0_20, %c0_21], %17 {strides = array<i32>} : memref<1x16x128xf32, #tpu.memory_space<vmem>>, vector<1x16x128xf32>,
    %cst_22 = arith.constant dense<0.000000e+00> : vector<16x256xf32>
    %18 = tpu.matmul %9, %7, %cst_22 {dimension_numbers = #tpu.dot_dimension_numbers<[1], [0], [0], [1], [0, 0, 1, 1], [], []>, precision = #tpu.contract_precision<fp32>} : vector<16x128xf32>, vector<128x256xf32>, vector<16x256xf32> -> vector<16x256xf32>
    %cst_23 = arith.constant dense<0.000000e+00> : vector<32x256xf32>
    %19 = tpu.matmul %6, %18, %cst_23 {dimension_numbers = #tpu.dot_dimension_numbers<[1], [0], [0], [1], [0, 0, 1, 1], [], []>, precision = #tpu.contract_precision<fp32>} : vector<32x16xf32>, vector<16x256xf32>, vector<32x256xf32> -> vector<32x256xf32>
    %20 = arith.subf %1, %19 : vector<32x256xf32>
    %21 = math.absf %20 : vector<32x256xf32>
    %22 = tpu.iota {dimensions = array<i32: 1>} : vector<32x256xi32>
    %c1_i32 = arith.constant 1 : i32
    %23 = vector.broadcast %c1_i32 : i32 to vector<32x256xi32>
    %24 = arith.cmpi sge, %22, %23 : vector<32x256xi32>
    %c1_i32_24 = arith.constant 1 : i32
    %25 = tpu.dynamic_rotate %21 by %c1_i32_24 dim 1 : vector<32x256xf32>, i32 -> vector<32x256xf32>
    %cst_25 = arith.constant 0.000000e+00 : f32
    %26 = vector.broadcast %cst_25 : f32 to vector<32x256xf32>
    %27 = arith.select %24, %25, %26 : vector<32x256xi1>, vector<32x256xf32>
    %28 = tpu.iota {dimensions = array<i32: 1>} : vector<32x256xi32>
    %c255_i32 = arith.constant 255 : i32
    %29 = vector.broadcast %c255_i32 : i32 to vector<32x256xi32>
    %30 = arith.cmpi slt, %28, %29 : vector<32x256xi32>
    %c255_i32_26 = arith.constant 255 : i32
    %31 = tpu.dynamic_rotate %21 by %c255_i32_26 dim 1 : vector<32x256xf32>, i32 -> vector<32x256xf32>
    %cst_27 = arith.constant 0.000000e+00 : f32
    %32 = vector.broadcast %cst_27 : f32 to vector<32x256xf32>
    %33 = arith.select %30, %31, %32 : vector<32x256xi1>, vector<32x256xf32>
    %34 = arith.addf %27, %33 : vector<32x256xf32>
    %35 = tpu.iota {dimensions = array<i32: 1>} : vector<32x256xi32>
    %c2_i32 = arith.constant 2 : i32
    %36 = vector.broadcast %c2_i32 : i32 to vector<32x256xi32>
    %37 = arith.cmpi sge, %35, %36 : vector<32x256xi32>
    %c2_i32_28 = arith.constant 2 : i32
    %38 = tpu.dynamic_rotate %21 by %c2_i32_28 dim 1 : vector<32x256xf32>, i32 -> vector<32x256xf32>
    %cst_29 = arith.constant 0.000000e+00 : f32
    %39 = vector.broadcast %cst_29 : f32 to vector<32x256xf32>
    %40 = arith.select %37, %38, %39 : vector<32x256xi1>, vector<32x256xf32>
    %41 = tpu.iota {dimensions = array<i32: 1>} : vector<32x256xi32>
    %c254_i32 = arith.constant 254 : i32
    %42 = vector.broadcast %c254_i32 : i32 to vector<32x256xi32>
    %43 = arith.cmpi slt, %41, %42 : vector<32x256xi32>
    %c254_i32_30 = arith.constant 254 : i32
    %44 = tpu.dynamic_rotate %21 by %c254_i32_30 dim 1 : vector<32x256xf32>, i32 -> vector<32x256xf32>
    %cst_31 = arith.constant 0.000000e+00 : f32
    %45 = vector.broadcast %cst_31 : f32 to vector<32x256xf32>
    %46 = arith.select %43, %44, %45 : vector<32x256xi1>, vector<32x256xf32>
    %47 = arith.addf %40, %46 : vector<32x256xf32>
    %48 = arith.addf %21, %47 : vector<32x256xf32>
    %cst_32 = arith.constant 5.000000e-02 : f32
    %49 = vector.broadcast %cst_32 : f32 to vector<32x256xf32>
    %50 = arith.mulf %49, %48 : vector<32x256xf32>
    %cst_33 = arith.constant 4.000000e-02 : f32
    %51 = vector.broadcast %cst_33 : f32 to vector<32x256xf32>
    %52 = arith.mulf %51, %34 : vector<32x256xf32>
    %53 = arith.addf %50, %52 : vector<32x256xf32>
    %54 = arith.addf %21, %47 : vector<32x256xf32>
    %cst_34 = arith.constant 4.000000e-02 : f32
    %55 = vector.broadcast %cst_34 : f32 to vector<32x256xf32>
    %56 = arith.mulf %55, %54 : vector<32x256xf32>
    %cst_35 = arith.constant 3.000000e-02 : f32
    %57 = vector.broadcast %cst_35 : f32 to vector<32x256xf32>
    %58 = arith.mulf %57, %34 : vector<32x256xf32>
    %59 = arith.addf %56, %58 : vector<32x256xf32>
    %cst_36 = arith.constant 5.000000e-02 : f32
    %60 = vector.broadcast %cst_36 : f32 to vector<32x256xf32>
    %61 = arith.mulf %60, %21 : vector<32x256xf32>
    %62 = arith.addf %34, %47 : vector<32x256xf32>
    %cst_37 = arith.constant 4.000000e-02 : f32
    %63 = vector.broadcast %cst_37 : f32 to vector<32x256xf32>
    %64 = arith.mulf %63, %62 : vector<32x256xf32>
    %65 = arith.addf %61, %64 : vector<32x256xf32>
    %66 = tpu.iota {dimensions = array<i32: 0>} : vector<32x256xi32>
    %c1_i32_38 = arith.constant 1 : i32
    %67 = vector.broadcast %c1_i32_38 : i32 to vector<32x256xi32>
    %68 = arith.cmpi sge, %66, %67 : vector<32x256xi32>
    %c1_i32_39 = arith.constant 1 : i32
    %69 = tpu.dynamic_rotate %59 by %c1_i32_39 dim 0 : vector<32x256xf32>, i32 -> vector<32x256xf32>
    %cst_40 = arith.constant 0.000000e+00 : f32
    %70 = vector.broadcast %cst_40 : f32 to vector<32x256xf32>
    %71 = arith.select %68, %69, %70 : vector<32x256xi1>, vector<32x256xf32>
    %72 = arith.addf %53, %71 : vector<32x256xf32>
    %73 = tpu.iota {dimensions = array<i32: 0>} : vector<32x256xi32>
    %c31_i32 = arith.constant 31 : i32
    %74 = vector.broadcast %c31_i32 : i32 to vector<32x256xi32>
    %75 = arith.cmpi slt, %73, %74 : vector<32x256xi32>
    %c31_i32_41 = arith.constant 31 : i32
    %76 = tpu.dynamic_rotate %59 by %c31_i32_41 dim 0 : vector<32x256xf32>, i32 -> vector<32x256xf32>
    %cst_42 = arith.constant 0.000000e+00 : f32
    %77 = vector.broadcast %cst_42 : f32 to vector<32x256xf32>
    %78 = arith.select %75, %76, %77 : vector<32x256xi1>, vector<32x256xf32>
    %79 = arith.addf %72, %78 : vector<32x256xf32>
    %80 = tpu.iota {dimensions = array<i32: 0>} : vector<32x256xi32>
    %c2_i32_43 = arith.constant 2 : i32
    %81 = vector.broadcast %c2_i32_43 : i32 to vector<32x256xi32>
    %82 = arith.cmpi sge, %80, %81 : vector<32x256xi32>
    %c2_i32_44 = arith.constant 2 : i32
    %83 = tpu.dynamic_rotate %65 by %c2_i32_44 dim 0 : vector<32x256xf32>, i32 -> vector<32x256xf32>
    %cst_45 = arith.constant 0.000000e+00 : f32
    %84 = vector.broadcast %cst_45 : f32 to vector<32x256xf32>
    %85 = arith.select %82, %83, %84 : vector<32x256xi1>, vector<32x256xf32>
    %86 = arith.addf %79, %85 : vector<32x256xf32>
    %87 = tpu.iota {dimensions = array<i32: 0>} : vector<32x256xi32>
    %c30_i32 = arith.constant 30 : i32
    %88 = vector.broadcast %c30_i32 : i32 to vector<32x256xi32>
    %89 = arith.cmpi slt, %87, %88 : vector<32x256xi32>
    %c30_i32_46 = arith.constant 30 : i32
    %90 = tpu.dynamic_rotate %65 by %c30_i32_46 dim 0 : vector<32x256xf32>, i32 -> vector<32x256xf32>
    %cst_47 = arith.constant 0.000000e+00 : f32
    %91 = vector.broadcast %cst_47 : f32 to vector<32x256xf32>
    %92 = arith.select %89, %90, %91 : vector<32x256xi1>, vector<32x256xf32>
    %93 = arith.addf %86, %92 : vector<32x256xf32>
    %94 = vector.shape_cast %93 : vector<32x256xf32> to vector<1x32x256xf32>
    %cst_48 = arith.constant dense<0.000000e+00> : vector<1xf32>
    %95 = vector.multi_reduction <add>, %94, %cst_48 [1, 2] : vector<1x32x256xf32> to vector<1xf32>
    %96 = vector.shape_cast %95 : vector<1xf32> to vector<1x1x1xf32>
    %97 = vector.extract %96[0, 0, 0] : f32 from vector<1x1x1xf32>
    %cst_49 = arith.constant 8.192000e+03 : f32
    %98 = arith.divf %97, %cst_49 : f32
    %99 = vector.broadcast %98 : f32 to vector<32x256xf32>
    %100 = arith.addf %93, %99 : vector<32x256xf32>
    %101 = tpu.reciprocal %100 {approx = true} : vector<32x256xf32> -> vector<32x256xf32>
    %102 = arith.mulf %20, %101 : vector<32x256xf32>
    %103 = arith.subf %3, %19 : vector<32x256xf32>
    %104 = math.absf %103 : vector<32x256xf32>
    %105 = tpu.iota {dimensions = array<i32: 1>} : vector<32x256xi32>
    %c1_i32_50 = arith.constant 1 : i32
    %106 = vector.broadcast %c1_i32_50 : i32 to vector<32x256xi32>
    %107 = arith.cmpi sge, %105, %106 : vector<32x256xi32>
    %c1_i32_51 = arith.constant 1 : i32
    %108 = tpu.dynamic_rotate %104 by %c1_i32_51 dim 1 : vector<32x256xf32>, i32 -> vector<32x256xf32>
    %cst_52 = arith.constant 0.000000e+00 : f32
    %109 = vector.broadcast %cst_52 : f32 to vector<32x256xf32>
    %110 = arith.select %107, %108, %109 : vector<32x256xi1>, vector<32x256xf32>
    %111 = tpu.iota {dimensions = array<i32: 1>} : vector<32x256xi32>
    %c255_i32_53 = arith.constant 255 : i32
    %112 = vector.broadcast %c255_i32_53 : i32 to vector<32x256xi32>
    %113 = arith.cmpi slt, %111, %112 : vector<32x256xi32>
    %c255_i32_54 = arith.constant 255 : i32
    %114 = tpu.dynamic_rotate %104 by %c255_i32_54 dim 1 : vector<32x256xf32>, i32 -> vector<32x256xf32>
    %cst_55 = arith.constant 0.000000e+00 : f32
    %115 = vector.broadcast %cst_55 : f32 to vector<32x256xf32>
    %116 = arith.select %113, %114, %115 : vector<32x256xi1>, vector<32x256xf32>
    %117 = arith.addf %110, %116 : vector<32x256xf32>
    %118 = tpu.iota {dimensions = array<i32: 1>} : vector<32x256xi32>
    %c2_i32_56 = arith.constant 2 : i32
    %119 = vector.broadcast %c2_i32_56 : i32 to vector<32x256xi32>
    %120 = arith.cmpi sge, %118, %119 : vector<32x256xi32>
    %c2_i32_57 = arith.constant 2 : i32
    %121 = tpu.dynamic_rotate %104 by %c2_i32_57 dim 1 : vector<32x256xf32>, i32 -> vector<32x256xf32>
    %cst_58 = arith.constant 0.000000e+00 : f32
    %122 = vector.broadcast %cst_58 : f32 to vector<32x256xf32>
    %123 = arith.select %120, %121, %122 : vector<32x256xi1>, vector<32x256xf32>
    %124 = tpu.iota {dimensions = array<i32: 1>} : vector<32x256xi32>
    %c254_i32_59 = arith.constant 254 : i32
    %125 = vector.broadcast %c254_i32_59 : i32 to vector<32x256xi32>
    %126 = arith.cmpi slt, %124, %125 : vector<32x256xi32>
    %c254_i32_60 = arith.constant 254 : i32
    %127 = tpu.dynamic_rotate %104 by %c254_i32_60 dim 1 : vector<32x256xf32>, i32 -> vector<32x256xf32>
    %cst_61 = arith.constant 0.000000e+00 : f32
    %128 = vector.broadcast %cst_61 : f32 to vector<32x256xf32>
    %129 = arith.select %126, %127, %128 : vector<32x256xi1>, vector<32x256xf32>
    %130 = arith.addf %123, %129 : vector<32x256xf32>
    %131 = arith.addf %104, %130 : vector<32x256xf32>
    %cst_62 = arith.constant 5.000000e-02 : f32
    %132 = vector.broadcast %cst_62 : f32 to vector<32x256xf32>
    %133 = arith.mulf %132, %131 : vector<32x256xf32>
    %cst_63 = arith.constant 4.000000e-02 : f32
    %134 = vector.broadcast %cst_63 : f32 to vector<32x256xf32>
    %135 = arith.mulf %134, %117 : vector<32x256xf32>
    %136 = arith.addf %133, %135 : vector<32x256xf32>
    %137 = arith.addf %104, %130 : vector<32x256xf32>
    %cst_64 = arith.constant 4.000000e-02 : f32
    %138 = vector.broadcast %cst_64 : f32 to vector<32x256xf32>
    %139 = arith.mulf %138, %137 : vector<32x256xf32>
    %cst_65 = arith.constant 3.000000e-02 : f32
    %140 = vector.broadcast %cst_65 : f32 to vector<32x256xf32>
    %141 = arith.mulf %140, %117 : vector<32x256xf32>
    %142 = arith.addf %139, %141 : vector<32x256xf32>
    %cst_66 = arith.constant 5.000000e-02 : f32
    %143 = vector.broadcast %cst_66 : f32 to vector<32x256xf32>
    %144 = arith.mulf %143, %104 : vector<32x256xf32>
    %145 = arith.addf %117, %130 : vector<32x256xf32>
    %cst_67 = arith.constant 4.000000e-02 : f32
    %146 = vector.broadcast %cst_67 : f32 to vector<32x256xf32>
    %147 = arith.mulf %146, %145 : vector<32x256xf32>
    %148 = arith.addf %144, %147 : vector<32x256xf32>
    %149 = tpu.iota {dimensions = array<i32: 0>} : vector<32x256xi32>
    %c1_i32_68 = arith.constant 1 : i32
    %150 = vector.broadcast %c1_i32_68 : i32 to vector<32x256xi32>
    %151 = arith.cmpi sge, %149, %150 : vector<32x256xi32>
    %c1_i32_69 = arith.constant 1 : i32
    %152 = tpu.dynamic_rotate %142 by %c1_i32_69 dim 0 : vector<32x256xf32>, i32 -> vector<32x256xf32>
    %cst_70 = arith.constant 0.000000e+00 : f32
    %153 = vector.broadcast %cst_70 : f32 to vector<32x256xf32>
    %154 = arith.select %151, %152, %153 : vector<32x256xi1>, vector<32x256xf32>
    %155 = arith.addf %136, %154 : vector<32x256xf32>
    %156 = tpu.iota {dimensions = array<i32: 0>} : vector<32x256xi32>
    %c31_i32_71 = arith.constant 31 : i32
    %157 = vector.broadcast %c31_i32_71 : i32 to vector<32x256xi32>
    %158 = arith.cmpi slt, %156, %157 : vector<32x256xi32>
    %c31_i32_72 = arith.constant 31 : i32
    %159 = tpu.dynamic_rotate %142 by %c31_i32_72 dim 0 : vector<32x256xf32>, i32 -> vector<32x256xf32>
    %cst_73 = arith.constant 0.000000e+00 : f32
    %160 = vector.broadcast %cst_73 : f32 to vector<32x256xf32>
    %161 = arith.select %158, %159, %160 : vector<32x256xi1>, vector<32x256xf32>
    %162 = arith.addf %155, %161 : vector<32x256xf32>
    %163 = tpu.iota {dimensions = array<i32: 0>} : vector<32x256xi32>
    %c2_i32_74 = arith.constant 2 : i32
    %164 = vector.broadcast %c2_i32_74 : i32 to vector<32x256xi32>
    %165 = arith.cmpi sge, %163, %164 : vector<32x256xi32>
    %c2_i32_75 = arith.constant 2 : i32
    %166 = tpu.dynamic_rotate %148 by %c2_i32_75 dim 0 : vector<32x256xf32>, i32 -> vector<32x256xf32>
    %cst_76 = arith.constant 0.000000e+00 : f32
    %167 = vector.broadcast %cst_76 : f32 to vector<32x256xf32>
    %168 = arith.select %165, %166, %167 : vector<32x256xi1>, vector<32x256xf32>
    %169 = arith.addf %162, %168 : vector<32x256xf32>
    %170 = tpu.iota {dimensions = array<i32: 0>} : vector<32x256xi32>
    %c30_i32_77 = arith.constant 30 : i32
    %171 = vector.broadcast %c30_i32_77 : i32 to vector<32x256xi32>
    %172 = arith.cmpi slt, %170, %171 : vector<32x256xi32>
    %c30_i32_78 = arith.constant 30 : i32
    %173 = tpu.dynamic_rotate %148 by %c30_i32_78 dim 0 : vector<32x256xf32>, i32 -> vector<32x256xf32>
    %cst_79 = arith.constant 0.000000e+00 : f32
    %174 = vector.broadcast %cst_79 : f32 to vector<32x256xf32>
    %175 = arith.select %172, %173, %174 : vector<32x256xi1>, vector<32x256xf32>
    %176 = arith.addf %169, %175 : vector<32x256xf32>
    %177 = vector.shape_cast %176 : vector<32x256xf32> to vector<1x32x256xf32>
    %cst_80 = arith.constant dense<0.000000e+00> : vector<1xf32>
    %178 = vector.multi_reduction <add>, %177, %cst_80 [1, 2] : vector<1x32x256xf32> to vector<1xf32>
    %179 = vector.shape_cast %178 : vector<1xf32> to vector<1x1x1xf32>
    %180 = vector.extract %179[0, 0, 0] : f32 from vector<1x1x1xf32>
    %cst_81 = arith.constant 8.192000e+03 : f32
    %181 = arith.divf %180, %cst_81 : f32
    %182 = vector.broadcast %181 : f32 to vector<32x256xf32>
    %183 = arith.addf %176, %182 : vector<32x256xf32>
    %184 = tpu.reciprocal %183 {approx = true} : vector<32x256xf32> -> vector<32x256xf32>
    %185 = arith.mulf %103, %184 : vector<32x256xf32>
    %186 = arith.subf %102, %185 : vector<32x256xf32>
    %187 = arith.mulf %186, %186 : vector<32x256xf32>
    %188 = vector.shape_cast %187 : vector<32x256xf32> to vector<1x32x256xf32>
    %cst_82 = arith.constant dense<0.000000e+00> : vector<1xf32>
    %189 = vector.multi_reduction <add>, %188, %cst_82 [1, 2] : vector<1x32x256xf32> to vector<1xf32>
    %190 = vector.shape_cast %189 : vector<1xf32> to vector<1x1x1xf32>
    %191 = vector.extract %190[0, 0, 0] : f32 from vector<1x1x1xf32>
    %192 = vector.broadcast %191 : f32 to vector<8x128xf32>
    %c0_83 = arith.constant 0 : index
    %c0_84 = arith.constant 0 : index
    %c0_85 = arith.constant 0 : index
    %193 = vector.load %arg9[%c0_83, %c0_84, %c0_85] : memref<1x8x128xf32, #tpu.memory_space<vmem>>, vector<1x8x128xf32>
    %194 = vector.shape_cast %193 : vector<1x8x128xf32> to vector<8x128xf32>
    %195 = vector.shape_cast %192 : vector<8x128xf32> to vector<1x8x128xf32>
    tpu.vector_store %arg9[%c0_83, %c0_84, %c0_85], %195 {strides = array<i32>} : memref<1x8x128xf32, #tpu.memory_space<vmem>>, vector<1x8x128xf32>,
    return
  }
  func.func @transform_0(%arg0: i32) -> (i32, i32, i32) {
    %c0_i32 = arith.constant 0 : i32
    %c0_i32_0 = arith.constant 0 : i32
    %c0_i32_1 = arith.constant 0 : i32
    return %arg0, %c0_i32, %c0_i32_0 : i32, i32, i32
  }
  func.func @transform_1(%arg0: i32) -> (i32, i32, i32) {
    %c0_i32 = arith.constant 0 : i32
    %c0_i32_0 = arith.constant 0 : i32
    %c0_i32_1 = arith.constant 0 : i32
    return %arg0, %c0_i32, %c0_i32_0 : i32, i32, i32
  }
  func.func @transform_2(%arg0: i32) -> (i32, i32) {
    %c0_i32 = arith.constant 0 : i32
    %c0_i32_0 = arith.constant 0 : i32
    %c0_i32_1 = arith.constant 0 : i32
    return %c0_i32, %c0_i32_0 : i32, i32
  }
  func.func @transform_3(%arg0: i32) -> (i32, i32) {
    %c0_i32 = arith.constant 0 : i32
    %c0_i32_0 = arith.constant 0 : i32
    %c0_i32_1 = arith.constant 0 : i32
    return %c0_i32, %c0_i32_0 : i32, i32
  }
  func.func @transform_4(%arg0: i32) -> (i32, i32) {
    %c0_i32 = arith.constant 0 : i32
    %c0_i32_0 = arith.constant 0 : i32
    %c0_i32_1 = arith.constant 0 : i32
    return %c0_i32, %c0_i32_0 : i32, i32
  }
  func.func @transform_5(%arg0: i32) -> (i32, i32) {
    %c0_i32 = arith.constant 0 : i32
    %c0_i32_0 = arith.constant 0 : i32
    %c0_i32_1 = arith.constant 0 : i32
    return %c0_i32, %c0_i32_0 : i32, i32
  }
  func.func @transform_6(%arg0: i32) -> (i32, i32, i32) {
    %c0_i32 = arith.constant 0 : i32
    %c0_i32_0 = arith.constant 0 : i32
    %c0_i32_1 = arith.constant 0 : i32
    return %arg0, %c0_i32, %c0_i32_0 : i32, i32, i32
  }
  func.func @transform_7(%arg0: i32) -> (i32, i32, i32) {
    %c0_i32 = arith.constant 0 : i32
    %c0_i32_0 = arith.constant 0 : i32
    %c0_i32_1 = arith.constant 0 : i32
    return %arg0, %c0_i32, %c0_i32_0 : i32, i32, i32
  }
  func.func @transform_8(%arg0: i32) -> (i32, i32, i32) {
    %c0_i32 = arith.constant 0 : i32
    %c0_i32_0 = arith.constant 0 : i32
    %c0_i32_1 = arith.constant 0 : i32
    return %arg0, %c0_i32, %c0_i32_0 : i32, i32, i32
  }
}

module attributes {stable_mosaic.version = 11 : i64} {
  func.func @_level_kernel(%arg0: i32, %arg1: memref<1x16x128xf32, #tpu.memory_space<vmem>>, %arg2: memref<1x16x128xf32, #tpu.memory_space<vmem>>, %arg3: memref<8x16xf32, #tpu.memory_space<vmem>>, %arg4: memref<128x64xf32, #tpu.memory_space<vmem>>, %arg5: memref<16x8xf32, #tpu.memory_space<vmem>>, %arg6: memref<64x128xf32, #tpu.memory_space<vmem>>, %arg7: memref<1x8x64xf32, #tpu.memory_space<vmem>>, %arg8: memref<1x8x64xf32, #tpu.memory_space<vmem>>, %arg9: memref<1x8x128xf32, #tpu.memory_space<vmem>>) attributes {dimension_semantics = [#tpu.dimension_semantics<parallel>], iteration_bounds = array<i64: 2>, scalar_prefetch = 0 : i64, scratch_operands = 0 : i64, tpu.core_type = #tpu.core_type<tc>, window_params = [{transform_indices = @transform_0, window_bounds = array<i64: 1, 16, 128>}, {transform_indices = @transform_1, window_bounds = array<i64: 1, 16, 128>}, {pipeline_mode = #tpu.pipeline_mode<synchronous>, transform_indices = @transform_2, window_bounds = array<i64: 8, 16>}, {pipeline_mode = #tpu.pipeline_mode<synchronous>, transform_indices = @transform_3, window_bounds = array<i64: 128, 64>}, {pipeline_mode = #tpu.pipeline_mode<synchronous>, transform_indices = @transform_4, window_bounds = array<i64: 16, 8>}, {pipeline_mode = #tpu.pipeline_mode<synchronous>, transform_indices = @transform_5, window_bounds = array<i64: 64, 128>}, {transform_indices = @transform_6, window_bounds = array<i64: 1, 8, 64>}, {transform_indices = @transform_7, window_bounds = array<i64: 1, 8, 64>}, {transform_indices = @transform_8, window_bounds = array<i64: 1, 8, 128>}]} {
    %c0 = arith.constant 0 : index
    %c0_0 = arith.constant 0 : index
    %c0_1 = arith.constant 0 : index
    %0 = vector.load %arg1[%c0, %c0_0, %c0_1] : memref<1x16x128xf32, #tpu.memory_space<vmem>>, vector<1x16x128xf32>
    %1 = vector.shape_cast %0 : vector<1x16x128xf32> to vector<16x128xf32>
    %c0_2 = arith.constant 0 : index
    %c0_3 = arith.constant 0 : index
    %c0_4 = arith.constant 0 : index
    %2 = vector.load %arg2[%c0_2, %c0_3, %c0_4] : memref<1x16x128xf32, #tpu.memory_space<vmem>>, vector<1x16x128xf32>
    %3 = vector.shape_cast %2 : vector<1x16x128xf32> to vector<16x128xf32>
    %c0_5 = arith.constant 0 : index
    %c0_6 = arith.constant 0 : index
    %4 = vector.load %arg3[%c0_5, %c0_6] : memref<8x16xf32, #tpu.memory_space<vmem>>, vector<8x16xf32>
    %c0_7 = arith.constant 0 : index
    %c0_8 = arith.constant 0 : index
    %5 = vector.load %arg4[%c0_7, %c0_8] : memref<128x64xf32, #tpu.memory_space<vmem>>, vector<128x64xf32>
    %c0_9 = arith.constant 0 : index
    %c0_10 = arith.constant 0 : index
    %6 = vector.load %arg5[%c0_9, %c0_10] : memref<16x8xf32, #tpu.memory_space<vmem>>, vector<16x8xf32>
    %c0_11 = arith.constant 0 : index
    %c0_12 = arith.constant 0 : index
    %7 = vector.load %arg6[%c0_11, %c0_12] : memref<64x128xf32, #tpu.memory_space<vmem>>, vector<64x128xf32>
    %cst = arith.constant dense<0.000000e+00> : vector<8x128xf32>
    %8 = tpu.matmul %4, %1, %cst {dimension_numbers = #tpu.dot_dimension_numbers<[1], [0], [0], [1], [0, 0, 1, 1], [], []>, precision = #tpu.contract_precision<fp32>} : vector<8x16xf32>, vector<16x128xf32>, vector<8x128xf32> -> vector<8x128xf32>
    %cst_13 = arith.constant dense<0.000000e+00> : vector<8x64xf32>
    %9 = tpu.matmul %8, %5, %cst_13 {dimension_numbers = #tpu.dot_dimension_numbers<[1], [0], [0], [1], [0, 0, 1, 1], [], []>, precision = #tpu.contract_precision<fp32>} : vector<8x128xf32>, vector<128x64xf32>, vector<8x64xf32> -> vector<8x64xf32>
    %cst_14 = arith.constant dense<0.000000e+00> : vector<8x128xf32>
    %10 = tpu.matmul %4, %3, %cst_14 {dimension_numbers = #tpu.dot_dimension_numbers<[1], [0], [0], [1], [0, 0, 1, 1], [], []>, precision = #tpu.contract_precision<fp32>} : vector<8x16xf32>, vector<16x128xf32>, vector<8x128xf32> -> vector<8x128xf32>
    %cst_15 = arith.constant dense<0.000000e+00> : vector<8x64xf32>
    %11 = tpu.matmul %10, %5, %cst_15 {dimension_numbers = #tpu.dot_dimension_numbers<[1], [0], [0], [1], [0, 0, 1, 1], [], []>, precision = #tpu.contract_precision<fp32>} : vector<8x128xf32>, vector<128x64xf32>, vector<8x64xf32> -> vector<8x64xf32>
    %c0_16 = arith.constant 0 : index
    %c0_17 = arith.constant 0 : index
    %c0_18 = arith.constant 0 : index
    %12 = vector.load %arg7[%c0_16, %c0_17, %c0_18] : memref<1x8x64xf32, #tpu.memory_space<vmem>>, vector<1x8x64xf32>
    %13 = vector.shape_cast %12 : vector<1x8x64xf32> to vector<8x64xf32>
    %14 = vector.shape_cast %9 : vector<8x64xf32> to vector<1x8x64xf32>
    tpu.vector_store %arg7[%c0_16, %c0_17, %c0_18], %14 {strides = array<i32>} : memref<1x8x64xf32, #tpu.memory_space<vmem>>, vector<1x8x64xf32>,
    %c0_19 = arith.constant 0 : index
    %c0_20 = arith.constant 0 : index
    %c0_21 = arith.constant 0 : index
    %15 = vector.load %arg8[%c0_19, %c0_20, %c0_21] : memref<1x8x64xf32, #tpu.memory_space<vmem>>, vector<1x8x64xf32>
    %16 = vector.shape_cast %15 : vector<1x8x64xf32> to vector<8x64xf32>
    %17 = vector.shape_cast %11 : vector<8x64xf32> to vector<1x8x64xf32>
    tpu.vector_store %arg8[%c0_19, %c0_20, %c0_21], %17 {strides = array<i32>} : memref<1x8x64xf32, #tpu.memory_space<vmem>>, vector<1x8x64xf32>,
    %cst_22 = arith.constant dense<0.000000e+00> : vector<8x128xf32>
    %18 = tpu.matmul %9, %7, %cst_22 {dimension_numbers = #tpu.dot_dimension_numbers<[1], [0], [0], [1], [0, 0, 1, 1], [], []>, precision = #tpu.contract_precision<fp32>} : vector<8x64xf32>, vector<64x128xf32>, vector<8x128xf32> -> vector<8x128xf32>
    %cst_23 = arith.constant dense<0.000000e+00> : vector<16x128xf32>
    %19 = tpu.matmul %6, %18, %cst_23 {dimension_numbers = #tpu.dot_dimension_numbers<[1], [0], [0], [1], [0, 0, 1, 1], [], []>, precision = #tpu.contract_precision<fp32>} : vector<16x8xf32>, vector<8x128xf32>, vector<16x128xf32> -> vector<16x128xf32>
    %20 = arith.subf %1, %19 : vector<16x128xf32>
    %21 = math.absf %20 : vector<16x128xf32>
    %22 = tpu.iota {dimensions = array<i32: 1>} : vector<16x128xi32>
    %c1_i32 = arith.constant 1 : i32
    %23 = vector.broadcast %c1_i32 : i32 to vector<16x128xi32>
    %24 = arith.cmpi sge, %22, %23 : vector<16x128xi32>
    %c1_i32_24 = arith.constant 1 : i32
    %25 = tpu.dynamic_rotate %21 by %c1_i32_24 dim 1 : vector<16x128xf32>, i32 -> vector<16x128xf32>
    %cst_25 = arith.constant 0.000000e+00 : f32
    %26 = vector.broadcast %cst_25 : f32 to vector<16x128xf32>
    %27 = arith.select %24, %25, %26 : vector<16x128xi1>, vector<16x128xf32>
    %28 = tpu.iota {dimensions = array<i32: 1>} : vector<16x128xi32>
    %c127_i32 = arith.constant 127 : i32
    %29 = vector.broadcast %c127_i32 : i32 to vector<16x128xi32>
    %30 = arith.cmpi slt, %28, %29 : vector<16x128xi32>
    %c127_i32_26 = arith.constant 127 : i32
    %31 = tpu.dynamic_rotate %21 by %c127_i32_26 dim 1 : vector<16x128xf32>, i32 -> vector<16x128xf32>
    %cst_27 = arith.constant 0.000000e+00 : f32
    %32 = vector.broadcast %cst_27 : f32 to vector<16x128xf32>
    %33 = arith.select %30, %31, %32 : vector<16x128xi1>, vector<16x128xf32>
    %34 = arith.addf %27, %33 : vector<16x128xf32>
    %35 = tpu.iota {dimensions = array<i32: 1>} : vector<16x128xi32>
    %c2_i32 = arith.constant 2 : i32
    %36 = vector.broadcast %c2_i32 : i32 to vector<16x128xi32>
    %37 = arith.cmpi sge, %35, %36 : vector<16x128xi32>
    %c2_i32_28 = arith.constant 2 : i32
    %38 = tpu.dynamic_rotate %21 by %c2_i32_28 dim 1 : vector<16x128xf32>, i32 -> vector<16x128xf32>
    %cst_29 = arith.constant 0.000000e+00 : f32
    %39 = vector.broadcast %cst_29 : f32 to vector<16x128xf32>
    %40 = arith.select %37, %38, %39 : vector<16x128xi1>, vector<16x128xf32>
    %41 = tpu.iota {dimensions = array<i32: 1>} : vector<16x128xi32>
    %c126_i32 = arith.constant 126 : i32
    %42 = vector.broadcast %c126_i32 : i32 to vector<16x128xi32>
    %43 = arith.cmpi slt, %41, %42 : vector<16x128xi32>
    %c126_i32_30 = arith.constant 126 : i32
    %44 = tpu.dynamic_rotate %21 by %c126_i32_30 dim 1 : vector<16x128xf32>, i32 -> vector<16x128xf32>
    %cst_31 = arith.constant 0.000000e+00 : f32
    %45 = vector.broadcast %cst_31 : f32 to vector<16x128xf32>
    %46 = arith.select %43, %44, %45 : vector<16x128xi1>, vector<16x128xf32>
    %47 = arith.addf %40, %46 : vector<16x128xf32>
    %48 = arith.addf %21, %47 : vector<16x128xf32>
    %cst_32 = arith.constant 5.000000e-02 : f32
    %49 = vector.broadcast %cst_32 : f32 to vector<16x128xf32>
    %50 = arith.mulf %49, %48 : vector<16x128xf32>
    %cst_33 = arith.constant 4.000000e-02 : f32
    %51 = vector.broadcast %cst_33 : f32 to vector<16x128xf32>
    %52 = arith.mulf %51, %34 : vector<16x128xf32>
    %53 = arith.addf %50, %52 : vector<16x128xf32>
    %54 = arith.addf %21, %47 : vector<16x128xf32>
    %cst_34 = arith.constant 4.000000e-02 : f32
    %55 = vector.broadcast %cst_34 : f32 to vector<16x128xf32>
    %56 = arith.mulf %55, %54 : vector<16x128xf32>
    %cst_35 = arith.constant 3.000000e-02 : f32
    %57 = vector.broadcast %cst_35 : f32 to vector<16x128xf32>
    %58 = arith.mulf %57, %34 : vector<16x128xf32>
    %59 = arith.addf %56, %58 : vector<16x128xf32>
    %cst_36 = arith.constant 5.000000e-02 : f32
    %60 = vector.broadcast %cst_36 : f32 to vector<16x128xf32>
    %61 = arith.mulf %60, %21 : vector<16x128xf32>
    %62 = arith.addf %34, %47 : vector<16x128xf32>
    %cst_37 = arith.constant 4.000000e-02 : f32
    %63 = vector.broadcast %cst_37 : f32 to vector<16x128xf32>
    %64 = arith.mulf %63, %62 : vector<16x128xf32>
    %65 = arith.addf %61, %64 : vector<16x128xf32>
    %66 = tpu.iota {dimensions = array<i32: 0>} : vector<16x128xi32>
    %c1_i32_38 = arith.constant 1 : i32
    %67 = vector.broadcast %c1_i32_38 : i32 to vector<16x128xi32>
    %68 = arith.cmpi sge, %66, %67 : vector<16x128xi32>
    %c1_i32_39 = arith.constant 1 : i32
    %69 = tpu.dynamic_rotate %59 by %c1_i32_39 dim 0 : vector<16x128xf32>, i32 -> vector<16x128xf32>
    %cst_40 = arith.constant 0.000000e+00 : f32
    %70 = vector.broadcast %cst_40 : f32 to vector<16x128xf32>
    %71 = arith.select %68, %69, %70 : vector<16x128xi1>, vector<16x128xf32>
    %72 = arith.addf %53, %71 : vector<16x128xf32>
    %73 = tpu.iota {dimensions = array<i32: 0>} : vector<16x128xi32>
    %c15_i32 = arith.constant 15 : i32
    %74 = vector.broadcast %c15_i32 : i32 to vector<16x128xi32>
    %75 = arith.cmpi slt, %73, %74 : vector<16x128xi32>
    %c15_i32_41 = arith.constant 15 : i32
    %76 = tpu.dynamic_rotate %59 by %c15_i32_41 dim 0 : vector<16x128xf32>, i32 -> vector<16x128xf32>
    %cst_42 = arith.constant 0.000000e+00 : f32
    %77 = vector.broadcast %cst_42 : f32 to vector<16x128xf32>
    %78 = arith.select %75, %76, %77 : vector<16x128xi1>, vector<16x128xf32>
    %79 = arith.addf %72, %78 : vector<16x128xf32>
    %80 = tpu.iota {dimensions = array<i32: 0>} : vector<16x128xi32>
    %c2_i32_43 = arith.constant 2 : i32
    %81 = vector.broadcast %c2_i32_43 : i32 to vector<16x128xi32>
    %82 = arith.cmpi sge, %80, %81 : vector<16x128xi32>
    %c2_i32_44 = arith.constant 2 : i32
    %83 = tpu.dynamic_rotate %65 by %c2_i32_44 dim 0 : vector<16x128xf32>, i32 -> vector<16x128xf32>
    %cst_45 = arith.constant 0.000000e+00 : f32
    %84 = vector.broadcast %cst_45 : f32 to vector<16x128xf32>
    %85 = arith.select %82, %83, %84 : vector<16x128xi1>, vector<16x128xf32>
    %86 = arith.addf %79, %85 : vector<16x128xf32>
    %87 = tpu.iota {dimensions = array<i32: 0>} : vector<16x128xi32>
    %c14_i32 = arith.constant 14 : i32
    %88 = vector.broadcast %c14_i32 : i32 to vector<16x128xi32>
    %89 = arith.cmpi slt, %87, %88 : vector<16x128xi32>
    %c14_i32_46 = arith.constant 14 : i32
    %90 = tpu.dynamic_rotate %65 by %c14_i32_46 dim 0 : vector<16x128xf32>, i32 -> vector<16x128xf32>
    %cst_47 = arith.constant 0.000000e+00 : f32
    %91 = vector.broadcast %cst_47 : f32 to vector<16x128xf32>
    %92 = arith.select %89, %90, %91 : vector<16x128xi1>, vector<16x128xf32>
    %93 = arith.addf %86, %92 : vector<16x128xf32>
    %94 = vector.shape_cast %93 : vector<16x128xf32> to vector<1x16x128xf32>
    %cst_48 = arith.constant dense<0.000000e+00> : vector<1xf32>
    %95 = vector.multi_reduction <add>, %94, %cst_48 [1, 2] : vector<1x16x128xf32> to vector<1xf32>
    %96 = vector.shape_cast %95 : vector<1xf32> to vector<1x1x1xf32>
    %97 = vector.extract %96[0, 0, 0] : f32 from vector<1x1x1xf32>
    %cst_49 = arith.constant 2.048000e+03 : f32
    %98 = arith.divf %97, %cst_49 : f32
    %99 = vector.broadcast %98 : f32 to vector<16x128xf32>
    %100 = arith.addf %93, %99 : vector<16x128xf32>
    %101 = tpu.reciprocal %100 {approx = true} : vector<16x128xf32> -> vector<16x128xf32>
    %102 = arith.mulf %20, %101 : vector<16x128xf32>
    %103 = arith.subf %3, %19 : vector<16x128xf32>
    %104 = math.absf %103 : vector<16x128xf32>
    %105 = tpu.iota {dimensions = array<i32: 1>} : vector<16x128xi32>
    %c1_i32_50 = arith.constant 1 : i32
    %106 = vector.broadcast %c1_i32_50 : i32 to vector<16x128xi32>
    %107 = arith.cmpi sge, %105, %106 : vector<16x128xi32>
    %c1_i32_51 = arith.constant 1 : i32
    %108 = tpu.dynamic_rotate %104 by %c1_i32_51 dim 1 : vector<16x128xf32>, i32 -> vector<16x128xf32>
    %cst_52 = arith.constant 0.000000e+00 : f32
    %109 = vector.broadcast %cst_52 : f32 to vector<16x128xf32>
    %110 = arith.select %107, %108, %109 : vector<16x128xi1>, vector<16x128xf32>
    %111 = tpu.iota {dimensions = array<i32: 1>} : vector<16x128xi32>
    %c127_i32_53 = arith.constant 127 : i32
    %112 = vector.broadcast %c127_i32_53 : i32 to vector<16x128xi32>
    %113 = arith.cmpi slt, %111, %112 : vector<16x128xi32>
    %c127_i32_54 = arith.constant 127 : i32
    %114 = tpu.dynamic_rotate %104 by %c127_i32_54 dim 1 : vector<16x128xf32>, i32 -> vector<16x128xf32>
    %cst_55 = arith.constant 0.000000e+00 : f32
    %115 = vector.broadcast %cst_55 : f32 to vector<16x128xf32>
    %116 = arith.select %113, %114, %115 : vector<16x128xi1>, vector<16x128xf32>
    %117 = arith.addf %110, %116 : vector<16x128xf32>
    %118 = tpu.iota {dimensions = array<i32: 1>} : vector<16x128xi32>
    %c2_i32_56 = arith.constant 2 : i32
    %119 = vector.broadcast %c2_i32_56 : i32 to vector<16x128xi32>
    %120 = arith.cmpi sge, %118, %119 : vector<16x128xi32>
    %c2_i32_57 = arith.constant 2 : i32
    %121 = tpu.dynamic_rotate %104 by %c2_i32_57 dim 1 : vector<16x128xf32>, i32 -> vector<16x128xf32>
    %cst_58 = arith.constant 0.000000e+00 : f32
    %122 = vector.broadcast %cst_58 : f32 to vector<16x128xf32>
    %123 = arith.select %120, %121, %122 : vector<16x128xi1>, vector<16x128xf32>
    %124 = tpu.iota {dimensions = array<i32: 1>} : vector<16x128xi32>
    %c126_i32_59 = arith.constant 126 : i32
    %125 = vector.broadcast %c126_i32_59 : i32 to vector<16x128xi32>
    %126 = arith.cmpi slt, %124, %125 : vector<16x128xi32>
    %c126_i32_60 = arith.constant 126 : i32
    %127 = tpu.dynamic_rotate %104 by %c126_i32_60 dim 1 : vector<16x128xf32>, i32 -> vector<16x128xf32>
    %cst_61 = arith.constant 0.000000e+00 : f32
    %128 = vector.broadcast %cst_61 : f32 to vector<16x128xf32>
    %129 = arith.select %126, %127, %128 : vector<16x128xi1>, vector<16x128xf32>
    %130 = arith.addf %123, %129 : vector<16x128xf32>
    %131 = arith.addf %104, %130 : vector<16x128xf32>
    %cst_62 = arith.constant 5.000000e-02 : f32
    %132 = vector.broadcast %cst_62 : f32 to vector<16x128xf32>
    %133 = arith.mulf %132, %131 : vector<16x128xf32>
    %cst_63 = arith.constant 4.000000e-02 : f32
    %134 = vector.broadcast %cst_63 : f32 to vector<16x128xf32>
    %135 = arith.mulf %134, %117 : vector<16x128xf32>
    %136 = arith.addf %133, %135 : vector<16x128xf32>
    %137 = arith.addf %104, %130 : vector<16x128xf32>
    %cst_64 = arith.constant 4.000000e-02 : f32
    %138 = vector.broadcast %cst_64 : f32 to vector<16x128xf32>
    %139 = arith.mulf %138, %137 : vector<16x128xf32>
    %cst_65 = arith.constant 3.000000e-02 : f32
    %140 = vector.broadcast %cst_65 : f32 to vector<16x128xf32>
    %141 = arith.mulf %140, %117 : vector<16x128xf32>
    %142 = arith.addf %139, %141 : vector<16x128xf32>
    %cst_66 = arith.constant 5.000000e-02 : f32
    %143 = vector.broadcast %cst_66 : f32 to vector<16x128xf32>
    %144 = arith.mulf %143, %104 : vector<16x128xf32>
    %145 = arith.addf %117, %130 : vector<16x128xf32>
    %cst_67 = arith.constant 4.000000e-02 : f32
    %146 = vector.broadcast %cst_67 : f32 to vector<16x128xf32>
    %147 = arith.mulf %146, %145 : vector<16x128xf32>
    %148 = arith.addf %144, %147 : vector<16x128xf32>
    %149 = tpu.iota {dimensions = array<i32: 0>} : vector<16x128xi32>
    %c1_i32_68 = arith.constant 1 : i32
    %150 = vector.broadcast %c1_i32_68 : i32 to vector<16x128xi32>
    %151 = arith.cmpi sge, %149, %150 : vector<16x128xi32>
    %c1_i32_69 = arith.constant 1 : i32
    %152 = tpu.dynamic_rotate %142 by %c1_i32_69 dim 0 : vector<16x128xf32>, i32 -> vector<16x128xf32>
    %cst_70 = arith.constant 0.000000e+00 : f32
    %153 = vector.broadcast %cst_70 : f32 to vector<16x128xf32>
    %154 = arith.select %151, %152, %153 : vector<16x128xi1>, vector<16x128xf32>
    %155 = arith.addf %136, %154 : vector<16x128xf32>
    %156 = tpu.iota {dimensions = array<i32: 0>} : vector<16x128xi32>
    %c15_i32_71 = arith.constant 15 : i32
    %157 = vector.broadcast %c15_i32_71 : i32 to vector<16x128xi32>
    %158 = arith.cmpi slt, %156, %157 : vector<16x128xi32>
    %c15_i32_72 = arith.constant 15 : i32
    %159 = tpu.dynamic_rotate %142 by %c15_i32_72 dim 0 : vector<16x128xf32>, i32 -> vector<16x128xf32>
    %cst_73 = arith.constant 0.000000e+00 : f32
    %160 = vector.broadcast %cst_73 : f32 to vector<16x128xf32>
    %161 = arith.select %158, %159, %160 : vector<16x128xi1>, vector<16x128xf32>
    %162 = arith.addf %155, %161 : vector<16x128xf32>
    %163 = tpu.iota {dimensions = array<i32: 0>} : vector<16x128xi32>
    %c2_i32_74 = arith.constant 2 : i32
    %164 = vector.broadcast %c2_i32_74 : i32 to vector<16x128xi32>
    %165 = arith.cmpi sge, %163, %164 : vector<16x128xi32>
    %c2_i32_75 = arith.constant 2 : i32
    %166 = tpu.dynamic_rotate %148 by %c2_i32_75 dim 0 : vector<16x128xf32>, i32 -> vector<16x128xf32>
    %cst_76 = arith.constant 0.000000e+00 : f32
    %167 = vector.broadcast %cst_76 : f32 to vector<16x128xf32>
    %168 = arith.select %165, %166, %167 : vector<16x128xi1>, vector<16x128xf32>
    %169 = arith.addf %162, %168 : vector<16x128xf32>
    %170 = tpu.iota {dimensions = array<i32: 0>} : vector<16x128xi32>
    %c14_i32_77 = arith.constant 14 : i32
    %171 = vector.broadcast %c14_i32_77 : i32 to vector<16x128xi32>
    %172 = arith.cmpi slt, %170, %171 : vector<16x128xi32>
    %c14_i32_78 = arith.constant 14 : i32
    %173 = tpu.dynamic_rotate %148 by %c14_i32_78 dim 0 : vector<16x128xf32>, i32 -> vector<16x128xf32>
    %cst_79 = arith.constant 0.000000e+00 : f32
    %174 = vector.broadcast %cst_79 : f32 to vector<16x128xf32>
    %175 = arith.select %172, %173, %174 : vector<16x128xi1>, vector<16x128xf32>
    %176 = arith.addf %169, %175 : vector<16x128xf32>
    %177 = vector.shape_cast %176 : vector<16x128xf32> to vector<1x16x128xf32>
    %cst_80 = arith.constant dense<0.000000e+00> : vector<1xf32>
    %178 = vector.multi_reduction <add>, %177, %cst_80 [1, 2] : vector<1x16x128xf32> to vector<1xf32>
    %179 = vector.shape_cast %178 : vector<1xf32> to vector<1x1x1xf32>
    %180 = vector.extract %179[0, 0, 0] : f32 from vector<1x1x1xf32>
    %cst_81 = arith.constant 2.048000e+03 : f32
    %181 = arith.divf %180, %cst_81 : f32
    %182 = vector.broadcast %181 : f32 to vector<16x128xf32>
    %183 = arith.addf %176, %182 : vector<16x128xf32>
    %184 = tpu.reciprocal %183 {approx = true} : vector<16x128xf32> -> vector<16x128xf32>
    %185 = arith.mulf %103, %184 : vector<16x128xf32>
    %186 = arith.subf %102, %185 : vector<16x128xf32>
    %187 = arith.mulf %186, %186 : vector<16x128xf32>
    %188 = vector.shape_cast %187 : vector<16x128xf32> to vector<1x16x128xf32>
    %cst_82 = arith.constant dense<0.000000e+00> : vector<1xf32>
    %189 = vector.multi_reduction <add>, %188, %cst_82 [1, 2] : vector<1x16x128xf32> to vector<1xf32>
    %190 = vector.shape_cast %189 : vector<1xf32> to vector<1x1x1xf32>
    %191 = vector.extract %190[0, 0, 0] : f32 from vector<1x1x1xf32>
    %192 = vector.broadcast %191 : f32 to vector<8x128xf32>
    %c0_83 = arith.constant 0 : index
    %c0_84 = arith.constant 0 : index
    %c0_85 = arith.constant 0 : index
    %193 = vector.load %arg9[%c0_83, %c0_84, %c0_85] : memref<1x8x128xf32, #tpu.memory_space<vmem>>, vector<1x8x128xf32>
    %194 = vector.shape_cast %193 : vector<1x8x128xf32> to vector<8x128xf32>
    %195 = vector.shape_cast %192 : vector<8x128xf32> to vector<1x8x128xf32>
    tpu.vector_store %arg9[%c0_83, %c0_84, %c0_85], %195 {strides = array<i32>} : memref<1x8x128xf32, #tpu.memory_space<vmem>>, vector<1x8x128xf32>,
    return
  }
  func.func @transform_0(%arg0: i32) -> (i32, i32, i32) {
    %c0_i32 = arith.constant 0 : i32
    %c0_i32_0 = arith.constant 0 : i32
    %c0_i32_1 = arith.constant 0 : i32
    return %arg0, %c0_i32, %c0_i32_0 : i32, i32, i32
  }
  func.func @transform_1(%arg0: i32) -> (i32, i32, i32) {
    %c0_i32 = arith.constant 0 : i32
    %c0_i32_0 = arith.constant 0 : i32
    %c0_i32_1 = arith.constant 0 : i32
    return %arg0, %c0_i32, %c0_i32_0 : i32, i32, i32
  }
  func.func @transform_2(%arg0: i32) -> (i32, i32) {
    %c0_i32 = arith.constant 0 : i32
    %c0_i32_0 = arith.constant 0 : i32
    %c0_i32_1 = arith.constant 0 : i32
    return %c0_i32, %c0_i32_0 : i32, i32
  }
  func.func @transform_3(%arg0: i32) -> (i32, i32) {
    %c0_i32 = arith.constant 0 : i32
    %c0_i32_0 = arith.constant 0 : i32
    %c0_i32_1 = arith.constant 0 : i32
    return %c0_i32, %c0_i32_0 : i32, i32
  }
  func.func @transform_4(%arg0: i32) -> (i32, i32) {
    %c0_i32 = arith.constant 0 : i32
    %c0_i32_0 = arith.constant 0 : i32
    %c0_i32_1 = arith.constant 0 : i32
    return %c0_i32, %c0_i32_0 : i32, i32
  }
  func.func @transform_5(%arg0: i32) -> (i32, i32) {
    %c0_i32 = arith.constant 0 : i32
    %c0_i32_0 = arith.constant 0 : i32
    %c0_i32_1 = arith.constant 0 : i32
    return %c0_i32, %c0_i32_0 : i32, i32
  }
  func.func @transform_6(%arg0: i32) -> (i32, i32, i32) {
    %c0_i32 = arith.constant 0 : i32
    %c0_i32_0 = arith.constant 0 : i32
    %c0_i32_1 = arith.constant 0 : i32
    return %arg0, %c0_i32, %c0_i32_0 : i32, i32, i32
  }
  func.func @transform_7(%arg0: i32) -> (i32, i32, i32) {
    %c0_i32 = arith.constant 0 : i32
    %c0_i32_0 = arith.constant 0 : i32
    %c0_i32_1 = arith.constant 0 : i32
    return %arg0, %c0_i32, %c0_i32_0 : i32, i32, i32
  }
  func.func @transform_8(%arg0: i32) -> (i32, i32, i32) {
    %c0_i32 = arith.constant 0 : i32
    %c0_i32_0 = arith.constant 0 : i32
    %c0_i32_1 = arith.constant 0 : i32
    return %arg0, %c0_i32, %c0_i32_0 : i32, i32, i32
  }
}

</mosaic_0001>

<llo_original>
// kernel: nlp_distance_loss.3
$region0: #{nlp_distance_loss.3}
  #allocation0 [shape = 'u32[]', space=smem, size = 0x4, offset = 0x4, fixed_abs, tag = 'smem constant byte address 0x4 - core index']
  #allocation1 [shape = 'u32[144,128]{1,0:T(1,128)}', space=vmem, size = 0x12000, scoped, tag = 'internal scratch']
  %s0 = inlined_call_operand.vmem [shape: f32[2,16,128], index: 0, kind: input, shape index: {}]
  %s1 = inlined_call_operand.vmem [shape: f32[2,16,128], index: 1, kind: input, shape index: {}]
  %s2 = inlined_call_operand.vmem [shape: f32[8,16], index: 2, kind: input, shape index: {}]
  %s3 = inlined_call_operand.vmem [shape: f32[128,64], index: 3, kind: input, shape index: {}]
  %s4 = inlined_call_operand.vmem [shape: f32[16,8], index: 4, kind: input, shape index: {}]
  %s5 = inlined_call_operand.vmem [shape: f32[64,128], index: 5, kind: input, shape index: {}]
  %s6 = inlined_call_operand.hbm [shape: f32[2,8,64], index: 6, kind: output, shape index: {0}]
  %s7 = inlined_call_operand.hbm [shape: f32[2,8,64], index: 7, kind: output, shape index: {1}]
  %s8 = inlined_call_operand.vmem [shape: f32[2,8,128], index: 8, kind: output, shape index: {2}]
  %9 = xla_tuple %s6, %s7, %s8
  %s10 = sld [smem:[#allocation0]]
  $region73: #{nlp_distance_loss.3} parent=0
    _
  %s12 = ssub.s32 1, %s10
  %s13 = scalar_select 0, %s12, %s10
  $region1: #{nlp_distance_loss.3} parent=0
    #allocation2 [shape = 'u8[8192]{0}', space=vmem, size = 0x2000, scoped, tag = 'output window, operand 0']
    #allocation3 [shape = 's32[2]{0}', space=sflag, size = 0x8, scoped, tag = 'scoped memory for nlp_distance_loss.3']
    #allocation4 [shape = 'u8[8192]{0}', space=vmem, size = 0x2000, scoped, tag = 'output window, operand 1']
    #allocation5 [shape = 's32[2]{0}', space=sflag, size = 0x8, scoped, tag = 'scoped memory for nlp_distance_loss.3']
    %14 = vsyncpa [#allocation3], 0
    %s15 = scalar_lea.sflag [#allocation3], 1
    %16 = vsyncpa %s15, 0
    %17 = vsyncpa [#allocation5], 0
    %s18 = scalar_lea.sflag [#allocation5], 1
    %19 = vsyncpa %s18, 0
    loop: start=0, step=1, limit=4
    $region2: #{nlp_distance_loss.3} parent=1 // loop_pre_header
      _
    $region3: #{nlp_distance_loss.3} parent=1 // loop_header
      %s21 = sphi 0, %s25
      %p22 = scmp.ge.s32.totalorder %s21, 4
      %s31 = sphi 0, %s33
      %s34 = sphi 0, %s31
      %s35 = sphi 0, %s34
      %s51 = sphi 0, %s35
      %s57 = sphi 0, %s59
      %s60 = sphi 0, %s57
      %s61 = sphi 0, %s60
      %s77 = sphi 0, %s61
      %s81 = sphi 0, %s81
      %s83 = sphi 0, %s81
      %s84 = sphi 0, %s83
      %s98 = sphi 0, %s84
      %s102 = sphi 0, %s102
      %s104 = sphi 0, %s102
      %s105 = sphi 0, %s104
      %s119 = sphi 0, %s105
      %s123 = sphi 0, %s123
      %s125 = sphi 0, %s123
      %s126 = sphi 0, %s125
      %s140 = sphi 0, %s126
      %s144 = sphi 0, %s144
      %s146 = sphi 0, %s144
      %s147 = sphi 0, %s146
      %s161 = sphi 0, %s147
      %s167 = sphi 0, %s169
      %s170 = sphi 0, %s167
      %s171 = sphi 0, %s170
      %s187 = sphi 0, %s171
      %s193 = sphi 0, %s195
      %s196 = sphi 0, %s193
      %s197 = sphi 0, %s196
      %s213 = sphi 0, %s197
      %s219 = sphi 0, %s221
      %s222 = sphi 0, %s219
      %s223 = sphi 0, %s222
      %s239 = sphi 0, %s223
    $region4: #{nlp_distance_loss.3} parent=1 // loop_header_branch
      %24 = sbr.rel (%p22) target = $region8
    $region5: #{nlp_distance_loss.3} parent=1 // loop_body
      %s26 = ssub.s32 %s21, 1
      %s27 = ssub.s32 %s21, 2
      %s28 = sadd.s32 %s21, 1
      %s29 = ssub.s32 %s21, %s28
      %p30 = scmp.eq.s32.totalorder %s29, 0
      %s32 = sadd.s32 %s31, 1
      %s33 = scalar_select %p30, %s31, %s32
      %p36 = pneg %p30
      %p37 = scmp.eq.s32.totalorder %s21, 1
      %p38 = por %p36, %p37
      %p39 = scmp.ne.s32.totalorder %s31, %s34
      %p40 = scmp.eq.s32.totalorder %s21, 0
      %p41 = por %p39, %p40
      %p42 = scmp.ne.s32.totalorder %s31, %s34
      %p43 = scmp.eq.s32.totalorder %s26, 1
      %p44 = por %p42, %p43
      %p45 = scmp.ne.s32.totalorder %s34, %s35
      %p46 = scmp.eq.s32.totalorder %s26, 0
      %p47 = por %p45, %p46
      %p48 = scmp.ne.s32.totalorder %s34, %s35
      %p49 = scmp.eq.s32.totalorder %s27, 1
      %p50 = por %p48, %p49
      %p52 = scmp.ne.s32.totalorder %s35, %s51
      %p53 = scmp.eq.s32.totalorder %s27, 0
      %p54 = por %p52, %p53
      %s55 = ssub.s32 %s21, %s28
      %p56 = scmp.eq.s32.totalorder %s55, 0
      %s58 = sadd.s32 %s57, 1
      %s59 = scalar_select %p56, %s57, %s58
      %p62 = pneg %p56
      %p63 = scmp.eq.s32.totalorder %s21, 1
      %p64 = por %p62, %p63
      %p65 = scmp.ne.s32.totalorder %s57, %s60
      %p66 = scmp.eq.s32.totalorder %s21, 0
      %p67 = por %p65, %p66
      %p68 = scmp.ne.s32.totalorder %s57, %s60
      %p69 = scmp.eq.s32.totalorder %s26, 1
      %p70 = por %p68, %p69
      %p71 = scmp.ne.s32.totalorder %s60, %s61
      %p72 = scmp.eq.s32.totalorder %s26, 0
      %p73 = por %p71, %p72
      %p74 = scmp.ne.s32.totalorder %s60, %s61
      %p75 = scmp.eq.s32.totalorder %s27, 1
      %p76 = por %p74, %p75
      %p78 = scmp.ne.s32.totalorder %s61, %s77
      %p79 = scmp.eq.s32.totalorder %s27, 0
      %p80 = por %p78, %p79
      %s82 = sadd.s32 %s81, 1
      %p85 = scmp.eq.s32.totalorder %s21, 1
      %p86 = scmp.ne.s32.totalorder %s81, %s83
      %p87 = scmp.eq.s32.totalorder %s21, 0
      %p88 = por %p86, %p87
      %p89 = scmp.ne.s32.totalorder %s81, %s83
      %p90 = scmp.eq.s32.totalorder %s26, 1
      %p91 = por %p89, %p90
      %p92 = scmp.ne.s32.totalorder %s83, %s84
      %p93 = scmp.eq.s32.totalorder %s26, 0
      %p94 = por %p92, %p93
      %p95 = scmp.ne.s32.totalorder %s83, %s84
      %p96 = scmp.eq.s32.totalorder %s27, 1
      %p97 = por %p95, %p96
      %p99 = scmp.ne.s32.totalorder %s84, %s98
      %p100 = scmp.eq.s32.totalorder %s27, 0
      %p101 = por %p99, %p100
      %s103 = sadd.s32 %s102, 1
      %p106 = scmp.eq.s32.totalorder %s21, 1
      %p107 = scmp.ne.s32.totalorder %s102, %s104
      %p108 = scmp.eq.s32.totalorder %s21, 0
      %p109 = por %p107, %p108
      %p110 = scmp.ne.s32.totalorder %s102, %s104
      %p111 = scmp.eq.s32.totalorder %s26, 1
      %p112 = por %p110, %p111
      %p113 = scmp.ne.s32.totalorder %s104, %s105
      %p114 = scmp.eq.s32.totalorder %s26, 0
      %p115 = por %p113, %p114
      %p116 = scmp.ne.s32.totalorder %s104, %s105
      %p117 = scmp.eq.s32.totalorder %s27, 1
      %p118 = por %p116, %p117
      %p120 = scmp.ne.s32.totalorder %s105, %s119
      %p121 = scmp.eq.s32.totalorder %s27, 0
      %p122 = por %p120, %p121
      %s124 = sadd.s32 %s123, 1
      %p127 = scmp.eq.s32.totalorder %s21, 1
      %p128 = scmp.ne.s32.totalorder %s123, %s125
      %p129 = scmp.eq.s32.totalorder %s21, 0
      %p130 = por %p128, %p129
      %p131 = scmp.ne.s32.totalorder %s123, %s125
      %p132 = scmp.eq.s32.totalorder %s26, 1
      %p133 = por %p131, %p132
      %p134 = scmp.ne.s32.totalorder %s125, %s126
      %p135 = scmp.eq.s32.totalorder %s26, 0
      %p136 = por %p134, %p135
      %p137 = scmp.ne.s32.totalorder %s125, %s126
      %p138 = scmp.eq.s32.totalorder %s27, 1
      %p139 = por %p137, %p138
      %p141 = scmp.ne.s32.totalorder %s126, %s140
      %p142 = scmp.eq.s32.totalorder %s27, 0
      %p143 = por %p141, %p142
      %s145 = sadd.s32 %s144, 1
      %p148 = scmp.eq.s32.totalorder %s21, 1
      %p149 = scmp.ne.s32.totalorder %s144, %s146
      %p150 = scmp.eq.s32.totalorder %s21, 0
      %p151 = por %p149, %p150
      %p152 = scmp.ne.s32.totalorder %s144, %s146
      %p153 = scmp.eq.s32.totalorder %s26, 1
      %p154 = por %p152, %p153
      %p155 = scmp.ne.s32.totalorder %s146, %s147
      %p156 = scmp.eq.s32.totalorder %s26, 0
      %p157 = por %p155, %p156
      %p158 = scmp.ne.s32.totalorder %s146, %s147
      %p159 = scmp.eq.s32.totalorder %s27, 1
      %p160 = por %p158, %p159
      %p162 = scmp.ne.s32.totalorder %s147, %s161
      %p163 = scmp.eq.s32.totalorder %s27, 0
      %p164 = por %p162, %p163
      %s165 = ssub.s32 %s21, %s28
      %p166 = scmp.eq.s32.totalorder %s165, 0
      %s168 = sadd.s32 %s167, 1
      %s169 = scalar_select %p166, %s167, %s168
      %p172 = pneg %p166
      %p173 = scmp.eq.s32.totalorder %s21, 1
      %p174 = por %p172, %p173
      %p175 = scmp.ne.s32.totalorder %s167, %s170
      %p176 = scmp.eq.s32.totalorder %s21, 0
      %p177 = por %p175, %p176
      %p178 = scmp.ne.s32.totalorder %s167, %s170
      %p179 = scmp.eq.s32.totalorder %s26, 1
      %p180 = por %p178, %p179
      %p181 = scmp.ne.s32.totalorder %s170, %s171
      %p182 = scmp.eq.s32.totalorder %s26, 0
      %p183 = por %p181, %p182
      %p184 = scmp.ne.s32.totalorder %s170, %s171
      %p185 = scmp.eq.s32.totalorder %s27, 1
      %p186 = por %p184, %p185
      %p188 = scmp.ne.s32.totalorder %s171, %s187
      %p189 = scmp.eq.s32.totalorder %s27, 0
      %p190 = por %p188, %p189
      %s191 = ssub.s32 %s21, %s28
      %p192 = scmp.eq.s32.totalorder %s191, 0
      %s194 = sadd.s32 %s193, 1
      %s195 = scalar_select %p192, %s193, %s194
      %p198 = pneg %p192
      %p199 = scmp.eq.s32.totalorder %s21, 1
      %p200 = por %p198, %p199
      %p201 = scmp.ne.s32.totalorder %s193, %s196
      %p202 = scmp.eq.s32.totalorder %s21, 0
      %p203 = por %p201, %p202
      %p204 = scmp.ne.s32.totalorder %s193, %s196
      %p205 = scmp.eq.s32.totalorder %s26, 1
      %p206 = por %p204, %p205
      %p207 = scmp.ne.s32.totalorder %s196, %s197
      %p208 = scmp.eq.s32.totalorder %s26, 0
      %p209 = por %p207, %p208
      %p210 = scmp.ne.s32.totalorder %s196, %s197
      %p211 = scmp.eq.s32.totalorder %s27, 1
      %p212 = por %p210, %p211
      %p214 = scmp.ne.s32.totalorder %s197, %s213
      %p215 = scmp.eq.s32.totalorder %s27, 0
      %p216 = por %p214, %p215
      %s217 = ssub.s32 %s21, %s28
      %p218 = scmp.eq.s32.totalorder %s217, 0
      %s220 = sadd.s32 %s219, 1
      %s221 = scalar_select %p218, %s219, %s220
      %p224 = pneg %p218
      %p225 = scmp.eq.s32.totalorder %s21, 1
      %p226 = por %p224, %p225
      %p227 = scmp.ne.s32.totalorder %s219, %s222
      %p228 = scmp.eq.s32.totalorder %s21, 0
      %p229 = por %p227, %p228
      %p230 = scmp.ne.s32.totalorder %s219, %s222
      %p231 = scmp.eq.s32.totalorder %s26, 1
      %p232 = por %p230, %p231
      %p233 = scmp.ne.s32.totalorder %s222, %s223
      %p234 = scmp.eq.s32.totalorder %s26, 0
      %p235 = por %p233, %p234
      %p236 = scmp.ne.s32.totalorder %s222, %s223
      %p237 = scmp.eq.s32.totalorder %s27, 1
      %p238 = por %p236, %p237
      %p240 = scmp.ne.s32.totalorder %s223, %s239
      %p241 = scmp.eq.s32.totalorder %s27, 0
      %p242 = por %p240, %p241
      %p243 = scmp.le.s32.totalorder 1, %s21
      %p244 = scmp.lt.s32.totalorder %s21, 3
      %p245 = pnand %p243, %p244
      %p246 = pneg %p245
      // Predicated region
      $region9: #{nlp_distance_loss.3} parent=5 // pred_check
        _
      $region10: #{nlp_distance_loss.3} parent=5 // pred_check_branch
        %248 = sbr.rel (%p245) target = $region12
      $region11: #{nlp_distance_loss.3} parent=5 // pred_region
        %s249 = ssub.s32 %s21, 1
        // Predicated region
        $region13: #{nlp_distance_loss.3} parent=11 // pred_check
          %p250 = pneg %p94
        $region14: #{nlp_distance_loss.3} parent=11 // pred_check_branch
          %252 = sbr.rel (%p250) target = $region16
        $region15: #{nlp_distance_loss.3} parent=11 // pred_region
          _
        $region16: #{nlp_distance_loss.3} parent=11 // pred_fallthru
          _
        // Predicated region
        $region17: #{nlp_distance_loss.3} parent=11 // pred_check
          %p253 = pneg %p115
        $region18: #{nlp_distance_loss.3} parent=11 // pred_check_branch
          %255 = sbr.rel (%p253) target = $region20
        $region19: #{nlp_distance_loss.3} parent=11 // pred_region
          _
        $region20: #{nlp_distance_loss.3} parent=11 // pred_fallthru
          _
        // Predicated region
        $region21: #{nlp_distance_loss.3} parent=11 // pred_check
          %p256 = pneg %p136
        $region22: #{nlp_distance_loss.3} parent=11 // pred_check_branch
          %258 = sbr.rel (%p256) target = $region24
        $region23: #{nlp_distance_loss.3} parent=11 // pred_region
          _
        $region24: #{nlp_distance_loss.3} parent=11 // pred_fallthru
          _
        // Predicated region
        $region25: #{nlp_distance_loss.3} parent=11 // pred_check
          %p259 = pneg %p157
        $region26: #{nlp_distance_loss.3} parent=11 // pred_check_branch
          %261 = sbr.rel (%p259) target = $region28
        $region27: #{nlp_distance_loss.3} parent=11 // pred_region
          _
        $region28: #{nlp_distance_loss.3} parent=11 // pred_fallthru
          _
      $region12: #{nlp_distance_loss.3} parent=5 // pred_fallthru
        _
      %p262 = scmp.lt.s32.totalorder %s21, 2
      // Predicated region
      $region29: #{nlp_distance_loss.3} parent=5 // pred_check
        %p263 = pneg %p262
      $region30: #{nlp_distance_loss.3} parent=5 // pred_check_branch
        %265 = sbr.rel (%p263) target = $region32
      $region31: #{nlp_distance_loss.3} parent=5 // pred_region
        // Predicated region
        $region33: #{nlp_distance_loss.3} parent=31 // pred_check
          %p266 = pneg %p41
        $region34: #{nlp_distance_loss.3} parent=31 // pred_check_branch
          %268 = sbr.rel (%p266) target = $region36
        $region35: #{nlp_distance_loss.3} parent=31 // pred_region
          %p269 = scmp.lt.s32.totalorder %s21, 1
          %s270 = scalar_select %p269, %s21, 1
          %s271 = smul.addr %s270, 2
          %s272 = smul.addr %s271, 8
          %s273 = scalar_lea.vmem %s0, %s272
        $region36: #{nlp_distance_loss.3} parent=31 // pred_fallthru
          _
        // Predicated region
        $region37: #{nlp_distance_loss.3} parent=31 // pred_check
          %p274 = pneg %p67
        $region38: #{nlp_distance_loss.3} parent=31 // pred_check_branch
          %276 = sbr.rel (%p274) target = $region40
        $region39: #{nlp_distance_loss.3} parent=31 // pred_region
          %p277 = scmp.lt.s32.totalorder %s21, 1
          %s278 = scalar_select %p277, %s21, 1
          %s279 = smul.addr %s278, 2
          %s280 = smul.addr %s279, 8
          %s281 = scalar_lea.vmem %s1, %s280
        $region40: #{nlp_distance_loss.3} parent=31 // pred_fallthru
          _
      $region32: #{nlp_distance_loss.3} parent=5 // pred_fallthru
        _
      %p282 = scmp.le.s32.totalorder 1, %s21
      %p283 = scmp.lt.s32.totalorder %s21, 3
      %p284 = pnand %p282, %p283
      %p285 = pneg %p284
      // Predicated region
      $region41: #{nlp_distance_loss.3} parent=5 // pred_check
        _
      $region42: #{nlp_distance_loss.3} parent=5 // pred_check_branch
        %287 = sbr.rel (%p284) target = $region44
      $region43: #{nlp_distance_loss.3} parent=5 // pred_region
        %s288 = ssub.s32 %s21, 1
        %p289 = scmp.lt.s32.totalorder %s26, 1
        %s290 = scalar_select %p289, %s26, 1
        %s291 = smul.addr %s290, 2
        %s292 = smul.addr %s291, 8
        %s293 = scalar_lea.vmem %s0, %s292
        %p294 = pneg %p47
        %p295 = pneg %p44
        %p296 = scmp.lt.s32.totalorder %s26, 1
        %s297 = scalar_select %p296, %s26, 1
        %s298 = smul.addr %s297, 2
        %s299 = smul.addr %s298, 8
        %s300 = scalar_lea.vmem %s1, %s299
        %p301 = pneg %p73
        %p302 = pneg %p70
        %p303 = pneg %p94
        %p304 = pneg %p91
        %p305 = pneg %p115
        %p306 = pneg %p112
        %p307 = pneg %p136
        %p308 = pneg %p133
        %p309 = pneg %p157
        %p310 = pneg %p154
        %p311 = pneg %p183
        %p312 = pneg %p180
        %s313 = sand.u32 %s170, 1
        %s314 = scalar_lea.sflag [#allocation3], %s313
        %s315 = sand.u32 %s170, 1
        %s316 = smul.addr %s315, 8
        %s317 = scalar_lea.vmem [#allocation2], %s316
        %p318 = pneg %p209
        %p319 = pneg %p206
        %s320 = sand.u32 %s196, 1
        %s321 = scalar_lea.sflag [#allocation5], %s320
        %s322 = sand.u32 %s196, 1
        %s323 = smul.addr %s322, 8
        %s324 = scalar_lea.vmem [#allocation4], %s323
        %p325 = pneg %p235
        %p326 = pneg %p232
        %p327 = scmp.lt.s32.totalorder %s26, 1
        %s328 = scalar_select %p327, %s26, 1
        %s329 = smul.addr %s328, 8
        %s330 = scalar_lea.vmem %s8, %s329
        %p331 = scmp.lt.s32.totalorder %s26, 1
        %s332 = scalar_select %p331, %s26, 1
        %s333 = smul.addr %s332, 2
        %s334 = smul.addr %s333, 8
        %s335 = scalar_lea.vmem %s0, %s334
        %p336 = scmp.lt.s32.totalorder %s26, 1
        %s337 = scalar_select %p336, %s26, 1
        %s338 = smul.addr %s337, 2
        %s339 = smul.addr %s338, 8
        %s340 = scalar_lea.vmem %s1, %s339
        %p341 = scmp.lt.s32.totalorder %s26, 1
        %s342 = scalar_select %p341, %s26, 1
        %s343 = smul.addr %s342, 8
        %s344 = scalar_lea.vmem %s8, %s343
        %v345 = vld [vmem:[%s335] sm:$0xff]
        %v346 = vld [vmem:[%s335 + $0x8] sm:$0xff]
        %v347 = vld [vmem:[%s340] sm:$0xff]
        %v348 = vld [vmem:[%s340 + $0x8] sm:$0xff]
        %v349 = vld [vmem:[%s2] sm:$0xff]
        %v350 = vld [vmem:[%s3] sm:$0xff]
        %v351 = vld [vmem:[%s3 + $0x8] sm:$0xff]
        %v352 = vld [vmem:[%s3 + $0x10] sm:$0xff]
        %v353 = vld [vmem:[%s3 + $0x18] sm:$0xff]
        %v354 = vld [vmem:[%s3 + $0x20] sm:$0xff]
        %v355 = vld [vmem:[%s3 + $0x28] sm:$0xff]
        %v356 = vld [vmem:[%s3 + $0x30] sm:$0xff]
        %v357 = vld [vmem:[%s3 + $0x38] sm:$0xff]
        %v358 = vld [vmem:[%s3 + $0x40] sm:$0xff]
        %v359 = vld [vmem:[%s3 + $0x48] sm:$0xff]
        %v360 = vld [vmem:[%s3 + $0x50] sm:$0xff]
        %v361 = vld [vmem:[%s3 + $0x58] sm:$0xff]
        %v362 = vld [vmem:[%s3 + $0x60] sm:$0xff]
        %v363 = vld [vmem:[%s3 + $0x68] sm:$0xff]
        %v364 = vld [vmem:[%s3 + $0x70] sm:$0xff]
        %v365 = vld [vmem:[%s3 + $0x78] sm:$0xff]
        %v366 = vld [vmem:[%s4] sm:$0xff]
        %v367 = vld [vmem:[%s4 + $0x8] sm:$0xff]
        %v368 = vld [vmem:[%s5] sm:$0xff]
        %v369 = vld [vmem:[%s5 + $0x8] sm:$0xff]
        %v370 = vld [vmem:[%s5 + $0x10] sm:$0xff]
        %v371 = vld [vmem:[%s5 + $0x18] sm:$0xff]
        %v372 = vld [vmem:[%s5 + $0x20] sm:$0xff]
        %v373 = vld [vmem:[%s5 + $0x28] sm:$0xff]
        %v374 = vld [vmem:[%s5 + $0x30] sm:$0xff]
        %v375 = vld [vmem:[%s5 + $0x38] sm:$0xff]
        %vm376 = vcmask 130048
        %v378 = vsel %vm376, %v349, 0
        %380 = vmatprep.subr.mxu0 0.0
        %381 = vmatpush1.msra.mxu0 0.0
        %382 = vmatprep.subr.mxu0 0.0
        %383 = vmatpush1.msra.mxu0 0.0
        %384 = vmatprep.subr.mxu0 0.0
        %385 = vmatpush1.msra.mxu0 0.0
        %386 = vmatprep.subr.mxu0 0.0
        %387 = vmatpush1.msra.mxu0 0.0
        %388 = vmatprep.subr.mxu0 0.0
        %389 = vmatpush1.msra.mxu0 0.0
        %390 = vmatprep.subr.mxu0 0.0
        %391 = vmatpush1.msra.mxu0 0.0
        %392 = vmatprep.subr.mxu0 0.0
        %393 = vmatpush1.msra.mxu0 0.0
        %394 = vmatprep.subr.mxu0 0.0
        %395 = vmatpush1.msra.mxu0 0.0
        %396 = vmatprep.subr.mxu0 0.0
        %397 = vmatpush1.msra.mxu0 0.0
        %398 = vmatprep.subr.mxu0 0.0
        %399 = vmatpush1.msra.mxu0 0.0
        %400 = vmatprep.subr.mxu0 0.0
        %401 = vmatpush1.msra.mxu0 0.0
        %402 = vmatprep.subr.mxu0 0.0
        %403 = vmatpush1.msra.mxu0 0.0
        %404 = vmatprep.subr.mxu0 0.0
        %405 = vmatpush1.msra.mxu0 0.0
        %406 = vmatprep.subr.mxu0 0.0
        %407 = vmatpush1.msra.mxu0 0.0
        %408 = vmatprep.subr.mxu0 0.0
        %v409 = vand.u32 %v346, 4294901760
        %410 = vmatpush1.msra.mxu0 %v409
        %411 = vmatprep.subr.mxu0 0.0
        %v412 = vand.u32 %v345, 4294901760
        %413 = vmatpush1.msra.mxu0 %v412
        %414 = vmatprep.subr.mxu0 0.0
        %415 = vmatpush2.msra.mxu0 0.0
        %416 = vmatprep.subr.mxu0 0.0
        %417 = vmatpush2.msra.mxu0 0.0
        %418 = vmatprep.subr.mxu0 0.0
        %419 = vmatpush2.msra.mxu0 0.0
        %420 = vmatprep.subr.mxu0 0.0
        %421 = vmatpush2.msra.mxu0 0.0
        %422 = vmatprep.subr.mxu0 0.0
        %423 = vmatpush2.msra.mxu0 0.0
        %424 = vmatprep.subr.mxu0 0.0
        %425 = vmatpush2.msra.mxu0 0.0
        %426 = vmatprep.subr.mxu0 0.0
        %427 = vmatpush2.msra.mxu0 0.0
        %428 = vmatprep.subr.mxu0 0.0
        %429 = vmatpush2.msra.mxu0 0.0
        %430 = vmatprep.subr.mxu0 0.0
        %431 = vmatpush2.msra.mxu0 0.0
        %432 = vmatprep.subr.mxu0 0.0
        %433 = vmatpush2.msra.mxu0 0.0
        %434 = vmatprep.subr.mxu0 0.0
        %435 = vmatpush2.msra.mxu0 0.0
        %436 = vmatprep.subr.mxu0 0.0
        %437 = vmatpush2.msra.mxu0 0.0
        %438 = vmatprep.subr.mxu0 0.0
        %439 = vmatpush2.msra.mxu0 0.0
        %440 = vmatprep.subr.mxu0 0.0
        %441 = vmatpush2.msra.mxu0 0.0
        %442 = vmatprep.subr.mxu0 0.0
        %443 = vmatpush2.msra.mxu0 0.0
        %444 = vmatprep.subr.mxu0 0.0
        %445 = vmatpush2.msra.mxu0 0.0
        %446 = vmatprep.mubr.f32.mxu0 0.0
        %v447 = vand.u32 %v378, 4294901760
        %v448 = vsub.f32 %v378, %v447
        %v449 = vand.u32 %v448, 4294901760
        %v450 = vsub.f32 %v448, %v449
        %v451 = vand.u32 %v450, 4294901760
        %452 = vmatmul.mubr.f32.gmra.mxu0 %v451
        %v453 = vpop.f32.mrf.mxu0
        %v454 = vadd.f32 0.0, %v453
        %v455 = vpop.f32.mrf.mxu0
        %456 = vdwg.mxu0
        %457 = vmatprep.subr.mxu0 0.0
        %458 = vmatpush1.msra.mxu0 0.0
        %459 = vmatprep.subr.mxu0 0.0
        %460 = vmatpush1.msra.mxu0 0.0
        %461 = vmatprep.subr.mxu0 0.0
        %462 = vmatpush1.msra.mxu0 0.0
        %463 = vmatprep.subr.mxu0 0.0
        %464 = vmatpush1.msra.mxu0 0.0
        %465 = vmatprep.subr.mxu0 0.0
        %466 = vmatpush1.msra.mxu0 0.0
        %467 = vmatprep.subr.mxu0 0.0
        %468 = vmatpush1.msra.mxu0 0.0
        %469 = vmatprep.subr.mxu0 0.0
        %470 = vmatpush1.msra.mxu0 0.0
        %471 = vmatprep.subr.mxu0 0.0
        %472 = vmatpush1.msra.mxu0 0.0
        %473 = vmatprep.subr.mxu0 0.0
        %474 = vmatpush1.msra.mxu0 0.0
        %475 = vmatprep.subr.mxu0 0.0
        %476 = vmatpush1.msra.mxu0 0.0
        %477 = vmatprep.subr.mxu0 0.0
        %478 = vmatpush1.msra.mxu0 0.0
        %479 = vmatprep.subr.mxu0 0.0
        %480 = vmatpush1.msra.mxu0 0.0
        %481 = vmatprep.subr.mxu0 0.0
        %482 = vmatpush1.msra.mxu0 0.0
        %483 = vmatprep.subr.mxu0 0.0
        %484 = vmatpush1.msra.mxu0 0.0
        %485 = vmatprep.subr.mxu0 0.0
        %v486 = vand.u32 %v346, 4294901760
        %v487 = vsub.f32 %v346, %v486
        %v488 = vand.u32 %v487, 4294901760
        %v489 = vsub.f32 %v487, %v488
        %v490 = vand.u32 %v489, 4294901760
        %491 = vmatpush1.msra.mxu0 %v490
        %492 = vmatprep.subr.mxu0 0.0
        %v493 = vand.u32 %v345, 4294901760
        %v494 = vsub.f32 %v345, %v493
        %v495 = vand.u32 %v494, 4294901760
        %v496 = vsub.f32 %v494, %v495
        %v497 = vand.u32 %v496, 4294901760
        %498 = vmatpush1.msra.mxu0 %v497
        %499 = vmatprep.subr.mxu0 0.0
        %500 = vmatpush2.msra.mxu0 0.0
        %501 = vmatprep.subr.mxu0 0.0
        %502 = vmatpush2.msra.mxu0 0.0
        %503 = vmatprep.subr.mxu0 0.0
        %504 = vmatpush2.msra.mxu0 0.0
        %505 = vmatprep.subr.mxu0 0.0
        %506 = vmatpush2.msra.mxu0 0.0
        %507 = vmatprep.subr.mxu0 0.0
        %508 = vmatpush2.msra.mxu0 0.0
        %509 = vmatprep.subr.mxu0 0.0
        %510 = vmatpush2.msra.mxu0 0.0
        %511 = vmatprep.subr.mxu0 0.0
        %512 = vmatpush2.msra.mxu0 0.0
        %513 = vmatprep.subr.mxu0 0.0
        %514 = vmatpush2.msra.mxu0 0.0
        %515 = vmatprep.subr.mxu0 0.0
        %516 = vmatpush2.msra.mxu0 0.0
        %517 = vmatprep.subr.mxu0 0.0
        %518 = vmatpush2.msra.mxu0 0.0
        %519 = vmatprep.subr.mxu0 0.0
        %520 = vmatpush2.msra.mxu0 0.0
        %521 = vmatprep.subr.mxu0 0.0
        %522 = vmatpush2.msra.mxu0 0.0
        %523 = vmatprep.subr.mxu0 0.0
        %524 = vmatpush2.msra.mxu0 0.0
        %525 = vmatprep.subr.mxu0 0.0
        %526 = vmatpush2.msra.mxu0 0.0
        %527 = vmatprep.subr.mxu0 0.0
        %528 = vmatpush2.msra.mxu0 0.0
        %529 = vmatprep.subr.mxu0 0.0
        %530 = vmatpush2.msra.mxu0 0.0
        %531 = vmatprep.mubr.f32.mxu0 0.0
        %v532 = vand.u32 %v378, 4294901760
        %533 = vmatmul.mubr.f32.gmra.mxu0 %v532
        %v534 = vpop.f32.mrf.mxu0
        %v535 = vadd.f32 %v454, %v534
        %v536 = vpop.f32.mrf.mxu0
        %537 = vdwg.mxu0
        %538 = vmatprep.subr.mxu0 0.0
        %539 = vmatpush1.msra.mxu0 0.0
        %540 = vmatprep.subr.mxu0 0.0
        %541 = vmatpush1.msra.mxu0 0.0
        %542 = vmatprep.subr.mxu0 0.0
        %543 = vmatpush1.msra.mxu0 0.0
        %544 = vmatprep.subr.mxu0 0.0
        %545 = vmatpush1.msra.mxu0 0.0
        %546 = vmatprep.subr.mxu0 0.0
        %547 = vmatpush1.msra.mxu0 0.0
        %548 = vmatprep.subr.mxu0 0.0
        %549 = vmatpush1.msra.mxu0 0.0
        %550 = vmatprep.subr.mxu0 0.0
        %551 = vmatpush1.msra.mxu0 0.0
        %552 = vmatprep.subr.mxu0 0.0
        %553 = vmatpush1.msra.mxu0 0.0
        %554 = vmatprep.subr.mxu0 0.0
        %555 = vmatpush1.msra.mxu0 0.0
        %556 = vmatprep.subr.mxu0 0.0
        %557 = vmatpush1.msra.mxu0 0.0
        %558 = vmatprep.subr.mxu0 0.0
        %559 = vmatpush1.msra.mxu0 0.0
        %560 = vmatprep.subr.mxu0 0.0
        %561 = vmatpush1.msra.mxu0 0.0
        %562 = vmatprep.subr.mxu0 0.0
        %563 = vmatpush1.msra.mxu0 0.0
        %564 = vmatprep.subr.mxu0 0.0
        %565 = vmatpush1.msra.mxu0 0.0
        %566 = vmatprep.subr.mxu0 0.0
        %v567 = vand.u32 %v346, 4294901760
        %v568 = vsub.f32 %v346, %v567
        %569 = vmatpush1.msra.mxu0 %v568
        %570 = vmatprep.subr.mxu0 0.0
        %v571 = vand.u32 %v345, 4294901760
        %v572 = vsub.f32 %v345, %v571
        %573 = vmatpush1.msra.mxu0 %v572
        %574 = vmatprep.subr.mxu0 0.0
        %575 = vmatpush2.msra.mxu0 0.0
        %576 = vmatprep.subr.mxu0 0.0
        %577 = vmatpush2.msra.mxu0 0.0
        %578 = vmatprep.subr.mxu0 0.0
        %579 = vmatpush2.msra.mxu0 0.0
        %580 = vmatprep.subr.mxu0 0.0
        %581 = vmatpush2.msra.mxu0 0.0
        %582 = vmatprep.subr.mxu0 0.0
        %583 = vmatpush2.msra.mxu0 0.0
        %584 = vmatprep.subr.mxu0 0.0
        %585 = vmatpush2.msra.mxu0 0.0
        %586 = vmatprep.subr.mxu0 0.0
        %587 = vmatpush2.msra.mxu0 0.0
        %588 = vmatprep.subr.mxu0 0.0
        %589 = vmatpush2.msra.mxu0 0.0
        %590 = vmatprep.subr.mxu0 0.0
        %591 = vmatpush2.msra.mxu0 0.0
        %592 = vmatprep.subr.mxu0 0.0
        %593 = vmatpush2.msra.mxu0 0.0
        %594 = vmatprep.subr.mxu0 0.0
        %595 = vmatpush2.msra.mxu0 0.0
        %596 = vmatprep.subr.mxu0 0.0
        %597 = vmatpush2.msra.mxu0 0.0
        %598 = vmatprep.subr.mxu0 0.0
        %599 = vmatpush2.msra.mxu0 0.0
        %600 = vmatprep.subr.mxu0 0.0
        %601 = vmatpush2.msra.mxu0 0.0
        %602 = vmatprep.subr.mxu0 0.0
        %603 = vmatpush2.msra.mxu0 0.0
        %604 = vmatprep.subr.mxu0 0.0
        %605 = vmatpush2.msra.mxu0 0.0
        %606 = vmatprep.mubr.f32.mxu0 0.0
        %v607 = vand.u32 %v378, 4294901760
        %v608 = vsub.f32 %v378, %v607
        %609 = vmatmul.mubr.f32.gmra.mxu0 %v608
        %v610 = vpop.f32.mrf.mxu0
        %v611 = vadd.f32 %v535, %v610
        %v612 = vpop.f32.mrf.mxu0
        %613 = vdwg.mxu0
        %614 = vmatprep.subr.mxu0 0.0
        %615 = vmatpush1.msra.mxu0 0.0
        %616 = vmatprep.subr.mxu0 0.0
        %617 = vmatpush1.msra.mxu0 0.0
        %618 = vmatprep.subr.mxu0 0.0
        %619 = vmatpush1.msra.mxu0 0.0
        %620 = vmatprep.subr.mxu0 0.0
        %621 = vmatpush1.msra.mxu0 0.0
        %622 = vmatprep.subr.mxu0 0.0
        %623 = vmatpush1.msra.mxu0 0.0
        %624 = vmatprep.subr.mxu0 0.0
        %625 = vmatpush1.msra.mxu0 0.0
        %626 = vmatprep.subr.mxu0 0.0
        %627 = vmatpush1.msra.mxu0 0.0
        %628 = vmatprep.subr.mxu0 0.0
        %629 = vmatpush1.msra.mxu0 0.0
        %630 = vmatprep.subr.mxu0 0.0
        %631 = vmatpush1.msra.mxu0 0.0
        %632 = vmatprep.subr.mxu0 0.0
        %633 = vmatpush1.msra.mxu0 0.0
        %634 = vmatprep.subr.mxu0 0.0
        %635 = vmatpush1.msra.mxu0 0.0
        %636 = vmatprep.subr.mxu0 0.0
        %637 = vmatpush1.msra.mxu0 0.0
        %638 = vmatprep.subr.mxu0 0.0
        %639 = vmatpush1.msra.mxu0 0.0
        %640 = vmatprep.subr.mxu0 0.0
        %641 = vmatpush1.msra.mxu0 0.0
        %642 = vmatprep.subr.mxu0 0.0
        %v643 = vand.u32 %v346, 4294901760
        %644 = vmatpush1.msra.mxu0 %v643
        %645 = vmatprep.subr.mxu0 0.0
        %v646 = vand.u32 %v345, 4294901760
        %647 = vmatpush1.msra.mxu0 %v646
        %648 = vmatprep.subr.mxu0 0.0
        %649 = vmatpush2.msra.mxu0 0.0
        %650 = vmatprep.subr.mxu0 0.0
        %651 = vmatpush2.msra.mxu0 0.0
        %652 = vmatprep.subr.mxu0 0.0
        %653 = vmatpush2.msra.mxu0 0.0
        %654 = vmatprep.subr.mxu0 0.0
        %655 = vmatpush2.msra.mxu0 0.0
        %656 = vmatprep.subr.mxu0 0.0
        %657 = vmatpush2.msra.mxu0 0.0
        %658 = vmatprep.subr.mxu0 0.0
        %659 = vmatpush2.msra.mxu0 0.0
        %660 = vmatprep.subr.mxu0 0.0
        %661 = vmatpush2.msra.mxu0 0.0
        %662 = vmatprep.subr.mxu0 0.0
        %663 = vmatpush2.msra.mxu0 0.0
        %664 = vmatprep.subr.mxu0 0.0
        %665 = vmatpush2.msra.mxu0 0.0
        %666 = vmatprep.subr.mxu0 0.0
        %667 = vmatpush2.msra.mxu0 0.0
        %668 = vmatprep.subr.mxu0 0.0
        %669 = vmatpush2.msra.mxu0 0.0
        %670 = vmatprep.subr.mxu0 0.0
        %671 = vmatpush2.msra.mxu0 0.0
        %672 = vmatprep.subr.mxu0 0.0
        %673 = vmatpush2.msra.mxu0 0.0
        %674 = vmatprep.subr.mxu0 0.0
        %675 = vmatpush2.msra.mxu0 0.0
        %676 = vmatprep.subr.mxu0 0.0
        %677 = vmatpush2.msra.mxu0 0.0
        %678 = vmatprep.subr.mxu0 0.0
        %679 = vmatpush2.msra.mxu0 0.0
        %680 = vmatprep.mubr.f32.mxu0 0.0
        %v681 = vand.u32 %v378, 4294901760
        %v682 = vsub.f32 %v378, %v681
        %v683 = vand.u32 %v682, 4294901760
        %684 = vmatmul.mubr.f32.gmra.mxu0 %v683
        %v685 = vpop.f32.mrf.mxu0
        %v686 = vadd.f32 %v611, %v685
        %v687 = vpop.f32.mrf.mxu0
        %688 = vdwg.mxu0
        %689 = vmatprep.subr.mxu0 0.0
        %690 = vmatpush1.msra.mxu0 0.0
        %691 = vmatprep.subr.mxu0 0.0
        %692 = vmatpush1.msra.mxu0 0.0
        %693 = vmatprep.subr.mxu0 0.0
        %694 = vmatpush1.msra.mxu0 0.0
        %695 = vmatprep.subr.mxu0 0.0
        %696 = vmatpush1.msra.mxu0 0.0
        %697 = vmatprep.subr.mxu0 0.0
        %698 = vmatpush1.msra.mxu0 0.0
        %699 = vmatprep.subr.mxu0 0.0
        %700 = vmatpush1.msra.mxu0 0.0
        %701 = vmatprep.subr.mxu0 0.0
        %702 = vmatpush1.msra.mxu0 0.0
        %703 = vmatprep.subr.mxu0 0.0
        %704 = vmatpush1.msra.mxu0 0.0
        %705 = vmatprep.subr.mxu0 0.0
        %706 = vmatpush1.msra.mxu0 0.0
        %707 = vmatprep.subr.mxu0 0.0
        %708 = vmatpush1.msra.mxu0 0.0
        %709 = vmatprep.subr.mxu0 0.0
        %710 = vmatpush1.msra.mxu0 0.0
        %711 = vmatprep.subr.mxu0 0.0
        %712 = vmatpush1.msra.mxu0 0.0
        %713 = vmatprep.subr.mxu0 0.0
        %714 = vmatpush1.msra.mxu0 0.0
        %715 = vmatprep.subr.mxu0 0.0
        %716 = vmatpush1.msra.mxu0 0.0
        %717 = vmatprep.subr.mxu0 0.0
        %v718 = vand.u32 %v346, 4294901760
        %v719 = vsub.f32 %v346, %v718
        %v720 = vand.u32 %v719, 4294901760
        %721 = vmatpush1.msra.mxu0 %v720
        %722 = vmatprep.subr.mxu0 0.0
        %v723 = vand.u32 %v345, 4294901760
        %v724 = vsub.f32 %v345, %v723
        %v725 = vand.u32 %v724, 4294901760
        %726 = vmatpush1.msra.mxu0 %v725
        %727 = vmatprep.subr.mxu0 0.0
        %728 = vmatpush2.msra.mxu0 0.0
        %729 = vmatprep.subr.mxu0 0.0
        %730 = vmatpush2.msra.mxu0 0.0
        %731 = vmatprep.subr.mxu0 0.0
        %732 = vmatpush2.msra.mxu0 0.0
        %733 = vmatprep.subr.mxu0 0.0
        %734 = vmatpush2.msra.mxu0 0.0
        %735 = vmatprep.subr.mxu0 0.0
        %736 = vmatpush2.msra.mxu0 0.0
        %737 = vmatprep.subr.mxu0 0.0
        %738 = vmatpush2.msra.mxu0 0.0
        %739 = vmatprep.subr.mxu0 0.0
        %740 = vmatpush2.msra.mxu0 0.0
        %741 = vmatprep.subr.mxu0 0.0
        %742 = vmatpush2.msra.mxu0 0.0
        %743 = vmatprep.subr.mxu0 0.0
        %744 = vmatpush2.msra.mxu0 0.0
        %745 = vmatprep.subr.mxu0 0.0
        %746 = vmatpush2.msra.mxu0 0.0
        %747 = vmatprep.subr.mxu0 0.0
        %748 = vmatpush2.msra.mxu0 0.0
        %749 = vmatprep.subr.mxu0 0.0
        %750 = vmatpush2.msra.mxu0 0.0
        %751 = vmatprep.subr.mxu0 0.0
        %752 = vmatpush2.msra.mxu0 0.0
        %753 = vmatprep.subr.mxu0 0.0
        %754 = vmatpush2.msra.mxu0 0.0
        %755 = vmatprep.subr.mxu0 0.0
        %756 = vmatpush2.msra.mxu0 0.0
        %757 = vmatprep.subr.mxu0 0.0
        %758 = vmatpush2.msra.mxu0 0.0
        %759 = vmatprep.mubr.f32.mxu0 0.0
        %v760 = vand.u32 %v378, 4294901760
        %761 = vmatmul.mubr.f32.gmra.mxu0 %v760
        %v762 = vpop.f32.mrf.mxu0
        %v763 = vadd.f32 %v686, %v762
        %v764 = vpop.f32.mrf.mxu0
        %765 = vdwg.mxu0
        %766 = vmatprep.subr.mxu0 0.0
        %767 = vmatpush1.msra.mxu0 0.0
        %768 = vmatprep.subr.mxu0 0.0
        %769 = vmatpush1.msra.mxu0 0.0
        %770 = vmatprep.subr.mxu0 0.0
        %771 = vmatpush1.msra.mxu0 0.0
        %772 = vmatprep.subr.mxu0 0.0
        %773 = vmatpush1.msra.mxu0 0.0
        %774 = vmatprep.subr.mxu0 0.0
        %775 = vmatpush1.msra.mxu0 0.0
        %776 = vmatprep.subr.mxu0 0.0
        %777 = vmatpush1.msra.mxu0 0.0
        %778 = vmatprep.subr.mxu0 0.0
        %779 = vmatpush1.msra.mxu0 0.0
        %780 = vmatprep.subr.mxu0 0.0
        %781 = vmatpush1.msra.mxu0 0.0
        %782 = vmatprep.subr.mxu0 0.0
        %783 = vmatpush1.msra.mxu0 0.0
        %784 = vmatprep.subr.mxu0 0.0
        %785 = vmatpush1.msra.mxu0 0.0
        %786 = vmatprep.subr.mxu0 0.0
        %787 = vmatpush1.msra.mxu0 0.0
        %788 = vmatprep.subr.mxu0 0.0
        %789 = vmatpush1.msra.mxu0 0.0
        %790 = vmatprep.subr.mxu0 0.0
        %791 = vmatpush1.msra.mxu0 0.0
        %792 = vmatprep.subr.mxu0 0.0
        %793 = vmatpush1.msra.mxu0 0.0
        %794 = vmatprep.subr.mxu0 0.0
        %v795 = vand.u32 %v346, 4294901760
        %796 = vmatpush1.msra.mxu0 %v795
        %797 = vmatprep.subr.mxu0 0.0
        %v798 = vand.u32 %v345, 4294901760
        %799 = vmatpush1.msra.mxu0 %v798
        %800 = vmatprep.subr.mxu0 0.0
        %801 = vmatpush2.msra.mxu0 0.0
        %802 = vmatprep.subr.mxu0 0.0
        %803 = vmatpush2.msra.mxu0 0.0
        %804 = vmatprep.subr.mxu0 0.0
        %805 = vmatpush2.msra.mxu0 0.0
        %806 = vmatprep.subr.mxu0 0.0
        %807 = vmatpush2.msra.mxu0 0.0
        %808 = vmatprep.subr.mxu0 0.0
        %809 = vmatpush2.msra.mxu0 0.0
        %810 = vmatprep.subr.mxu0 0.0
        %811 = vmatpush2.msra.mxu0 0.0
        %812 = vmatprep.subr.mxu0 0.0
        %813 = vmatpush2.msra.mxu0 0.0
        %814 = vmatprep.subr.mxu0 0.0
        %815 = vmatpush2.msra.mxu0 0.0
        %816 = vmatprep.subr.mxu0 0.0
        %817 = vmatpush2.msra.mxu0 0.0
        %818 = vmatprep.subr.mxu0 0.0
        %819 = vmatpush2.msra.mxu0 0.0
        %820 = vmatprep.subr.mxu0 0.0
        %821 = vmatpush2.msra.mxu0 0.0
        %822 = vmatprep.subr.mxu0 0.0
        %823 = vmatpush2.msra.mxu0 0.0
        %824 = vmatprep.subr.mxu0 0.0
        %825 = vmatpush2.msra.mxu0 0.0
        %826 = vmatprep.subr.mxu0 0.0
        %827 = vmatpush2.msra.mxu0 0.0
        %828 = vmatprep.subr.mxu0 0.0
        %829 = vmatpush2.msra.mxu0 0.0
        %830 = vmatprep.subr.mxu0 0.0
        %831 = vmatpush2.msra.mxu0 0.0
        %832 = vmatprep.mubr.f32.mxu0 0.0
        %v833 = vand.u32 %v378, 4294901760
        %834 = vmatmul.mubr.f32.gmra.mxu0 %v833
        %v835 = vpop.f32.mrf.mxu0
        %v836 = vadd.f32 %v763, %v835
        %v837 = vpop.f32.mrf.mxu0
        %838 = vdwg.mxu0
        %839 = vmatprep.subr.mxu0 0.0
        %v840 = vand.u32 %v365, 4294901760
        %841 = vmatpush1.msra.mxu0 %v840
        %842 = vmatprep.subr.mxu0 0.0
        %v843 = vand.u32 %v364, 4294901760
        %844 = vmatpush1.msra.mxu0 %v843
        %845 = vmatprep.subr.mxu0 0.0
        %v846 = vand.u32 %v363, 4294901760
        %847 = vmatpush1.msra.mxu0 %v846
        %848 = vmatprep.subr.mxu0 0.0
        %v849 = vand.u32 %v362, 4294901760
        %850 = vmatpush1.msra.mxu0 %v849
        %851 = vmatprep.subr.mxu0 0.0
        %v852 = vand.u32 %v361, 4294901760
        %853 = vmatpush1.msra.mxu0 %v852
        %854 = vmatprep.subr.mxu0 0.0
        %v855 = vand.u32 %v360, 4294901760
        %856 = vmatpush1.msra.mxu0 %v855
        %857 = vmatprep.subr.mxu0 0.0
        %v858 = vand.u32 %v359, 4294901760
        %859 = vmatpush1.msra.mxu0 %v858
        %860 = vmatprep.subr.mxu0 0.0
        %v861 = vand.u32 %v358, 4294901760
        %862 = vmatpush1.msra.mxu0 %v861
        %863 = vmatprep.subr.mxu0 0.0
        %v864 = vand.u32 %v357, 4294901760
        %865 = vmatpush1.msra.mxu0 %v864
        %866 = vmatprep.subr.mxu0 0.0
        %v867 = vand.u32 %v356, 4294901760
        %868 = vmatpush1.msra.mxu0 %v867
        %869 = vmatprep.subr.mxu0 0.0
        %v870 = vand.u32 %v355, 4294901760
        %871 = vmatpush1.msra.mxu0 %v870
        %872 = vmatprep.subr.mxu0 0.0
        %v873 = vand.u32 %v354, 4294901760
        %874 = vmatpush1.msra.mxu0 %v873
        %875 = vmatprep.subr.mxu0 0.0
        %v876 = vand.u32 %v353, 4294901760
        %877 = vmatpush1.msra.mxu0 %v876
        %878 = vmatprep.subr.mxu0 0.0
        %v879 = vand.u32 %v352, 4294901760
        %880 = vmatpush1.msra.mxu0 %v879
        %881 = vmatprep.subr.mxu0 0.0
        %v882 = vand.u32 %v351, 4294901760
        %883 = vmatpush1.msra.mxu0 %v882
        %884 = vmatprep.subr.mxu0 0.0
        %v885 = vand.u32 %v350, 4294901760
        %886 = vmatpush1.msra.mxu0 %v885
        %887 = vmatprep.subr.mxu0 0.0
        %888 = vmatpush2.msra.mxu0 0.0
        %889 = vmatprep.subr.mxu0 0.0
        %890 = vmatpush2.msra.mxu0 0.0
        %891 = vmatprep.subr.mxu0 0.0
        %892 = vmatpush2.msra.mxu0 0.0
        %893 = vmatprep.subr.mxu0 0.0
        %894 = vmatpush2.msra.mxu0 0.0
        %895 = vmatprep.subr.mxu0 0.0
        %896 = vmatpush2.msra.mxu0 0.0
        %897 = vmatprep.subr.mxu0 0.0
        %898 = vmatpush2.msra.mxu0 0.0
        %899 = vmatprep.subr.mxu0 0.0
        %900 = vmatpush2.msra.mxu0 0.0
        %901 = vmatprep.subr.mxu0 0.0
        %902 = vmatpush2.msra.mxu0 0.0
        %903 = vmatprep.subr.mxu0 0.0
        %904 = vmatpush2.msra.mxu0 0.0
        %905 = vmatprep.subr.mxu0 0.0
        %906 = vmatpush2.msra.mxu0 0.0
        %907 = vmatprep.subr.mxu0 0.0
        %908 = vmatpush2.msra.mxu0 0.0
        %909 = vmatprep.subr.mxu0 0.0
        %910 = vmatpush2.msra.mxu0 0.0
        %911 = vmatprep.subr.mxu0 0.0
        %912 = vmatpush2.msra.mxu0 0.0
        %913 = vmatprep.subr.mxu0 0.0
        %914 = vmatpush2.msra.mxu0 0.0
        %915 = vmatprep.subr.mxu0 0.0
        %916 = vmatpush2.msra.mxu0 0.0
        %917 = vmatprep.subr.mxu0 0.0
        %918 = vmatpush2.msra.mxu0 0.0
        %919 = vmatprep.mubr.f32.mxu0 0.0
        %v920 = vand.u32 %v836, 4294901760
        %v921 = vsub.f32 %v836, %v920
        %v922 = vand.u32 %v921, 4294901760
        %v923 = vsub.f32 %v921, %v922
        %v924 = vand.u32 %v923, 4294901760
        %925 = vmatmul.mubr.f32.gmra.mxu0 %v924
        %v926 = vpop.f32.mrf.mxu0
        %v927 = vadd.f32 0.0, %v926
        %v928 = vpop.f32.mrf.mxu0
        %929 = vdwg.mxu0
        %930 = vmatprep.subr.mxu0 0.0
        %v931 = vand.u32 %v365, 4294901760
        %v932 = vsub.f32 %v365, %v931
        %v933 = vand.u32 %v932, 4294901760
        %v934 = vsub.f32 %v932, %v933
        %v935 = vand.u32 %v934, 4294901760
        %936 = vmatpush1.msra.mxu0 %v935
        %937 = vmatprep.subr.mxu0 0.0
        %v938 = vand.u32 %v364, 4294901760
        %v939 = vsub.f32 %v364, %v938
        %v940 = vand.u32 %v939, 4294901760
        %v941 = vsub.f32 %v939, %v940
        %v942 = vand.u32 %v941, 4294901760
        %943 = vmatpush1.msra.mxu0 %v942
        %944 = vmatprep.subr.mxu0 0.0
        %v945 = vand.u32 %v363, 4294901760
        %v946 = vsub.f32 %v363, %v945
        %v947 = vand.u32 %v946, 4294901760
        %v948 = vsub.f32 %v946, %v947
        %v949 = vand.u32 %v948, 4294901760
        %950 = vmatpush1.msra.mxu0 %v949
        %951 = vmatprep.subr.mxu0 0.0
        %v952 = vand.u32 %v362, 4294901760
        %v953 = vsub.f32 %v362, %v952
        %v954 = vand.u32 %v953, 4294901760
        %v955 = vsub.f32 %v953, %v954
        %v956 = vand.u32 %v955, 4294901760
        %957 = vmatpush1.msra.mxu0 %v956
        %958 = vmatprep.subr.mxu0 0.0
        %v959 = vand.u32 %v361, 4294901760
        %v960 = vsub.f32 %v361, %v959
        %v961 = vand.u32 %v960, 4294901760
        %v962 = vsub.f32 %v960, %v961
        %v963 = vand.u32 %v962, 4294901760
        %964 = vmatpush1.msra.mxu0 %v963
        %965 = vmatprep.subr.mxu0 0.0
        %v966 = vand.u32 %v360, 4294901760
        %v967 = vsub.f32 %v360, %v966
        %v968 = vand.u32 %v967, 4294901760
        %v969 = vsub.f32 %v967, %v968
        %v970 = vand.u32 %v969, 4294901760
        %971 = vmatpush1.msra.mxu0 %v970
        %972 = vmatprep.subr.mxu0 0.0
        %v973 = vand.u32 %v359, 4294901760
        %v974 = vsub.f32 %v359, %v973
        %v975 = vand.u32 %v974, 4294901760
        %v976 = vsub.f32 %v974, %v975
        %v977 = vand.u32 %v976, 4294901760
        %978 = vmatpush1.msra.mxu0 %v977
        %979 = vmatprep.subr.mxu0 0.0
        %v980 = vand.u32 %v358, 4294901760
        %v981 = vsub.f32 %v358, %v980
        %v982 = vand.u32 %v981, 4294901760
        %v983 = vsub.f32 %v981, %v982
        %v984 = vand.u32 %v983, 4294901760
        %985 = vmatpush1.msra.mxu0 %v984
        %986 = vmatprep.subr.mxu0 0.0
        %v987 = vand.u32 %v357, 4294901760
        %v988 = vsub.f32 %v357, %v987
        %v989 = vand.u32 %v988, 4294901760
        %v990 = vsub.f32 %v988, %v989
        %v991 = vand.u32 %v990, 4294901760
        %992 = vmatpush1.msra.mxu0 %v991
        %993 = vmatprep.subr.mxu0 0.0
        %v994 = vand.u32 %v356, 4294901760
        %v995 = vsub.f32 %v356, %v994
        %v996 = vand.u32 %v995, 4294901760
        %v997 = vsub.f32 %v995, %v996
        %v998 = vand.u32 %v997, 4294901760
        %999 = vmatpush1.msra.mxu0 %v998
        %1000 = vmatprep.subr.mxu0 0.0
        %v1001 = vand.u32 %v355, 4294901760
        %v1002 = vsub.f32 %v355, %v1001
        %v1003 = vand.u32 %v1002, 4294901760
        %v1004 = vsub.f32 %v1002, %v1003
        %v1005 = vand.u32 %v1004, 4294901760
        %1006 = vmatpush1.msra.mxu0 %v1005
        %1007 = vmatprep.subr.mxu0 0.0
        %v1008 = vand.u32 %v354, 4294901760
        %v1009 = vsub.f32 %v354, %v1008
        %v1010 = vand.u32 %v1009, 4294901760
        %v1011 = vsub.f32 %v1009, %v1010
        %v1012 = vand.u32 %v1011, 4294901760
        %1013 = vmatpush1.msra.mxu0 %v1012
        %1014 = vmatprep.subr.mxu0 0.0
        %v1015 = vand.u32 %v353, 4294901760
        %v1016 = vsub.f32 %v353, %v1015
        %v1017 = vand.u32 %v1016, 4294901760
        %v1018 = vsub.f32 %v1016, %v1017
        %v1019 = vand.u32 %v1018, 4294901760
        %1020 = vmatpush1.msra.mxu0 %v1019
        %1021 = vmatprep.subr.mxu0 0.0
        %v1022 = vand.u32 %v352, 4294901760
        %v1023 = vsub.f32 %v352, %v1022
        %v1024 = vand.u32 %v1023, 4294901760
        %v1025 = vsub.f32 %v1023, %v1024
        %v1026 = vand.u32 %v1025, 4294901760
        %1027 = vmatpush1.msra.mxu0 %v1026
        %1028 = vmatprep.subr.mxu0 0.0
        %v1029 = vand.u32 %v351, 4294901760
        %v1030 = vsub.f32 %v351, %v1029
        %v1031 = vand.u32 %v1030, 4294901760
        %v1032 = vsub.f32 %v1030, %v1031
        %v1033 = vand.u32 %v1032, 4294901760
        %1034 = vmatpush1.msra.mxu0 %v1033
        %1035 = vmatprep.subr.mxu0 0.0
        %v1036 = vand.u32 %v350, 4294901760
        %v1037 = vsub.f32 %v350, %v1036
        %v1038 = vand.u32 %v1037, 4294901760
        %v1039 = vsub.f32 %v1037, %v1038
        %v1040 = vand.u32 %v1039, 4294901760
        %1041 = vmatpush1.msra.mxu0 %v1040
        %1042 = vmatprep.subr.mxu0 0.0
        %1043 = vmatpush2.msra.mxu0 0.0
        %1044 = vmatprep.subr.mxu0 0.0
        %1045 = vmatpush2.msra.mxu0 0.0
        %1046 = vmatprep.subr.mxu0 0.0
        %1047 = vmatpush2.msra.mxu0 0.0
        %1048 = vmatprep.subr.mxu0 0.0
        %1049 = vmatpush2.msra.mxu0 0.0
        %1050 = vmatprep.subr.mxu0 0.0
        %1051 = vmatpush2.msra.mxu0 0.0
        %1052 = vmatprep.subr.mxu0 0.0
        %1053 = vmatpush2.msra.mxu0 0.0
        %1054 = vmatprep.subr.mxu0 0.0
        %1055 = vmatpush2.msra.mxu0 0.0
        %1056 = vmatprep.subr.mxu0 0.0
        %1057 = vmatpush2.msra.mxu0 0.0
        %1058 = vmatprep.subr.mxu0 0.0
        %1059 = vmatpush2.msra.mxu0 0.0
        %1060 = vmatprep.subr.mxu0 0.0
        %1061 = vmatpush2.msra.mxu0 0.0
        %1062 = vmatprep.subr.mxu0 0.0
        %1063 = vmatpush2.msra.mxu0 0.0
        %1064 = vmatprep.subr.mxu0 0.0
        %1065 = vmatpush2.msra.mxu0 0.0
        %1066 = vmatprep.subr.mxu0 0.0
        %1067 = vmatpush2.msra.mxu0 0.0
        %1068 = vmatprep.subr.mxu0 0.0
        %1069 = vmatpush2.msra.mxu0 0.0
        %1070 = vmatprep.subr.mxu0 0.0
        %1071 = vmatpush2.msra.mxu0 0.0
        %1072 = vmatprep.subr.mxu0 0.0
        %1073 = vmatpush2.msra.mxu0 0.0
        %1074 = vmatprep.mubr.f32.mxu0 0.0
        %v1075 = vand.u32 %v836, 4294901760
        %1076 = vmatmul.mubr.f32.gmra.mxu0 %v1075
        %v1077 = vpop.f32.mrf.mxu0
        %v1078 = vadd.f32 %v927, %v1077
        %v1079 = vpop.f32.mrf.mxu0
        %1080 = vdwg.mxu0
        %1081 = vmatprep.subr.mxu0 0.0
        %v1082 = vand.u32 %v365, 4294901760
        %v1083 = vsub.f32 %v365, %v1082
        %1084 = vmatpush1.msra.mxu0 %v1083
        %1085 = vmatprep.subr.mxu0 0.0
        %v1086 = vand.u32 %v364, 4294901760
        %v1087 = vsub.f32 %v364, %v1086
        %1088 = vmatpush1.msra.mxu0 %v1087
        %1089 = vmatprep.subr.mxu0 0.0
        %v1090 = vand.u32 %v363, 4294901760
        %v1091 = vsub.f32 %v363, %v1090
        %1092 = vmatpush1.msra.mxu0 %v1091
        %1093 = vmatprep.subr.mxu0 0.0
        %v1094 = vand.u32 %v362, 4294901760
        %v1095 = vsub.f32 %v362, %v1094
        %1096 = vmatpush1.msra.mxu0 %v1095
        %1097 = vmatprep.subr.mxu0 0.0
        %v1098 = vand.u32 %v361, 4294901760
        %v1099 = vsub.f32 %v361, %v1098
        %1100 = vmatpush1.msra.mxu0 %v1099
        %1101 = vmatprep.subr.mxu0 0.0
        %v1102 = vand.u32 %v360, 4294901760
        %v1103 = vsub.f32 %v360, %v1102
        %1104 = vmatpush1.msra.mxu0 %v1103
        %1105 = vmatprep.subr.mxu0 0.0
        %v1106 = vand.u32 %v359, 4294901760
        %v1107 = vsub.f32 %v359, %v1106
        %1108 = vmatpush1.msra.mxu0 %v1107
        %1109 = vmatprep.subr.mxu0 0.0
        %v1110 = vand.u32 %v358, 4294901760
        %v1111 = vsub.f32 %v358, %v1110
        %1112 = vmatpush1.msra.mxu0 %v1111
        %1113 = vmatprep.subr.mxu0 0.0
        %v1114 = vand.u32 %v357, 4294901760
        %v1115 = vsub.f32 %v357, %v1114
        %1116 = vmatpush1.msra.mxu0 %v1115
        %1117 = vmatprep.subr.mxu0 0.0
        %v1118 = vand.u32 %v356, 4294901760
        %v1119 = vsub.f32 %v356, %v1118
        %1120 = vmatpush1.msra.mxu0 %v1119
        %1121 = vmatprep.subr.mxu0 0.0
        %v1122 = vand.u32 %v355, 4294901760
        %v1123 = vsub.f32 %v355, %v1122
        %1124 = vmatpush1.msra.mxu0 %v1123
        %1125 = vmatprep.subr.mxu0 0.0
        %v1126 = vand.u32 %v354, 4294901760
        %v1127 = vsub.f32 %v354, %v1126
        %1128 = vmatpush1.msra.mxu0 %v1127
        %1129 = vmatprep.subr.mxu0 0.0
        %v1130 = vand.u32 %v353, 4294901760
        %v1131 = vsub.f32 %v353, %v1130
        %1132 = vmatpush1.msra.mxu0 %v1131
        %1133 = vmatprep.subr.mxu0 0.0
        %v1134 = vand.u32 %v352, 4294901760
        %v1135 = vsub.f32 %v352, %v1134
        %1136 = vmatpush1.msra.mxu0 %v1135
        %1137 = vmatprep.subr.mxu0 0.0
        %v1138 = vand.u32 %v351, 4294901760
        %v1139 = vsub.f32 %v351, %v1138
        %1140 = vmatpush1.msra.mxu0 %v1139
        %1141 = vmatprep.subr.mxu0 0.0
        %v1142 = vand.u32 %v350, 4294901760
        %v1143 = vsub.f32 %v350, %v1142
        %1144 = vmatpush1.msra.mxu0 %v1143
        %1145 = vmatprep.subr.mxu0 0.0
        %1146 = vmatpush2.msra.mxu0 0.0
        %1147 = vmatprep.subr.mxu0 0.0
        %1148 = vmatpush2.msra.mxu0 0.0
        %1149 = vmatprep.subr.mxu0 0.0
        %1150 = vmatpush2.msra.mxu0 0.0
        %1151 = vmatprep.subr.mxu0 0.0
        %1152 = vmatpush2.msra.mxu0 0.0
        %1153 = vmatprep.subr.mxu0 0.0
        %1154 = vmatpush2.msra.mxu0 0.0
        %1155 = vmatprep.subr.mxu0 0.0
        %1156 = vmatpush2.msra.mxu0 0.0
        %1157 = vmatprep.subr.mxu0 0.0
        %1158 = vmatpush2.msra.mxu0 0.0
        %1159 = vmatprep.subr.mxu0 0.0
        %1160 = vmatpush2.msra.mxu0 0.0
        %1161 = vmatprep.subr.mxu0 0.0
        %1162 = vmatpush2.msra.mxu0 0.0
        %1163 = vmatprep.subr.mxu0 0.0
        %1164 = vmatpush2.msra.mxu0 0.0
        %1165 = vmatprep.subr.mxu0 0.0
        %1166 = vmatpush2.msra.mxu0 0.0
        %1167 = vmatprep.subr.mxu0 0.0
        %1168 = vmatpush2.msra.mxu0 0.0
        %1169 = vmatprep.subr.mxu0 0.0
        %1170 = vmatpush2.msra.mxu0 0.0
        %1171 = vmatprep.subr.mxu0 0.0
        %1172 = vmatpush2.msra.mxu0 0.0
        %1173 = vmatprep.subr.mxu0 0.0
        %1174 = vmatpush2.msra.mxu0 0.0
        %1175 = vmatprep.subr.mxu0 0.0
        %1176 = vmatpush2.msra.mxu0 0.0
        %1177 = vmatprep.mubr.f32.mxu0 0.0
        %v1178 = vand.u32 %v836, 4294901760
        %v1179 = vsub.f32 %v836, %v1178
        %1180 = vmatmul.mubr.f32.gmra.mxu0 %v1179
        %v1181 = vpop.f32.mrf.mxu0
        %v1182 = vadd.f32 %v1078, %v1181
        %v1183 = vpop.f32.mrf.mxu0
        %1184 = vdwg.mxu0
        %1185 = vmatprep.subr.mxu0 0.0
        %v1186 = vand.u32 %v365, 4294901760
        %1187 = vmatpush1.msra.mxu0 %v1186
        %1188 = vmatprep.subr.mxu0 0.0
        %v1189 = vand.u32 %v364, 4294901760
        %1190 = vmatpush1.msra.mxu0 %v1189
        %1191 = vmatprep.subr.mxu0 0.0
        %v1192 = vand.u32 %v363, 4294901760
        %1193 = vmatpush1.msra.mxu0 %v1192
        %1194 = vmatprep.subr.mxu0 0.0
        %v1195 = vand.u32 %v362, 4294901760
        %1196 = vmatpush1.msra.mxu0 %v1195
        %1197 = vmatprep.subr.mxu0 0.0
        %v1198 = vand.u32 %v361, 4294901760
        %1199 = vmatpush1.msra.mxu0 %v1198
        %1200 = vmatprep.subr.mxu0 0.0
        %v1201 = vand.u32 %v360, 4294901760
        %1202 = vmatpush1.msra.mxu0 %v1201
        %1203 = vmatprep.subr.mxu0 0.0
        %v1204 = vand.u32 %v359, 4294901760
        %1205 = vmatpush1.msra.mxu0 %v1204
        %1206 = vmatprep.subr.mxu0 0.0
        %v1207 = vand.u32 %v358, 4294901760
        %1208 = vmatpush1.msra.mxu0 %v1207
        %1209 = vmatprep.subr.mxu0 0.0
        %v1210 = vand.u32 %v357, 4294901760
        %1211 = vmatpush1.msra.mxu0 %v1210
        %1212 = vmatprep.subr.mxu0 0.0
        %v1213 = vand.u32 %v356, 4294901760
        %1214 = vmatpush1.msra.mxu0 %v1213
        %1215 = vmatprep.subr.mxu0 0.0
        %v1216 = vand.u32 %v355, 4294901760
        %1217 = vmatpush1.msra.mxu0 %v1216
        %1218 = vmatprep.subr.mxu0 0.0
        %v1219 = vand.u32 %v354, 4294901760
        %1220 = vmatpush1.msra.mxu0 %v1219
        %1221 = vmatprep.subr.mxu0 0.0
        %v1222 = vand.u32 %v353, 4294901760
        %1223 = vmatpush1.msra.mxu0 %v1222
        %1224 = vmatprep.subr.mxu0 0.0
        %v1225 = vand.u32 %v352, 4294901760
        %1226 = vmatpush1.msra.mxu0 %v1225
        %1227 = vmatprep.subr.mxu0 0.0
        %v1228 = vand.u32 %v351, 4294901760
        %1229 = vmatpush1.msra.mxu0 %v1228
        %1230 = vmatprep.subr.mxu0 0.0
        %v1231 = vand.u32 %v350, 4294901760
        %1232 = vmatpush1.msra.mxu0 %v1231
        %1233 = vmatprep.subr.mxu0 0.0
        %1234 = vmatpush2.msra.mxu0 0.0
        %1235 = vmatprep.subr.mxu0 0.0
        %1236 = vmatpush2.msra.mxu0 0.0
        %1237 = vmatprep.subr.mxu0 0.0
        %1238 = vmatpush2.msra.mxu0 0.0
        %1239 = vmatprep.subr.mxu0 0.0
        %1240 = vmatpush2.msra.mxu0 0.0
        %1241 = vmatprep.subr.mxu0 0.0
        %1242 = vmatpush2.msra.mxu0 0.0
        %1243 = vmatprep.subr.mxu0 0.0
        %1244 = vmatpush2.msra.mxu0 0.0
        %1245 = vmatprep.subr.mxu0 0.0
        %1246 = vmatpush2.msra.mxu0 0.0
        %1247 = vmatprep.subr.mxu0 0.0
        %1248 = vmatpush2.msra.mxu0 0.0
        %1249 = vmatprep.subr.mxu0 0.0
        %1250 = vmatpush2.msra.mxu0 0.0
        %1251 = vmatprep.subr.mxu0 0.0
        %1252 = vmatpush2.msra.mxu0 0.0
        %1253 = vmatprep.subr.mxu0 0.0
        %1254 = vmatpush2.msra.mxu0 0.0
        %1255 = vmatprep.subr.mxu0 0.0
        %1256 = vmatpush2.msra.mxu0 0.0
        %1257 = vmatprep.subr.mxu0 0.0
        %1258 = vmatpush2.msra.mxu0 0.0
        %1259 = vmatprep.subr.mxu0 0.0
        %1260 = vmatpush2.msra.mxu0 0.0
        %1261 = vmatprep.subr.mxu0 0.0
        %1262 = vmatpush2.msra.mxu0 0.0
        %1263 = vmatprep.subr.mxu0 0.0
        %1264 = vmatpush2.msra.mxu0 0.0
        %1265 = vmatprep.mubr.f32.mxu0 0.0
        %v1266 = vand.u32 %v836, 4294901760
        %v1267 = vsub.f32 %v836, %v1266
        %v1268 = vand.u32 %v1267, 4294901760
        %1269 = vmatmul.mubr.f32.gmra.mxu0 %v1268
        %v1270 = vpop.f32.mrf.mxu0
        %v1271 = vadd.f32 %v1182, %v1270
        %v1272 = vpop.f32.mrf.mxu0
        %1273 = vdwg.mxu0
        %1274 = vmatprep.subr.mxu0 0.0
        %v1275 = vand.u32 %v365, 4294901760
        %v1276 = vsub.f32 %v365, %v1275
        %v1277 = vand.u32 %v1276, 4294901760
        %1278 = vmatpush1.msra.mxu0 %v1277
        %1279 = vmatprep.subr.mxu0 0.0
        %v1280 = vand.u32 %v364, 4294901760
        %v1281 = vsub.f32 %v364, %v1280
        %v1282 = vand.u32 %v1281, 4294901760
        %1283 = vmatpush1.msra.mxu0 %v1282
        %1284 = vmatprep.subr.mxu0 0.0
        %v1285 = vand.u32 %v363, 4294901760
        %v1286 = vsub.f32 %v363, %v1285
        %v1287 = vand.u32 %v1286, 4294901760
        %1288 = vmatpush1.msra.mxu0 %v1287
        %1289 = vmatprep.subr.mxu0 0.0
        %v1290 = vand.u32 %v362, 4294901760
        %v1291 = vsub.f32 %v362, %v1290
        %v1292 = vand.u32 %v1291, 4294901760
        %1293 = vmatpush1.msra.mxu0 %v1292
        %1294 = vmatprep.subr.mxu0 0.0
        %v1295 = vand.u32 %v361, 4294901760
        %v1296 = vsub.f32 %v361, %v1295
        %v1297 = vand.u32 %v1296, 4294901760
        %1298 = vmatpush1.msra.mxu0 %v1297
        %1299 = vmatprep.subr.mxu0 0.0
        %v1300 = vand.u32 %v360, 4294901760
        %v1301 = vsub.f32 %v360, %v1300
        %v1302 = vand.u32 %v1301, 4294901760
        %1303 = vmatpush1.msra.mxu0 %v1302
        %1304 = vmatprep.subr.mxu0 0.0
        %v1305 = vand.u32 %v359, 4294901760
        %v1306 = vsub.f32 %v359, %v1305
        %v1307 = vand.u32 %v1306, 4294901760
        %1308 = vmatpush1.msra.mxu0 %v1307
        %1309 = vmatprep.subr.mxu0 0.0
        %v1310 = vand.u32 %v358, 4294901760
        %v1311 = vsub.f32 %v358, %v1310
        %v1312 = vand.u32 %v1311, 4294901760
        %1313 = vmatpush1.msra.mxu0 %v1312
        %1314 = vmatprep.subr.mxu0 0.0
        %v1315 = vand.u32 %v357, 4294901760
        %v1316 = vsub.f32 %v357, %v1315
        %v1317 = vand.u32 %v1316, 4294901760
        %1318 = vmatpush1.msra.mxu0 %v1317
        %1319 = vmatprep.subr.mxu0 0.0
        %v1320 = vand.u32 %v356, 4294901760
        %v1321 = vsub.f32 %v356, %v1320
        %v1322 = vand.u32 %v1321, 4294901760
        %1323 = vmatpush1.msra.mxu0 %v1322
        %1324 = vmatprep.subr.mxu0 0.0
        %v1325 = vand.u32 %v355, 4294901760
        %v1326 = vsub.f32 %v355, %v1325
        %v1327 = vand.u32 %v1326, 4294901760
        %1328 = vmatpush1.msra.mxu0 %v1327
        %1329 = vmatprep.subr.mxu0 0.0
        %v1330 = vand.u32 %v354, 4294901760
        %v1331 = vsub.f32 %v354, %v1330
        %v1332 = vand.u32 %v1331, 4294901760
        %1333 = vmatpush1.msra.mxu0 %v1332
        %1334 = vmatprep.subr.mxu0 0.0
        %v1335 = vand.u32 %v353, 4294901760
        %v1336 = vsub.f32 %v353, %v1335
        %v1337 = vand.u32 %v1336, 4294901760
        %1338 = vmatpush1.msra.mxu0 %v1337
        %1339 = vmatprep.subr.mxu0 0.0
        %v1340 = vand.u32 %v352, 4294901760
        %v1341 = vsub.f32 %v352, %v1340
        %v1342 = vand.u32 %v1341, 4294901760
        %1343 = vmatpush1.msra.mxu0 %v1342
        %1344 = vmatprep.subr.mxu0 0.0
        %v1345 = vand.u32 %v351, 4294901760
        %v1346 = vsub.f32 %v351, %v1345
        %v1347 = vand.u32 %v1346, 4294901760
        %1348 = vmatpush1.msra.mxu0 %v1347
        %1349 = vmatprep.subr.mxu0 0.0
        %v1350 = vand.u32 %v350, 4294901760
        %v1351 = vsub.f32 %v350, %v1350
        %v1352 = vand.u32 %v1351, 4294901760
        %1353 = vmatpush1.msra.mxu0 %v1352
        %1354 = vmatprep.subr.mxu0 0.0
        %1355 = vmatpush2.msra.mxu0 0.0
        %1356 = vmatprep.subr.mxu0 0.0
        %1357 = vmatpush2.msra.mxu0 0.0
        %1358 = vmatprep.subr.mxu0 0.0
        %1359 = vmatpush2.msra.mxu0 0.0
        %1360 = vmatprep.subr.mxu0 0.0
        %1361 = vmatpush2.msra.mxu0 0.0
        %1362 = vmatprep.subr.mxu0 0.0
        %1363 = vmatpush2.msra.mxu0 0.0
        %1364 = vmatprep.subr.mxu0 0.0
        %1365 = vmatpush2.msra.mxu0 0.0
        %1366 = vmatprep.subr.mxu0 0.0
        %1367 = vmatpush2.msra.mxu0 0.0
        %1368 = vmatprep.subr.mxu0 0.0
        %1369 = vmatpush2.msra.mxu0 0.0
        %1370 = vmatprep.subr.mxu0 0.0
        %1371 = vmatpush2.msra.mxu0 0.0
        %1372 = vmatprep.subr.mxu0 0.0
        %1373 = vmatpush2.msra.mxu0 0.0
        %1374 = vmatprep.subr.mxu0 0.0
        %1375 = vmatpush2.msra.mxu0 0.0
        %1376 = vmatprep.subr.mxu0 0.0
        %1377 = vmatpush2.msra.mxu0 0.0
        %1378 = vmatprep.subr.mxu0 0.0
        %1379 = vmatpush2.msra.mxu0 0.0
        %1380 = vmatprep.subr.mxu0 0.0
        %1381 = vmatpush2.msra.mxu0 0.0
        %1382 = vmatprep.subr.mxu0 0.0
        %1383 = vmatpush2.msra.mxu0 0.0
        %1384 = vmatprep.subr.mxu0 0.0
        %1385 = vmatpush2.msra.mxu0 0.0
        %1386 = vmatprep.mubr.f32.mxu0 0.0
        %v1387 = vand.u32 %v836, 4294901760
        %1388 = vmatmul.mubr.f32.gmra.mxu0 %v1387
        %v1389 = vpop.f32.mrf.mxu0
        %v1390 = vadd.f32 %v1271, %v1389
        %v1391 = vpop.f32.mrf.mxu0
        %1392 = vdwg.mxu0
        %1393 = vmatprep.subr.mxu0 0.0
        %v1394 = vand.u32 %v365, 4294901760
        %1395 = vmatpush1.msra.mxu0 %v1394
        %1396 = vmatprep.subr.mxu0 0.0
        %v1397 = vand.u32 %v364, 4294901760
        %1398 = vmatpush1.msra.mxu0 %v1397
        %1399 = vmatprep.subr.mxu0 0.0
        %v1400 = vand.u32 %v363, 4294901760
        %1401 = vmatpush1.msra.mxu0 %v1400
        %1402 = vmatprep.subr.mxu0 0.0
        %v1403 = vand.u32 %v362, 4294901760
        %1404 = vmatpush1.msra.mxu0 %v1403
        %1405 = vmatprep.subr.mxu0 0.0
        %v1406 = vand.u32 %v361, 4294901760
        %1407 = vmatpush1.msra.mxu0 %v1406
        %1408 = vmatprep.subr.mxu0 0.0
        %v1409 = vand.u32 %v360, 4294901760
        %1410 = vmatpush1.msra.mxu0 %v1409
        %1411 = vmatprep.subr.mxu0 0.0
        %v1412 = vand.u32 %v359, 4294901760
        %1413 = vmatpush1.msra.mxu0 %v1412
        %1414 = vmatprep.subr.mxu0 0.0
        %v1415 = vand.u32 %v358, 4294901760
        %1416 = vmatpush1.msra.mxu0 %v1415
        %1417 = vmatprep.subr.mxu0 0.0
        %v1418 = vand.u32 %v357, 4294901760
        %1419 = vmatpush1.msra.mxu0 %v1418
        %1420 = vmatprep.subr.mxu0 0.0
        %v1421 = vand.u32 %v356, 4294901760
        %1422 = vmatpush1.msra.mxu0 %v1421
        %1423 = vmatprep.subr.mxu0 0.0
        %v1424 = vand.u32 %v355, 4294901760
        %1425 = vmatpush1.msra.mxu0 %v1424
        %1426 = vmatprep.subr.mxu0 0.0
        %v1427 = vand.u32 %v354, 4294901760
        %1428 = vmatpush1.msra.mxu0 %v1427
        %1429 = vmatprep.subr.mxu0 0.0
        %v1430 = vand.u32 %v353, 4294901760
        %1431 = vmatpush1.msra.mxu0 %v1430
        %1432 = vmatprep.subr.mxu0 0.0
        %v1433 = vand.u32 %v352, 4294901760
        %1434 = vmatpush1.msra.mxu0 %v1433
        %1435 = vmatprep.subr.mxu0 0.0
        %v1436 = vand.u32 %v351, 4294901760
        %1437 = vmatpush1.msra.mxu0 %v1436
        %1438 = vmatprep.subr.mxu0 0.0
        %v1439 = vand.u32 %v350, 4294901760
        %1440 = vmatpush1.msra.mxu0 %v1439
        %1441 = vmatprep.subr.mxu0 0.0
        %1442 = vmatpush2.msra.mxu0 0.0
        %1443 = vmatprep.subr.mxu0 0.0
        %1444 = vmatpush2.msra.mxu0 0.0
        %1445 = vmatprep.subr.mxu0 0.0
        %1446 = vmatpush2.msra.mxu0 0.0
        %1447 = vmatprep.subr.mxu0 0.0
        %1448 = vmatpush2.msra.mxu0 0.0
        %1449 = vmatprep.subr.mxu0 0.0
        %1450 = vmatpush2.msra.mxu0 0.0
        %1451 = vmatprep.subr.mxu0 0.0
        %1452 = vmatpush2.msra.mxu0 0.0
        %1453 = vmatprep.subr.mxu0 0.0
        %1454 = vmatpush2.msra.mxu0 0.0
        %1455 = vmatprep.subr.mxu0 0.0
        %1456 = vmatpush2.msra.mxu0 0.0
        %1457 = vmatprep.subr.mxu0 0.0
        %1458 = vmatpush2.msra.mxu0 0.0
        %1459 = vmatprep.subr.mxu0 0.0
        %1460 = vmatpush2.msra.mxu0 0.0
        %1461 = vmatprep.subr.mxu0 0.0
        %1462 = vmatpush2.msra.mxu0 0.0
        %1463 = vmatprep.subr.mxu0 0.0
        %1464 = vmatpush2.msra.mxu0 0.0
        %1465 = vmatprep.subr.mxu0 0.0
        %1466 = vmatpush2.msra.mxu0 0.0
        %1467 = vmatprep.subr.mxu0 0.0
        %1468 = vmatpush2.msra.mxu0 0.0
        %1469 = vmatprep.subr.mxu0 0.0
        %1470 = vmatpush2.msra.mxu0 0.0
        %1471 = vmatprep.subr.mxu0 0.0
        %1472 = vmatpush2.msra.mxu0 0.0
        %1473 = vmatprep.mubr.f32.mxu0 0.0
        %v1474 = vand.u32 %v836, 4294901760
        %1475 = vmatmul.mubr.f32.gmra.mxu0 %v1474
        %v1476 = vpop.f32.mrf.mxu0
        %v1477 = vadd.f32 %v1390, %v1476
        %v1478 = vpop.f32.mrf.mxu0
        %1479 = vdwg.mxu0
        %1480 = vmatprep.subr.mxu0 0.0
        %1481 = vmatpush1.msra.mxu0 0.0
        %1482 = vmatprep.subr.mxu0 0.0
        %1483 = vmatpush1.msra.mxu0 0.0
        %1484 = vmatprep.subr.mxu0 0.0
        %1485 = vmatpush1.msra.mxu0 0.0
        %1486 = vmatprep.subr.mxu0 0.0
        %1487 = vmatpush1.msra.mxu0 0.0
        %1488 = vmatprep.subr.mxu0 0.0
        %1489 = vmatpush1.msra.mxu0 0.0
        %1490 = vmatprep.subr.mxu0 0.0
        %1491 = vmatpush1.msra.mxu0 0.0
        %1492 = vmatprep.subr.mxu0 0.0
        %1493 = vmatpush1.msra.mxu0 0.0
        %1494 = vmatprep.subr.mxu0 0.0
        %1495 = vmatpush1.msra.mxu0 0.0
        %1496 = vmatprep.subr.mxu0 0.0
        %1497 = vmatpush1.msra.mxu0 0.0
        %1498 = vmatprep.subr.mxu0 0.0
        %1499 = vmatpush1.msra.mxu0 0.0
        %1500 = vmatprep.subr.mxu0 0.0
        %1501 = vmatpush1.msra.mxu0 0.0
        %1502 = vmatprep.subr.mxu0 0.0
        %1503 = vmatpush1.msra.mxu0 0.0
        %1504 = vmatprep.subr.mxu0 0.0
        %1505 = vmatpush1.msra.mxu0 0.0
        %1506 = vmatprep.subr.mxu0 0.0
        %1507 = vmatpush1.msra.mxu0 0.0
        %1508 = vmatprep.subr.mxu0 0.0
        %v1509 = vand.u32 %v348, 4294901760
        %1510 = vmatpush1.msra.mxu0 %v1509
        %1511 = vmatprep.subr.mxu0 0.0
        %v1512 = vand.u32 %v347, 4294901760
        %1513 = vmatpush1.msra.mxu0 %v1512
        %1514 = vmatprep.subr.mxu0 0.0
        %1515 = vmatpush2.msra.mxu0 0.0
        %1516 = vmatprep.subr.mxu0 0.0
        %1517 = vmatpush2.msra.mxu0 0.0
        %1518 = vmatprep.subr.mxu0 0.0
        %1519 = vmatpush2.msra.mxu0 0.0
        %1520 = vmatprep.subr.mxu0 0.0
        %1521 = vmatpush2.msra.mxu0 0.0
        %1522 = vmatprep.subr.mxu0 0.0
        %1523 = vmatpush2.msra.mxu0 0.0
        %1524 = vmatprep.subr.mxu0 0.0
        %1525 = vmatpush2.msra.mxu0 0.0
        %1526 = vmatprep.subr.mxu0 0.0
        %1527 = vmatpush2.msra.mxu0 0.0
        %1528 = vmatprep.subr.mxu0 0.0
        %1529 = vmatpush2.msra.mxu0 0.0
        %1530 = vmatprep.subr.mxu0 0.0
        %1531 = vmatpush2.msra.mxu0 0.0
        %1532 = vmatprep.subr.mxu0 0.0
        %1533 = vmatpush2.msra.mxu0 0.0
        %1534 = vmatprep.subr.mxu0 0.0
        %1535 = vmatpush2.msra.mxu0 0.0
        %1536 = vmatprep.subr.mxu0 0.0
        %1537 = vmatpush2.msra.mxu0 0.0
        %1538 = vmatprep.subr.mxu0 0.0
        %1539 = vmatpush2.msra.mxu0 0.0
        %1540 = vmatprep.subr.mxu0 0.0
        %1541 = vmatpush2.msra.mxu0 0.0
        %1542 = vmatprep.subr.mxu0 0.0
        %1543 = vmatpush2.msra.mxu0 0.0
        %1544 = vmatprep.subr.mxu0 0.0
        %1545 = vmatpush2.msra.mxu0 0.0
        %1546 = vmatprep.mubr.f32.mxu0 0.0
        %v1547 = vand.u32 %v378, 4294901760
        %v1548 = vsub.f32 %v378, %v1547
        %v1549 = vand.u32 %v1548, 4294901760
        %v1550 = vsub.f32 %v1548, %v1549
        %v1551 = vand.u32 %v1550, 4294901760
        %1552 = vmatmul.mubr.f32.gmra.mxu0 %v1551
        %v1553 = vpop.f32.mrf.mxu0
        %v1554 = vadd.f32 0.0, %v1553
        %v1555 = vpop.f32.mrf.mxu0
        %1556 = vdwg.mxu0
        %1557 = vmatprep.subr.mxu0 0.0
        %1558 = vmatpush1.msra.mxu0 0.0
        %1559 = vmatprep.subr.mxu0 0.0
        %1560 = vmatpush1.msra.mxu0 0.0
        %1561 = vmatprep.subr.mxu0 0.0
        %1562 = vmatpush1.msra.mxu0 0.0
        %1563 = vmatprep.subr.mxu0 0.0
        %1564 = vmatpush1.msra.mxu0 0.0
        %1565 = vmatprep.subr.mxu0 0.0
        %1566 = vmatpush1.msra.mxu0 0.0
        %1567 = vmatprep.subr.mxu0 0.0
        %1568 = vmatpush1.msra.mxu0 0.0
        %1569 = vmatprep.subr.mxu0 0.0
        %1570 = vmatpush1.msra.mxu0 0.0
        %1571 = vmatprep.subr.mxu0 0.0
        %1572 = vmatpush1.msra.mxu0 0.0
        %1573 = vmatprep.subr.mxu0 0.0
        %1574 = vmatpush1.msra.mxu0 0.0
        %1575 = vmatprep.subr.mxu0 0.0
        %1576 = vmatpush1.msra.mxu0 0.0
        %1577 = vmatprep.subr.mxu0 0.0
        %1578 = vmatpush1.msra.mxu0 0.0
        %1579 = vmatprep.subr.mxu0 0.0
        %1580 = vmatpush1.msra.mxu0 0.0
        %1581 = vmatprep.subr.mxu0 0.0
        %1582 = vmatpush1.msra.mxu0 0.0
        %1583 = vmatprep.subr.mxu0 0.0
        %1584 = vmatpush1.msra.mxu0 0.0
        %1585 = vmatprep.subr.mxu0 0.0
        %v1586 = vand.u32 %v348, 4294901760
        %v1587 = vsub.f32 %v348, %v1586
        %v1588 = vand.u32 %v1587, 4294901760
        %v1589 = vsub.f32 %v1587, %v1588
        %v1590 = vand.u32 %v1589, 4294901760
        %1591 = vmatpush1.msra.mxu0 %v1590
        %1592 = vmatprep.subr.mxu0 0.0
        %v1593 = vand.u32 %v347, 4294901760
        %v1594 = vsub.f32 %v347, %v1593
        %v1595 = vand.u32 %v1594, 4294901760
        %v1596 = vsub.f32 %v1594, %v1595
        %v1597 = vand.u32 %v1596, 4294901760
        %1598 = vmatpush1.msra.mxu0 %v1597
        %1599 = vmatprep.subr.mxu0 0.0
        %1600 = vmatpush2.msra.mxu0 0.0
        %1601 = vmatprep.subr.mxu0 0.0
        %1602 = vmatpush2.msra.mxu0 0.0
        %1603 = vmatprep.subr.mxu0 0.0
        %1604 = vmatpush2.msra.mxu0 0.0
        %1605 = vmatprep.subr.mxu0 0.0
        %1606 = vmatpush2.msra.mxu0 0.0
        %1607 = vmatprep.subr.mxu0 0.0
        %1608 = vmatpush2.msra.mxu0 0.0
        %1609 = vmatprep.subr.mxu0 0.0
        %1610 = vmatpush2.msra.mxu0 0.0
        %1611 = vmatprep.subr.mxu0 0.0
        %1612 = vmatpush2.msra.mxu0 0.0
        %1613 = vmatprep.subr.mxu0 0.0
        %1614 = vmatpush2.msra.mxu0 0.0
        %1615 = vmatprep.subr.mxu0 0.0
        %1616 = vmatpush2.msra.mxu0 0.0
        %1617 = vmatprep.subr.mxu0 0.0
        %1618 = vmatpush2.msra.mxu0 0.0
        %1619 = vmatprep.subr.mxu0 0.0
        %1620 = vmatpush2.msra.mxu0 0.0
        %1621 = vmatprep.subr.mxu0 0.0
        %1622 = vmatpush2.msra.mxu0 0.0
        %1623 = vmatprep.subr.mxu0 0.0
        %1624 = vmatpush2.msra.mxu0 0.0
        %1625 = vmatprep.subr.mxu0 0.0
        %1626 = vmatpush2.msra.mxu0 0.0
        %1627 = vmatprep.subr.mxu0 0.0
        %1628 = vmatpush2.msra.mxu0 0.0
        %1629 = vmatprep.subr.mxu0 0.0
        %1630 = vmatpush2.msra.mxu0 0.0
        %1631 = vmatprep.mubr.f32.mxu0 0.0
        %v1632 = vand.u32 %v378, 4294901760
        %1633 = vmatmul.mubr.f32.gmra.mxu0 %v1632
        %v1634 = vpop.f32.mrf.mxu0
        %v1635 = vadd.f32 %v1554, %v1634
        %v1636 = vpop.f32.mrf.mxu0
        %1637 = vdwg.mxu0
        %1638 = vmatprep.subr.mxu0 0.0
        %1639 = vmatpush1.msra.mxu0 0.0
        %1640 = vmatprep.subr.mxu0 0.0
        %1641 = vmatpush1.msra.mxu0 0.0
        %1642 = vmatprep.subr.mxu0 0.0
        %1643 = vmatpush1.msra.mxu0 0.0
        %1644 = vmatprep.subr.mxu0 0.0
        %1645 = vmatpush1.msra.mxu0 0.0
        %1646 = vmatprep.subr.mxu0 0.0
        %1647 = vmatpush1.msra.mxu0 0.0
        %1648 = vmatprep.subr.mxu0 0.0
        %1649 = vmatpush1.msra.mxu0 0.0
        %1650 = vmatprep.subr.mxu0 0.0
        %1651 = vmatpush1.msra.mxu0 0.0
        %1652 = vmatprep.subr.mxu0 0.0
        %1653 = vmatpush1.msra.mxu0 0.0
        %1654 = vmatprep.subr.mxu0 0.0
        %1655 = vmatpush1.msra.mxu0 0.0
        %1656 = vmatprep.subr.mxu0 0.0
        %1657 = vmatpush1.msra.mxu0 0.0
        %1658 = vmatprep.subr.mxu0 0.0
        %1659 = vmatpush1.msra.mxu0 0.0
        %1660 = vmatprep.subr.mxu0 0.0
        %1661 = vmatpush1.msra.mxu0 0.0
        %1662 = vmatprep.subr.mxu0 0.0
        %1663 = vmatpush1.msra.mxu0 0.0
        %1664 = vmatprep.subr.mxu0 0.0
        %1665 = vmatpush1.msra.mxu0 0.0
        %1666 = vmatprep.subr.mxu0 0.0
        %v1667 = vand.u32 %v348, 4294901760
        %v1668 = vsub.f32 %v348, %v1667
        %1669 = vmatpush1.msra.mxu0 %v1668
        %1670 = vmatprep.subr.mxu0 0.0
        %v1671 = vand.u32 %v347, 4294901760
        %v1672 = vsub.f32 %v347, %v1671
        %1673 = vmatpush1.msra.mxu0 %v1672
        %1674 = vmatprep.subr.mxu0 0.0
        %1675 = vmatpush2.msra.mxu0 0.0
        %1676 = vmatprep.subr.mxu0 0.0
        %1677 = vmatpush2.msra.mxu0 0.0
        %1678 = vmatprep.subr.mxu0 0.0
        %1679 = vmatpush2.msra.mxu0 0.0
        %1680 = vmatprep.subr.mxu0 0.0
        %1681 = vmatpush2.msra.mxu0 0.0
        %1682 = vmatprep.subr.mxu0 0.0
        %1683 = vmatpush2.msra.mxu0 0.0
        %1684 = vmatprep.subr.mxu0 0.0
        %1685 = vmatpush2.msra.mxu0 0.0
        %1686 = vmatprep.subr.mxu0 0.0
        %1687 = vmatpush2.msra.mxu0 0.0
        %1688 = vmatprep.subr.mxu0 0.0
        %1689 = vmatpush2.msra.mxu0 0.0
        %1690 = vmatprep.subr.mxu0 0.0
        %1691 = vmatpush2.msra.mxu0 0.0
        %1692 = vmatprep.subr.mxu0 0.0
        %1693 = vmatpush2.msra.mxu0 0.0
        %1694 = vmatprep.subr.mxu0 0.0
        %1695 = vmatpush2.msra.mxu0 0.0
        %1696 = vmatprep.subr.mxu0 0.0
        %1697 = vmatpush2.msra.mxu0 0.0
        %1698 = vmatprep.subr.mxu0 0.0
        %1699 = vmatpush2.msra.mxu0 0.0
        %1700 = vmatprep.subr.mxu0 0.0
        %1701 = vmatpush2.msra.mxu0 0.0
        %1702 = vmatprep.subr.mxu0 0.0
        %1703 = vmatpush2.msra.mxu0 0.0
        %1704 = vmatprep.subr.mxu0 0.0
        %1705 = vmatpush2.msra.mxu0 0.0
        %1706 = vmatprep.mubr.f32.mxu0 0.0
        %v1707 = vand.u32 %v378, 4294901760
        %v1708 = vsub.f32 %v378, %v1707
        %1709 = vmatmul.mubr.f32.gmra.mxu0 %v1708
        %v1710 = vpop.f32.mrf.mxu0
        %v1711 = vadd.f32 %v1635, %v1710
        %v1712 = vpop.f32.mrf.mxu0
        %1713 = vdwg.mxu0
        %1714 = vmatprep.subr.mxu0 0.0
        %1715 = vmatpush1.msra.mxu0 0.0
        %1716 = vmatprep.subr.mxu0 0.0
        %1717 = vmatpush1.msra.mxu0 0.0
        %1718 = vmatprep.subr.mxu0 0.0
        %1719 = vmatpush1.msra.mxu0 0.0
        %1720 = vmatprep.subr.mxu0 0.0
        %1721 = vmatpush1.msra.mxu0 0.0
        %1722 = vmatprep.subr.mxu0 0.0
        %1723 = vmatpush1.msra.mxu0 0.0
        %1724 = vmatprep.subr.mxu0 0.0
        %1725 = vmatpush1.msra.mxu0 0.0
        %1726 = vmatprep.subr.mxu0 0.0
        %1727 = vmatpush1.msra.mxu0 0.0
        %1728 = vmatprep.subr.mxu0 0.0
        %1729 = vmatpush1.msra.mxu0 0.0
        %1730 = vmatprep.subr.mxu0 0.0
        %1731 = vmatpush1.msra.mxu0 0.0
        %1732 = vmatprep.subr.mxu0 0.0
        %1733 = vmatpush1.msra.mxu0 0.0
        %1734 = vmatprep.subr.mxu0 0.0
        %1735 = vmatpush1.msra.mxu0 0.0
        %1736 = vmatprep.subr.mxu0 0.0
        %1737 = vmatpush1.msra.mxu0 0.0
        %1738 = vmatprep.subr.mxu0 0.0
        %1739 = vmatpush1.msra.mxu0 0.0
        %1740 = vmatprep.subr.mxu0 0.0
        %1741 = vmatpush1.msra.mxu0 0.0
        %1742 = vmatprep.subr.mxu0 0.0
        %v1743 = vand.u32 %v348, 4294901760
        %1744 = vmatpush1.msra.mxu0 %v1743
        %1745 = vmatprep.subr.mxu0 0.0
        %v1746 = vand.u32 %v347, 4294901760
        %1747 = vmatpush1.msra.mxu0 %v1746
        %1748 = vmatprep.subr.mxu0 0.0
        %1749 = vmatpush2.msra.mxu0 0.0
        %1750 = vmatprep.subr.mxu0 0.0
        %1751 = vmatpush2.msra.mxu0 0.0
        %1752 = vmatprep.subr.mxu0 0.0
        %1753 = vmatpush2.msra.mxu0 0.0
        %1754 = vmatprep.subr.mxu0 0.0
        %1755 = vmatpush2.msra.mxu0 0.0
        %1756 = vmatprep.subr.mxu0 0.0
        %1757 = vmatpush2.msra.mxu0 0.0
        %1758 = vmatprep.subr.mxu0 0.0
        %1759 = vmatpush2.msra.mxu0 0.0
        %1760 = vmatprep.subr.mxu0 0.0
        %1761 = vmatpush2.msra.mxu0 0.0
        %1762 = vmatprep.subr.mxu0 0.0
        %1763 = vmatpush2.msra.mxu0 0.0
        %1764 = vmatprep.subr.mxu0 0.0
        %1765 = vmatpush2.msra.mxu0 0.0
        %1766 = vmatprep.subr.mxu0 0.0
        %1767 = vmatpush2.msra.mxu0 0.0
        %1768 = vmatprep.subr.mxu0 0.0
        %1769 = vmatpush2.msra.mxu0 0.0
        %1770 = vmatprep.subr.mxu0 0.0
        %1771 = vmatpush2.msra.mxu0 0.0
        %1772 = vmatprep.subr.mxu0 0.0
        %1773 = vmatpush2.msra.mxu0 0.0
        %1774 = vmatprep.subr.mxu0 0.0
        %1775 = vmatpush2.msra.mxu0 0.0
        %1776 = vmatprep.subr.mxu0 0.0
        %1777 = vmatpush2.msra.mxu0 0.0
        %1778 = vmatprep.subr.mxu0 0.0
        %1779 = vmatpush2.msra.mxu0 0.0
        %1780 = vmatprep.mubr.f32.mxu0 0.0
        %v1781 = vand.u32 %v378, 4294901760
        %v1782 = vsub.f32 %v378, %v1781
        %v1783 = vand.u32 %v1782, 4294901760
        %1784 = vmatmul.mubr.f32.gmra.mxu0 %v1783
        %v1785 = vpop.f32.mrf.mxu0
        %v1786 = vadd.f32 %v1711, %v1785
        %v1787 = vpop.f32.mrf.mxu0
        %1788 = vdwg.mxu0
        %1789 = vmatprep.subr.mxu0 0.0
        %1790 = vmatpush1.msra.mxu0 0.0
        %1791 = vmatprep.subr.mxu0 0.0
        %1792 = vmatpush1.msra.mxu0 0.0
        %1793 = vmatprep.subr.mxu0 0.0
        %1794 = vmatpush1.msra.mxu0 0.0
        %1795 = vmatprep.subr.mxu0 0.0
        %1796 = vmatpush1.msra.mxu0 0.0
        %1797 = vmatprep.subr.mxu0 0.0
        %1798 = vmatpush1.msra.mxu0 0.0
        %1799 = vmatprep.subr.mxu0 0.0
        %1800 = vmatpush1.msra.mxu0 0.0
        %1801 = vmatprep.subr.mxu0 0.0
        %1802 = vmatpush1.msra.mxu0 0.0
        %1803 = vmatprep.subr.mxu0 0.0
        %1804 = vmatpush1.msra.mxu0 0.0
        %1805 = vmatprep.subr.mxu0 0.0
        %1806 = vmatpush1.msra.mxu0 0.0
        %1807 = vmatprep.subr.mxu0 0.0
        %1808 = vmatpush1.msra.mxu0 0.0
        %1809 = vmatprep.subr.mxu0 0.0
        %1810 = vmatpush1.msra.mxu0 0.0
        %1811 = vmatprep.subr.mxu0 0.0
        %1812 = vmatpush1.msra.mxu0 0.0
        %1813 = vmatprep.subr.mxu0 0.0
        %1814 = vmatpush1.msra.mxu0 0.0
        %1815 = vmatprep.subr.mxu0 0.0
        %1816 = vmatpush1.msra.mxu0 0.0
        %1817 = vmatprep.subr.mxu0 0.0
        %v1818 = vand.u32 %v348, 4294901760
        %v1819 = vsub.f32 %v348, %v1818
        %v1820 = vand.u32 %v1819, 4294901760
        %1821 = vmatpush1.msra.mxu0 %v1820
        %1822 = vmatprep.subr.mxu0 0.0
        %v1823 = vand.u32 %v347, 4294901760
        %v1824 = vsub.f32 %v347, %v1823
        %v1825 = vand.u32 %v1824, 4294901760
        %1826 = vmatpush1.msra.mxu0 %v1825
        %1827 = vmatprep.subr.mxu0 0.0
        %1828 = vmatpush2.msra.mxu0 0.0
        %1829 = vmatprep.subr.mxu0 0.0
        %1830 = vmatpush2.msra.mxu0 0.0
        %1831 = vmatprep.subr.mxu0 0.0
        %1832 = vmatpush2.msra.mxu0 0.0
        %1833 = vmatprep.subr.mxu0 0.0
        %1834 = vmatpush2.msra.mxu0 0.0
        %1835 = vmatprep.subr.mxu0 0.0
        %1836 = vmatpush2.msra.mxu0 0.0
        %1837 = vmatprep.subr.mxu0 0.0
        %1838 = vmatpush2.msra.mxu0 0.0
        %1839 = vmatprep.subr.mxu0 0.0
        %1840 = vmatpush2.msra.mxu0 0.0
        %1841 = vmatprep.subr.mxu0 0.0
        %1842 = vmatpush2.msra.mxu0 0.0
        %1843 = vmatprep.subr.mxu0 0.0
        %1844 = vmatpush2.msra.mxu0 0.0
        %1845 = vmatprep.subr.mxu0 0.0
        %1846 = vmatpush2.msra.mxu0 0.0
        %1847 = vmatprep.subr.mxu0 0.0
        %1848 = vmatpush2.msra.mxu0 0.0
        %1849 = vmatprep.subr.mxu0 0.0
        %1850 = vmatpush2.msra.mxu0 0.0
        %1851 = vmatprep.subr.mxu0 0.0
        %1852 = vmatpush2.msra.mxu0 0.0
        %1853 = vmatprep.subr.mxu0 0.0
        %1854 = vmatpush2.msra.mxu0 0.0
        %1855 = vmatprep.subr.mxu0 0.0
        %1856 = vmatpush2.msra.mxu0 0.0
        %1857 = vmatprep.subr.mxu0 0.0
        %1858 = vmatpush2.msra.mxu0 0.0
        %1859 = vmatprep.mubr.f32.mxu0 0.0
        %v1860 = vand.u32 %v378, 4294901760
        %1861 = vmatmul.mubr.f32.gmra.mxu0 %v1860
        %v1862 = vpop.f32.mrf.mxu0
        %v1863 = vadd.f32 %v1786, %v1862
        %v1864 = vpop.f32.mrf.mxu0
        %1865 = vdwg.mxu0
        %1866 = vmatprep.subr.mxu0 0.0
        %1867 = vmatpush1.msra.mxu0 0.0
        %1868 = vmatprep.subr.mxu0 0.0
        %1869 = vmatpush1.msra.mxu0 0.0
        %1870 = vmatprep.subr.mxu0 0.0
        %1871 = vmatpush1.msra.mxu0 0.0
        %1872 = vmatprep.subr.mxu0 0.0
        %1873 = vmatpush1.msra.mxu0 0.0
        %1874 = vmatprep.subr.mxu0 0.0
        %1875 = vmatpush1.msra.mxu0 0.0
        %1876 = vmatprep.subr.mxu0 0.0
        %1877 = vmatpush1.msra.mxu0 0.0
        %1878 = vmatprep.subr.mxu0 0.0
        %1879 = vmatpush1.msra.mxu0 0.0
        %1880 = vmatprep.subr.mxu0 0.0
        %1881 = vmatpush1.msra.mxu0 0.0
        %1882 = vmatprep.subr.mxu0 0.0
        %1883 = vmatpush1.msra.mxu0 0.0
        %1884 = vmatprep.subr.mxu0 0.0
        %1885 = vmatpush1.msra.mxu0 0.0
        %1886 = vmatprep.subr.mxu0 0.0
        %1887 = vmatpush1.msra.mxu0 0.0
        %1888 = vmatprep.subr.mxu0 0.0
        %1889 = vmatpush1.msra.mxu0 0.0
        %1890 = vmatprep.subr.mxu0 0.0
        %1891 = vmatpush1.msra.mxu0 0.0
        %1892 = vmatprep.subr.mxu0 0.0
        %1893 = vmatpush1.msra.mxu0 0.0
        %1894 = vmatprep.subr.mxu0 0.0
        %v1895 = vand.u32 %v348, 4294901760
        %1896 = vmatpush1.msra.mxu0 %v1895
        %1897 = vmatprep.subr.mxu0 0.0
        %v1898 = vand.u32 %v347, 4294901760
        %1899 = vmatpush1.msra.mxu0 %v1898
        %1900 = vmatprep.subr.mxu0 0.0
        %1901 = vmatpush2.msra.mxu0 0.0
        %1902 = vmatprep.subr.mxu0 0.0
        %1903 = vmatpush2.msra.mxu0 0.0
        %1904 = vmatprep.subr.mxu0 0.0
        %1905 = vmatpush2.msra.mxu0 0.0
        %1906 = vmatprep.subr.mxu0 0.0
        %1907 = vmatpush2.msra.mxu0 0.0
        %1908 = vmatprep.subr.mxu0 0.0
        %1909 = vmatpush2.msra.mxu0 0.0
        %1910 = vmatprep.subr.mxu0 0.0
        %1911 = vmatpush2.msra.mxu0 0.0
        %1912 = vmatprep.subr.mxu0 0.0
        %1913 = vmatpush2.msra.mxu0 0.0
        %1914 = vmatprep.subr.mxu0 0.0
        %1915 = vmatpush2.msra.mxu0 0.0
        %1916 = vmatprep.subr.mxu0 0.0
        %1917 = vmatpush2.msra.mxu0 0.0
        %1918 = vmatprep.subr.mxu0 0.0
        %1919 = vmatpush2.msra.mxu0 0.0
        %1920 = vmatprep.subr.mxu0 0.0
        %1921 = vmatpush2.msra.mxu0 0.0
        %1922 = vmatprep.subr.mxu0 0.0
        %1923 = vmatpush2.msra.mxu0 0.0
        %1924 = vmatprep.subr.mxu0 0.0
        %1925 = vmatpush2.msra.mxu0 0.0
        %1926 = vmatprep.subr.mxu0 0.0
        %1927 = vmatpush2.msra.mxu0 0.0
        %1928 = vmatprep.subr.mxu0 0.0
        %1929 = vmatpush2.msra.mxu0 0.0
        %1930 = vmatprep.subr.mxu0 0.0
        %1931 = vmatpush2.msra.mxu0 0.0
        %1932 = vmatprep.mubr.f32.mxu0 0.0
        %v1933 = vand.u32 %v378, 4294901760
        %1934 = vmatmul.mubr.f32.gmra.mxu0 %v1933
        %v1935 = vpop.f32.mrf.mxu0
        %v1936 = vadd.f32 %v1863, %v1935
        %v1937 = vpop.f32.mrf.mxu0
        %1938 = vdwg.mxu0
        %1939 = vmatprep.subr.mxu0 0.0
        %v1940 = vand.u32 %v365, 4294901760
        %1941 = vmatpush1.msra.mxu0 %v1940
        %1942 = vmatprep.subr.mxu0 0.0
        %v1943 = vand.u32 %v364, 4294901760
        %1944 = vmatpush1.msra.mxu0 %v1943
        %1945 = vmatprep.subr.mxu0 0.0
        %v1946 = vand.u32 %v363, 4294901760
        %1947 = vmatpush1.msra.mxu0 %v1946
        %1948 = vmatprep.subr.mxu0 0.0
        %v1949 = vand.u32 %v362, 4294901760
        %1950 = vmatpush1.msra.mxu0 %v1949
        %1951 = vmatprep.subr.mxu0 0.0
        %v1952 = vand.u32 %v361, 4294901760
        %1953 = vmatpush1.msra.mxu0 %v1952
        %1954 = vmatprep.subr.mxu0 0.0
        %v1955 = vand.u32 %v360, 4294901760
        %1956 = vmatpush1.msra.mxu0 %v1955
        %1957 = vmatprep.subr.mxu0 0.0
        %v1958 = vand.u32 %v359, 4294901760
        %1959 = vmatpush1.msra.mxu0 %v1958
        %1960 = vmatprep.subr.mxu0 0.0
        %v1961 = vand.u32 %v358, 4294901760
        %1962 = vmatpush1.msra.mxu0 %v1961
        %1963 = vmatprep.subr.mxu0 0.0
        %v1964 = vand.u32 %v357, 4294901760
        %1965 = vmatpush1.msra.mxu0 %v1964
        %1966 = vmatprep.subr.mxu0 0.0
        %v1967 = vand.u32 %v356, 4294901760
        %1968 = vmatpush1.msra.mxu0 %v1967
        %1969 = vmatprep.subr.mxu0 0.0
        %v1970 = vand.u32 %v355, 4294901760
        %1971 = vmatpush1.msra.mxu0 %v1970
        %1972 = vmatprep.subr.mxu0 0.0
        %v1973 = vand.u32 %v354, 4294901760
        %1974 = vmatpush1.msra.mxu0 %v1973
        %1975 = vmatprep.subr.mxu0 0.0
        %v1976 = vand.u32 %v353, 4294901760
        %1977 = vmatpush1.msra.mxu0 %v1976
        %1978 = vmatprep.subr.mxu0 0.0
        %v1979 = vand.u32 %v352, 4294901760
        %1980 = vmatpush1.msra.mxu0 %v1979
        %1981 = vmatprep.subr.mxu0 0.0
        %v1982 = vand.u32 %v351, 4294901760
        %1983 = vmatpush1.msra.mxu0 %v1982
        %1984 = vmatprep.subr.mxu0 0.0
        %v1985 = vand.u32 %v350, 4294901760
        %1986 = vmatpush1.msra.mxu0 %v1985
        %1987 = vmatprep.subr.mxu0 0.0
        %1988 = vmatpush2.msra.mxu0 0.0
        %1989 = vmatprep.subr.mxu0 0.0
        %1990 = vmatpush2.msra.mxu0 0.0
        %1991 = vmatprep.subr.mxu0 0.0
        %1992 = vmatpush2.msra.mxu0 0.0
        %1993 = vmatprep.subr.mxu0 0.0
        %1994 = vmatpush2.msra.mxu0 0.0
        %1995 = vmatprep.subr.mxu0 0.0
        %1996 = vmatpush2.msra.mxu0 0.0
        %1997 = vmatprep.subr.mxu0 0.0
        %1998 = vmatpush2.msra.mxu0 0.0
        %1999 = vmatprep.subr.mxu0 0.0
        %2000 = vmatpush2.msra.mxu0 0.0
        %2001 = vmatprep.subr.mxu0 0.0
        %2002 = vmatpush2.msra.mxu0 0.0
        %2003 = vmatprep.subr.mxu0 0.0
        %2004 = vmatpush2.msra.mxu0 0.0
        %2005 = vmatprep.subr.mxu0 0.0
        %2006 = vmatpush2.msra.mxu0 0.0
        %2007 = vmatprep.subr.mxu0 0.0
        %2008 = vmatpush2.msra.mxu0 0.0
        %2009 = vmatprep.subr.mxu0 0.0
        %2010 = vmatpush2.msra.mxu0 0.0
        %2011 = vmatprep.subr.mxu0 0.0
        %2012 = vmatpush2.msra.mxu0 0.0
        %2013 = vmatprep.subr.mxu0 0.0
        %2014 = vmatpush2.msra.mxu0 0.0
        %2015 = vmatprep.subr.mxu0 0.0
        %2016 = vmatpush2.msra.mxu0 0.0
        %2017 = vmatprep.subr.mxu0 0.0
        %2018 = vmatpush2.msra.mxu0 0.0
        %2019 = vmatprep.mubr.f32.mxu0 0.0
        %v2020 = vand.u32 %v1936, 4294901760
        %v2021 = vsub.f32 %v1936, %v2020
        %v2022 = vand.u32 %v2021, 4294901760
        %v2023 = vsub.f32 %v2021, %v2022
        %v2024 = vand.u32 %v2023, 4294901760
        %2025 = vmatmul.mubr.f32.gmra.mxu0 %v2024
        %v2026 = vpop.f32.mrf.mxu0
        %v2027 = vadd.f32 0.0, %v2026
        %v2028 = vpop.f32.mrf.mxu0
        %2029 = vdwg.mxu0
        %2030 = vmatprep.subr.mxu0 0.0
        %v2031 = vand.u32 %v365, 4294901760
        %v2032 = vsub.f32 %v365, %v2031
        %v2033 = vand.u32 %v2032, 4294901760
        %v2034 = vsub.f32 %v2032, %v2033
        %v2035 = vand.u32 %v2034, 4294901760
        %2036 = vmatpush1.msra.mxu0 %v2035
        %2037 = vmatprep.subr.mxu0 0.0
        %v2038 = vand.u32 %v364, 4294901760
        %v2039 = vsub.f32 %v364, %v2038
        %v2040 = vand.u32 %v2039, 4294901760
        %v2041 = vsub.f32 %v2039, %v2040
        %v2042 = vand.u32 %v2041, 4294901760
        %2043 = vmatpush1.msra.mxu0 %v2042
        %2044 = vmatprep.subr.mxu0 0.0
        %v2045 = vand.u32 %v363, 4294901760
        %v2046 = vsub.f32 %v363, %v2045
        %v2047 = vand.u32 %v2046, 4294901760
        %v2048 = vsub.f32 %v2046, %v2047
        %v2049 = vand.u32 %v2048, 4294901760
        %2050 = vmatpush1.msra.mxu0 %v2049
        %2051 = vmatprep.subr.mxu0 0.0
        %v2052 = vand.u32 %v362, 4294901760
        %v2053 = vsub.f32 %v362, %v2052
        %v2054 = vand.u32 %v2053, 4294901760
        %v2055 = vsub.f32 %v2053, %v2054
        %v2056 = vand.u32 %v2055, 4294901760
        %2057 = vmatpush1.msra.mxu0 %v2056
        %2058 = vmatprep.subr.mxu0 0.0
        %v2059 = vand.u32 %v361, 4294901760
        %v2060 = vsub.f32 %v361, %v2059
        %v2061 = vand.u32 %v2060, 4294901760
        %v2062 = vsub.f32 %v2060, %v2061
        %v2063 = vand.u32 %v2062, 4294901760
        %2064 = vmatpush1.msra.mxu0 %v2063
        %2065 = vmatprep.subr.mxu0 0.0
        %v2066 = vand.u32 %v360, 4294901760
        %v2067 = vsub.f32 %v360, %v2066
        %v2068 = vand.u32 %v2067, 4294901760
        %v2069 = vsub.f32 %v2067, %v2068
        %v2070 = vand.u32 %v2069, 4294901760
        %2071 = vmatpush1.msra.mxu0 %v2070
        %2072 = vmatprep.subr.mxu0 0.0
        %v2073 = vand.u32 %v359, 4294901760
        %v2074 = vsub.f32 %v359, %v2073
        %v2075 = vand.u32 %v2074, 4294901760
        %v2076 = vsub.f32 %v2074, %v2075
        %v2077 = vand.u32 %v2076, 4294901760
        %2078 = vmatpush1.msra.mxu0 %v2077
        %2079 = vmatprep.subr.mxu0 0.0
        %v2080 = vand.u32 %v358, 4294901760
        %v2081 = vsub.f32 %v358, %v2080
        %v2082 = vand.u32 %v2081, 4294901760
        %v2083 = vsub.f32 %v2081, %v2082
        %v2084 = vand.u32 %v2083, 4294901760
        %2085 = vmatpush1.msra.mxu0 %v2084
        %2086 = vmatprep.subr.mxu0 0.0
        %v2087 = vand.u32 %v357, 4294901760
        %v2088 = vsub.f32 %v357, %v2087
        %v2089 = vand.u32 %v2088, 4294901760
        %v2090 = vsub.f32 %v2088, %v2089
        %v2091 = vand.u32 %v2090, 4294901760
        %2092 = vmatpush1.msra.mxu0 %v2091
        %2093 = vmatprep.subr.mxu0 0.0
        %v2094 = vand.u32 %v356, 4294901760
        %v2095 = vsub.f32 %v356, %v2094
        %v2096 = vand.u32 %v2095, 4294901760
        %v2097 = vsub.f32 %v2095, %v2096
        %v2098 = vand.u32 %v2097, 4294901760
        %2099 = vmatpush1.msra.mxu0 %v2098
        %2100 = vmatprep.subr.mxu0 0.0
        %v2101 = vand.u32 %v355, 4294901760
        %v2102 = vsub.f32 %v355, %v2101
        %v2103 = vand.u32 %v2102, 4294901760
        %v2104 = vsub.f32 %v2102, %v2103
        %v2105 = vand.u32 %v2104, 4294901760
        %2106 = vmatpush1.msra.mxu0 %v2105
        %2107 = vmatprep.subr.mxu0 0.0
        %v2108 = vand.u32 %v354, 4294901760
        %v2109 = vsub.f32 %v354, %v2108
        %v2110 = vand.u32 %v2109, 4294901760
        %v2111 = vsub.f32 %v2109, %v2110
        %v2112 = vand.u32 %v2111, 4294901760
        %2113 = vmatpush1.msra.mxu0 %v2112
        %2114 = vmatprep.subr.mxu0 0.0
        %v2115 = vand.u32 %v353, 4294901760
        %v2116 = vsub.f32 %v353, %v2115
        %v2117 = vand.u32 %v2116, 4294901760
        %v2118 = vsub.f32 %v2116, %v2117
        %v2119 = vand.u32 %v2118, 4294901760
        %2120 = vmatpush1.msra.mxu0 %v2119
        %2121 = vmatprep.subr.mxu0 0.0
        %v2122 = vand.u32 %v352, 4294901760
        %v2123 = vsub.f32 %v352, %v2122
        %v2124 = vand.u32 %v2123, 4294901760
        %v2125 = vsub.f32 %v2123, %v2124
        %v2126 = vand.u32 %v2125, 4294901760
        %2127 = vmatpush1.msra.mxu0 %v2126
        %2128 = vmatprep.subr.mxu0 0.0
        %v2129 = vand.u32 %v351, 4294901760
        %v2130 = vsub.f32 %v351, %v2129
        %v2131 = vand.u32 %v2130, 4294901760
        %v2132 = vsub.f32 %v2130, %v2131
        %v2133 = vand.u32 %v2132, 4294901760
        %2134 = vmatpush1.msra.mxu0 %v2133
        %2135 = vmatprep.subr.mxu0 0.0
        %v2136 = vand.u32 %v350, 4294901760
        %v2137 = vsub.f32 %v350, %v2136
        %v2138 = vand.u32 %v2137, 4294901760
        %v2139 = vsub.f32 %v2137, %v2138
        %v2140 = vand.u32 %v2139, 4294901760
        %2141 = vmatpush1.msra.mxu0 %v2140
        %2142 = vmatprep.subr.mxu0 0.0
        %2143 = vmatpush2.msra.mxu0 0.0
        %2144 = vmatprep.subr.mxu0 0.0
        %2145 = vmatpush2.msra.mxu0 0.0
        %2146 = vmatprep.subr.mxu0 0.0
        %2147 = vmatpush2.msra.mxu0 0.0
        %2148 = vmatprep.subr.mxu0 0.0
        %2149 = vmatpush2.msra.mxu0 0.0
        %2150 = vmatprep.subr.mxu0 0.0
        %2151 = vmatpush2.msra.mxu0 0.0
        %2152 = vmatprep.subr.mxu0 0.0
        %2153 = vmatpush2.msra.mxu0 0.0
        %2154 = vmatprep.subr.mxu0 0.0
        %2155 = vmatpush2.msra.mxu0 0.0
        %2156 = vmatprep.subr.mxu0 0.0
        %2157 = vmatpush2.msra.mxu0 0.0
        %2158 = vmatprep.subr.mxu0 0.0
        %2159 = vmatpush2.msra.mxu0 0.0
        %2160 = vmatprep.subr.mxu0 0.0
        %2161 = vmatpush2.msra.mxu0 0.0
        %2162 = vmatprep.subr.mxu0 0.0
        %2163 = vmatpush2.msra.mxu0 0.0
        %2164 = vmatprep.subr.mxu0 0.0
        %2165 = vmatpush2.msra.mxu0 0.0
        %2166 = vmatprep.subr.mxu0 0.0
        %2167 = vmatpush2.msra.mxu0 0.0
        %2168 = vmatprep.subr.mxu0 0.0
        %2169 = vmatpush2.msra.mxu0 0.0
        %2170 = vmatprep.subr.mxu0 0.0
        %2171 = vmatpush2.msra.mxu0 0.0
        %2172 = vmatprep.subr.mxu0 0.0
        %2173 = vmatpush2.msra.mxu0 0.0
        %2174 = vmatprep.mubr.f32.mxu0 0.0
        %v2175 = vand.u32 %v1936, 4294901760
        %2176 = vmatmul.mubr.f32.gmra.mxu0 %v2175
        %v2177 = vpop.f32.mrf.mxu0
        %v2178 = vadd.f32 %v2027, %v2177
        %v2179 = vpop.f32.mrf.mxu0
        %2180 = vdwg.mxu0
        %2181 = vmatprep.subr.mxu0 0.0
        %v2182 = vand.u32 %v365, 4294901760
        %v2183 = vsub.f32 %v365, %v2182
        %2184 = vmatpush1.msra.mxu0 %v2183
        %2185 = vmatprep.subr.mxu0 0.0
        %v2186 = vand.u32 %v364, 4294901760
        %v2187 = vsub.f32 %v364, %v2186
        %2188 = vmatpush1.msra.mxu0 %v2187
        %2189 = vmatprep.subr.mxu0 0.0
        %v2190 = vand.u32 %v363, 4294901760
        %v2191 = vsub.f32 %v363, %v2190
        %2192 = vmatpush1.msra.mxu0 %v2191
        %2193 = vmatprep.subr.mxu0 0.0
        %v2194 = vand.u32 %v362, 4294901760
        %v2195 = vsub.f32 %v362, %v2194
        %2196 = vmatpush1.msra.mxu0 %v2195
        %2197 = vmatprep.subr.mxu0 0.0
        %v2198 = vand.u32 %v361, 4294901760
        %v2199 = vsub.f32 %v361, %v2198
        %2200 = vmatpush1.msra.mxu0 %v2199
        %2201 = vmatprep.subr.mxu0 0.0
        %v2202 = vand.u32 %v360, 4294901760
        %v2203 = vsub.f32 %v360, %v2202
        %2204 = vmatpush1.msra.mxu0 %v2203
        %2205 = vmatprep.subr.mxu0 0.0
        %v2206 = vand.u32 %v359, 4294901760
        %v2207 = vsub.f32 %v359, %v2206
        %2208 = vmatpush1.msra.mxu0 %v2207
        %2209 = vmatprep.subr.mxu0 0.0
        %v2210 = vand.u32 %v358, 4294901760
        %v2211 = vsub.f32 %v358, %v2210
        %2212 = vmatpush1.msra.mxu0 %v2211
        %2213 = vmatprep.subr.mxu0 0.0
        %v2214 = vand.u32 %v357, 4294901760
        %v2215 = vsub.f32 %v357, %v2214
        %2216 = vmatpush1.msra.mxu0 %v2215
        %2217 = vmatprep.subr.mxu0 0.0
        %v2218 = vand.u32 %v356, 4294901760
        %v2219 = vsub.f32 %v356, %v2218
        %2220 = vmatpush1.msra.mxu0 %v2219
        %2221 = vmatprep.subr.mxu0 0.0
        %v2222 = vand.u32 %v355, 4294901760
        %v2223 = vsub.f32 %v355, %v2222
        %2224 = vmatpush1.msra.mxu0 %v2223
        %2225 = vmatprep.subr.mxu0 0.0
        %v2226 = vand.u32 %v354, 4294901760
        %v2227 = vsub.f32 %v354, %v2226
        %2228 = vmatpush1.msra.mxu0 %v2227
        %2229 = vmatprep.subr.mxu0 0.0
        %v2230 = vand.u32 %v353, 4294901760
        %v2231 = vsub.f32 %v353, %v2230
        %2232 = vmatpush1.msra.mxu0 %v2231
        %2233 = vmatprep.subr.mxu0 0.0
        %v2234 = vand.u32 %v352, 4294901760
        %v2235 = vsub.f32 %v352, %v2234
        %2236 = vmatpush1.msra.mxu0 %v2235
        %2237 = vmatprep.subr.mxu0 0.0
        %v2238 = vand.u32 %v351, 4294901760
        %v2239 = vsub.f32 %v351, %v2238
        %2240 = vmatpush1.msra.mxu0 %v2239
        %2241 = vmatprep.subr.mxu0 0.0
        %v2242 = vand.u32 %v350, 4294901760
        %v2243 = vsub.f32 %v350, %v2242
        %2244 = vmatpush1.msra.mxu0 %v2243
        %2245 = vmatprep.subr.mxu0 0.0
        %2246 = vmatpush2.msra.mxu0 0.0
        %2247 = vmatprep.subr.mxu0 0.0
        %2248 = vmatpush2.msra.mxu0 0.0
        %2249 = vmatprep.subr.mxu0 0.0
        %2250 = vmatpush2.msra.mxu0 0.0
        %2251 = vmatprep.subr.mxu0 0.0
        %2252 = vmatpush2.msra.mxu0 0.0
        %2253 = vmatprep.subr.mxu0 0.0
        %2254 = vmatpush2.msra.mxu0 0.0
        %2255 = vmatprep.subr.mxu0 0.0
        %2256 = vmatpush2.msra.mxu0 0.0
        %2257 = vmatprep.subr.mxu0 0.0
        %2258 = vmatpush2.msra.mxu0 0.0
        %2259 = vmatprep.subr.mxu0 0.0
        %2260 = vmatpush2.msra.mxu0 0.0
        %2261 = vmatprep.subr.mxu0 0.0
        %2262 = vmatpush2.msra.mxu0 0.0
        %2263 = vmatprep.subr.mxu0 0.0
        %2264 = vmatpush2.msra.mxu0 0.0
        %2265 = vmatprep.subr.mxu0 0.0
        %2266 = vmatpush2.msra.mxu0 0.0
        %2267 = vmatprep.subr.mxu0 0.0
        %2268 = vmatpush2.msra.mxu0 0.0
        %2269 = vmatprep.subr.mxu0 0.0
        %2270 = vmatpush2.msra.mxu0 0.0
        %2271 = vmatprep.subr.mxu0 0.0
        %2272 = vmatpush2.msra.mxu0 0.0
        %2273 = vmatprep.subr.mxu0 0.0
        %2274 = vmatpush2.msra.mxu0 0.0
        %2275 = vmatprep.subr.mxu0 0.0
        %2276 = vmatpush2.msra.mxu0 0.0
        %2277 = vmatprep.mubr.f32.mxu0 0.0
        %v2278 = vand.u32 %v1936, 4294901760
        %v2279 = vsub.f32 %v1936, %v2278
        %2280 = vmatmul.mubr.f32.gmra.mxu0 %v2279
        %v2281 = vpop.f32.mrf.mxu0
        %v2282 = vadd.f32 %v2178, %v2281
        %v2283 = vpop.f32.mrf.mxu0
        %2284 = vdwg.mxu0
        %2285 = vmatprep.subr.mxu0 0.0
        %v2286 = vand.u32 %v365, 4294901760
        %2287 = vmatpush1.msra.mxu0 %v2286
        %2288 = vmatprep.subr.mxu0 0.0
        %v2289 = vand.u32 %v364, 4294901760
        %2290 = vmatpush1.msra.mxu0 %v2289
        %2291 = vmatprep.subr.mxu0 0.0
        %v2292 = vand.u32 %v363, 4294901760
        %2293 = vmatpush1.msra.mxu0 %v2292
        %2294 = vmatprep.subr.mxu0 0.0
        %v2295 = vand.u32 %v362, 4294901760
        %2296 = vmatpush1.msra.mxu0 %v2295
        %2297 = vmatprep.subr.mxu0 0.0
        %v2298 = vand.u32 %v361, 4294901760
        %2299 = vmatpush1.msra.mxu0 %v2298
        %2300 = vmatprep.subr.mxu0 0.0
        %v2301 = vand.u32 %v360, 4294901760
        %2302 = vmatpush1.msra.mxu0 %v2301
        %2303 = vmatprep.subr.mxu0 0.0
        %v2304 = vand.u32 %v359, 4294901760
        %2305 = vmatpush1.msra.mxu0 %v2304
        %2306 = vmatprep.subr.mxu0 0.0
        %v2307 = vand.u32 %v358, 4294901760
        %2308 = vmatpush1.msra.mxu0 %v2307
        %2309 = vmatprep.subr.mxu0 0.0
        %v2310 = vand.u32 %v357, 4294901760
        %2311 = vmatpush1.msra.mxu0 %v2310
        %2312 = vmatprep.subr.mxu0 0.0
        %v2313 = vand.u32 %v356, 4294901760
        %2314 = vmatpush1.msra.mxu0 %v2313
        %2315 = vmatprep.subr.mxu0 0.0
        %v2316 = vand.u32 %v355, 4294901760
        %2317 = vmatpush1.msra.mxu0 %v2316
        %2318 = vmatprep.subr.mxu0 0.0
        %v2319 = vand.u32 %v354, 4294901760
        %2320 = vmatpush1.msra.mxu0 %v2319
        %2321 = vmatprep.subr.mxu0 0.0
        %v2322 = vand.u32 %v353, 4294901760
        %2323 = vmatpush1.msra.mxu0 %v2322
        %2324 = vmatprep.subr.mxu0 0.0
        %v2325 = vand.u32 %v352, 4294901760
        %2326 = vmatpush1.msra.mxu0 %v2325
        %2327 = vmatprep.subr.mxu0 0.0
        %v2328 = vand.u32 %v351, 4294901760
        %2329 = vmatpush1.msra.mxu0 %v2328
        %2330 = vmatprep.subr.mxu0 0.0
        %v2331 = vand.u32 %v350, 4294901760
        %2332 = vmatpush1.msra.mxu0 %v2331
        %2333 = vmatprep.subr.mxu0 0.0
        %2334 = vmatpush2.msra.mxu0 0.0
        %2335 = vmatprep.subr.mxu0 0.0
        %2336 = vmatpush2.msra.mxu0 0.0
        %2337 = vmatprep.subr.mxu0 0.0
        %2338 = vmatpush2.msra.mxu0 0.0
        %2339 = vmatprep.subr.mxu0 0.0
        %2340 = vmatpush2.msra.mxu0 0.0
        %2341 = vmatprep.subr.mxu0 0.0
        %2342 = vmatpush2.msra.mxu0 0.0
        %2343 = vmatprep.subr.mxu0 0.0
        %2344 = vmatpush2.msra.mxu0 0.0
        %2345 = vmatprep.subr.mxu0 0.0
        %2346 = vmatpush2.msra.mxu0 0.0
        %2347 = vmatprep.subr.mxu0 0.0
        %2348 = vmatpush2.msra.mxu0 0.0
        %2349 = vmatprep.subr.mxu0 0.0
        %2350 = vmatpush2.msra.mxu0 0.0
        %2351 = vmatprep.subr.mxu0 0.0
        %2352 = vmatpush2.msra.mxu0 0.0
        %2353 = vmatprep.subr.mxu0 0.0
        %2354 = vmatpush2.msra.mxu0 0.0
        %2355 = vmatprep.subr.mxu0 0.0
        %2356 = vmatpush2.msra.mxu0 0.0
        %2357 = vmatprep.subr.mxu0 0.0
        %2358 = vmatpush2.msra.mxu0 0.0
        %2359 = vmatprep.subr.mxu0 0.0
        %2360 = vmatpush2.msra.mxu0 0.0
        %2361 = vmatprep.subr.mxu0 0.0
        %2362 = vmatpush2.msra.mxu0 0.0
        %2363 = vmatprep.subr.mxu0 0.0
        %2364 = vmatpush2.msra.mxu0 0.0
        %2365 = vmatprep.mubr.f32.mxu0 0.0
        %v2366 = vand.u32 %v1936, 4294901760
        %v2367 = vsub.f32 %v1936, %v2366
        %v2368 = vand.u32 %v2367, 4294901760
        %2369 = vmatmul.mubr.f32.gmra.mxu0 %v2368
        %v2370 = vpop.f32.mrf.mxu0
        %v2371 = vadd.f32 %v2282, %v2370
        %v2372 = vpop.f32.mrf.mxu0
        %2373 = vdwg.mxu0
        %2374 = vmatprep.subr.mxu0 0.0
        %v2375 = vand.u32 %v365, 4294901760
        %v2376 = vsub.f32 %v365, %v2375
        %v2377 = vand.u32 %v2376, 4294901760
        %2378 = vmatpush1.msra.mxu0 %v2377
        %2379 = vmatprep.subr.mxu0 0.0
        %v2380 = vand.u32 %v364, 4294901760
        %v2381 = vsub.f32 %v364, %v2380
        %v2382 = vand.u32 %v2381, 4294901760
        %2383 = vmatpush1.msra.mxu0 %v2382
        %2384 = vmatprep.subr.mxu0 0.0
        %v2385 = vand.u32 %v363, 4294901760
        %v2386 = vsub.f32 %v363, %v2385
        %v2387 = vand.u32 %v2386, 4294901760
        %2388 = vmatpush1.msra.mxu0 %v2387
        %2389 = vmatprep.subr.mxu0 0.0
        %v2390 = vand.u32 %v362, 4294901760
        %v2391 = vsub.f32 %v362, %v2390
        %v2392 = vand.u32 %v2391, 4294901760
        %2393 = vmatpush1.msra.mxu0 %v2392
        %2394 = vmatprep.subr.mxu0 0.0
        %v2395 = vand.u32 %v361, 4294901760
        %v2396 = vsub.f32 %v361, %v2395
        %v2397 = vand.u32 %v2396, 4294901760
        %2398 = vmatpush1.msra.mxu0 %v2397
        %2399 = vmatprep.subr.mxu0 0.0
        %v2400 = vand.u32 %v360, 4294901760
        %v2401 = vsub.f32 %v360, %v2400
        %v2402 = vand.u32 %v2401, 4294901760
        %2403 = vmatpush1.msra.mxu0 %v2402
        %2404 = vmatprep.subr.mxu0 0.0
        %v2405 = vand.u32 %v359, 4294901760
        %v2406 = vsub.f32 %v359, %v2405
        %v2407 = vand.u32 %v2406, 4294901760
        %2408 = vmatpush1.msra.mxu0 %v2407
        %2409 = vmatprep.subr.mxu0 0.0
        %v2410 = vand.u32 %v358, 4294901760
        %v2411 = vsub.f32 %v358, %v2410
        %v2412 = vand.u32 %v2411, 4294901760
        %2413 = vmatpush1.msra.mxu0 %v2412
        %2414 = vmatprep.subr.mxu0 0.0
        %v2415 = vand.u32 %v357, 4294901760
        %v2416 = vsub.f32 %v357, %v2415
        %v2417 = vand.u32 %v2416, 4294901760
        %2418 = vmatpush1.msra.mxu0 %v2417
        %2419 = vmatprep.subr.mxu0 0.0
        %v2420 = vand.u32 %v356, 4294901760
        %v2421 = vsub.f32 %v356, %v2420
        %v2422 = vand.u32 %v2421, 4294901760
        %2423 = vmatpush1.msra.mxu0 %v2422
        %2424 = vmatprep.subr.mxu0 0.0
        %v2425 = vand.u32 %v355, 4294901760
        %v2426 = vsub.f32 %v355, %v2425
        %v2427 = vand.u32 %v2426, 4294901760
        %2428 = vmatpush1.msra.mxu0 %v2427
        %2429 = vmatprep.subr.mxu0 0.0
        %v2430 = vand.u32 %v354, 4294901760
        %v2431 = vsub.f32 %v354, %v2430
        %v2432 = vand.u32 %v2431, 4294901760
        %2433 = vmatpush1.msra.mxu0 %v2432
        %2434 = vmatprep.subr.mxu0 0.0
        %v2435 = vand.u32 %v353, 4294901760
        %v2436 = vsub.f32 %v353, %v2435
        %v2437 = vand.u32 %v2436, 4294901760
        %2438 = vmatpush1.msra.mxu0 %v2437
        %2439 = vmatprep.subr.mxu0 0.0
        %v2440 = vand.u32 %v352, 4294901760
        %v2441 = vsub.f32 %v352, %v2440
        %v2442 = vand.u32 %v2441, 4294901760
        %2443 = vmatpush1.msra.mxu0 %v2442
        %2444 = vmatprep.subr.mxu0 0.0
        %v2445 = vand.u32 %v351, 4294901760
        %v2446 = vsub.f32 %v351, %v2445
        %v2447 = vand.u32 %v2446, 4294901760
        %2448 = vmatpush1.msra.mxu0 %v2447
        %2449 = vmatprep.subr.mxu0 0.0
        %v2450 = vand.u32 %v350, 4294901760
        %v2451 = vsub.f32 %v350, %v2450
        %v2452 = vand.u32 %v2451, 4294901760
        %2453 = vmatpush1.msra.mxu0 %v2452
        %2454 = vmatprep.subr.mxu0 0.0
        %2455 = vmatpush2.msra.mxu0 0.0
        %2456 = vmatprep.subr.mxu0 0.0
        %2457 = vmatpush2.msra.mxu0 0.0
        %2458 = vmatprep.subr.mxu0 0.0
        %2459 = vmatpush2.msra.mxu0 0.0
        %2460 = vmatprep.subr.mxu0 0.0
        %2461 = vmatpush2.msra.mxu0 0.0
        %2462 = vmatprep.subr.mxu0 0.0
        %2463 = vmatpush2.msra.mxu0 0.0
        %2464 = vmatprep.subr.mxu0 0.0
        %2465 = vmatpush2.msra.mxu0 0.0
        %2466 = vmatprep.subr.mxu0 0.0
        %2467 = vmatpush2.msra.mxu0 0.0
        %2468 = vmatprep.subr.mxu0 0.0
        %2469 = vmatpush2.msra.mxu0 0.0
        %2470 = vmatprep.subr.mxu0 0.0
        %2471 = vmatpush2.msra.mxu0 0.0
        %2472 = vmatprep.subr.mxu0 0.0
        %2473 = vmatpush2.msra.mxu0 0.0
        %2474 = vmatprep.subr.mxu0 0.0
        %2475 = vmatpush2.msra.mxu0 0.0
        %2476 = vmatprep.subr.mxu0 0.0
        %2477 = vmatpush2.msra.mxu0 0.0
        %2478 = vmatprep.subr.mxu0 0.0
        %2479 = vmatpush2.msra.mxu0 0.0
        %2480 = vmatprep.subr.mxu0 0.0
        %2481 = vmatpush2.msra.mxu0 0.0
        %2482 = vmatprep.subr.mxu0 0.0
        %2483 = vmatpush2.msra.mxu0 0.0
        %2484 = vmatprep.subr.mxu0 0.0
        %2485 = vmatpush2.msra.mxu0 0.0
        %2486 = vmatprep.mubr.f32.mxu0 0.0
        %v2487 = vand.u32 %v1936, 4294901760
        %2488 = vmatmul.mubr.f32.gmra.mxu0 %v2487
        %v2489 = vpop.f32.mrf.mxu0
        %v2490 = vadd.f32 %v2371, %v2489
        %v2491 = vpop.f32.mrf.mxu0
        %2492 = vdwg.mxu0
        %2493 = vmatprep.subr.mxu0 0.0
        %v2494 = vand.u32 %v365, 4294901760
        %2495 = vmatpush1.msra.mxu0 %v2494
        %2496 = vmatprep.subr.mxu0 0.0
        %v2497 = vand.u32 %v364, 4294901760
        %2498 = vmatpush1.msra.mxu0 %v2497
        %2499 = vmatprep.subr.mxu0 0.0
        %v2500 = vand.u32 %v363, 4294901760
        %2501 = vmatpush1.msra.mxu0 %v2500
        %2502 = vmatprep.subr.mxu0 0.0
        %v2503 = vand.u32 %v362, 4294901760
        %2504 = vmatpush1.msra.mxu0 %v2503
        %2505 = vmatprep.subr.mxu0 0.0
        %v2506 = vand.u32 %v361, 4294901760
        %2507 = vmatpush1.msra.mxu0 %v2506
        %2508 = vmatprep.subr.mxu0 0.0
        %v2509 = vand.u32 %v360, 4294901760
        %2510 = vmatpush1.msra.mxu0 %v2509
        %2511 = vmatprep.subr.mxu0 0.0
        %v2512 = vand.u32 %v359, 4294901760
        %2513 = vmatpush1.msra.mxu0 %v2512
        %2514 = vmatprep.subr.mxu0 0.0
        %v2515 = vand.u32 %v358, 4294901760
        %2516 = vmatpush1.msra.mxu0 %v2515
        %2517 = vmatprep.subr.mxu0 0.0
        %v2518 = vand.u32 %v357, 4294901760
        %2519 = vmatpush1.msra.mxu0 %v2518
        %2520 = vmatprep.subr.mxu0 0.0
        %v2521 = vand.u32 %v356, 4294901760
        %2522 = vmatpush1.msra.mxu0 %v2521
        %2523 = vmatprep.subr.mxu0 0.0
        %v2524 = vand.u32 %v355, 4294901760
        %2525 = vmatpush1.msra.mxu0 %v2524
        %2526 = vmatprep.subr.mxu0 0.0
        %v2527 = vand.u32 %v354, 4294901760
        %2528 = vmatpush1.msra.mxu0 %v2527
        %2529 = vmatprep.subr.mxu0 0.0
        %v2530 = vand.u32 %v353, 4294901760
        %2531 = vmatpush1.msra.mxu0 %v2530
        %2532 = vmatprep.subr.mxu0 0.0
        %v2533 = vand.u32 %v352, 4294901760
        %2534 = vmatpush1.msra.mxu0 %v2533
        %2535 = vmatprep.subr.mxu0 0.0
        %v2536 = vand.u32 %v351, 4294901760
        %2537 = vmatpush1.msra.mxu0 %v2536
        %2538 = vmatprep.subr.mxu0 0.0
        %v2539 = vand.u32 %v350, 4294901760
        %2540 = vmatpush1.msra.mxu0 %v2539
        %2541 = vmatprep.subr.mxu0 0.0
        %2542 = vmatpush2.msra.mxu0 0.0
        %2543 = vmatprep.subr.mxu0 0.0
        %2544 = vmatpush2.msra.mxu0 0.0
        %2545 = vmatprep.subr.mxu0 0.0
        %2546 = vmatpush2.msra.mxu0 0.0
        %2547 = vmatprep.subr.mxu0 0.0
        %2548 = vmatpush2.msra.mxu0 0.0
        %2549 = vmatprep.subr.mxu0 0.0
        %2550 = vmatpush2.msra.mxu0 0.0
        %2551 = vmatprep.subr.mxu0 0.0
        %2552 = vmatpush2.msra.mxu0 0.0
        %2553 = vmatprep.subr.mxu0 0.0
        %2554 = vmatpush2.msra.mxu0 0.0
        %2555 = vmatprep.subr.mxu0 0.0
        %2556 = vmatpush2.msra.mxu0 0.0
        %2557 = vmatprep.subr.mxu0 0.0
        %2558 = vmatpush2.msra.mxu0 0.0
        %2559 = vmatprep.subr.mxu0 0.0
        %2560 = vmatpush2.msra.mxu0 0.0
        %2561 = vmatprep.subr.mxu0 0.0
        %2562 = vmatpush2.msra.mxu0 0.0
        %2563 = vmatprep.subr.mxu0 0.0
        %2564 = vmatpush2.msra.mxu0 0.0
        %2565 = vmatprep.subr.mxu0 0.0
        %2566 = vmatpush2.msra.mxu0 0.0
        %2567 = vmatprep.subr.mxu0 0.0
        %2568 = vmatpush2.msra.mxu0 0.0
        %2569 = vmatprep.subr.mxu0 0.0
        %2570 = vmatpush2.msra.mxu0 0.0
        %2571 = vmatprep.subr.mxu0 0.0
        %2572 = vmatpush2.msra.mxu0 0.0
        %2573 = vmatprep.mubr.f32.mxu0 0.0
        %v2574 = vand.u32 %v1936, 4294901760
        %2575 = vmatmul.mubr.f32.gmra.mxu0 %v2574
        %v2576 = vpop.f32.mrf.mxu0
        %v2577 = vadd.f32 %v2490, %v2576
        %v2578 = vpop.f32.mrf.mxu0
        %2579 = vdwg.mxu0
        %vm2580 = vcmask 523264
        %2581 = vst.msk [vmem:[%s317] sm:$0xff] %vm2580, %v1477
        %2582 = vst.msk [vmem:[%s324] sm:$0xff] %vm2580, %v2577
        %v2584 = vsel %vm2580, %v1477, 0
        %2586 = vmatprep.subr.mxu0 0.0
        %2587 = vmatpush1.msra.mxu0 0.0
        %2588 = vmatprep.subr.mxu0 0.0
        %2589 = vmatpush1.msra.mxu0 0.0
        %2590 = vmatprep.subr.mxu0 0.0
        %2591 = vmatpush1.msra.mxu0 0.0
        %2592 = vmatprep.subr.mxu0 0.0
        %2593 = vmatpush1.msra.mxu0 0.0
        %2594 = vmatprep.subr.mxu0 0.0
        %2595 = vmatpush1.msra.mxu0 0.0
        %2596 = vmatprep.subr.mxu0 0.0
        %2597 = vmatpush1.msra.mxu0 0.0
        %2598 = vmatprep.subr.mxu0 0.0
        %2599 = vmatpush1.msra.mxu0 0.0
        %2600 = vmatprep.subr.mxu0 0.0
        %2601 = vmatpush1.msra.mxu0 0.0
        %2602 = vmatprep.subr.mxu0 0.0
        %v2603 = vand.u32 %v375, 4294901760
        %2604 = vmatpush1.msra.mxu0 %v2603
        %2605 = vmatprep.subr.mxu0 0.0
        %v2606 = vand.u32 %v374, 4294901760
        %2607 = vmatpush1.msra.mxu0 %v2606
        %2608 = vmatprep.subr.mxu0 0.0
        %v2609 = vand.u32 %v373, 4294901760
        %2610 = vmatpush1.msra.mxu0 %v2609
        %2611 = vmatprep.subr.mxu0 0.0
        %v2612 = vand.u32 %v372, 4294901760
        %2613 = vmatpush1.msra.mxu0 %v2612
        %2614 = vmatprep.subr.mxu0 0.0
        %v2615 = vand.u32 %v371, 4294901760
        %2616 = vmatpush1.msra.mxu0 %v2615
        %2617 = vmatprep.subr.mxu0 0.0
        %v2618 = vand.u32 %v370, 4294901760
        %2619 = vmatpush1.msra.mxu0 %v2618
        %2620 = vmatprep.subr.mxu0 0.0
        %v2621 = vand.u32 %v369, 4294901760
        %2622 = vmatpush1.msra.mxu0 %v2621
        %2623 = vmatprep.subr.mxu0 0.0
        %v2624 = vand.u32 %v368, 4294901760
        %2625 = vmatpush1.msra.mxu0 %v2624
        %2626 = vmatprep.subr.mxu0 0.0
        %2627 = vmatpush2.msra.mxu0 0.0
        %2628 = vmatprep.subr.mxu0 0.0
        %2629 = vmatpush2.msra.mxu0 0.0
        %2630 = vmatprep.subr.mxu0 0.0
        %2631 = vmatpush2.msra.mxu0 0.0
        %2632 = vmatprep.subr.mxu0 0.0
        %2633 = vmatpush2.msra.mxu0 0.0
        %2634 = vmatprep.subr.mxu0 0.0
        %2635 = vmatpush2.msra.mxu0 0.0
        %2636 = vmatprep.subr.mxu0 0.0
        %2637 = vmatpush2.msra.mxu0 0.0
        %2638 = vmatprep.subr.mxu0 0.0
        %2639 = vmatpush2.msra.mxu0 0.0
        %2640 = vmatprep.subr.mxu0 0.0
        %2641 = vmatpush2.msra.mxu0 0.0
        %2642 = vmatprep.subr.mxu0 0.0
        %2643 = vmatpush2.msra.mxu0 0.0
        %2644 = vmatprep.subr.mxu0 0.0
        %2645 = vmatpush2.msra.mxu0 0.0
        %2646 = vmatprep.subr.mxu0 0.0
        %2647 = vmatpush2.msra.mxu0 0.0
        %2648 = vmatprep.subr.mxu0 0.0
        %2649 = vmatpush2.msra.mxu0 0.0
        %2650 = vmatprep.subr.mxu0 0.0
        %2651 = vmatpush2.msra.mxu0 0.0
        %2652 = vmatprep.subr.mxu0 0.0
        %2653 = vmatpush2.msra.mxu0 0.0
        %2654 = vmatprep.subr.mxu0 0.0
        %2655 = vmatpush2.msra.mxu0 0.0
        %2656 = vmatprep.subr.mxu0 0.0
        %2657 = vmatpush2.msra.mxu0 0.0
        %2658 = vmatprep.mubr.f32.mxu0 0.0
        %v2659 = vand.u32 %v2584, 4294901760
        %v2660 = vsub.f32 %v2584, %v2659
        %v2661 = vand.u32 %v2660, 4294901760
        %v2662 = vsub.f32 %v2660, %v2661
        %v2663 = vand.u32 %v2662, 4294901760
        %2664 = vmatmul.mubr.f32.gmra.mxu0 %v2663
        %v2665 = vpop.f32.mrf.mxu0
        %v2666 = vadd.f32 0.0, %v2665
        %v2667 = vpop.f32.mrf.mxu0
        %2668 = vdwg.mxu0
        %2669 = vmatprep.subr.mxu0 0.0
        %2670 = vmatpush1.msra.mxu0 0.0
        %2671 = vmatprep.subr.mxu0 0.0
        %2672 = vmatpush1.msra.mxu0 0.0
        %2673 = vmatprep.subr.mxu0 0.0
        %2674 = vmatpush1.msra.mxu0 0.0
        %2675 = vmatprep.subr.mxu0 0.0
        %2676 = vmatpush1.msra.mxu0 0.0
        %2677 = vmatprep.subr.mxu0 0.0
        %2678 = vmatpush1.msra.mxu0 0.0
        %2679 = vmatprep.subr.mxu0 0.0
        %2680 = vmatpush1.msra.mxu0 0.0
        %2681 = vmatprep.subr.mxu0 0.0
        %2682 = vmatpush1.msra.mxu0 0.0
        %2683 = vmatprep.subr.mxu0 0.0
        %2684 = vmatpush1.msra.mxu0 0.0
        %2685 = vmatprep.subr.mxu0 0.0
        %v2686 = vand.u32 %v375, 4294901760
        %v2687 = vsub.f32 %v375, %v2686
        %v2688 = vand.u32 %v2687, 4294901760
        %v2689 = vsub.f32 %v2687, %v2688
        %v2690 = vand.u32 %v2689, 4294901760
        %2691 = vmatpush1.msra.mxu0 %v2690
        %2692 = vmatprep.subr.mxu0 0.0
        %v2693 = vand.u32 %v374, 4294901760
        %v2694 = vsub.f32 %v374, %v2693
        %v2695 = vand.u32 %v2694, 4294901760
        %v2696 = vsub.f32 %v2694, %v2695
        %v2697 = vand.u32 %v2696, 4294901760
        %2698 = vmatpush1.msra.mxu0 %v2697
        %2699 = vmatprep.subr.mxu0 0.0
        %v2700 = vand.u32 %v373, 4294901760
        %v2701 = vsub.f32 %v373, %v2700
        %v2702 = vand.u32 %v2701, 4294901760
        %v2703 = vsub.f32 %v2701, %v2702
        %v2704 = vand.u32 %v2703, 4294901760
        %2705 = vmatpush1.msra.mxu0 %v2704
        %2706 = vmatprep.subr.mxu0 0.0
        %v2707 = vand.u32 %v372, 4294901760
        %v2708 = vsub.f32 %v372, %v2707
        %v2709 = vand.u32 %v2708, 4294901760
        %v2710 = vsub.f32 %v2708, %v2709
        %v2711 = vand.u32 %v2710, 4294901760
        %2712 = vmatpush1.msra.mxu0 %v2711
        %2713 = vmatprep.subr.mxu0 0.0
        %v2714 = vand.u32 %v371, 4294901760
        %v2715 = vsub.f32 %v371, %v2714
        %v2716 = vand.u32 %v2715, 4294901760
        %v2717 = vsub.f32 %v2715, %v2716
        %v2718 = vand.u32 %v2717, 4294901760
        %2719 = vmatpush1.msra.mxu0 %v2718
        %2720 = vmatprep.subr.mxu0 0.0
        %v2721 = vand.u32 %v370, 4294901760
        %v2722 = vsub.f32 %v370, %v2721
        %v2723 = vand.u32 %v2722, 4294901760
        %v2724 = vsub.f32 %v2722, %v2723
        %v2725 = vand.u32 %v2724, 4294901760
        %2726 = vmatpush1.msra.mxu0 %v2725
        %2727 = vmatprep.subr.mxu0 0.0
        %v2728 = vand.u32 %v369, 4294901760
        %v2729 = vsub.f32 %v369, %v2728
        %v2730 = vand.u32 %v2729, 4294901760
        %v2731 = vsub.f32 %v2729, %v2730
        %v2732 = vand.u32 %v2731, 4294901760
        %2733 = vmatpush1.msra.mxu0 %v2732
        %2734 = vmatprep.subr.mxu0 0.0
        %v2735 = vand.u32 %v368, 4294901760
        %v2736 = vsub.f32 %v368, %v2735
        %v2737 = vand.u32 %v2736, 4294901760
        %v2738 = vsub.f32 %v2736, %v2737
        %v2739 = vand.u32 %v2738, 4294901760
        %2740 = vmatpush1.msra.mxu0 %v2739
        %2741 = vmatprep.subr.mxu0 0.0
        %2742 = vmatpush2.msra.mxu0 0.0
        %2743 = vmatprep.subr.mxu0 0.0
        %2744 = vmatpush2.msra.mxu0 0.0
        %2745 = vmatprep.subr.mxu0 0.0
        %2746 = vmatpush2.msra.mxu0 0.0
        %2747 = vmatprep.subr.mxu0 0.0
        %2748 = vmatpush2.msra.mxu0 0.0
        %2749 = vmatprep.subr.mxu0 0.0
        %2750 = vmatpush2.msra.mxu0 0.0
        %2751 = vmatprep.subr.mxu0 0.0
        %2752 = vmatpush2.msra.mxu0 0.0
        %2753 = vmatprep.subr.mxu0 0.0
        %2754 = vmatpush2.msra.mxu0 0.0
        %2755 = vmatprep.subr.mxu0 0.0
        %2756 = vmatpush2.msra.mxu0 0.0
        %2757 = vmatprep.subr.mxu0 0.0
        %2758 = vmatpush2.msra.mxu0 0.0
        %2759 = vmatprep.subr.mxu0 0.0
        %2760 = vmatpush2.msra.mxu0 0.0
        %2761 = vmatprep.subr.mxu0 0.0
        %2762 = vmatpush2.msra.mxu0 0.0
        %2763 = vmatprep.subr.mxu0 0.0
        %2764 = vmatpush2.msra.mxu0 0.0
        %2765 = vmatprep.subr.mxu0 0.0
        %2766 = vmatpush2.msra.mxu0 0.0
        %2767 = vmatprep.subr.mxu0 0.0
        %2768 = vmatpush2.msra.mxu0 0.0
        %2769 = vmatprep.subr.mxu0 0.0
        %2770 = vmatpush2.msra.mxu0 0.0
        %2771 = vmatprep.subr.mxu0 0.0
        %2772 = vmatpush2.msra.mxu0 0.0
        %2773 = vmatprep.mubr.f32.mxu0 0.0
        %v2774 = vand.u32 %v2584, 4294901760
        %2775 = vmatmul.mubr.f32.gmra.mxu0 %v2774
        %v2776 = vpop.f32.mrf.mxu0
        %v2777 = vadd.f32 %v2666, %v2776
        %v2778 = vpop.f32.mrf.mxu0
        %2779 = vdwg.mxu0
        %2780 = vmatprep.subr.mxu0 0.0
        %2781 = vmatpush1.msra.mxu0 0.0
        %2782 = vmatprep.subr.mxu0 0.0
        %2783 = vmatpush1.msra.mxu0 0.0
        %2784 = vmatprep.subr.mxu0 0.0
        %2785 = vmatpush1.msra.mxu0 0.0
        %2786 = vmatprep.subr.mxu0 0.0
        %2787 = vmatpush1.msra.mxu0 0.0
        %2788 = vmatprep.subr.mxu0 0.0
        %2789 = vmatpush1.msra.mxu0 0.0
        %2790 = vmatprep.subr.mxu0 0.0
        %2791 = vmatpush1.msra.mxu0 0.0
        %2792 = vmatprep.subr.mxu0 0.0
        %2793 = vmatpush1.msra.mxu0 0.0
        %2794 = vmatprep.subr.mxu0 0.0
        %2795 = vmatpush1.msra.mxu0 0.0
        %2796 = vmatprep.subr.mxu0 0.0
        %v2797 = vand.u32 %v375, 4294901760
        %v2798 = vsub.f32 %v375, %v2797
        %2799 = vmatpush1.msra.mxu0 %v2798
        %2800 = vmatprep.subr.mxu0 0.0
        %v2801 = vand.u32 %v374, 4294901760
        %v2802 = vsub.f32 %v374, %v2801
        %2803 = vmatpush1.msra.mxu0 %v2802
        %2804 = vmatprep.subr.mxu0 0.0
        %v2805 = vand.u32 %v373, 4294901760
        %v2806 = vsub.f32 %v373, %v2805
        %2807 = vmatpush1.msra.mxu0 %v2806
        %2808 = vmatprep.subr.mxu0 0.0
        %v2809 = vand.u32 %v372, 4294901760
        %v2810 = vsub.f32 %v372, %v2809
        %2811 = vmatpush1.msra.mxu0 %v2810
        %2812 = vmatprep.subr.mxu0 0.0
        %v2813 = vand.u32 %v371, 4294901760
        %v2814 = vsub.f32 %v371, %v2813
        %2815 = vmatpush1.msra.mxu0 %v2814
        %2816 = vmatprep.subr.mxu0 0.0
        %v2817 = vand.u32 %v370, 4294901760
        %v2818 = vsub.f32 %v370, %v2817
        %2819 = vmatpush1.msra.mxu0 %v2818
        %2820 = vmatprep.subr.mxu0 0.0
        %v2821 = vand.u32 %v369, 4294901760
        %v2822 = vsub.f32 %v369, %v2821
        %2823 = vmatpush1.msra.mxu0 %v2822
        %2824 = vmatprep.subr.mxu0 0.0
        %v2825 = vand.u32 %v368, 4294901760
        %v2826 = vsub.f32 %v368, %v2825
        %2827 = vmatpush1.msra.mxu0 %v2826
        %2828 = vmatprep.subr.mxu0 0.0
        %2829 = vmatpush2.msra.mxu0 0.0
        %2830 = vmatprep.subr.mxu0 0.0
        %2831 = vmatpush2.msra.mxu0 0.0
        %2832 = vmatprep.subr.mxu0 0.0
        %2833 = vmatpush2.msra.mxu0 0.0
        %2834 = vmatprep.subr.mxu0 0.0
        %2835 = vmatpush2.msra.mxu0 0.0
        %2836 = vmatprep.subr.mxu0 0.0
        %2837 = vmatpush2.msra.mxu0 0.0
        %2838 = vmatprep.subr.mxu0 0.0
        %2839 = vmatpush2.msra.mxu0 0.0
        %2840 = vmatprep.subr.mxu0 0.0
        %2841 = vmatpush2.msra.mxu0 0.0
        %2842 = vmatprep.subr.mxu0 0.0
        %2843 = vmatpush2.msra.mxu0 0.0
        %2844 = vmatprep.subr.mxu0 0.0
        %2845 = vmatpush2.msra.mxu0 0.0
        %2846 = vmatprep.subr.mxu0 0.0
        %2847 = vmatpush2.msra.mxu0 0.0
        %2848 = vmatprep.subr.mxu0 0.0
        %2849 = vmatpush2.msra.mxu0 0.0
        %2850 = vmatprep.subr.mxu0 0.0
        %2851 = vmatpush2.msra.mxu0 0.0
        %2852 = vmatprep.subr.mxu0 0.0
        %2853 = vmatpush2.msra.mxu0 0.0
        %2854 = vmatprep.subr.mxu0 0.0
        %2855 = vmatpush2.msra.mxu0 0.0
        %2856 = vmatprep.subr.mxu0 0.0
        %2857 = vmatpush2.msra.mxu0 0.0
        %2858 = vmatprep.subr.mxu0 0.0
        %2859 = vmatpush2.msra.mxu0 0.0
        %2860 = vmatprep.mubr.f32.mxu0 0.0
        %v2861 = vand.u32 %v2584, 4294901760
        %v2862 = vsub.f32 %v2584, %v2861
        %2863 = vmatmul.mubr.f32.gmra.mxu0 %v2862
        %v2864 = vpop.f32.mrf.mxu0
        %v2865 = vadd.f32 %v2777, %v2864
        %v2866 = vpop.f32.mrf.mxu0
        %2867 = vdwg.mxu0
        %2868 = vmatprep.subr.mxu0 0.0
        %2869 = vmatpush1.msra.mxu0 0.0
        %2870 = vmatprep.subr.mxu0 0.0
        %2871 = vmatpush1.msra.mxu0 0.0
        %2872 = vmatprep.subr.mxu0 0.0
        %2873 = vmatpush1.msra.mxu0 0.0
        %2874 = vmatprep.subr.mxu0 0.0
        %2875 = vmatpush1.msra.mxu0 0.0
        %2876 = vmatprep.subr.mxu0 0.0
        %2877 = vmatpush1.msra.mxu0 0.0
        %2878 = vmatprep.subr.mxu0 0.0
        %2879 = vmatpush1.msra.mxu0 0.0
        %2880 = vmatprep.subr.mxu0 0.0
        %2881 = vmatpush1.msra.mxu0 0.0
        %2882 = vmatprep.subr.mxu0 0.0
        %2883 = vmatpush1.msra.mxu0 0.0
        %2884 = vmatprep.subr.mxu0 0.0
        %v2885 = vand.u32 %v375, 4294901760
        %2886 = vmatpush1.msra.mxu0 %v2885
        %2887 = vmatprep.subr.mxu0 0.0
        %v2888 = vand.u32 %v374, 4294901760
        %2889 = vmatpush1.msra.mxu0 %v2888
        %2890 = vmatprep.subr.mxu0 0.0
        %v2891 = vand.u32 %v373, 4294901760
        %2892 = vmatpush1.msra.mxu0 %v2891
        %2893 = vmatprep.subr.mxu0 0.0
        %v2894 = vand.u32 %v372, 4294901760
        %2895 = vmatpush1.msra.mxu0 %v2894
        %2896 = vmatprep.subr.mxu0 0.0
        %v2897 = vand.u32 %v371, 4294901760
        %2898 = vmatpush1.msra.mxu0 %v2897
        %2899 = vmatprep.subr.mxu0 0.0
        %v2900 = vand.u32 %v370, 4294901760
        %2901 = vmatpush1.msra.mxu0 %v2900
        %2902 = vmatprep.subr.mxu0 0.0
        %v2903 = vand.u32 %v369, 4294901760
        %2904 = vmatpush1.msra.mxu0 %v2903
        %2905 = vmatprep.subr.mxu0 0.0
        %v2906 = vand.u32 %v368, 4294901760
        %2907 = vmatpush1.msra.mxu0 %v2906
        %2908 = vmatprep.subr.mxu0 0.0
        %2909 = vmatpush2.msra.mxu0 0.0
        %2910 = vmatprep.subr.mxu0 0.0
        %2911 = vmatpush2.msra.mxu0 0.0
        %2912 = vmatprep.subr.mxu0 0.0
        %2913 = vmatpush2.msra.mxu0 0.0
        %2914 = vmatprep.subr.mxu0 0.0
        %2915 = vmatpush2.msra.mxu0 0.0
        %2916 = vmatprep.subr.mxu0 0.0
        %2917 = vmatpush2.msra.mxu0 0.0
        %2918 = vmatprep.subr.mxu0 0.0
        %2919 = vmatpush2.msra.mxu0 0.0
        %2920 = vmatprep.subr.mxu0 0.0
        %2921 = vmatpush2.msra.mxu0 0.0
        %2922 = vmatprep.subr.mxu0 0.0
        %2923 = vmatpush2.msra.mxu0 0.0
        %2924 = vmatprep.subr.mxu0 0.0
        %2925 = vmatpush2.msra.mxu0 0.0
        %2926 = vmatprep.subr.mxu0 0.0
        %2927 = vmatpush2.msra.mxu0 0.0
        %2928 = vmatprep.subr.mxu0 0.0
        %2929 = vmatpush2.msra.mxu0 0.0
        %2930 = vmatprep.subr.mxu0 0.0
        %2931 = vmatpush2.msra.mxu0 0.0
        %2932 = vmatprep.subr.mxu0 0.0
        %2933 = vmatpush2.msra.mxu0 0.0
        %2934 = vmatprep.subr.mxu0 0.0
        %2935 = vmatpush2.msra.mxu0 0.0
        %2936 = vmatprep.subr.mxu0 0.0
        %2937 = vmatpush2.msra.mxu0 0.0
        %2938 = vmatprep.subr.mxu0 0.0
        %2939 = vmatpush2.msra.mxu0 0.0
        %2940 = vmatprep.mubr.f32.mxu0 0.0
        %v2941 = vand.u32 %v2584, 4294901760
        %v2942 = vsub.f32 %v2584, %v2941
        %v2943 = vand.u32 %v2942, 4294901760
        %2944 = vmatmul.mubr.f32.gmra.mxu0 %v2943
        %v2945 = vpop.f32.mrf.mxu0
        %v2946 = vadd.f32 %v2865, %v2945
        %v2947 = vpop.f32.mrf.mxu0
        %2948 = vdwg.mxu0
        %2949 = vmatprep.subr.mxu0 0.0
        %2950 = vmatpush1.msra.mxu0 0.0
        %2951 = vmatprep.subr.mxu0 0.0
        %2952 = vmatpush1.msra.mxu0 0.0
        %2953 = vmatprep.subr.mxu0 0.0
        %2954 = vmatpush1.msra.mxu0 0.0
        %2955 = vmatprep.subr.mxu0 0.0
        %2956 = vmatpush1.msra.mxu0 0.0
        %2957 = vmatprep.subr.mxu0 0.0
        %2958 = vmatpush1.msra.mxu0 0.0
        %2959 = vmatprep.subr.mxu0 0.0
        %2960 = vmatpush1.msra.mxu0 0.0
        %2961 = vmatprep.subr.mxu0 0.0
        %2962 = vmatpush1.msra.mxu0 0.0
        %2963 = vmatprep.subr.mxu0 0.0
        %2964 = vmatpush1.msra.mxu0 0.0
        %2965 = vmatprep.subr.mxu0 0.0
        %v2966 = vand.u32 %v375, 4294901760
        %v2967 = vsub.f32 %v375, %v2966
        %v2968 = vand.u32 %v2967, 4294901760
        %2969 = vmatpush1.msra.mxu0 %v2968
        %2970 = vmatprep.subr.mxu0 0.0
        %v2971 = vand.u32 %v374, 4294901760
        %v2972 = vsub.f32 %v374, %v2971
        %v2973 = vand.u32 %v2972, 4294901760
        %2974 = vmatpush1.msra.mxu0 %v2973
        %2975 = vmatprep.subr.mxu0 0.0
        %v2976 = vand.u32 %v373, 4294901760
        %v2977 = vsub.f32 %v373, %v2976
        %v2978 = vand.u32 %v2977, 4294901760
        %2979 = vmatpush1.msra.mxu0 %v2978
        %2980 = vmatprep.subr.mxu0 0.0
        %v2981 = vand.u32 %v372, 4294901760
        %v2982 = vsub.f32 %v372, %v2981
        %v2983 = vand.u32 %v2982, 4294901760
        %2984 = vmatpush1.msra.mxu0 %v2983
        %2985 = vmatprep.subr.mxu0 0.0
        %v2986 = vand.u32 %v371, 4294901760
        %v2987 = vsub.f32 %v371, %v2986
        %v2988 = vand.u32 %v2987, 4294901760
        %2989 = vmatpush1.msra.mxu0 %v2988
        %2990 = vmatprep.subr.mxu0 0.0
        %v2991 = vand.u32 %v370, 4294901760
        %v2992 = vsub.f32 %v370, %v2991
        %v2993 = vand.u32 %v2992, 4294901760
        %2994 = vmatpush1.msra.mxu0 %v2993
        %2995 = vmatprep.subr.mxu0 0.0
        %v2996 = vand.u32 %v369, 4294901760
        %v2997 = vsub.f32 %v369, %v2996
        %v2998 = vand.u32 %v2997, 4294901760
        %2999 = vmatpush1.msra.mxu0 %v2998
        %3000 = vmatprep.subr.mxu0 0.0
        %v3001 = vand.u32 %v368, 4294901760
        %v3002 = vsub.f32 %v368, %v3001
        %v3003 = vand.u32 %v3002, 4294901760
        %3004 = vmatpush1.msra.mxu0 %v3003
        %3005 = vmatprep.subr.mxu0 0.0
        %3006 = vmatpush2.msra.mxu0 0.0
        %3007 = vmatprep.subr.mxu0 0.0
        %3008 = vmatpush2.msra.mxu0 0.0
        %3009 = vmatprep.subr.mxu0 0.0
        %3010 = vmatpush2.msra.mxu0 0.0
        %3011 = vmatprep.subr.mxu0 0.0
        %3012 = vmatpush2.msra.mxu0 0.0
        %3013 = vmatprep.subr.mxu0 0.0
        %3014 = vmatpush2.msra.mxu0 0.0
        %3015 = vmatprep.subr.mxu0 0.0
        %3016 = vmatpush2.msra.mxu0 0.0
        %3017 = vmatprep.subr.mxu0 0.0
        %3018 = vmatpush2.msra.mxu0 0.0
        %3019 = vmatprep.subr.mxu0 0.0
        %3020 = vmatpush2.msra.mxu0 0.0
        %3021 = vmatprep.subr.mxu0 0.0
        %3022 = vmatpush2.msra.mxu0 0.0
        %3023 = vmatprep.subr.mxu0 0.0
        %3024 = vmatpush2.msra.mxu0 0.0
        %3025 = vmatprep.subr.mxu0 0.0
        %3026 = vmatpush2.msra.mxu0 0.0
        %3027 = vmatprep.subr.mxu0 0.0
        %3028 = vmatpush2.msra.mxu0 0.0
        %3029 = vmatprep.subr.mxu0 0.0
        %3030 = vmatpush2.msra.mxu0 0.0
        %3031 = vmatprep.subr.mxu0 0.0
        %3032 = vmatpush2.msra.mxu0 0.0
        %3033 = vmatprep.subr.mxu0 0.0
        %3034 = vmatpush2.msra.mxu0 0.0
        %3035 = vmatprep.subr.mxu0 0.0
        %3036 = vmatpush2.msra.mxu0 0.0
        %3037 = vmatprep.mubr.f32.mxu0 0.0
        %v3038 = vand.u32 %v2584, 4294901760
        %3039 = vmatmul.mubr.f32.gmra.mxu0 %v3038
        %v3040 = vpop.f32.mrf.mxu0
        %v3041 = vadd.f32 %v2946, %v3040
        %v3042 = vpop.f32.mrf.mxu0
        %3043 = vdwg.mxu0
        %3044 = vmatprep.subr.mxu0 0.0
        %3045 = vmatpush1.msra.mxu0 0.0
        %3046 = vmatprep.subr.mxu0 0.0
        %3047 = vmatpush1.msra.mxu0 0.0
        %3048 = vmatprep.subr.mxu0 0.0
        %3049 = vmatpush1.msra.mxu0 0.0
        %3050 = vmatprep.subr.mxu0 0.0
        %3051 = vmatpush1.msra.mxu0 0.0
        %3052 = vmatprep.subr.mxu0 0.0
        %3053 = vmatpush1.msra.mxu0 0.0
        %3054 = vmatprep.subr.mxu0 0.0
        %3055 = vmatpush1.msra.mxu0 0.0
        %3056 = vmatprep.subr.mxu0 0.0
        %3057 = vmatpush1.msra.mxu0 0.0
        %3058 = vmatprep.subr.mxu0 0.0
        %3059 = vmatpush1.msra.mxu0 0.0
        %3060 = vmatprep.subr.mxu0 0.0
        %v3061 = vand.u32 %v375, 4294901760
        %3062 = vmatpush1.msra.mxu0 %v3061
        %3063 = vmatprep.subr.mxu0 0.0
        %v3064 = vand.u32 %v374, 4294901760
        %3065 = vmatpush1.msra.mxu0 %v3064
        %3066 = vmatprep.subr.mxu0 0.0
        %v3067 = vand.u32 %v373, 4294901760
        %3068 = vmatpush1.msra.mxu0 %v3067
        %3069 = vmatprep.subr.mxu0 0.0
        %v3070 = vand.u32 %v372, 4294901760
        %3071 = vmatpush1.msra.mxu0 %v3070
        %3072 = vmatprep.subr.mxu0 0.0
        %v3073 = vand.u32 %v371, 4294901760
        %3074 = vmatpush1.msra.mxu0 %v3073
        %3075 = vmatprep.subr.mxu0 0.0
        %v3076 = vand.u32 %v370, 4294901760
        %3077 = vmatpush1.msra.mxu0 %v3076
        %3078 = vmatprep.subr.mxu0 0.0
        %v3079 = vand.u32 %v369, 4294901760
        %3080 = vmatpush1.msra.mxu0 %v3079
        %3081 = vmatprep.subr.mxu0 0.0
        %v3082 = vand.u32 %v368, 4294901760
        %3083 = vmatpush1.msra.mxu0 %v3082
        %3084 = vmatprep.subr.mxu0 0.0
        %3085 = vmatpush2.msra.mxu0 0.0
        %3086 = vmatprep.subr.mxu0 0.0
        %3087 = vmatpush2.msra.mxu0 0.0
        %3088 = vmatprep.subr.mxu0 0.0
        %3089 = vmatpush2.msra.mxu0 0.0
        %3090 = vmatprep.subr.mxu0 0.0
        %3091 = vmatpush2.msra.mxu0 0.0
        %3092 = vmatprep.subr.mxu0 0.0
        %3093 = vmatpush2.msra.mxu0 0.0
        %3094 = vmatprep.subr.mxu0 0.0
        %3095 = vmatpush2.msra.mxu0 0.0
        %3096 = vmatprep.subr.mxu0 0.0
        %3097 = vmatpush2.msra.mxu0 0.0
        %3098 = vmatprep.subr.mxu0 0.0
        %3099 = vmatpush2.msra.mxu0 0.0
        %3100 = vmatprep.subr.mxu0 0.0
        %3101 = vmatpush2.msra.mxu0 0.0
        %3102 = vmatprep.subr.mxu0 0.0
        %3103 = vmatpush2.msra.mxu0 0.0
        %3104 = vmatprep.subr.mxu0 0.0
        %3105 = vmatpush2.msra.mxu0 0.0
        %3106 = vmatprep.subr.mxu0 0.0
        %3107 = vmatpush2.msra.mxu0 0.0
        %3108 = vmatprep.subr.mxu0 0.0
        %3109 = vmatpush2.msra.mxu0 0.0
        %3110 = vmatprep.subr.mxu0 0.0
        %3111 = vmatpush2.msra.mxu0 0.0
        %3112 = vmatprep.subr.mxu0 0.0
        %3113 = vmatpush2.msra.mxu0 0.0
        %3114 = vmatprep.subr.mxu0 0.0
        %3115 = vmatpush2.msra.mxu0 0.0
        %3116 = vmatprep.mubr.f32.mxu0 0.0
        %v3117 = vand.u32 %v2584, 4294901760
        %3118 = vmatmul.mubr.f32.gmra.mxu0 %v3117
        %v3119 = vpop.f32.mrf.mxu0
        %v3120 = vadd.f32 %v3041, %v3119
        %v3121 = vpop.f32.mrf.mxu0
        %3122 = vdwg.mxu0
        %vm3123 = vcmask 64512
        %v3125 = vsel %vm3123, %v366, 0
        %v3128 = vsel %vm3123, %v367, 0
        %3130 = vmatprep.subr.mxu0 0.0
        %3131 = vmatpush1.msra.mxu0 0.0
        %3132 = vmatprep.subr.mxu0 0.0
        %3133 = vmatpush1.msra.mxu0 0.0
        %3134 = vmatprep.subr.mxu0 0.0
        %3135 = vmatpush1.msra.mxu0 0.0
        %3136 = vmatprep.subr.mxu0 0.0
        %3137 = vmatpush1.msra.mxu0 0.0
        %3138 = vmatprep.subr.mxu0 0.0
        %3139 = vmatpush1.msra.mxu0 0.0
        %3140 = vmatprep.subr.mxu0 0.0
        %3141 = vmatpush1.msra.mxu0 0.0
        %3142 = vmatprep.subr.mxu0 0.0
        %3143 = vmatpush1.msra.mxu0 0.0
        %3144 = vmatprep.subr.mxu0 0.0
        %3145 = vmatpush1.msra.mxu0 0.0
        %3146 = vmatprep.subr.mxu0 0.0
        %3147 = vmatpush1.msra.mxu0 0.0
        %3148 = vmatprep.subr.mxu0 0.0
        %3149 = vmatpush1.msra.mxu0 0.0
        %3150 = vmatprep.subr.mxu0 0.0
        %3151 = vmatpush1.msra.mxu0 0.0
        %3152 = vmatprep.subr.mxu0 0.0
        %3153 = vmatpush1.msra.mxu0 0.0
        %3154 = vmatprep.subr.mxu0 0.0
        %3155 = vmatpush1.msra.mxu0 0.0
        %3156 = vmatprep.subr.mxu0 0.0
        %3157 = vmatpush1.msra.mxu0 0.0
        %3158 = vmatprep.subr.mxu0 0.0
        %3159 = vmatpush1.msra.mxu0 0.0
        %3160 = vmatprep.subr.mxu0 0.0
        %v3161 = vand.u32 %v3120, 4294901760
        %3162 = vmatpush1.msra.mxu0 %v3161
        %3163 = vmatprep.subr.mxu0 0.0
        %3164 = vmatpush2.msra.mxu0 0.0
        %3165 = vmatprep.subr.mxu0 0.0
        %3166 = vmatpush2.msra.mxu0 0.0
        %3167 = vmatprep.subr.mxu0 0.0
        %3168 = vmatpush2.msra.mxu0 0.0
        %3169 = vmatprep.subr.mxu0 0.0
        %3170 = vmatpush2.msra.mxu0 0.0
        %3171 = vmatprep.subr.mxu0 0.0
        %3172 = vmatpush2.msra.mxu0 0.0
        %3173 = vmatprep.subr.mxu0 0.0
        %3174 = vmatpush2.msra.mxu0 0.0
        %3175 = vmatprep.subr.mxu0 0.0
        %3176 = vmatpush2.msra.mxu0 0.0
        %3177 = vmatprep.subr.mxu0 0.0
        %3178 = vmatpush2.msra.mxu0 0.0
        %3179 = vmatprep.subr.mxu0 0.0
        %3180 = vmatpush2.msra.mxu0 0.0
        %3181 = vmatprep.subr.mxu0 0.0
        %3182 = vmatpush2.msra.mxu0 0.0
        %3183 = vmatprep.subr.mxu0 0.0
        %3184 = vmatpush2.msra.mxu0 0.0
        %3185 = vmatprep.subr.mxu0 0.0
        %3186 = vmatpush2.msra.mxu0 0.0
        %3187 = vmatprep.subr.mxu0 0.0
        %3188 = vmatpush2.msra.mxu0 0.0
        %3189 = vmatprep.subr.mxu0 0.0
        %3190 = vmatpush2.msra.mxu0 0.0
        %3191 = vmatprep.subr.mxu0 0.0
        %3192 = vmatpush2.msra.mxu0 0.0
        %3193 = vmatprep.subr.mxu0 0.0
        %3194 = vmatpush2.msra.mxu0 0.0
        %3195 = vmatprep.mubr.f32.mxu0 0.0
        %v3196 = vand.u32 %v3125, 4294901760
        %v3197 = vsub.f32 %v3125, %v3196
        %v3198 = vand.u32 %v3197, 4294901760
        %v3199 = vsub.f32 %v3197, %v3198
        %v3200 = vand.u32 %v3199, 4294901760
        %3201 = vmatmul.mubr.f32.gmra.mxu0 %v3200
        %v3202 = vpop.f32.mrf.mxu0
        %v3203 = vadd.f32 0.0, %v3202
        %v3204 = vpop.f32.mrf.mxu0
        %3205 = vmatprep.mubr.f32.mxu0 0.0
        %v3206 = vand.u32 %v3128, 4294901760
        %v3207 = vsub.f32 %v3128, %v3206
        %v3208 = vand.u32 %v3207, 4294901760
        %v3209 = vsub.f32 %v3207, %v3208
        %v3210 = vand.u32 %v3209, 4294901760
        %3211 = vmatmul.mubr.f32.gmra.mxu0 %v3210
        %v3212 = vpop.f32.mrf.mxu0
        %v3213 = vadd.f32 0.0, %v3212
        %v3214 = vpop.f32.mrf.mxu0
        %3215 = vdwg.mxu0
        %3216 = vmatprep.subr.mxu0 0.0
        %3217 = vmatpush1.msra.mxu0 0.0
        %3218 = vmatprep.subr.mxu0 0.0
        %3219 = vmatpush1.msra.mxu0 0.0
        %3220 = vmatprep.subr.mxu0 0.0
        %3221 = vmatpush1.msra.mxu0 0.0
        %3222 = vmatprep.subr.mxu0 0.0
        %3223 = vmatpush1.msra.mxu0 0.0
        %3224 = vmatprep.subr.mxu0 0.0
        %3225 = vmatpush1.msra.mxu0 0.0
        %3226 = vmatprep.subr.mxu0 0.0
        %3227 = vmatpush1.msra.mxu0 0.0
        %3228 = vmatprep.subr.mxu0 0.0
        %3229 = vmatpush1.msra.mxu0 0.0
        %3230 = vmatprep.subr.mxu0 0.0
        %3231 = vmatpush1.msra.mxu0 0.0
        %3232 = vmatprep.subr.mxu0 0.0
        %3233 = vmatpush1.msra.mxu0 0.0
        %3234 = vmatprep.subr.mxu0 0.0
        %3235 = vmatpush1.msra.mxu0 0.0
        %3236 = vmatprep.subr.mxu0 0.0
        %3237 = vmatpush1.msra.mxu0 0.0
        %3238 = vmatprep.subr.mxu0 0.0
        %3239 = vmatpush1.msra.mxu0 0.0
        %3240 = vmatprep.subr.mxu0 0.0
        %3241 = vmatpush1.msra.mxu0 0.0
        %3242 = vmatprep.subr.mxu0 0.0
        %3243 = vmatpush1.msra.mxu0 0.0
        %3244 = vmatprep.subr.mxu0 0.0
        %3245 = vmatpush1.msra.mxu0 0.0
        %3246 = vmatprep.subr.mxu0 0.0
        %v3247 = vand.u32 %v3120, 4294901760
        %v3248 = vsub.f32 %v3120, %v3247
        %v3249 = vand.u32 %v3248, 4294901760
        %v3250 = vsub.f32 %v3248, %v3249
        %v3251 = vand.u32 %v3250, 4294901760
        %3252 = vmatpush1.msra.mxu0 %v3251
        %3253 = vmatprep.subr.mxu0 0.0
        %3254 = vmatpush2.msra.mxu0 0.0
        %3255 = vmatprep.subr.mxu0 0.0
        %3256 = vmatpush2.msra.mxu0 0.0
        %3257 = vmatprep.subr.mxu0 0.0
        %3258 = vmatpush2.msra.mxu0 0.0
        %3259 = vmatprep.subr.mxu0 0.0
        %3260 = vmatpush2.msra.mxu0 0.0
        %3261 = vmatprep.subr.mxu0 0.0
        %3262 = vmatpush2.msra.mxu0 0.0
        %3263 = vmatprep.subr.mxu0 0.0
        %3264 = vmatpush2.msra.mxu0 0.0
        %3265 = vmatprep.subr.mxu0 0.0
        %3266 = vmatpush2.msra.mxu0 0.0
        %3267 = vmatprep.subr.mxu0 0.0
        %3268 = vmatpush2.msra.mxu0 0.0
        %3269 = vmatprep.subr.mxu0 0.0
        %3270 = vmatpush2.msra.mxu0 0.0
        %3271 = vmatprep.subr.mxu0 0.0
        %3272 = vmatpush2.msra.mxu0 0.0
        %3273 = vmatprep.subr.mxu0 0.0
        %3274 = vmatpush2.msra.mxu0 0.0
        %3275 = vmatprep.subr.mxu0 0.0
        %3276 = vmatpush2.msra.mxu0 0.0
        %3277 = vmatprep.subr.mxu0 0.0
        %3278 = vmatpush2.msra.mxu0 0.0
        %3279 = vmatprep.subr.mxu0 0.0
        %3280 = vmatpush2.msra.mxu0 0.0
        %3281 = vmatprep.subr.mxu0 0.0
        %3282 = vmatpush2.msra.mxu0 0.0
        %3283 = vmatprep.subr.mxu0 0.0
        %3284 = vmatpush2.msra.mxu0 0.0
        %3285 = vmatprep.mubr.f32.mxu0 0.0
        %v3286 = vand.u32 %v3125, 4294901760
        %3287 = vmatmul.mubr.f32.gmra.mxu0 %v3286
        %v3288 = vpop.f32.mrf.mxu0
        %v3289 = vadd.f32 %v3203, %v3288
        %v3290 = vpop.f32.mrf.mxu0
        %3291 = vmatprep.mubr.f32.mxu0 0.0
        %v3292 = vand.u32 %v3128, 4294901760
        %3293 = vmatmul.mubr.f32.gmra.mxu0 %v3292
        %v3294 = vpop.f32.mrf.mxu0
        %v3295 = vadd.f32 %v3213, %v3294
        %v3296 = vpop.f32.mrf.mxu0
        %3297 = vdwg.mxu0
        %3298 = vmatprep.subr.mxu0 0.0
        %3299 = vmatpush1.msra.mxu0 0.0
        %3300 = vmatprep.subr.mxu0 0.0
        %3301 = vmatpush1.msra.mxu0 0.0
        %3302 = vmatprep.subr.mxu0 0.0
        %3303 = vmatpush1.msra.mxu0 0.0
        %3304 = vmatprep.subr.mxu0 0.0
        %3305 = vmatpush1.msra.mxu0 0.0
        %3306 = vmatprep.subr.mxu0 0.0
        %3307 = vmatpush1.msra.mxu0 0.0
        %3308 = vmatprep.subr.mxu0 0.0
        %3309 = vmatpush1.msra.mxu0 0.0
        %3310 = vmatprep.subr.mxu0 0.0
        %3311 = vmatpush1.msra.mxu0 0.0
        %3312 = vmatprep.subr.mxu0 0.0
        %3313 = vmatpush1.msra.mxu0 0.0
        %3314 = vmatprep.subr.mxu0 0.0
        %3315 = vmatpush1.msra.mxu0 0.0
        %3316 = vmatprep.subr.mxu0 0.0
        %3317 = vmatpush1.msra.mxu0 0.0
        %3318 = vmatprep.subr.mxu0 0.0
        %3319 = vmatpush1.msra.mxu0 0.0
        %3320 = vmatprep.subr.mxu0 0.0
        %3321 = vmatpush1.msra.mxu0 0.0
        %3322 = vmatprep.subr.mxu0 0.0
        %3323 = vmatpush1.msra.mxu0 0.0
        %3324 = vmatprep.subr.mxu0 0.0
        %3325 = vmatpush1.msra.mxu0 0.0
        %3326 = vmatprep.subr.mxu0 0.0
        %3327 = vmatpush1.msra.mxu0 0.0
        %3328 = vmatprep.subr.mxu0 0.0
        %v3329 = vand.u32 %v3120, 4294901760
        %v3330 = vsub.f32 %v3120, %v3329
        %3331 = vmatpush1.msra.mxu0 %v3330
        %3332 = vmatprep.subr.mxu0 0.0
        %3333 = vmatpush2.msra.mxu0 0.0
        %3334 = vmatprep.subr.mxu0 0.0
        %3335 = vmatpush2.msra.mxu0 0.0
        %3336 = vmatprep.subr.mxu0 0.0
        %3337 = vmatpush2.msra.mxu0 0.0
        %3338 = vmatprep.subr.mxu0 0.0
        %3339 = vmatpush2.msra.mxu0 0.0
        %3340 = vmatprep.subr.mxu0 0.0
        %3341 = vmatpush2.msra.mxu0 0.0
        %3342 = vmatprep.subr.mxu0 0.0
        %3343 = vmatpush2.msra.mxu0 0.0
        %3344 = vmatprep.subr.mxu0 0.0
        %3345 = vmatpush2.msra.mxu0 0.0
        %3346 = vmatprep.subr.mxu0 0.0
        %3347 = vmatpush2.msra.mxu0 0.0
        %3348 = vmatprep.subr.mxu0 0.0
        %3349 = vmatpush2.msra.mxu0 0.0
        %3350 = vmatprep.subr.mxu0 0.0
        %3351 = vmatpush2.msra.mxu0 0.0
        %3352 = vmatprep.subr.mxu0 0.0
        %3353 = vmatpush2.msra.mxu0 0.0
        %3354 = vmatprep.subr.mxu0 0.0
        %3355 = vmatpush2.msra.mxu0 0.0
        %3356 = vmatprep.subr.mxu0 0.0
        %3357 = vmatpush2.msra.mxu0 0.0
        %3358 = vmatprep.subr.mxu0 0.0
        %3359 = vmatpush2.msra.mxu0 0.0
        %3360 = vmatprep.subr.mxu0 0.0
        %3361 = vmatpush2.msra.mxu0 0.0
        %3362 = vmatprep.subr.mxu0 0.0
        %3363 = vmatpush2.msra.mxu0 0.0
        %3364 = vmatprep.mubr.f32.mxu0 0.0
        %v3365 = vand.u32 %v3125, 4294901760
        %v3366 = vsub.f32 %v3125, %v3365
        %3367 = vmatmul.mubr.f32.gmra.mxu0 %v3366
        %v3368 = vpop.f32.mrf.mxu0
        %v3369 = vadd.f32 %v3289, %v3368
        %v3370 = vpop.f32.mrf.mxu0
        %3371 = vmatprep.mubr.f32.mxu0 0.0
        %v3372 = vand.u32 %v3128, 4294901760
        %v3373 = vsub.f32 %v3128, %v3372
        %3374 = vmatmul.mubr.f32.gmra.mxu0 %v3373
        %v3375 = vpop.f32.mrf.mxu0
        %v3376 = vadd.f32 %v3295, %v3375
        %v3377 = vpop.f32.mrf.mxu0
        %3378 = vdwg.mxu0
        %3379 = vmatprep.subr.mxu0 0.0
        %3380 = vmatpush1.msra.mxu0 0.0
        %3381 = vmatprep.subr.mxu0 0.0
        %3382 = vmatpush1.msra.mxu0 0.0
        %3383 = vmatprep.subr.mxu0 0.0
        %3384 = vmatpush1.msra.mxu0 0.0
        %3385 = vmatprep.subr.mxu0 0.0
        %3386 = vmatpush1.msra.mxu0 0.0
        %3387 = vmatprep.subr.mxu0 0.0
        %3388 = vmatpush1.msra.mxu0 0.0
        %3389 = vmatprep.subr.mxu0 0.0
        %3390 = vmatpush1.msra.mxu0 0.0
        %3391 = vmatprep.subr.mxu0 0.0
        %3392 = vmatpush1.msra.mxu0 0.0
        %3393 = vmatprep.subr.mxu0 0.0
        %3394 = vmatpush1.msra.mxu0 0.0
        %3395 = vmatprep.subr.mxu0 0.0
        %3396 = vmatpush1.msra.mxu0 0.0
        %3397 = vmatprep.subr.mxu0 0.0
        %3398 = vmatpush1.msra.mxu0 0.0
        %3399 = vmatprep.subr.mxu0 0.0
        %3400 = vmatpush1.msra.mxu0 0.0
        %3401 = vmatprep.subr.mxu0 0.0
        %3402 = vmatpush1.msra.mxu0 0.0
        %3403 = vmatprep.subr.mxu0 0.0
        %3404 = vmatpush1.msra.mxu0 0.0
        %3405 = vmatprep.subr.mxu0 0.0
        %3406 = vmatpush1.msra.mxu0 0.0
        %3407 = vmatprep.subr.mxu0 0.0
        %3408 = vmatpush1.msra.mxu0 0.0
        %3409 = vmatprep.subr.mxu0 0.0
        %v3410 = vand.u32 %v3120, 4294901760
        %3411 = vmatpush1.msra.mxu0 %v3410
        %3412 = vmatprep.subr.mxu0 0.0
        %3413 = vmatpush2.msra.mxu0 0.0
        %3414 = vmatprep.subr.mxu0 0.0
        %3415 = vmatpush2.msra.mxu0 0.0
        %3416 = vmatprep.subr.mxu0 0.0
        %3417 = vmatpush2.msra.mxu0 0.0
        %3418 = vmatprep.subr.mxu0 0.0
        %3419 = vmatpush2.msra.mxu0 0.0
        %3420 = vmatprep.subr.mxu0 0.0
        %3421 = vmatpush2.msra.mxu0 0.0
        %3422 = vmatprep.subr.mxu0 0.0
        %3423 = vmatpush2.msra.mxu0 0.0
        %3424 = vmatprep.subr.mxu0 0.0
        %3425 = vmatpush2.msra.mxu0 0.0
        %3426 = vmatprep.subr.mxu0 0.0
        %3427 = vmatpush2.msra.mxu0 0.0
        %3428 = vmatprep.subr.mxu0 0.0
        %3429 = vmatpush2.msra.mxu0 0.0
        %3430 = vmatprep.subr.mxu0 0.0
        %3431 = vmatpush2.msra.mxu0 0.0
        %3432 = vmatprep.subr.mxu0 0.0
        %3433 = vmatpush2.msra.mxu0 0.0
        %3434 = vmatprep.subr.mxu0 0.0
        %3435 = vmatpush2.msra.mxu0 0.0
        %3436 = vmatprep.subr.mxu0 0.0
        %3437 = vmatpush2.msra.mxu0 0.0
        %3438 = vmatprep.subr.mxu0 0.0
        %3439 = vmatpush2.msra.mxu0 0.0
        %3440 = vmatprep.subr.mxu0 0.0
        %3441 = vmatpush2.msra.mxu0 0.0
        %3442 = vmatprep.subr.mxu0 0.0
        %3443 = vmatpush2.msra.mxu0 0.0
        %3444 = vmatprep.mubr.f32.mxu0 0.0
        %v3445 = vand.u32 %v3125, 4294901760
        %v3446 = vsub.f32 %v3125, %v3445
        %v3447 = vand.u32 %v3446, 4294901760
        %3448 = vmatmul.mubr.f32.gmra.mxu0 %v3447
        %v3449 = vpop.f32.mrf.mxu0
        %v3450 = vadd.f32 %v3369, %v3449
        %v3451 = vpop.f32.mrf.mxu0
        %3452 = vmatprep.mubr.f32.mxu0 0.0
        %v3453 = vand.u32 %v3128, 4294901760
        %v3454 = vsub.f32 %v3128, %v3453
        %v3455 = vand.u32 %v3454, 4294901760
        %3456 = vmatmul.mubr.f32.gmra.mxu0 %v3455
        %v3457 = vpop.f32.mrf.mxu0
        %v3458 = vadd.f32 %v3376, %v3457
        %v3459 = vpop.f32.mrf.mxu0
        %3460 = vdwg.mxu0
        %3461 = vmatprep.subr.mxu0 0.0
        %3462 = vmatpush1.msra.mxu0 0.0
        %3463 = vmatprep.subr.mxu0 0.0
        %3464 = vmatpush1.msra.mxu0 0.0
        %3465 = vmatprep.subr.mxu0 0.0
        %3466 = vmatpush1.msra.mxu0 0.0
        %3467 = vmatprep.subr.mxu0 0.0
        %3468 = vmatpush1.msra.mxu0 0.0
        %3469 = vmatprep.subr.mxu0 0.0
        %3470 = vmatpush1.msra.mxu0 0.0
        %3471 = vmatprep.subr.mxu0 0.0
        %3472 = vmatpush1.msra.mxu0 0.0
        %3473 = vmatprep.subr.mxu0 0.0
        %3474 = vmatpush1.msra.mxu0 0.0
        %3475 = vmatprep.subr.mxu0 0.0
        %3476 = vmatpush1.msra.mxu0 0.0
        %3477 = vmatprep.subr.mxu0 0.0
        %3478 = vmatpush1.msra.mxu0 0.0
        %3479 = vmatprep.subr.mxu0 0.0
        %3480 = vmatpush1.msra.mxu0 0.0
        %3481 = vmatprep.subr.mxu0 0.0
        %3482 = vmatpush1.msra.mxu0 0.0
        %3483 = vmatprep.subr.mxu0 0.0
        %3484 = vmatpush1.msra.mxu0 0.0
        %3485 = vmatprep.subr.mxu0 0.0
        %3486 = vmatpush1.msra.mxu0 0.0
        %3487 = vmatprep.subr.mxu0 0.0
        %3488 = vmatpush1.msra.mxu0 0.0
        %3489 = vmatprep.subr.mxu0 0.0
        %3490 = vmatpush1.msra.mxu0 0.0
        %3491 = vmatprep.subr.mxu0 0.0
        %v3492 = vand.u32 %v3120, 4294901760
        %v3493 = vsub.f32 %v3120, %v3492
        %v3494 = vand.u32 %v3493, 4294901760
        %3495 = vmatpush1.msra.mxu0 %v3494
        %3496 = vmatprep.subr.mxu0 0.0
        %3497 = vmatpush2.msra.mxu0 0.0
        %3498 = vmatprep.subr.mxu0 0.0
        %3499 = vmatpush2.msra.mxu0 0.0
        %3500 = vmatprep.subr.mxu0 0.0
        %3501 = vmatpush2.msra.mxu0 0.0
        %3502 = vmatprep.subr.mxu0 0.0
        %3503 = vmatpush2.msra.mxu0 0.0
        %3504 = vmatprep.subr.mxu0 0.0
        %3505 = vmatpush2.msra.mxu0 0.0
        %3506 = vmatprep.subr.mxu0 0.0
        %3507 = vmatpush2.msra.mxu0 0.0
        %3508 = vmatprep.subr.mxu0 0.0
        %3509 = vmatpush2.msra.mxu0 0.0
        %3510 = vmatprep.subr.mxu0 0.0
        %3511 = vmatpush2.msra.mxu0 0.0
        %3512 = vmatprep.subr.mxu0 0.0
        %3513 = vmatpush2.msra.mxu0 0.0
        %3514 = vmatprep.subr.mxu0 0.0
        %3515 = vmatpush2.msra.mxu0 0.0
        %3516 = vmatprep.subr.mxu0 0.0
        %3517 = vmatpush2.msra.mxu0 0.0
        %3518 = vmatprep.subr.mxu0 0.0
        %3519 = vmatpush2.msra.mxu0 0.0
        %3520 = vmatprep.subr.mxu0 0.0
        %3521 = vmatpush2.msra.mxu0 0.0
        %3522 = vmatprep.subr.mxu0 0.0
        %3523 = vmatpush2.msra.mxu0 0.0
        %3524 = vmatprep.subr.mxu0 0.0
        %3525 = vmatpush2.msra.mxu0 0.0
        %3526 = vmatprep.subr.mxu0 0.0
        %3527 = vmatpush2.msra.mxu0 0.0
        %3528 = vmatprep.mubr.f32.mxu0 0.0
        %v3529 = vand.u32 %v3125, 4294901760
        %3530 = vmatmul.mubr.f32.gmra.mxu0 %v3529
        %v3531 = vpop.f32.mrf.mxu0
        %v3532 = vadd.f32 %v3450, %v3531
        %v3533 = vpop.f32.mrf.mxu0
        %3534 = vmatprep.mubr.f32.mxu0 0.0
        %v3535 = vand.u32 %v3128, 4294901760
        %3536 = vmatmul.mubr.f32.gmra.mxu0 %v3535
        %v3537 = vpop.f32.mrf.mxu0
        %v3538 = vadd.f32 %v3458, %v3537
        %v3539 = vpop.f32.mrf.mxu0
        %3540 = vdwg.mxu0
        %3541 = vmatprep.subr.mxu0 0.0
        %3542 = vmatpush1.msra.mxu0 0.0
        %3543 = vmatprep.subr.mxu0 0.0
        %3544 = vmatpush1.msra.mxu0 0.0
        %3545 = vmatprep.subr.mxu0 0.0
        %3546 = vmatpush1.msra.mxu0 0.0
        %3547 = vmatprep.subr.mxu0 0.0
        %3548 = vmatpush1.msra.mxu0 0.0
        %3549 = vmatprep.subr.mxu0 0.0
        %3550 = vmatpush1.msra.mxu0 0.0
        %3551 = vmatprep.subr.mxu0 0.0
        %3552 = vmatpush1.msra.mxu0 0.0
        %3553 = vmatprep.subr.mxu0 0.0
        %3554 = vmatpush1.msra.mxu0 0.0
        %3555 = vmatprep.subr.mxu0 0.0
        %3556 = vmatpush1.msra.mxu0 0.0
        %3557 = vmatprep.subr.mxu0 0.0
        %3558 = vmatpush1.msra.mxu0 0.0
        %3559 = vmatprep.subr.mxu0 0.0
        %3560 = vmatpush1.msra.mxu0 0.0
        %3561 = vmatprep.subr.mxu0 0.0
        %3562 = vmatpush1.msra.mxu0 0.0
        %3563 = vmatprep.subr.mxu0 0.0
        %3564 = vmatpush1.msra.mxu0 0.0
        %3565 = vmatprep.subr.mxu0 0.0
        %3566 = vmatpush1.msra.mxu0 0.0
        %3567 = vmatprep.subr.mxu0 0.0
        %3568 = vmatpush1.msra.mxu0 0.0
        %3569 = vmatprep.subr.mxu0 0.0
        %3570 = vmatpush1.msra.mxu0 0.0
        %3571 = vmatprep.subr.mxu0 0.0
        %v3572 = vand.u32 %v3120, 4294901760
        %3573 = vmatpush1.msra.mxu0 %v3572
        %3574 = vmatprep.subr.mxu0 0.0
        %3575 = vmatpush2.msra.mxu0 0.0
        %3576 = vmatprep.subr.mxu0 0.0
        %3577 = vmatpush2.msra.mxu0 0.0
        %3578 = vmatprep.subr.mxu0 0.0
        %3579 = vmatpush2.msra.mxu0 0.0
        %3580 = vmatprep.subr.mxu0 0.0
        %3581 = vmatpush2.msra.mxu0 0.0
        %3582 = vmatprep.subr.mxu0 0.0
        %3583 = vmatpush2.msra.mxu0 0.0
        %3584 = vmatprep.subr.mxu0 0.0
        %3585 = vmatpush2.msra.mxu0 0.0
        %3586 = vmatprep.subr.mxu0 0.0
        %3587 = vmatpush2.msra.mxu0 0.0
        %3588 = vmatprep.subr.mxu0 0.0
        %3589 = vmatpush2.msra.mxu0 0.0
        %3590 = vmatprep.subr.mxu0 0.0
        %3591 = vmatpush2.msra.mxu0 0.0
        %3592 = vmatprep.subr.mxu0 0.0
        %3593 = vmatpush2.msra.mxu0 0.0
        %3594 = vmatprep.subr.mxu0 0.0
        %3595 = vmatpush2.msra.mxu0 0.0
        %3596 = vmatprep.subr.mxu0 0.0
        %3597 = vmatpush2.msra.mxu0 0.0
        %3598 = vmatprep.subr.mxu0 0.0
        %3599 = vmatpush2.msra.mxu0 0.0
        %3600 = vmatprep.subr.mxu0 0.0
        %3601 = vmatpush2.msra.mxu0 0.0
        %3602 = vmatprep.subr.mxu0 0.0
        %3603 = vmatpush2.msra.mxu0 0.0
        %3604 = vmatprep.subr.mxu0 0.0
        %3605 = vmatpush2.msra.mxu0 0.0
        %3606 = vmatprep.mubr.f32.mxu0 0.0
        %v3607 = vand.u32 %v3125, 4294901760
        %3608 = vmatmul.mubr.f32.gmra.mxu0 %v3607
        %v3609 = vpop.f32.mrf.mxu0
        %v3610 = vadd.f32 %v3532, %v3609
        %v3611 = vpop.f32.mrf.mxu0
        %3612 = vmatprep.mubr.f32.mxu0 0.0
        %v3613 = vand.u32 %v3128, 4294901760
        %3614 = vmatmul.mubr.f32.gmra.mxu0 %v3613
        %v3615 = vpop.f32.mrf.mxu0
        %v3616 = vadd.f32 %v3538, %v3615
        %v3617 = vpop.f32.mrf.mxu0
        %3618 = vdwg.mxu0
        %v3619 = vsub.f32 %v345, %v3610
        %v3620 = vsub.f32 %v346, %v3616
        %v3621 = vand.u32 2147483647, %v3619
        %v3622 = vand.u32 2147483647, %v3620
        %v3623 = vlaneseq
        %v3624 = vand.u32 %v3623, 127
        %vm3625 = vcmp.ge.s32.totalorder %v3624, 1
        %3626 = vrot.lane.b32.xlu0 %v3621, 1
        %v3627 = vpop.permute.xlu0 %3626
        %3628 = vrot.lane.b32.xlu0 %v3622, 1
        %v3629 = vpop.permute.xlu0 %3628
        %v3630 = vsel %vm3625, %v3627, 0.0
        %v3631 = vsel %vm3625, %v3629, 0.0
        %vm3632 = vcmp.lt.s32.totalorder %v3624, 127
        %3633 = vrot.lane.b32.xlu0 %v3621, 127
        %v3634 = vpop.permute.xlu0 %3633
        %3635 = vrot.lane.b32.xlu0 %v3622, 127
        %v3636 = vpop.permute.xlu0 %3635
        %v3637 = vsel %vm3632, %v3634, 0.0
        %v3638 = vsel %vm3632, %v3636, 0.0
        %v3639 = vadd.f32 %v3630, %v3637
        %v3640 = vadd.f32 %v3631, %v3638
        %vm3641 = vcmp.ge.s32.totalorder %v3624, 2
        %3642 = vrot.lane.b32.xlu0 %v3621, 2
        %v3643 = vpop.permute.xlu0 %3642
        %3644 = vrot.lane.b32.xlu0 %v3622, 2
        %v3645 = vpop.permute.xlu0 %3644
        %v3646 = vsel %vm3641, %v3643, 0.0
        %v3647 = vsel %vm3641, %v3645, 0.0
        %vm3648 = vcmp.lt.s32.totalorder %v3624, 126
        %3649 = vrot.lane.b32.xlu0 %v3621, 126
        %v3650 = vpop.permute.xlu0 %3649
        %3651 = vrot.lane.b32.xlu0 %v3622, 126
        %v3652 = vpop.permute.xlu0 %3651
        %v3653 = vsel %vm3648, %v3650, 0.0
        %v3654 = vsel %vm3648, %v3652, 0.0
        %v3655 = vadd.f32 %v3646, %v3653
        %v3656 = vadd.f32 %v3647, %v3654
        %v3657 = vadd.f32 %v3621, %v3655
        %v3658 = vadd.f32 %v3622, %v3656
        %v3659 = vmul.f32 %v3657, 0.05
        %v3660 = vmul.f32 %v3658, 0.05
        %v3661 = vmul.f32 %v3639, 0.04
        %v3662 = vmul.f32 %v3640, 0.04
        %v3663 = vadd.f32 %v3659, %v3661
        %v3664 = vadd.f32 %v3660, %v3662
        %v3665 = vmul.f32 %v3657, 0.04
        %v3666 = vmul.f32 %v3658, 0.04
        %v3667 = vmul.f32 %v3639, 0.03
        %v3668 = vmul.f32 %v3640, 0.03
        %v3669 = vadd.f32 %v3665, %v3667
        %v3670 = vadd.f32 %v3666, %v3668
        %v3671 = vmul.f32 %v3621, 0.05
        %v3672 = vmul.f32 %v3622, 0.05
        %v3673 = vadd.f32 %v3639, %v3655
        %v3674 = vadd.f32 %v3640, %v3656
        %v3675 = vmul.f32 %v3673, 0.04
        %v3676 = vmul.f32 %v3674, 0.04
        %v3677 = vadd.f32 %v3671, %v3675
        %v3678 = vadd.f32 %v3672, %v3676
        %v3679 = vlaneseq
        %v3680 = vshrl.u32 %v3679, 7
        %v3681 = vadd.s32 %v3680, 8
        %vm3682 = vcmp.ge.s32.totalorder %v3680, 1
        %vm3683 = vcmp.ge.s32.totalorder %v3681, 1
        %v3684 = vrot.slane %v3669, 7
        %v3685 = vrot.slane %v3670, 7
        %vm3686 = vcmp.lt.s32.totalorder %v3680, 1
        %v3687 = vsel %vm3686, %v3684, %v3685
        %v3688 = vsel %vm3686, %v3685, %v3684
        %v3689 = vsel %vm3682, %v3688, 0.0
        %v3690 = vsel %vm3683, %v3687, 0.0
        %v3691 = vadd.f32 %v3663, %v3689
        %v3692 = vadd.f32 %v3664, %v3690
        %vm3693 = vcmp.lt.s32.totalorder %v3680, 15
        %vm3694 = vcmp.lt.s32.totalorder %v3681, 15
        %v3695 = vrot.slane %v3669, 1
        %v3696 = vrot.slane %v3670, 1
        %vm3697 = vcmp.lt.s32.totalorder %v3680, 7
        %v3698 = vsel %vm3697, %v3695, %v3696
        %v3699 = vsel %vm3697, %v3696, %v3695
        %v3700 = vsel %vm3693, %v3698, 0.0
        %v3701 = vsel %vm3694, %v3699, 0.0
        %v3702 = vadd.f32 %v3691, %v3700
        %v3703 = vadd.f32 %v3692, %v3701
        %vm3704 = vcmp.ge.s32.totalorder %v3680, 2
        %vm3705 = vcmp.ge.s32.totalorder %v3681, 2
        %v3706 = vrot.slane %v3677, 6
        %v3707 = vrot.slane %v3678, 6
        %vm3708 = vcmp.lt.s32.totalorder %v3680, 2
        %v3709 = vsel %vm3708, %v3706, %v3707
        %v3710 = vsel %vm3708, %v3707, %v3706
        %v3711 = vsel %vm3704, %v3710, 0.0
        %v3712 = vsel %vm3705, %v3709, 0.0
        %v3713 = vadd.f32 %v3702, %v3711
        %v3714 = vadd.f32 %v3703, %v3712
        %vm3715 = vcmp.lt.s32.totalorder %v3680, 14
        %vm3716 = vcmp.lt.s32.totalorder %v3681, 14
        %v3717 = vrot.slane %v3677, 2
        %v3718 = vrot.slane %v3678, 2
        %vm3719 = vcmp.lt.s32.totalorder %v3680, 6
        %v3720 = vsel %vm3719, %v3717, %v3718
        %v3721 = vsel %vm3719, %v3718, %v3717
        %v3722 = vsel %vm3715, %v3720, 0.0
        %v3723 = vsel %vm3716, %v3721, 0.0
        %v3724 = vadd.f32 %v3713, %v3722
        %v3725 = vadd.f32 %v3714, %v3723
        %v3726 = vadd.f32 %v3724, %v3725
        %3727 = vadd.xlane.f32.xlu0 %v3726
        %v3728 = vpop.xlane.xlu0 %3727
        %v3729 = vrot.slane %v3728, 4
        %v3730 = vadd.f32 %v3728, %v3729
        %v3731 = vrot.slane %v3730, 2
        %v3732 = vadd.f32 %v3730, %v3731
        %v3733 = vrot.slane %v3732, 1
        %v3734 = vadd.f32 %v3732, %v3733
        %s3735 = vtos %v3734
        %v3736 = vrcp.pop 2048.0
        %s3737 = vtos %v3736
        %s3738 = smul.f32 %s3735, %s3737
        %v3739 = vstv %s3738
        %v3740 = vadd.f32 %v3724, %v3739
        %v3741 = vadd.f32 %v3725, %v3739
        %v3742 = vrcp.pop %v3740
        %v3743 = vrcp.pop %v3741
        %v3744 = vmul.f32 %v3619, %v3742
        %v3745 = vmul.f32 %v3620, %v3743
        %v3746 = vsub.f32 %v347, %v3610
        %v3747 = vsub.f32 %v348, %v3616
        %v3748 = vand.u32 2147483647, %v3746
        %v3749 = vand.u32 2147483647, %v3747
        %3750 = vrot.lane.b32.xlu0 %v3748, 1
        %v3751 = vpop.permute.xlu0 %3750
        %3752 = vrot.lane.b32.xlu0 %v3749, 1
        %v3753 = vpop.permute.xlu0 %3752
        %v3754 = vsel %vm3625, %v3751, 0.0
        %v3755 = vsel %vm3625, %v3753, 0.0
        %3756 = vrot.lane.b32.xlu0 %v3748, 127
        %v3757 = vpop.permute.xlu0 %3756
        %3758 = vrot.lane.b32.xlu0 %v3749, 127
        %v3759 = vpop.permute.xlu0 %3758
        %v3760 = vsel %vm3632, %v3757, 0.0
        %v3761 = vsel %vm3632, %v3759, 0.0
        %v3762 = vadd.f32 %v3754, %v3760
        %v3763 = vadd.f32 %v3755, %v3761
        %3764 = vrot.lane.b32.xlu0 %v3748, 2
        %v3765 = vpop.permute.xlu0 %3764
        %3766 = vrot.lane.b32.xlu0 %v3749, 2
        %v3767 = vpop.permute.xlu0 %3766
        %v3768 = vsel %vm3641, %v3765, 0.0
        %v3769 = vsel %vm3641, %v3767, 0.0
        %3770 = vrot.lane.b32.xlu0 %v3748, 126
        %v3771 = vpop.permute.xlu0 %3770
        %3772 = vrot.lane.b32.xlu0 %v3749, 126
        %v3773 = vpop.permute.xlu0 %3772
        %v3774 = vsel %vm3648, %v3771, 0.0
        %v3775 = vsel %vm3648, %v3773, 0.0
        %v3776 = vadd.f32 %v3768, %v3774
        %v3777 = vadd.f32 %v3769, %v3775
        %v3778 = vadd.f32 %v3748, %v3776
        %v3779 = vadd.f32 %v3749, %v3777
        %v3780 = vmul.f32 %v3778, 0.05
        %v3781 = vmul.f32 %v3779, 0.05
        %v3782 = vmul.f32 %v3762, 0.04
        %v3783 = vmul.f32 %v3763, 0.04
        %v3784 = vadd.f32 %v3780, %v3782
        %v3785 = vadd.f32 %v3781, %v3783
        %v3786 = vmul.f32 %v3778, 0.04
        %v3787 = vmul.f32 %v3779, 0.04
        %v3788 = vmul.f32 %v3762, 0.03
        %v3789 = vmul.f32 %v3763, 0.03
        %v3790 = vadd.f32 %v3786, %v3788
        %v3791 = vadd.f32 %v3787, %v3789
        %v3792 = vmul.f32 %v3748, 0.05
        %v3793 = vmul.f32 %v3749, 0.05
        %v3794 = vadd.f32 %v3762, %v3776
        %v3795 = vadd.f32 %v3763, %v3777
        %v3796 = vmul.f32 %v3794, 0.04
        %v3797 = vmul.f32 %v3795, 0.04
        %v3798 = vadd.f32 %v3792, %v3796
        %v3799 = vadd.f32 %v3793, %v3797
        %v3800 = vrot.slane %v3790, 7
        %v3801 = vrot.slane %v3791, 7
        %v3802 = vsel %vm3686, %v3800, %v3801
        %v3803 = vsel %vm3686, %v3801, %v3800
        %v3804 = vsel %vm3682, %v3803, 0.0
        %v3805 = vsel %vm3683, %v3802, 0.0
        %v3806 = vadd.f32 %v3784, %v3804
        %v3807 = vadd.f32 %v3785, %v3805
        %v3808 = vrot.slane %v3790, 1
        %v3809 = vrot.slane %v3791, 1
        %v3810 = vsel %vm3697, %v3808, %v3809
        %v3811 = vsel %vm3697, %v3809, %v3808
        %v3812 = vsel %vm3693, %v3810, 0.0
        %v3813 = vsel %vm3694, %v3811, 0.0
        %v3814 = vadd.f32 %v3806, %v3812
        %v3815 = vadd.f32 %v3807, %v3813
        %v3816 = vrot.slane %v3798, 6
        %v3817 = vrot.slane %v3799, 6
        %v3818 = vsel %vm3708, %v3816, %v3817
        %v3819 = vsel %vm3708, %v3817, %v3816
        %v3820 = vsel %vm3704, %v3819, 0.0
        %v3821 = vsel %vm3705, %v3818, 0.0
        %v3822 = vadd.f32 %v3814, %v3820
        %v3823 = vadd.f32 %v3815, %v3821
        %v3824 = vrot.slane %v3798, 2
        %v3825 = vrot.slane %v3799, 2
        %v3826 = vsel %vm3719, %v3824, %v3825
        %v3827 = vsel %vm3719, %v3825, %v3824
        %v3828 = vsel %vm3715, %v3826, 0.0
        %v3829 = vsel %vm3716, %v3827, 0.0
        %v3830 = vadd.f32 %v3822, %v3828
        %v3831 = vadd.f32 %v3823, %v3829
        %v3832 = vadd.f32 %v3830, %v3831
        %3833 = vadd.xlane.f32.xlu0 %v3832
        %v3834 = vpop.xlane.xlu0 %3833
        %v3835 = vrot.slane %v3834, 4
        %v3836 = vadd.f32 %v3834, %v3835
        %v3837 = vrot.slane %v3836, 2
        %v3838 = vadd.f32 %v3836, %v3837
        %v3839 = vrot.slane %v3838, 1
        %v3840 = vadd.f32 %v3838, %v3839
        %s3841 = vtos %v3840
        %v3842 = vrcp.pop 2048.0
        %s3843 = vtos %v3842
        %s3844 = smul.f32 %s3841, %s3843
        %v3845 = vstv %s3844
        %v3846 = vadd.f32 %v3830, %v3845
        %v3847 = vadd.f32 %v3831, %v3845
        %v3848 = vrcp.pop %v3846
        %v3849 = vrcp.pop %v3847
        %v3850 = vmul.f32 %v3746, %v3848
        %v3851 = vmul.f32 %v3747, %v3849
        %v3852 = vsub.f32 %v3744, %v3850
        %v3853 = vsub.f32 %v3745, %v3851
        %v3854 = vmul.f32 %v3852, %v3852
        %v3855 = vmul.f32 %v3853, %v3853
        %v3856 = vadd.f32 %v3854, %v3855
        %3857 = vadd.xlane.f32.xlu0 %v3856
        %v3858 = vpop.xlane.xlu0 %3857
        %v3859 = vrot.slane %v3858, 4
        %v3860 = vadd.f32 %v3858, %v3859
        %v3861 = vrot.slane %v3860, 2
        %v3862 = vadd.f32 %v3860, %v3861
        %v3863 = vrot.slane %v3862, 1
        %v3864 = vadd.f32 %v3862, %v3863
        %s3865 = vtos %v3864
        %v3866 = vstv %s3865
        %3867 = vst [vmem:[%s344] sm:$0xff] %v3866
        %s3868 = sand.u32 %s170, 1
        %s3869 = scalar_lea.sflag [#allocation3], %s3868
        %s3870 = sand.u32 %s170, 1
        %s3871 = smul.addr %s3870, 8
        %s3872 = scalar_lea.vmem [#allocation2], %s3871
        %s3873 = sand.u32 %s196, 1
        %s3874 = scalar_lea.sflag [#allocation5], %s3873
        %s3875 = sand.u32 %s196, 1
        %s3876 = smul.addr %s3875, 8
        %s3877 = scalar_lea.vmem [#allocation4], %s3876
        %p3878 = scmp.lt.s32.totalorder %s26, 1
        %s3879 = scalar_select %p3878, %s26, 1
        %s3880 = smul.addr %s3879, 8
        %s3881 = scalar_lea.vmem %s8, %s3880
        // Predicated region
        $region45: #{nlp_distance_loss.3} parent=43 // pred_check
          %p3882 = pneg %p180
        $region46: #{nlp_distance_loss.3} parent=43 // pred_check_branch
          %3884 = sbr.rel (%p3882) target = $region48
        $region47: #{nlp_distance_loss.3} parent=43 // pred_region
          %s3886 = ssub.s32 128, 128
          %3887 = vsyncadd %s3869, %s3886
          %s3888 = smul.addr %s26, 128
          %s3889 = scalar_lea.hbm %s6, %s3888
          %s3891 = sshll.u32 %s3872, 4
          %s3892 = int_to_ptr.vmem [resolvable:$true] %s3891
          %3894 = dma.vmem_to_hbm [thread:$0]  %s3892, 128, %s3889, %s3869
        $region48: #{nlp_distance_loss.3} parent=43 // pred_fallthru
          _
        // Predicated region
        $region49: #{nlp_distance_loss.3} parent=43 // pred_check
          %p3895 = pneg %p206
        $region50: #{nlp_distance_loss.3} parent=43 // pred_check_branch
          %3897 = sbr.rel (%p3895) target = $region52
        $region51: #{nlp_distance_loss.3} parent=43 // pred_region
          %s3899 = ssub.s32 128, 128
          %3900 = vsyncadd %s3874, %s3899
          %s3901 = smul.addr %s26, 128
          %s3902 = scalar_lea.hbm %s7, %s3901
          %s3904 = sshll.u32 %s3877, 4
          %s3905 = int_to_ptr.vmem [resolvable:$true] %s3904
          %3907 = dma.vmem_to_hbm [thread:$0]  %s3905, 128, %s3902, %s3874
        $region52: #{nlp_distance_loss.3} parent=43 // pred_fallthru
          _
        // Predicated region
        $region53: #{nlp_distance_loss.3} parent=43 // pred_check
          %p3908 = pneg %p232
        $region54: #{nlp_distance_loss.3} parent=43 // pred_check_branch
          %3910 = sbr.rel (%p3908) target = $region56
        $region55: #{nlp_distance_loss.3} parent=43 // pred_region
          _
        $region56: #{nlp_distance_loss.3} parent=43 // pred_fallthru
          _
      $region44: #{nlp_distance_loss.3} parent=5 // pred_fallthru
        _
      %p3911 = scmp.le.s32.totalorder 2, %s21
      // Predicated region
      $region57: #{nlp_distance_loss.3} parent=5 // pred_check
        %p3912 = pneg %p3911
      $region58: #{nlp_distance_loss.3} parent=5 // pred_check_branch
        %3914 = sbr.rel (%p3912) target = $region60
      $region59: #{nlp_distance_loss.3} parent=5 // pred_region
        %s3915 = ssub.s32 %s21, 2
        // Predicated region
        $region61: #{nlp_distance_loss.3} parent=59 // pred_check
          %p3916 = pneg %p186
        $region62: #{nlp_distance_loss.3} parent=59 // pred_check_branch
          %3918 = sbr.rel (%p3916) target = $region64
        $region63: #{nlp_distance_loss.3} parent=59 // pred_region
          %s3919 = sand.u32 %s171, 1
          %s3920 = scalar_lea.sflag [#allocation3], %s3919
          %s3921 = sand.u32 %s171, 1
          %s3922 = smul.addr %s3921, 8
          %s3923 = scalar_lea.vmem [#allocation2], %s3922
          %3924 = dma.done %s3920, 128
        $region64: #{nlp_distance_loss.3} parent=59 // pred_fallthru
          _
        // Predicated region
        $region65: #{nlp_distance_loss.3} parent=59 // pred_check
          %p3925 = pneg %p212
        $region66: #{nlp_distance_loss.3} parent=59 // pred_check_branch
          %3927 = sbr.rel (%p3925) target = $region68
        $region67: #{nlp_distance_loss.3} parent=59 // pred_region
          %s3928 = sand.u32 %s197, 1
          %s3929 = scalar_lea.sflag [#allocation5], %s3928
          %s3930 = sand.u32 %s197, 1
          %s3931 = smul.addr %s3930, 8
          %s3932 = scalar_lea.vmem [#allocation4], %s3931
          %3933 = dma.done %s3929, 128
        $region68: #{nlp_distance_loss.3} parent=59 // pred_fallthru
          _
        // Predicated region
        $region69: #{nlp_distance_loss.3} parent=59 // pred_check
          %p3934 = pneg %p238
        $region70: #{nlp_distance_loss.3} parent=59 // pred_check_branch
          %3936 = sbr.rel (%p3934) target = $region72
        $region71: #{nlp_distance_loss.3} parent=59 // pred_region
          %p3937 = scmp.lt.s32.totalorder %s27, 1
          %s3938 = scalar_select %p3937, %s27, 1
          %s3939 = smul.addr %s3938, 8
          %s3940 = scalar_lea.vmem %s8, %s3939
        $region72: #{nlp_distance_loss.3} parent=59 // pred_fallthru
          _
      $region60: #{nlp_distance_loss.3} parent=5 // pred_fallthru
        _
    $region6: #{nlp_distance_loss.3} parent=1 // loop_footer
      %s25 = sadd.s32 1, %s21
    $region7: #{nlp_distance_loss.3} parent=1 // loop_footer_branch
      %20 = sbr.rel target = $region3
    $region8: #{nlp_distance_loss.3} parent=1 // loop_exit
      _
    %3941 = vsyncpa [#allocation3], 1
    %s3942 = scalar_lea.sflag [#allocation3], 1
    %3943 = vsyncpa %s3942, 1
    %3944 = vsyncpa [#allocation5], 1
    %s3945 = scalar_lea.sflag [#allocation5], 1
    %3946 = vsyncpa %s3945, 1

// kernel: nlp_distance_loss.2
$region0: #{nlp_distance_loss.2}
  #allocation0 [shape = 'u32[]', space=smem, size = 0x4, offset = 0x4, fixed_abs, tag = 'smem constant byte address 0x4 - core index']
  #allocation1 [shape = 'u32[144,128]{1,0:T(1,128)}', space=vmem, size = 0x12000, scoped, tag = 'internal scratch']
  %s0 = inlined_call_operand.hbm [shape: f32[2,32,256], index: 0, kind: input, shape index: {}]
  %s1 = inlined_call_operand.hbm [shape: f32[2,32,256], index: 1, kind: input, shape index: {}]
  %s2 = inlined_call_operand.vmem [shape: f32[16,32], index: 2, kind: input, shape index: {}]
  %s3 = inlined_call_operand.hbm [shape: f32[256,128], index: 3, kind: input, shape index: {}]
  %s4 = inlined_call_operand.hbm [shape: f32[32,16], index: 4, kind: input, shape index: {}]
  %s5 = inlined_call_operand.hbm [shape: f32[128,256], index: 5, kind: input, shape index: {}]
  %s6 = inlined_call_operand.vmem [shape: f32[2,16,128], index: 6, kind: output, shape index: {0}]
  %s7 = inlined_call_operand.vmem [shape: f32[2,16,128], index: 7, kind: output, shape index: {1}]
  %s8 = inlined_call_operand.vmem [shape: f32[2,8,128], index: 8, kind: output, shape index: {2}]
  %9 = xla_tuple %s6, %s7, %s8
  %s10 = sld [smem:[#allocation0]]
  $region93: #{nlp_distance_loss.2} parent=0
    _
  %s12 = ssub.s32 1, %s10
  %s13 = scalar_select 0, %s12, %s10
  $region1: #{nlp_distance_loss.2} parent=0
    #allocation2 [shape = 'u8[65536]{0}', space=vmem, size = 0x10000, scoped, tag = 'input window, operand 0']
    #allocation3 [shape = 's32[2]{0}', space=sflag, size = 0x8, scoped, tag = 'scoped memory for nlp_distance_loss.2']
    #allocation4 [shape = 'u8[65536]{0}', space=vmem, size = 0x10000, scoped, tag = 'input window, operand 1']
    #allocation5 [shape = 's32[2]{0}', space=sflag, size = 0x8, scoped, tag = 'scoped memory for nlp_distance_loss.2']
    #allocation6 [shape = 'u8[131072]{0}', space=vmem, size = 0x20000, scoped, tag = 'input window, operand 3, single buffered']
    #allocation7 [shape = 'u8[16384]{0}', space=vmem, size = 0x4000, scoped, tag = 'input window, operand 4, single buffered']
    #allocation8 [shape = 's32[1]{0}', space=sflag, size = 0x4, scoped, tag = 'scoped memory for nlp_distance_loss.2']
    #allocation9 [shape = 'u8[131072]{0}', space=vmem, size = 0x20000, scoped, tag = 'input window, operand 5, single buffered']
    %14 = vsyncpa [#allocation3], 0
    %s15 = scalar_lea.sflag [#allocation3], 1
    %16 = vsyncpa %s15, 0
    %17 = vsyncpa [#allocation5], 0
    %s18 = scalar_lea.sflag [#allocation5], 1
    %19 = vsyncpa %s18, 0
    %20 = vsyncpa [#allocation8], 0
    loop: start=0, step=1, limit=4
    $region2: #{nlp_distance_loss.2} parent=1 // loop_pre_header
      _
    $region3: #{nlp_distance_loss.2} parent=1 // loop_header
      %s22 = sphi 0, %s26
      %p23 = scmp.ge.s32.totalorder %s22, 4
      %s32 = sphi 0, %s34
      %s35 = sphi 0, %s32
      %s36 = sphi 0, %s35
      %s52 = sphi 0, %s36
      %s58 = sphi 0, %s60
      %s61 = sphi 0, %s58
      %s62 = sphi 0, %s61
      %s78 = sphi 0, %s62
      %s82 = sphi 0, %s82
      %s84 = sphi 0, %s82
      %s85 = sphi 0, %s84
      %s99 = sphi 0, %s85
      %s103 = sphi 0, %s103
      %s105 = sphi 0, %s103
      %s106 = sphi 0, %s105
      %s120 = sphi 0, %s106
      %s124 = sphi 0, %s124
      %s126 = sphi 0, %s124
      %s127 = sphi 0, %s126
      %s141 = sphi 0, %s127
      %s145 = sphi 0, %s145
      %s147 = sphi 0, %s145
      %s148 = sphi 0, %s147
      %s162 = sphi 0, %s148
      %s168 = sphi 0, %s170
      %s171 = sphi 0, %s168
      %s172 = sphi 0, %s171
      %s188 = sphi 0, %s172
      %s194 = sphi 0, %s196
      %s197 = sphi 0, %s194
      %s198 = sphi 0, %s197
      %s214 = sphi 0, %s198
      %s220 = sphi 0, %s222
      %s223 = sphi 0, %s220
      %s224 = sphi 0, %s223
      %s240 = sphi 0, %s224
    $region4: #{nlp_distance_loss.2} parent=1 // loop_header_branch
      %25 = sbr.rel (%p23) target = $region8
    $region5: #{nlp_distance_loss.2} parent=1 // loop_body
      %s27 = ssub.s32 %s22, 1
      %s28 = ssub.s32 %s22, 2
      %s29 = sadd.s32 %s22, 1
      %s30 = ssub.s32 %s22, %s29
      %p31 = scmp.eq.s32.totalorder %s30, 0
      %s33 = sadd.s32 %s32, 1
      %s34 = scalar_select %p31, %s32, %s33
      %p37 = pneg %p31
      %p38 = scmp.eq.s32.totalorder %s22, 1
      %p39 = por %p37, %p38
      %p40 = scmp.ne.s32.totalorder %s32, %s35
      %p41 = scmp.eq.s32.totalorder %s22, 0
      %p42 = por %p40, %p41
      %p43 = scmp.ne.s32.totalorder %s32, %s35
      %p44 = scmp.eq.s32.totalorder %s27, 1
      %p45 = por %p43, %p44
      %p46 = scmp.ne.s32.totalorder %s35, %s36
      %p47 = scmp.eq.s32.totalorder %s27, 0
      %p48 = por %p46, %p47
      %p49 = scmp.ne.s32.totalorder %s35, %s36
      %p50 = scmp.eq.s32.totalorder %s28, 1
      %p51 = por %p49, %p50
      %p53 = scmp.ne.s32.totalorder %s36, %s52
      %p54 = scmp.eq.s32.totalorder %s28, 0
      %p55 = por %p53, %p54
      %s56 = ssub.s32 %s22, %s29
      %p57 = scmp.eq.s32.totalorder %s56, 0
      %s59 = sadd.s32 %s58, 1
      %s60 = scalar_select %p57, %s58, %s59
      %p63 = pneg %p57
      %p64 = scmp.eq.s32.totalorder %s22, 1
      %p65 = por %p63, %p64
      %p66 = scmp.ne.s32.totalorder %s58, %s61
      %p67 = scmp.eq.s32.totalorder %s22, 0
      %p68 = por %p66, %p67
      %p69 = scmp.ne.s32.totalorder %s58, %s61
      %p70 = scmp.eq.s32.totalorder %s27, 1
      %p71 = por %p69, %p70
      %p72 = scmp.ne.s32.totalorder %s61, %s62
      %p73 = scmp.eq.s32.totalorder %s27, 0
      %p74 = por %p72, %p73
      %p75 = scmp.ne.s32.totalorder %s61, %s62
      %p76 = scmp.eq.s32.totalorder %s28, 1
      %p77 = por %p75, %p76
      %p79 = scmp.ne.s32.totalorder %s62, %s78
      %p80 = scmp.eq.s32.totalorder %s28, 0
      %p81 = por %p79, %p80
      %s83 = sadd.s32 %s82, 1
      %p86 = scmp.eq.s32.totalorder %s22, 1
      %p87 = scmp.ne.s32.totalorder %s82, %s84
      %p88 = scmp.eq.s32.totalorder %s22, 0
      %p89 = por %p87, %p88
      %p90 = scmp.ne.s32.totalorder %s82, %s84
      %p91 = scmp.eq.s32.totalorder %s27, 1
      %p92 = por %p90, %p91
      %p93 = scmp.ne.s32.totalorder %s84, %s85
      %p94 = scmp.eq.s32.totalorder %s27, 0
      %p95 = por %p93, %p94
      %p96 = scmp.ne.s32.totalorder %s84, %s85
      %p97 = scmp.eq.s32.totalorder %s28, 1
      %p98 = por %p96, %p97
      %p100 = scmp.ne.s32.totalorder %s85, %s99
      %p101 = scmp.eq.s32.totalorder %s28, 0
      %p102 = por %p100, %p101
      %s104 = sadd.s32 %s103, 1
      %p107 = scmp.eq.s32.totalorder %s22, 1
      %p108 = scmp.ne.s32.totalorder %s103, %s105
      %p109 = scmp.eq.s32.totalorder %s22, 0
      %p110 = por %p108, %p109
      %p111 = scmp.ne.s32.totalorder %s103, %s105
      %p112 = scmp.eq.s32.totalorder %s27, 1
      %p113 = por %p111, %p112
      %p114 = scmp.ne.s32.totalorder %s105, %s106
      %p115 = scmp.eq.s32.totalorder %s27, 0
      %p116 = por %p114, %p115
      %p117 = scmp.ne.s32.totalorder %s105, %s106
      %p118 = scmp.eq.s32.totalorder %s28, 1
      %p119 = por %p117, %p118
      %p121 = scmp.ne.s32.totalorder %s106, %s120
      %p122 = scmp.eq.s32.totalorder %s28, 0
      %p123 = por %p121, %p122
      %s125 = sadd.s32 %s124, 1
      %p128 = scmp.eq.s32.totalorder %s22, 1
      %p129 = scmp.ne.s32.totalorder %s124, %s126
      %p130 = scmp.eq.s32.totalorder %s22, 0
      %p131 = por %p129, %p130
      %p132 = scmp.ne.s32.totalorder %s124, %s126
      %p133 = scmp.eq.s32.totalorder %s27, 1
      %p134 = por %p132, %p133
      %p135 = scmp.ne.s32.totalorder %s126, %s127
      %p136 = scmp.eq.s32.totalorder %s27, 0
      %p137 = por %p135, %p136
      %p138 = scmp.ne.s32.totalorder %s126, %s127
      %p139 = scmp.eq.s32.totalorder %s28, 1
      %p140 = por %p138, %p139
      %p142 = scmp.ne.s32.totalorder %s127, %s141
      %p143 = scmp.eq.s32.totalorder %s28, 0
      %p144 = por %p142, %p143
      %s146 = sadd.s32 %s145, 1
      %p149 = scmp.eq.s32.totalorder %s22, 1
      %p150 = scmp.ne.s32.totalorder %s145, %s147
      %p151 = scmp.eq.s32.totalorder %s22, 0
      %p152 = por %p150, %p151
      %p153 = scmp.ne.s32.totalorder %s145, %s147
      %p154 = scmp.eq.s32.totalorder %s27, 1
      %p155 = por %p153, %p154
      %p156 = scmp.ne.s32.totalorder %s147, %s148
      %p157 = scmp.eq.s32.totalorder %s27, 0
      %p158 = por %p156, %p157
      %p159 = scmp.ne.s32.totalorder %s147, %s148
      %p160 = scmp.eq.s32.totalorder %s28, 1
      %p161 = por %p159, %p160
      %p163 = scmp.ne.s32.totalorder %s148, %s162
      %p164 = scmp.eq.s32.totalorder %s28, 0
      %p165 = por %p163, %p164
      %s166 = ssub.s32 %s22, %s29
      %p167 = scmp.eq.s32.totalorder %s166, 0
      %s169 = sadd.s32 %s168, 1
      %s170 = scalar_select %p167, %s168, %s169
      %p173 = pneg %p167
      %p174 = scmp.eq.s32.totalorder %s22, 1
      %p175 = por %p173, %p174
      %p176 = scmp.ne.s32.totalorder %s168, %s171
      %p177 = scmp.eq.s32.totalorder %s22, 0
      %p178 = por %p176, %p177
      %p179 = scmp.ne.s32.totalorder %s168, %s171
      %p180 = scmp.eq.s32.totalorder %s27, 1
      %p181 = por %p179, %p180
      %p182 = scmp.ne.s32.totalorder %s171, %s172
      %p183 = scmp.eq.s32.totalorder %s27, 0
      %p184 = por %p182, %p183
      %p185 = scmp.ne.s32.totalorder %s171, %s172
      %p186 = scmp.eq.s32.totalorder %s28, 1
      %p187 = por %p185, %p186
      %p189 = scmp.ne.s32.totalorder %s172, %s188
      %p190 = scmp.eq.s32.totalorder %s28, 0
      %p191 = por %p189, %p190
      %s192 = ssub.s32 %s22, %s29
      %p193 = scmp.eq.s32.totalorder %s192, 0
      %s195 = sadd.s32 %s194, 1
      %s196 = scalar_select %p193, %s194, %s195
      %p199 = pneg %p193
      %p200 = scmp.eq.s32.totalorder %s22, 1
      %p201 = por %p199, %p200
      %p202 = scmp.ne.s32.totalorder %s194, %s197
      %p203 = scmp.eq.s32.totalorder %s22, 0
      %p204 = por %p202, %p203
      %p205 = scmp.ne.s32.totalorder %s194, %s197
      %p206 = scmp.eq.s32.totalorder %s27, 1
      %p207 = por %p205, %p206
      %p208 = scmp.ne.s32.totalorder %s197, %s198
      %p209 = scmp.eq.s32.totalorder %s27, 0
      %p210 = por %p208, %p209
      %p211 = scmp.ne.s32.totalorder %s197, %s198
      %p212 = scmp.eq.s32.totalorder %s28, 1
      %p213 = por %p211, %p212
      %p215 = scmp.ne.s32.totalorder %s198, %s214
      %p216 = scmp.eq.s32.totalorder %s28, 0
      %p217 = por %p215, %p216
      %s218 = ssub.s32 %s22, %s29
      %p219 = scmp.eq.s32.totalorder %s218, 0
      %s221 = sadd.s32 %s220, 1
      %s222 = scalar_select %p219, %s220, %s221
      %p225 = pneg %p219
      %p226 = scmp.eq.s32.totalorder %s22, 1
      %p227 = por %p225, %p226
      %p228 = scmp.ne.s32.totalorder %s220, %s223
      %p229 = scmp.eq.s32.totalorder %s22, 0
      %p230 = por %p228, %p229
      %p231 = scmp.ne.s32.totalorder %s220, %s223
      %p232 = scmp.eq.s32.totalorder %s27, 1
      %p233 = por %p231, %p232
      %p234 = scmp.ne.s32.totalorder %s223, %s224
      %p235 = scmp.eq.s32.totalorder %s27, 0
      %p236 = por %p234, %p235
      %p237 = scmp.ne.s32.totalorder %s223, %s224
      %p238 = scmp.eq.s32.totalorder %s28, 1
      %p239 = por %p237, %p238
      %p241 = scmp.ne.s32.totalorder %s224, %s240
      %p242 = scmp.eq.s32.totalorder %s28, 0
      %p243 = por %p241, %p242
      %p244 = scmp.le.s32.totalorder 1, %s22
      %p245 = scmp.lt.s32.totalorder %s22, 3
      %p246 = pnand %p244, %p245
      %p247 = pneg %p246
      // Predicated region
      $region9: #{nlp_distance_loss.2} parent=5 // pred_check
        _
      $region10: #{nlp_distance_loss.2} parent=5 // pred_check_branch
        %249 = sbr.rel (%p246) target = $region12
      $region11: #{nlp_distance_loss.2} parent=5 // pred_region
        %s250 = ssub.s32 %s22, 1
        // Predicated region
        $region13: #{nlp_distance_loss.2} parent=11 // pred_check
          %p251 = pneg %p95
        $region14: #{nlp_distance_loss.2} parent=11 // pred_check_branch
          %253 = sbr.rel (%p251) target = $region16
        $region15: #{nlp_distance_loss.2} parent=11 // pred_region
          _
        $region16: #{nlp_distance_loss.2} parent=11 // pred_fallthru
          _
        // Predicated region
        $region17: #{nlp_distance_loss.2} parent=11 // pred_check
          %p254 = pneg %p116
        $region18: #{nlp_distance_loss.2} parent=11 // pred_check_branch
          %256 = sbr.rel (%p254) target = $region20
        $region19: #{nlp_distance_loss.2} parent=11 // pred_region
          %s258 = ssub.s32 4096, 4096
          %259 = vsyncadd [#allocation5], %s258
          %s260 = sshll.u32 [#allocation6], 4
          %s261 = int_to_ptr.vmem [resolvable:$true] %s260
          %266 = dma.hbm_to_vmem [thread:$0]  %s3, 4096, %s261, [#allocation5], 128, 128, 8
        $region20: #{nlp_distance_loss.2} parent=11 // pred_fallthru
          _
        // Predicated region
        $region21: #{nlp_distance_loss.2} parent=11 // pred_check
          %p267 = pneg %p137
        $region22: #{nlp_distance_loss.2} parent=11 // pred_check_branch
          %269 = sbr.rel (%p267) target = $region24
        $region23: #{nlp_distance_loss.2} parent=11 // pred_region
          %s271 = ssub.s32 512, 512
          %272 = vsyncadd [#allocation8], %s271
          %s273 = sshll.u32 [#allocation7], 4
          %s274 = int_to_ptr.vmem [resolvable:$true] %s273
          %279 = dma.hbm_to_vmem [thread:$0]  %s4, 512, %s274, [#allocation8], 128, 128, 8
        $region24: #{nlp_distance_loss.2} parent=11 // pred_fallthru
          _
        // Predicated region
        $region25: #{nlp_distance_loss.2} parent=11 // pred_check
          %p280 = pneg %p158
        $region26: #{nlp_distance_loss.2} parent=11 // pred_check_branch
          %282 = sbr.rel (%p280) target = $region28
        $region27: #{nlp_distance_loss.2} parent=11 // pred_region
          %s284 = ssub.s32 4096, 4096
          %285 = vsyncadd [#allocation8], %s284
          %s286 = sshll.u32 [#allocation9], 4
          %s287 = int_to_ptr.vmem [resolvable:$true] %s286
          %292 = dma.hbm_to_vmem [thread:$0]  %s5, 4096, %s287, [#allocation8], 256, 256, 16
        $region28: #{nlp_distance_loss.2} parent=11 // pred_fallthru
          _
      $region12: #{nlp_distance_loss.2} parent=5 // pred_fallthru
        _
      %p293 = scmp.lt.s32.totalorder %s22, 2
      // Predicated region
      $region29: #{nlp_distance_loss.2} parent=5 // pred_check
        %p294 = pneg %p293
      $region30: #{nlp_distance_loss.2} parent=5 // pred_check_branch
        %296 = sbr.rel (%p294) target = $region32
      $region31: #{nlp_distance_loss.2} parent=5 // pred_region
        // Predicated region
        $region33: #{nlp_distance_loss.2} parent=31 // pred_check
          %p297 = pneg %p42
        $region34: #{nlp_distance_loss.2} parent=31 // pred_check_branch
          %299 = sbr.rel (%p297) target = $region36
        $region35: #{nlp_distance_loss.2} parent=31 // pred_region
          %s300 = sand.u32 %s32, 1
          %s301 = scalar_lea.sflag [#allocation3], %s300
          %s302 = sand.u32 %s32, 1
          %s303 = smul.addr %s302, 64
          %s304 = scalar_lea.vmem [#allocation2], %s303
          %s306 = ssub.s32 1024, 1024
          %307 = vsyncadd %s301, %s306
          %s308 = smul.addr %s22, 8
          %s309 = smul.addr %s308, 128
          %s310 = scalar_lea.hbm %s0, %s309
          %s311 = sshll.u32 %s304, 4
          %s312 = int_to_ptr.vmem [resolvable:$true] %s311
          %317 = dma.hbm_to_vmem [thread:$0]  %s310, 1024, %s312, %s301, 256, 256, 16
        $region36: #{nlp_distance_loss.2} parent=31 // pred_fallthru
          _
        // Predicated region
        $region37: #{nlp_distance_loss.2} parent=31 // pred_check
          %p318 = pneg %p68
        $region38: #{nlp_distance_loss.2} parent=31 // pred_check_branch
          %320 = sbr.rel (%p318) target = $region40
        $region39: #{nlp_distance_loss.2} parent=31 // pred_region
          %s321 = sand.u32 %s22, 1
          %s322 = scalar_lea.sflag [#allocation5], %s321
          %s323 = sand.u32 %s58, 1
          %s324 = smul.addr %s323, 64
          %s325 = scalar_lea.vmem [#allocation4], %s324
          %s327 = ssub.s32 1024, 1024
          %328 = vsyncadd %s322, %s327
          %s329 = smul.addr %s22, 8
          %s330 = smul.addr %s329, 128
          %s331 = scalar_lea.hbm %s1, %s330
          %s332 = sshll.u32 %s325, 4
          %s333 = int_to_ptr.vmem [resolvable:$true] %s332
          %338 = dma.hbm_to_vmem [thread:$0]  %s331, 1024, %s333, %s322, 256, 256, 16
        $region40: #{nlp_distance_loss.2} parent=31 // pred_fallthru
          _
      $region32: #{nlp_distance_loss.2} parent=5 // pred_fallthru
        _
      %p339 = scmp.le.s32.totalorder 1, %s22
      %p340 = scmp.lt.s32.totalorder %s22, 3
      %p341 = pnand %p339, %p340
      %p342 = pneg %p341
      // Predicated region
      $region41: #{nlp_distance_loss.2} parent=5 // pred_check
        _
      $region42: #{nlp_distance_loss.2} parent=5 // pred_check_branch
        %344 = sbr.rel (%p341) target = $region44
      $region43: #{nlp_distance_loss.2} parent=5 // pred_region
        %s345 = ssub.s32 %s22, 1
        %s346 = sand.u32 %s35, 1
        %s347 = scalar_lea.sflag [#allocation3], %s346
        %s348 = sand.u32 %s35, 1
        %s349 = smul.addr %s348, 64
        %s350 = scalar_lea.vmem [#allocation2], %s349
        // Predicated region
        $region45: #{nlp_distance_loss.2} parent=43 // pred_check
          %p351 = pneg %p48
        $region46: #{nlp_distance_loss.2} parent=43 // pred_check_branch
          %353 = sbr.rel (%p351) target = $region48
        $region47: #{nlp_distance_loss.2} parent=43 // pred_region
          %354 = dma.done %s347, 1024
        $region48: #{nlp_distance_loss.2} parent=43 // pred_fallthru
          _
        %s355 = sand.u32 %s27, 1
        %s356 = scalar_lea.sflag [#allocation5], %s355
        %s357 = sand.u32 %s61, 1
        %s358 = smul.addr %s357, 64
        %s359 = scalar_lea.vmem [#allocation4], %s358
        // Predicated region
        $region49: #{nlp_distance_loss.2} parent=43 // pred_check
          %p360 = pneg %p74
        $region50: #{nlp_distance_loss.2} parent=43 // pred_check_branch
          %362 = sbr.rel (%p360) target = $region52
        $region51: #{nlp_distance_loss.2} parent=43 // pred_region
          %363 = dma.done %s356, 1024
        $region52: #{nlp_distance_loss.2} parent=43 // pred_fallthru
          _
        // Predicated region
        $region53: #{nlp_distance_loss.2} parent=43 // pred_check
          %p364 = pneg %p116
        $region54: #{nlp_distance_loss.2} parent=43 // pred_check_branch
          %366 = sbr.rel (%p364) target = $region56
        $region55: #{nlp_distance_loss.2} parent=43 // pred_region
          %367 = dma.done [#allocation5], 4096
        $region56: #{nlp_distance_loss.2} parent=43 // pred_fallthru
          _
        // Predicated region
        $region57: #{nlp_distance_loss.2} parent=43 // pred_check
          %p368 = pneg %p137
        $region58: #{nlp_distance_loss.2} parent=43 // pred_check_branch
          %370 = sbr.rel (%p368) target = $region60
        $region59: #{nlp_distance_loss.2} parent=43 // pred_region
          %371 = dma.done [#allocation8], 512
        $region60: #{nlp_distance_loss.2} parent=43 // pred_fallthru
          _
        // Predicated region
        $region61: #{nlp_distance_loss.2} parent=43 // pred_check
          %p372 = pneg %p158
        $region62: #{nlp_distance_loss.2} parent=43 // pred_check_branch
          %374 = sbr.rel (%p372) target = $region64
        $region63: #{nlp_distance_loss.2} parent=43 // pred_region
          %375 = dma.done [#allocation8], 4096
        $region64: #{nlp_distance_loss.2} parent=43 // pred_fallthru
          _
        %s376 = sand.u32 %s35, 1
        %s377 = scalar_lea.sflag [#allocation3], %s376
        %s378 = sand.u32 %s35, 1
        %s379 = smul.addr %s378, 64
        %s380 = scalar_lea.vmem [#allocation2], %s379
        %p381 = pneg %p48
        %p382 = pneg %p45
        %s383 = sand.u32 %s27, 1
        %s384 = scalar_lea.sflag [#allocation5], %s383
        %s385 = sand.u32 %s61, 1
        %s386 = smul.addr %s385, 64
        %s387 = scalar_lea.vmem [#allocation4], %s386
        %p388 = pneg %p74
        %p389 = pneg %p71
        %p390 = pneg %p95
        %p391 = pneg %p92
        %p392 = pneg %p116
        %p393 = pneg %p113
        %p394 = pneg %p137
        %p395 = pneg %p134
        %p396 = pneg %p158
        %p397 = pneg %p155
        %p398 = pneg %p184
        %p399 = pneg %p181
        %p400 = scmp.lt.s32.totalorder %s27, 1
        %s401 = scalar_select %p400, %s27, 1
        %s402 = smul.addr %s401, 2
        %s403 = smul.addr %s402, 8
        %s404 = scalar_lea.vmem %s6, %s403
        %p405 = pneg %p210
        %p406 = pneg %p207
        %p407 = scmp.lt.s32.totalorder %s27, 1
        %s408 = scalar_select %p407, %s27, 1
        %s409 = smul.addr %s408, 2
        %s410 = smul.addr %s409, 8
        %s411 = scalar_lea.vmem %s7, %s410
        %p412 = pneg %p236
        %p413 = pneg %p233
        %p414 = scmp.lt.s32.totalorder %s27, 1
        %s415 = scalar_select %p414, %s27, 1
        %s416 = smul.addr %s415, 8
        %s417 = scalar_lea.vmem %s8, %s416
        %p418 = scmp.lt.s32.totalorder %s27, 1
        %s419 = scalar_select %p418, %s27, 1
        %s420 = smul.addr %s419, 2
        %s421 = smul.addr %s420, 8
        %s422 = scalar_lea.vmem %s6, %s421
        %p423 = scmp.lt.s32.totalorder %s27, 1
        %s424 = scalar_select %p423, %s27, 1
        %s425 = smul.addr %s424, 2
        %s426 = smul.addr %s425, 8
        %s427 = scalar_lea.vmem %s7, %s426
        %p428 = scmp.lt.s32.totalorder %s27, 1
        %s429 = scalar_select %p428, %s27, 1
        %s430 = smul.addr %s429, 8
        %s431 = scalar_lea.vmem %s8, %s430
        %v432 = vld [vmem:[%s350] sm:$0xff]
        %v433 = vld [vmem:[%s350 + $0x8] sm:$0xff]
        %v434 = vld [vmem:[%s350 + $0x10] sm:$0xff]
        %v435 = vld [vmem:[%s350 + $0x18] sm:$0xff]
        %v436 = vld [vmem:[%s350 + $0x20] sm:$0xff]
        %v437 = vld [vmem:[%s350 + $0x28] sm:$0xff]
        %v438 = vld [vmem:[%s350 + $0x30] sm:$0xff]
        %v439 = vld [vmem:[%s350 + $0x38] sm:$0xff]
        %v440 = vld [vmem:[%s359] sm:$0xff]
        %v441 = vld [vmem:[%s359 + $0x8] sm:$0xff]
        %v442 = vld [vmem:[%s359 + $0x10] sm:$0xff]
        %v443 = vld [vmem:[%s359 + $0x18] sm:$0xff]
        %v444 = vld [vmem:[%s359 + $0x20] sm:$0xff]
        %v445 = vld [vmem:[%s359 + $0x28] sm:$0xff]
        %v446 = vld [vmem:[%s359 + $0x30] sm:$0xff]
        %v447 = vld [vmem:[%s359 + $0x38] sm:$0xff]
        %v448 = vld [vmem:[%s2] sm:$0xff]
        %v449 = vld [vmem:[%s2 + $0x8] sm:$0xff]
        %v450 = vld [vmem:[#allocation6] sm:$0xff]
        %v451 = vld [vmem:[#allocation6 + $0x8] sm:$0xff]
        %v452 = vld [vmem:[#allocation6 + $0x10] sm:$0xff]
        %v453 = vld [vmem:[#allocation6 + $0x18] sm:$0xff]
        %v454 = vld [vmem:[#allocation6 + $0x20] sm:$0xff]
        %v455 = vld [vmem:[#allocation6 + $0x28] sm:$0xff]
        %v456 = vld [vmem:[#allocation6 + $0x30] sm:$0xff]
        %v457 = vld [vmem:[#allocation6 + $0x38] sm:$0xff]
        %v458 = vld [vmem:[#allocation6 + $0x40] sm:$0xff]
        %v459 = vld [vmem:[#allocation6 + $0x48] sm:$0xff]
        %v460 = vld [vmem:[#allocation6 + $0x50] sm:$0xff]
        %v461 = vld [vmem:[#allocation6 + $0x58] sm:$0xff]
        %v462 = vld [vmem:[#allocation6 + $0x60] sm:$0xff]
        %v463 = vld [vmem:[#allocation6 + $0x68] sm:$0xff]
        %v464 = vld [vmem:[#allocation6 + $0x70] sm:$0xff]
        %v465 = vld [vmem:[#allocation6 + $0x78] sm:$0xff]
        %v466 = vld [vmem:[#allocation6 + $0x80] sm:$0xff]
        %v467 = vld [vmem:[#allocation6 + $0x88] sm:$0xff]
        %v468 = vld [vmem:[#allocation6 + $0x90] sm:$0xff]
        %v469 = vld [vmem:[#allocation6 + $0x98] sm:$0xff]
        %v470 = vld [vmem:[#allocation6 + $0xa0] sm:$0xff]
        %v471 = vld [vmem:[#allocation6 + $0xa8] sm:$0xff]
        %v472 = vld [vmem:[#allocation6 + $0xb0] sm:$0xff]
        %v473 = vld [vmem:[#allocation6 + $0xb8] sm:$0xff]
        %v474 = vld [vmem:[#allocation6 + $0xc0] sm:$0xff]
        %v475 = vld [vmem:[#allocation6 + $0xc8] sm:$0xff]
        %v476 = vld [vmem:[#allocation6 + $0xd0] sm:$0xff]
        %v477 = vld [vmem:[#allocation6 + $0xd8] sm:$0xff]
        %v478 = vld [vmem:[#allocation6 + $0xe0] sm:$0xff]
        %v479 = vld [vmem:[#allocation6 + $0xe8] sm:$0xff]
        %v480 = vld [vmem:[#allocation6 + $0xf0] sm:$0xff]
        %v481 = vld [vmem:[#allocation6 + $0xf8] sm:$0xff]
        %v482 = vld [vmem:[#allocation7] sm:$0xff]
        %v483 = vld [vmem:[#allocation7 + $0x8] sm:$0xff]
        %v484 = vld [vmem:[#allocation7 + $0x10] sm:$0xff]
        %v485 = vld [vmem:[#allocation7 + $0x18] sm:$0xff]
        %v486 = vld [vmem:[#allocation9] sm:$0xff]
        %v487 = vld [vmem:[#allocation9 + $0x8] sm:$0xff]
        %v488 = vld [vmem:[#allocation9 + $0x10] sm:$0xff]
        %v489 = vld [vmem:[#allocation9 + $0x18] sm:$0xff]
        %v490 = vld [vmem:[#allocation9 + $0x20] sm:$0xff]
        %v491 = vld [vmem:[#allocation9 + $0x28] sm:$0xff]
        %v492 = vld [vmem:[#allocation9 + $0x30] sm:$0xff]
        %v493 = vld [vmem:[#allocation9 + $0x38] sm:$0xff]
        %v494 = vld [vmem:[#allocation9 + $0x40] sm:$0xff]
        %v495 = vld [vmem:[#allocation9 + $0x48] sm:$0xff]
        %v496 = vld [vmem:[#allocation9 + $0x50] sm:$0xff]
        %v497 = vld [vmem:[#allocation9 + $0x58] sm:$0xff]
        %v498 = vld [vmem:[#allocation9 + $0x60] sm:$0xff]
        %v499 = vld [vmem:[#allocation9 + $0x68] sm:$0xff]
        %v500 = vld [vmem:[#allocation9 + $0x70] sm:$0xff]
        %v501 = vld [vmem:[#allocation9 + $0x78] sm:$0xff]
        %v502 = vld [vmem:[#allocation9 + $0x80] sm:$0xff]
        %v503 = vld [vmem:[#allocation9 + $0x88] sm:$0xff]
        %v504 = vld [vmem:[#allocation9 + $0x90] sm:$0xff]
        %v505 = vld [vmem:[#allocation9 + $0x98] sm:$0xff]
        %v506 = vld [vmem:[#allocation9 + $0xa0] sm:$0xff]
        %v507 = vld [vmem:[#allocation9 + $0xa8] sm:$0xff]
        %v508 = vld [vmem:[#allocation9 + $0xb0] sm:$0xff]
        %v509 = vld [vmem:[#allocation9 + $0xb8] sm:$0xff]
        %v510 = vld [vmem:[#allocation9 + $0xc0] sm:$0xff]
        %v511 = vld [vmem:[#allocation9 + $0xc8] sm:$0xff]
        %v512 = vld [vmem:[#allocation9 + $0xd0] sm:$0xff]
        %v513 = vld [vmem:[#allocation9 + $0xd8] sm:$0xff]
        %v514 = vld [vmem:[#allocation9 + $0xe0] sm:$0xff]
        %v515 = vld [vmem:[#allocation9 + $0xe8] sm:$0xff]
        %v516 = vld [vmem:[#allocation9 + $0xf0] sm:$0xff]
        %v517 = vld [vmem:[#allocation9 + $0xf8] sm:$0xff]
        %vm518 = vcmask 261120
        %v520 = vsel %vm518, %v448, 0
        %v523 = vsel %vm518, %v449, 0
        %525 = vmatprep.subr.mxu0 0.0
        %526 = vmatpush1.msra.mxu0 0.0
        %527 = vmatprep.subr.mxu0 0.0
        %528 = vmatpush1.msra.mxu0 0.0
        %529 = vmatprep.subr.mxu0 0.0
        %530 = vmatpush1.msra.mxu0 0.0
        %531 = vmatprep.subr.mxu0 0.0
        %532 = vmatpush1.msra.mxu0 0.0
        %533 = vmatprep.subr.mxu0 0.0
        %534 = vmatpush1.msra.mxu0 0.0
        %535 = vmatprep.subr.mxu0 0.0
        %536 = vmatpush1.msra.mxu0 0.0
        %537 = vmatprep.subr.mxu0 0.0
        %538 = vmatpush1.msra.mxu0 0.0
        %539 = vmatprep.subr.mxu0 0.0
        %540 = vmatpush1.msra.mxu0 0.0
        %541 = vmatprep.subr.mxu0 0.0
        %542 = vmatpush1.msra.mxu0 0.0
        %543 = vmatprep.subr.mxu0 0.0
        %544 = vmatpush1.msra.mxu0 0.0
        %545 = vmatprep.subr.mxu0 0.0
        %546 = vmatpush1.msra.mxu0 0.0
        %547 = vmatprep.subr.mxu0 0.0
        %548 = vmatpush1.msra.mxu0 0.0
        %v549 = vand.u32 %v439, 4294901760
        %550 = vmatprep.subr.mxu0 %v549
        %v551 = vand.u32 %v438, 4294901760
        %552 = vmatpush1.msra.mxu0 %v551
        %v553 = vand.u32 %v437, 4294901760
        %554 = vmatprep.subr.mxu0 %v553
        %v555 = vand.u32 %v436, 4294901760
        %556 = vmatpush1.msra.mxu0 %v555
        %v557 = vand.u32 %v435, 4294901760
        %558 = vmatprep.subr.mxu0 %v557
        %v559 = vand.u32 %v434, 4294901760
        %560 = vmatpush1.msra.mxu0 %v559
        %v561 = vand.u32 %v433, 4294901760
        %562 = vmatprep.subr.mxu0 %v561
        %v563 = vand.u32 %v432, 4294901760
        %564 = vmatpush1.msra.mxu0 %v563
        %565 = vmatprep.subr.mxu0 0.0
        %566 = vmatpush2.msra.mxu0 0.0
        %567 = vmatprep.subr.mxu0 0.0
        %568 = vmatpush2.msra.mxu0 0.0
        %569 = vmatprep.subr.mxu0 0.0
        %570 = vmatpush2.msra.mxu0 0.0
        %571 = vmatprep.subr.mxu0 0.0
        %572 = vmatpush2.msra.mxu0 0.0
        %573 = vmatprep.subr.mxu0 0.0
        %574 = vmatpush2.msra.mxu0 0.0
        %575 = vmatprep.subr.mxu0 0.0
        %576 = vmatpush2.msra.mxu0 0.0
        %577 = vmatprep.subr.mxu0 0.0
        %578 = vmatpush2.msra.mxu0 0.0
        %579 = vmatprep.subr.mxu0 0.0
        %580 = vmatpush2.msra.mxu0 0.0
        %581 = vmatprep.subr.mxu0 0.0
        %582 = vmatpush2.msra.mxu0 0.0
        %583 = vmatprep.subr.mxu0 0.0
        %584 = vmatpush2.msra.mxu0 0.0
        %585 = vmatprep.subr.mxu0 0.0
        %586 = vmatpush2.msra.mxu0 0.0
        %587 = vmatprep.subr.mxu0 0.0
        %588 = vmatpush2.msra.mxu0 0.0
        %589 = vmatprep.subr.mxu0 0.0
        %590 = vmatpush2.msra.mxu0 0.0
        %591 = vmatprep.subr.mxu0 0.0
        %592 = vmatpush2.msra.mxu0 0.0
        %593 = vmatprep.subr.mxu0 0.0
        %594 = vmatpush2.msra.mxu0 0.0
        %595 = vmatprep.subr.mxu0 0.0
        %596 = vmatpush2.msra.mxu0 0.0
        %597 = vmatprep.mubr.f32.mxu0 0.0
        %v598 = vand.u32 %v520, 4294901760
        %v599 = vsub.f32 %v520, %v598
        %v600 = vand.u32 %v599, 4294901760
        %v601 = vsub.f32 %v599, %v600
        %v602 = vand.u32 %v601, 4294901760
        %603 = vmatmul.mubr.f32.gmra.mxu0 %v602
        %v604 = vpop.f32.mrf.mxu0
        %v605 = vadd.f32 0.0, %v604
        %v606 = vpop.f32.mrf.mxu0
        %v607 = vadd.f32 0.0, %v606
        %608 = vmatprep.mubr.f32.mxu0 0.0
        %v609 = vand.u32 %v523, 4294901760
        %v610 = vsub.f32 %v523, %v609
        %v611 = vand.u32 %v610, 4294901760
        %v612 = vsub.f32 %v610, %v611
        %v613 = vand.u32 %v612, 4294901760
        %614 = vmatmul.mubr.f32.gmra.mxu0 %v613
        %v615 = vpop.f32.mrf.mxu0
        %v616 = vadd.f32 0.0, %v615
        %v617 = vpop.f32.mrf.mxu0
        %v618 = vadd.f32 0.0, %v617
        %619 = vdwg.mxu0
        %620 = vmatprep.subr.mxu0 0.0
        %621 = vmatpush1.msra.mxu0 0.0
        %622 = vmatprep.subr.mxu0 0.0
        %623 = vmatpush1.msra.mxu0 0.0
        %624 = vmatprep.subr.mxu0 0.0
        %625 = vmatpush1.msra.mxu0 0.0
        %626 = vmatprep.subr.mxu0 0.0
        %627 = vmatpush1.msra.mxu0 0.0
        %628 = vmatprep.subr.mxu0 0.0
        %629 = vmatpush1.msra.mxu0 0.0
        %630 = vmatprep.subr.mxu0 0.0
        %631 = vmatpush1.msra.mxu0 0.0
        %632 = vmatprep.subr.mxu0 0.0
        %633 = vmatpush1.msra.mxu0 0.0
        %634 = vmatprep.subr.mxu0 0.0
        %635 = vmatpush1.msra.mxu0 0.0
        %636 = vmatprep.subr.mxu0 0.0
        %637 = vmatpush1.msra.mxu0 0.0
        %638 = vmatprep.subr.mxu0 0.0
        %639 = vmatpush1.msra.mxu0 0.0
        %640 = vmatprep.subr.mxu0 0.0
        %641 = vmatpush1.msra.mxu0 0.0
        %642 = vmatprep.subr.mxu0 0.0
        %643 = vmatpush1.msra.mxu0 0.0
        %v644 = vand.u32 %v439, 4294901760
        %v645 = vsub.f32 %v439, %v644
        %v646 = vand.u32 %v645, 4294901760
        %v647 = vsub.f32 %v645, %v646
        %v648 = vand.u32 %v647, 4294901760
        %649 = vmatprep.subr.mxu0 %v648
        %v650 = vand.u32 %v438, 4294901760
        %v651 = vsub.f32 %v438, %v650
        %v652 = vand.u32 %v651, 4294901760
        %v653 = vsub.f32 %v651, %v652
        %v654 = vand.u32 %v653, 4294901760
        %655 = vmatpush1.msra.mxu0 %v654
        %v656 = vand.u32 %v437, 4294901760
        %v657 = vsub.f32 %v437, %v656
        %v658 = vand.u32 %v657, 4294901760
        %v659 = vsub.f32 %v657, %v658
        %v660 = vand.u32 %v659, 4294901760
        %661 = vmatprep.subr.mxu0 %v660
        %v662 = vand.u32 %v436, 4294901760
        %v663 = vsub.f32 %v436, %v662
        %v664 = vand.u32 %v663, 4294901760
        %v665 = vsub.f32 %v663, %v664
        %v666 = vand.u32 %v665, 4294901760
        %667 = vmatpush1.msra.mxu0 %v666
        %v668 = vand.u32 %v435, 4294901760
        %v669 = vsub.f32 %v435, %v668
        %v670 = vand.u32 %v669, 4294901760
        %v671 = vsub.f32 %v669, %v670
        %v672 = vand.u32 %v671, 4294901760
        %673 = vmatprep.subr.mxu0 %v672
        %v674 = vand.u32 %v434, 4294901760
        %v675 = vsub.f32 %v434, %v674
        %v676 = vand.u32 %v675, 4294901760
        %v677 = vsub.f32 %v675, %v676
        %v678 = vand.u32 %v677, 4294901760
        %679 = vmatpush1.msra.mxu0 %v678
        %v680 = vand.u32 %v433, 4294901760
        %v681 = vsub.f32 %v433, %v680
        %v682 = vand.u32 %v681, 4294901760
        %v683 = vsub.f32 %v681, %v682
        %v684 = vand.u32 %v683, 4294901760
        %685 = vmatprep.subr.mxu0 %v684
        %v686 = vand.u32 %v432, 4294901760
        %v687 = vsub.f32 %v432, %v686
        %v688 = vand.u32 %v687, 4294901760
        %v689 = vsub.f32 %v687, %v688
        %v690 = vand.u32 %v689, 4294901760
        %691 = vmatpush1.msra.mxu0 %v690
        %692 = vmatprep.subr.mxu0 0.0
        %693 = vmatpush2.msra.mxu0 0.0
        %694 = vmatprep.subr.mxu0 0.0
        %695 = vmatpush2.msra.mxu0 0.0
        %696 = vmatprep.subr.mxu0 0.0
        %697 = vmatpush2.msra.mxu0 0.0
        %698 = vmatprep.subr.mxu0 0.0
        %699 = vmatpush2.msra.mxu0 0.0
        %700 = vmatprep.subr.mxu0 0.0
        %701 = vmatpush2.msra.mxu0 0.0
        %702 = vmatprep.subr.mxu0 0.0
        %703 = vmatpush2.msra.mxu0 0.0
        %704 = vmatprep.subr.mxu0 0.0
        %705 = vmatpush2.msra.mxu0 0.0
        %706 = vmatprep.subr.mxu0 0.0
        %707 = vmatpush2.msra.mxu0 0.0
        %708 = vmatprep.subr.mxu0 0.0
        %709 = vmatpush2.msra.mxu0 0.0
        %710 = vmatprep.subr.mxu0 0.0
        %711 = vmatpush2.msra.mxu0 0.0
        %712 = vmatprep.subr.mxu0 0.0
        %713 = vmatpush2.msra.mxu0 0.0
        %714 = vmatprep.subr.mxu0 0.0
        %715 = vmatpush2.msra.mxu0 0.0
        %716 = vmatprep.subr.mxu0 0.0
        %717 = vmatpush2.msra.mxu0 0.0
        %718 = vmatprep.subr.mxu0 0.0
        %719 = vmatpush2.msra.mxu0 0.0
        %720 = vmatprep.subr.mxu0 0.0
        %721 = vmatpush2.msra.mxu0 0.0
        %722 = vmatprep.subr.mxu0 0.0
        %723 = vmatpush2.msra.mxu0 0.0
        %724 = vmatprep.mubr.f32.mxu0 0.0
        %v725 = vand.u32 %v520, 4294901760
        %726 = vmatmul.mubr.f32.gmra.mxu0 %v725
        %v727 = vpop.f32.mrf.mxu0
        %v728 = vadd.f32 %v605, %v727
        %v729 = vpop.f32.mrf.mxu0
        %v730 = vadd.f32 %v607, %v729
        %731 = vmatprep.mubr.f32.mxu0 0.0
        %v732 = vand.u32 %v523, 4294901760
        %733 = vmatmul.mubr.f32.gmra.mxu0 %v732
        %v734 = vpop.f32.mrf.mxu0
        %v735 = vadd.f32 %v616, %v734
        %v736 = vpop.f32.mrf.mxu0
        %v737 = vadd.f32 %v618, %v736
        %738 = vdwg.mxu0
        %739 = vmatprep.subr.mxu0 0.0
        %740 = vmatpush1.msra.mxu0 0.0
        %741 = vmatprep.subr.mxu0 0.0
        %742 = vmatpush1.msra.mxu0 0.0
        %743 = vmatprep.subr.mxu0 0.0
        %744 = vmatpush1.msra.mxu0 0.0
        %745 = vmatprep.subr.mxu0 0.0
        %746 = vmatpush1.msra.mxu0 0.0
        %747 = vmatprep.subr.mxu0 0.0
        %748 = vmatpush1.msra.mxu0 0.0
        %749 = vmatprep.subr.mxu0 0.0
        %750 = vmatpush1.msra.mxu0 0.0
        %751 = vmatprep.subr.mxu0 0.0
        %752 = vmatpush1.msra.mxu0 0.0
        %753 = vmatprep.subr.mxu0 0.0
        %754 = vmatpush1.msra.mxu0 0.0
        %755 = vmatprep.subr.mxu0 0.0
        %756 = vmatpush1.msra.mxu0 0.0
        %757 = vmatprep.subr.mxu0 0.0
        %758 = vmatpush1.msra.mxu0 0.0
        %759 = vmatprep.subr.mxu0 0.0
        %760 = vmatpush1.msra.mxu0 0.0
        %761 = vmatprep.subr.mxu0 0.0
        %762 = vmatpush1.msra.mxu0 0.0
        %v763 = vand.u32 %v439, 4294901760
        %v764 = vsub.f32 %v439, %v763
        %765 = vmatprep.subr.mxu0 %v764
        %v766 = vand.u32 %v438, 4294901760
        %v767 = vsub.f32 %v438, %v766
        %768 = vmatpush1.msra.mxu0 %v767
        %v769 = vand.u32 %v437, 4294901760
        %v770 = vsub.f32 %v437, %v769
        %771 = vmatprep.subr.mxu0 %v770
        %v772 = vand.u32 %v436, 4294901760
        %v773 = vsub.f32 %v436, %v772
        %774 = vmatpush1.msra.mxu0 %v773
        %v775 = vand.u32 %v435, 4294901760
        %v776 = vsub.f32 %v435, %v775
        %777 = vmatprep.subr.mxu0 %v776
        %v778 = vand.u32 %v434, 4294901760
        %v779 = vsub.f32 %v434, %v778
        %780 = vmatpush1.msra.mxu0 %v779
        %v781 = vand.u32 %v433, 4294901760
        %v782 = vsub.f32 %v433, %v781
        %783 = vmatprep.subr.mxu0 %v782
        %v784 = vand.u32 %v432, 4294901760
        %v785 = vsub.f32 %v432, %v784
        %786 = vmatpush1.msra.mxu0 %v785
        %787 = vmatprep.subr.mxu0 0.0
        %788 = vmatpush2.msra.mxu0 0.0
        %789 = vmatprep.subr.mxu0 0.0
        %790 = vmatpush2.msra.mxu0 0.0
        %791 = vmatprep.subr.mxu0 0.0
        %792 = vmatpush2.msra.mxu0 0.0
        %793 = vmatprep.subr.mxu0 0.0
        %794 = vmatpush2.msra.mxu0 0.0
        %795 = vmatprep.subr.mxu0 0.0
        %796 = vmatpush2.msra.mxu0 0.0
        %797 = vmatprep.subr.mxu0 0.0
        %798 = vmatpush2.msra.mxu0 0.0
        %799 = vmatprep.subr.mxu0 0.0
        %800 = vmatpush2.msra.mxu0 0.0
        %801 = vmatprep.subr.mxu0 0.0
        %802 = vmatpush2.msra.mxu0 0.0
        %803 = vmatprep.subr.mxu0 0.0
        %804 = vmatpush2.msra.mxu0 0.0
        %805 = vmatprep.subr.mxu0 0.0
        %806 = vmatpush2.msra.mxu0 0.0
        %807 = vmatprep.subr.mxu0 0.0
        %808 = vmatpush2.msra.mxu0 0.0
        %809 = vmatprep.subr.mxu0 0.0
        %810 = vmatpush2.msra.mxu0 0.0
        %811 = vmatprep.subr.mxu0 0.0
        %812 = vmatpush2.msra.mxu0 0.0
        %813 = vmatprep.subr.mxu0 0.0
        %814 = vmatpush2.msra.mxu0 0.0
        %815 = vmatprep.subr.mxu0 0.0
        %816 = vmatpush2.msra.mxu0 0.0
        %817 = vmatprep.subr.mxu0 0.0
        %818 = vmatpush2.msra.mxu0 0.0
        %819 = vmatprep.mubr.f32.mxu0 0.0
        %v820 = vand.u32 %v520, 4294901760
        %v821 = vsub.f32 %v520, %v820
        %822 = vmatmul.mubr.f32.gmra.mxu0 %v821
        %v823 = vpop.f32.mrf.mxu0
        %v824 = vadd.f32 %v728, %v823
        %v825 = vpop.f32.mrf.mxu0
        %v826 = vadd.f32 %v730, %v825
        %827 = vmatprep.mubr.f32.mxu0 0.0
        %v828 = vand.u32 %v523, 4294901760
        %v829 = vsub.f32 %v523, %v828
        %830 = vmatmul.mubr.f32.gmra.mxu0 %v829
        %v831 = vpop.f32.mrf.mxu0
        %v832 = vadd.f32 %v735, %v831
        %v833 = vpop.f32.mrf.mxu0
        %v834 = vadd.f32 %v737, %v833
        %835 = vdwg.mxu0
        %836 = vmatprep.subr.mxu0 0.0
        %837 = vmatpush1.msra.mxu0 0.0
        %838 = vmatprep.subr.mxu0 0.0
        %839 = vmatpush1.msra.mxu0 0.0
        %840 = vmatprep.subr.mxu0 0.0
        %841 = vmatpush1.msra.mxu0 0.0
        %842 = vmatprep.subr.mxu0 0.0
        %843 = vmatpush1.msra.mxu0 0.0
        %844 = vmatprep.subr.mxu0 0.0
        %845 = vmatpush1.msra.mxu0 0.0
        %846 = vmatprep.subr.mxu0 0.0
        %847 = vmatpush1.msra.mxu0 0.0
        %848 = vmatprep.subr.mxu0 0.0
        %849 = vmatpush1.msra.mxu0 0.0
        %850 = vmatprep.subr.mxu0 0.0
        %851 = vmatpush1.msra.mxu0 0.0
        %852 = vmatprep.subr.mxu0 0.0
        %853 = vmatpush1.msra.mxu0 0.0
        %854 = vmatprep.subr.mxu0 0.0
        %855 = vmatpush1.msra.mxu0 0.0
        %856 = vmatprep.subr.mxu0 0.0
        %857 = vmatpush1.msra.mxu0 0.0
        %858 = vmatprep.subr.mxu0 0.0
        %859 = vmatpush1.msra.mxu0 0.0
        %v860 = vand.u32 %v439, 4294901760
        %861 = vmatprep.subr.mxu0 %v860
        %v862 = vand.u32 %v438, 4294901760
        %863 = vmatpush1.msra.mxu0 %v862
        %v864 = vand.u32 %v437, 4294901760
        %865 = vmatprep.subr.mxu0 %v864
        %v866 = vand.u32 %v436, 4294901760
        %867 = vmatpush1.msra.mxu0 %v866
        %v868 = vand.u32 %v435, 4294901760
        %869 = vmatprep.subr.mxu0 %v868
        %v870 = vand.u32 %v434, 4294901760
        %871 = vmatpush1.msra.mxu0 %v870
        %v872 = vand.u32 %v433, 4294901760
        %873 = vmatprep.subr.mxu0 %v872
        %v874 = vand.u32 %v432, 4294901760
        %875 = vmatpush1.msra.mxu0 %v874
        %876 = vmatprep.subr.mxu0 0.0
        %877 = vmatpush2.msra.mxu0 0.0
        %878 = vmatprep.subr.mxu0 0.0
        %879 = vmatpush2.msra.mxu0 0.0
        %880 = vmatprep.subr.mxu0 0.0
        %881 = vmatpush2.msra.mxu0 0.0
        %882 = vmatprep.subr.mxu0 0.0
        %883 = vmatpush2.msra.mxu0 0.0
        %884 = vmatprep.subr.mxu0 0.0
        %885 = vmatpush2.msra.mxu0 0.0
        %886 = vmatprep.subr.mxu0 0.0
        %887 = vmatpush2.msra.mxu0 0.0
        %888 = vmatprep.subr.mxu0 0.0
        %889 = vmatpush2.msra.mxu0 0.0
        %890 = vmatprep.subr.mxu0 0.0
        %891 = vmatpush2.msra.mxu0 0.0
        %892 = vmatprep.subr.mxu0 0.0
        %893 = vmatpush2.msra.mxu0 0.0
        %894 = vmatprep.subr.mxu0 0.0
        %895 = vmatpush2.msra.mxu0 0.0
        %896 = vmatprep.subr.mxu0 0.0
        %897 = vmatpush2.msra.mxu0 0.0
        %898 = vmatprep.subr.mxu0 0.0
        %899 = vmatpush2.msra.mxu0 0.0
        %900 = vmatprep.subr.mxu0 0.0
        %901 = vmatpush2.msra.mxu0 0.0
        %902 = vmatprep.subr.mxu0 0.0
        %903 = vmatpush2.msra.mxu0 0.0
        %904 = vmatprep.subr.mxu0 0.0
        %905 = vmatpush2.msra.mxu0 0.0
        %906 = vmatprep.subr.mxu0 0.0
        %907 = vmatpush2.msra.mxu0 0.0
        %908 = vmatprep.mubr.f32.mxu0 0.0
        %v909 = vand.u32 %v520, 4294901760
        %v910 = vsub.f32 %v520, %v909
        %v911 = vand.u32 %v910, 4294901760
        %912 = vmatmul.mubr.f32.gmra.mxu0 %v911
        %v913 = vpop.f32.mrf.mxu0
        %v914 = vadd.f32 %v824, %v913
        %v915 = vpop.f32.mrf.mxu0
        %v916 = vadd.f32 %v826, %v915
        %917 = vmatprep.mubr.f32.mxu0 0.0
        %v918 = vand.u32 %v523, 4294901760
        %v919 = vsub.f32 %v523, %v918
        %v920 = vand.u32 %v919, 4294901760
        %921 = vmatmul.mubr.f32.gmra.mxu0 %v920
        %v922 = vpop.f32.mrf.mxu0
        %v923 = vadd.f32 %v832, %v922
        %v924 = vpop.f32.mrf.mxu0
        %v925 = vadd.f32 %v834, %v924
        %926 = vdwg.mxu0
        %927 = vmatprep.subr.mxu0 0.0
        %928 = vmatpush1.msra.mxu0 0.0
        %929 = vmatprep.subr.mxu0 0.0
        %930 = vmatpush1.msra.mxu0 0.0
        %931 = vmatprep.subr.mxu0 0.0
        %932 = vmatpush1.msra.mxu0 0.0
        %933 = vmatprep.subr.mxu0 0.0
        %934 = vmatpush1.msra.mxu0 0.0
        %935 = vmatprep.subr.mxu0 0.0
        %936 = vmatpush1.msra.mxu0 0.0
        %937 = vmatprep.subr.mxu0 0.0
        %938 = vmatpush1.msra.mxu0 0.0
        %939 = vmatprep.subr.mxu0 0.0
        %940 = vmatpush1.msra.mxu0 0.0
        %941 = vmatprep.subr.mxu0 0.0
        %942 = vmatpush1.msra.mxu0 0.0
        %943 = vmatprep.subr.mxu0 0.0
        %944 = vmatpush1.msra.mxu0 0.0
        %945 = vmatprep.subr.mxu0 0.0
        %946 = vmatpush1.msra.mxu0 0.0
        %947 = vmatprep.subr.mxu0 0.0
        %948 = vmatpush1.msra.mxu0 0.0
        %949 = vmatprep.subr.mxu0 0.0
        %950 = vmatpush1.msra.mxu0 0.0
        %v951 = vand.u32 %v439, 4294901760
        %v952 = vsub.f32 %v439, %v951
        %v953 = vand.u32 %v952, 4294901760
        %954 = vmatprep.subr.mxu0 %v953
        %v955 = vand.u32 %v438, 4294901760
        %v956 = vsub.f32 %v438, %v955
        %v957 = vand.u32 %v956, 4294901760
        %958 = vmatpush1.msra.mxu0 %v957
        %v959 = vand.u32 %v437, 4294901760
        %v960 = vsub.f32 %v437, %v959
        %v961 = vand.u32 %v960, 4294901760
        %962 = vmatprep.subr.mxu0 %v961
        %v963 = vand.u32 %v436, 4294901760
        %v964 = vsub.f32 %v436, %v963
        %v965 = vand.u32 %v964, 4294901760
        %966 = vmatpush1.msra.mxu0 %v965
        %v967 = vand.u32 %v435, 4294901760
        %v968 = vsub.f32 %v435, %v967
        %v969 = vand.u32 %v968, 4294901760
        %970 = vmatprep.subr.mxu0 %v969
        %v971 = vand.u32 %v434, 4294901760
        %v972 = vsub.f32 %v434, %v971
        %v973 = vand.u32 %v972, 4294901760
        %974 = vmatpush1.msra.mxu0 %v973
        %v975 = vand.u32 %v433, 4294901760
        %v976 = vsub.f32 %v433, %v975
        %v977 = vand.u32 %v976, 4294901760
        %978 = vmatprep.subr.mxu0 %v977
        %v979 = vand.u32 %v432, 4294901760
        %v980 = vsub.f32 %v432, %v979
        %v981 = vand.u32 %v980, 4294901760
        %982 = vmatpush1.msra.mxu0 %v981
        %983 = vmatprep.subr.mxu0 0.0
        %984 = vmatpush2.msra.mxu0 0.0
        %985 = vmatprep.subr.mxu0 0.0
        %986 = vmatpush2.msra.mxu0 0.0
        %987 = vmatprep.subr.mxu0 0.0
        %988 = vmatpush2.msra.mxu0 0.0
        %989 = vmatprep.subr.mxu0 0.0
        %990 = vmatpush2.msra.mxu0 0.0
        %991 = vmatprep.subr.mxu0 0.0
        %992 = vmatpush2.msra.mxu0 0.0
        %993 = vmatprep.subr.mxu0 0.0
        %994 = vmatpush2.msra.mxu0 0.0
        %995 = vmatprep.subr.mxu0 0.0
        %996 = vmatpush2.msra.mxu0 0.0
        %997 = vmatprep.subr.mxu0 0.0
        %998 = vmatpush2.msra.mxu0 0.0
        %999 = vmatprep.subr.mxu0 0.0
        %1000 = vmatpush2.msra.mxu0 0.0
        %1001 = vmatprep.subr.mxu0 0.0
        %1002 = vmatpush2.msra.mxu0 0.0
        %1003 = vmatprep.subr.mxu0 0.0
        %1004 = vmatpush2.msra.mxu0 0.0
        %1005 = vmatprep.subr.mxu0 0.0
        %1006 = vmatpush2.msra.mxu0 0.0
        %1007 = vmatprep.subr.mxu0 0.0
        %1008 = vmatpush2.msra.mxu0 0.0
        %1009 = vmatprep.subr.mxu0 0.0
        %1010 = vmatpush2.msra.mxu0 0.0
        %1011 = vmatprep.subr.mxu0 0.0
        %1012 = vmatpush2.msra.mxu0 0.0
        %1013 = vmatprep.subr.mxu0 0.0
        %1014 = vmatpush2.msra.mxu0 0.0
        %1015 = vmatprep.mubr.f32.mxu0 0.0
        %v1016 = vand.u32 %v520, 4294901760
        %1017 = vmatmul.mubr.f32.gmra.mxu0 %v1016
        %v1018 = vpop.f32.mrf.mxu0
        %v1019 = vadd.f32 %v914, %v1018
        %v1020 = vpop.f32.mrf.mxu0
        %v1021 = vadd.f32 %v916, %v1020
        %1022 = vmatprep.mubr.f32.mxu0 0.0
        %v1023 = vand.u32 %v523, 4294901760
        %1024 = vmatmul.mubr.f32.gmra.mxu0 %v1023
        %v1025 = vpop.f32.mrf.mxu0
        %v1026 = vadd.f32 %v923, %v1025
        %v1027 = vpop.f32.mrf.mxu0
        %v1028 = vadd.f32 %v925, %v1027
        %1029 = vdwg.mxu0
        %1030 = vmatprep.subr.mxu0 0.0
        %1031 = vmatpush1.msra.mxu0 0.0
        %1032 = vmatprep.subr.mxu0 0.0
        %1033 = vmatpush1.msra.mxu0 0.0
        %1034 = vmatprep.subr.mxu0 0.0
        %1035 = vmatpush1.msra.mxu0 0.0
        %1036 = vmatprep.subr.mxu0 0.0
        %1037 = vmatpush1.msra.mxu0 0.0
        %1038 = vmatprep.subr.mxu0 0.0
        %1039 = vmatpush1.msra.mxu0 0.0
        %1040 = vmatprep.subr.mxu0 0.0
        %1041 = vmatpush1.msra.mxu0 0.0
        %1042 = vmatprep.subr.mxu0 0.0
        %1043 = vmatpush1.msra.mxu0 0.0
        %1044 = vmatprep.subr.mxu0 0.0
        %1045 = vmatpush1.msra.mxu0 0.0
        %1046 = vmatprep.subr.mxu0 0.0
        %1047 = vmatpush1.msra.mxu0 0.0
        %1048 = vmatprep.subr.mxu0 0.0
        %1049 = vmatpush1.msra.mxu0 0.0
        %1050 = vmatprep.subr.mxu0 0.0
        %1051 = vmatpush1.msra.mxu0 0.0
        %1052 = vmatprep.subr.mxu0 0.0
        %1053 = vmatpush1.msra.mxu0 0.0
        %v1054 = vand.u32 %v439, 4294901760
        %1055 = vmatprep.subr.mxu0 %v1054
        %v1056 = vand.u32 %v438, 4294901760
        %1057 = vmatpush1.msra.mxu0 %v1056
        %v1058 = vand.u32 %v437, 4294901760
        %1059 = vmatprep.subr.mxu0 %v1058
        %v1060 = vand.u32 %v436, 4294901760
        %1061 = vmatpush1.msra.mxu0 %v1060
        %v1062 = vand.u32 %v435, 4294901760
        %1063 = vmatprep.subr.mxu0 %v1062
        %v1064 = vand.u32 %v434, 4294901760
        %1065 = vmatpush1.msra.mxu0 %v1064
        %v1066 = vand.u32 %v433, 4294901760
        %1067 = vmatprep.subr.mxu0 %v1066
        %v1068 = vand.u32 %v432, 4294901760
        %1069 = vmatpush1.msra.mxu0 %v1068
        %1070 = vmatprep.subr.mxu0 0.0
        %1071 = vmatpush2.msra.mxu0 0.0
        %1072 = vmatprep.subr.mxu0 0.0
        %1073 = vmatpush2.msra.mxu0 0.0
        %1074 = vmatprep.subr.mxu0 0.0
        %1075 = vmatpush2.msra.mxu0 0.0
        %1076 = vmatprep.subr.mxu0 0.0
        %1077 = vmatpush2.msra.mxu0 0.0
        %1078 = vmatprep.subr.mxu0 0.0
        %1079 = vmatpush2.msra.mxu0 0.0
        %1080 = vmatprep.subr.mxu0 0.0
        %1081 = vmatpush2.msra.mxu0 0.0
        %1082 = vmatprep.subr.mxu0 0.0
        %1083 = vmatpush2.msra.mxu0 0.0
        %1084 = vmatprep.subr.mxu0 0.0
        %1085 = vmatpush2.msra.mxu0 0.0
        %1086 = vmatprep.subr.mxu0 0.0
        %1087 = vmatpush2.msra.mxu0 0.0
        %1088 = vmatprep.subr.mxu0 0.0
        %1089 = vmatpush2.msra.mxu0 0.0
        %1090 = vmatprep.subr.mxu0 0.0
        %1091 = vmatpush2.msra.mxu0 0.0
        %1092 = vmatprep.subr.mxu0 0.0
        %1093 = vmatpush2.msra.mxu0 0.0
        %1094 = vmatprep.subr.mxu0 0.0
        %1095 = vmatpush2.msra.mxu0 0.0
        %1096 = vmatprep.subr.mxu0 0.0
        %1097 = vmatpush2.msra.mxu0 0.0
        %1098 = vmatprep.subr.mxu0 0.0
        %1099 = vmatpush2.msra.mxu0 0.0
        %1100 = vmatprep.subr.mxu0 0.0
        %1101 = vmatpush2.msra.mxu0 0.0
        %1102 = vmatprep.mubr.f32.mxu0 0.0
        %v1103 = vand.u32 %v520, 4294901760
        %1104 = vmatmul.mubr.f32.gmra.mxu0 %v1103
        %v1105 = vpop.f32.mrf.mxu0
        %v1106 = vadd.f32 %v1019, %v1105
        %v1107 = vpop.f32.mrf.mxu0
        %v1108 = vadd.f32 %v1021, %v1107
        %1109 = vmatprep.mubr.f32.mxu0 0.0
        %v1110 = vand.u32 %v523, 4294901760
        %1111 = vmatmul.mubr.f32.gmra.mxu0 %v1110
        %v1112 = vpop.f32.mrf.mxu0
        %v1113 = vadd.f32 %v1026, %v1112
        %v1114 = vpop.f32.mrf.mxu0
        %v1115 = vadd.f32 %v1028, %v1114
        %1116 = vdwg.mxu0
        %1117 = vmatprep.subr.mxu0 0.0
        %v1118 = vand.u32 %v465, 4294901760
        %1119 = vmatpush1.msra.mxu0 %v1118
        %1120 = vmatprep.subr.mxu0 0.0
        %v1121 = vand.u32 %v464, 4294901760
        %1122 = vmatpush1.msra.mxu0 %v1121
        %1123 = vmatprep.subr.mxu0 0.0
        %v1124 = vand.u32 %v463, 4294901760
        %1125 = vmatpush1.msra.mxu0 %v1124
        %1126 = vmatprep.subr.mxu0 0.0
        %v1127 = vand.u32 %v462, 4294901760
        %1128 = vmatpush1.msra.mxu0 %v1127
        %1129 = vmatprep.subr.mxu0 0.0
        %v1130 = vand.u32 %v461, 4294901760
        %1131 = vmatpush1.msra.mxu0 %v1130
        %1132 = vmatprep.subr.mxu0 0.0
        %v1133 = vand.u32 %v460, 4294901760
        %1134 = vmatpush1.msra.mxu0 %v1133
        %1135 = vmatprep.subr.mxu0 0.0
        %v1136 = vand.u32 %v459, 4294901760
        %1137 = vmatpush1.msra.mxu0 %v1136
        %1138 = vmatprep.subr.mxu0 0.0
        %v1139 = vand.u32 %v458, 4294901760
        %1140 = vmatpush1.msra.mxu0 %v1139
        %1141 = vmatprep.subr.mxu0 0.0
        %v1142 = vand.u32 %v457, 4294901760
        %1143 = vmatpush1.msra.mxu0 %v1142
        %1144 = vmatprep.subr.mxu0 0.0
        %v1145 = vand.u32 %v456, 4294901760
        %1146 = vmatpush1.msra.mxu0 %v1145
        %1147 = vmatprep.subr.mxu0 0.0
        %v1148 = vand.u32 %v455, 4294901760
        %1149 = vmatpush1.msra.mxu0 %v1148
        %1150 = vmatprep.subr.mxu0 0.0
        %v1151 = vand.u32 %v454, 4294901760
        %1152 = vmatpush1.msra.mxu0 %v1151
        %1153 = vmatprep.subr.mxu0 0.0
        %v1154 = vand.u32 %v453, 4294901760
        %1155 = vmatpush1.msra.mxu0 %v1154
        %1156 = vmatprep.subr.mxu0 0.0
        %v1157 = vand.u32 %v452, 4294901760
        %1158 = vmatpush1.msra.mxu0 %v1157
        %1159 = vmatprep.subr.mxu0 0.0
        %v1160 = vand.u32 %v451, 4294901760
        %1161 = vmatpush1.msra.mxu0 %v1160
        %1162 = vmatprep.subr.mxu0 0.0
        %v1163 = vand.u32 %v450, 4294901760
        %1164 = vmatpush1.msra.mxu0 %v1163
        %1165 = vmatprep.subr.mxu0 0.0
        %v1166 = vand.u32 %v481, 4294901760
        %1167 = vmatpush2.msra.mxu0 %v1166
        %1168 = vmatprep.subr.mxu0 0.0
        %v1169 = vand.u32 %v480, 4294901760
        %1170 = vmatpush2.msra.mxu0 %v1169
        %1171 = vmatprep.subr.mxu0 0.0
        %v1172 = vand.u32 %v479, 4294901760
        %1173 = vmatpush2.msra.mxu0 %v1172
        %1174 = vmatprep.subr.mxu0 0.0
        %v1175 = vand.u32 %v478, 4294901760
        %1176 = vmatpush2.msra.mxu0 %v1175
        %1177 = vmatprep.subr.mxu0 0.0
        %v1178 = vand.u32 %v477, 4294901760
        %1179 = vmatpush2.msra.mxu0 %v1178
        %1180 = vmatprep.subr.mxu0 0.0
        %v1181 = vand.u32 %v476, 4294901760
        %1182 = vmatpush2.msra.mxu0 %v1181
        %1183 = vmatprep.subr.mxu0 0.0
        %v1184 = vand.u32 %v475, 4294901760
        %1185 = vmatpush2.msra.mxu0 %v1184
        %1186 = vmatprep.subr.mxu0 0.0
        %v1187 = vand.u32 %v474, 4294901760
        %1188 = vmatpush2.msra.mxu0 %v1187
        %1189 = vmatprep.subr.mxu0 0.0
        %v1190 = vand.u32 %v473, 4294901760
        %1191 = vmatpush2.msra.mxu0 %v1190
        %1192 = vmatprep.subr.mxu0 0.0
        %v1193 = vand.u32 %v472, 4294901760
        %1194 = vmatpush2.msra.mxu0 %v1193
        %1195 = vmatprep.subr.mxu0 0.0
        %v1196 = vand.u32 %v471, 4294901760
        %1197 = vmatpush2.msra.mxu0 %v1196
        %1198 = vmatprep.subr.mxu0 0.0
        %v1199 = vand.u32 %v470, 4294901760
        %1200 = vmatpush2.msra.mxu0 %v1199
        %1201 = vmatprep.subr.mxu0 0.0
        %v1202 = vand.u32 %v469, 4294901760
        %1203 = vmatpush2.msra.mxu0 %v1202
        %1204 = vmatprep.subr.mxu0 0.0
        %v1205 = vand.u32 %v468, 4294901760
        %1206 = vmatpush2.msra.mxu0 %v1205
        %1207 = vmatprep.subr.mxu0 0.0
        %v1208 = vand.u32 %v467, 4294901760
        %1209 = vmatpush2.msra.mxu0 %v1208
        %1210 = vmatprep.subr.mxu0 0.0
        %v1211 = vand.u32 %v466, 4294901760
        %1212 = vmatpush2.msra.mxu0 %v1211
        %v1213 = vand.u32 %v1108, 4294901760
        %v1214 = vsub.f32 %v1108, %v1213
        %v1215 = vand.u32 %v1214, 4294901760
        %v1216 = vsub.f32 %v1214, %v1215
        %v1217 = vand.u32 %v1216, 4294901760
        %1218 = vmatprep.mubr.f32.mxu0 %v1217
        %v1219 = vand.u32 %v1106, 4294901760
        %v1220 = vsub.f32 %v1106, %v1219
        %v1221 = vand.u32 %v1220, 4294901760
        %v1222 = vsub.f32 %v1220, %v1221
        %v1223 = vand.u32 %v1222, 4294901760
        %1224 = vmatmul.mubr.f32.gmra.mxu0 %v1223
        %v1225 = vpop.f32.mrf.mxu0
        %v1226 = vadd.f32 0.0, %v1225
        %v1227 = vpop.f32.mrf.mxu0
        %v1228 = vand.u32 %v1115, 4294901760
        %v1229 = vsub.f32 %v1115, %v1228
        %v1230 = vand.u32 %v1229, 4294901760
        %v1231 = vsub.f32 %v1229, %v1230
        %v1232 = vand.u32 %v1231, 4294901760
        %1233 = vmatprep.mubr.f32.mxu0 %v1232
        %v1234 = vand.u32 %v1113, 4294901760
        %v1235 = vsub.f32 %v1113, %v1234
        %v1236 = vand.u32 %v1235, 4294901760
        %v1237 = vsub.f32 %v1235, %v1236
        %v1238 = vand.u32 %v1237, 4294901760
        %1239 = vmatmul.mubr.f32.gmra.mxu0 %v1238
        %v1240 = vpop.f32.mrf.mxu0
        %v1241 = vadd.f32 0.0, %v1240
        %v1242 = vpop.f32.mrf.mxu0
        %1243 = vdwg.mxu0
        %1244 = vmatprep.subr.mxu0 0.0
        %v1245 = vand.u32 %v465, 4294901760
        %v1246 = vsub.f32 %v465, %v1245
        %v1247 = vand.u32 %v1246, 4294901760
        %v1248 = vsub.f32 %v1246, %v1247
        %v1249 = vand.u32 %v1248, 4294901760
        %1250 = vmatpush1.msra.mxu0 %v1249
        %1251 = vmatprep.subr.mxu0 0.0
        %v1252 = vand.u32 %v464, 4294901760
        %v1253 = vsub.f32 %v464, %v1252
        %v1254 = vand.u32 %v1253, 4294901760
        %v1255 = vsub.f32 %v1253, %v1254
        %v1256 = vand.u32 %v1255, 4294901760
        %1257 = vmatpush1.msra.mxu0 %v1256
        %1258 = vmatprep.subr.mxu0 0.0
        %v1259 = vand.u32 %v463, 4294901760
        %v1260 = vsub.f32 %v463, %v1259
        %v1261 = vand.u32 %v1260, 4294901760
        %v1262 = vsub.f32 %v1260, %v1261
        %v1263 = vand.u32 %v1262, 4294901760
        %1264 = vmatpush1.msra.mxu0 %v1263
        %1265 = vmatprep.subr.mxu0 0.0
        %v1266 = vand.u32 %v462, 4294901760
        %v1267 = vsub.f32 %v462, %v1266
        %v1268 = vand.u32 %v1267, 4294901760
        %v1269 = vsub.f32 %v1267, %v1268
        %v1270 = vand.u32 %v1269, 4294901760
        %1271 = vmatpush1.msra.mxu0 %v1270
        %1272 = vmatprep.subr.mxu0 0.0
        %v1273 = vand.u32 %v461, 4294901760
        %v1274 = vsub.f32 %v461, %v1273
        %v1275 = vand.u32 %v1274, 4294901760
        %v1276 = vsub.f32 %v1274, %v1275
        %v1277 = vand.u32 %v1276, 4294901760
        %1278 = vmatpush1.msra.mxu0 %v1277
        %1279 = vmatprep.subr.mxu0 0.0
        %v1280 = vand.u32 %v460, 4294901760
        %v1281 = vsub.f32 %v460, %v1280
        %v1282 = vand.u32 %v1281, 4294901760
        %v1283 = vsub.f32 %v1281, %v1282
        %v1284 = vand.u32 %v1283, 4294901760
        %1285 = vmatpush1.msra.mxu0 %v1284
        %1286 = vmatprep.subr.mxu0 0.0
        %v1287 = vand.u32 %v459, 4294901760
        %v1288 = vsub.f32 %v459, %v1287
        %v1289 = vand.u32 %v1288, 4294901760
        %v1290 = vsub.f32 %v1288, %v1289
        %v1291 = vand.u32 %v1290, 4294901760
        %1292 = vmatpush1.msra.mxu0 %v1291
        %1293 = vmatprep.subr.mxu0 0.0
        %v1294 = vand.u32 %v458, 4294901760
        %v1295 = vsub.f32 %v458, %v1294
        %v1296 = vand.u32 %v1295, 4294901760
        %v1297 = vsub.f32 %v1295, %v1296
        %v1298 = vand.u32 %v1297, 4294901760
        %1299 = vmatpush1.msra.mxu0 %v1298
        %1300 = vmatprep.subr.mxu0 0.0
        %v1301 = vand.u32 %v457, 4294901760
        %v1302 = vsub.f32 %v457, %v1301
        %v1303 = vand.u32 %v1302, 4294901760
        %v1304 = vsub.f32 %v1302, %v1303
        %v1305 = vand.u32 %v1304, 4294901760
        %1306 = vmatpush1.msra.mxu0 %v1305
        %1307 = vmatprep.subr.mxu0 0.0
        %v1308 = vand.u32 %v456, 4294901760
        %v1309 = vsub.f32 %v456, %v1308
        %v1310 = vand.u32 %v1309, 4294901760
        %v1311 = vsub.f32 %v1309, %v1310
        %v1312 = vand.u32 %v1311, 4294901760
        %1313 = vmatpush1.msra.mxu0 %v1312
        %1314 = vmatprep.subr.mxu0 0.0
        %v1315 = vand.u32 %v455, 4294901760
        %v1316 = vsub.f32 %v455, %v1315
        %v1317 = vand.u32 %v1316, 4294901760
        %v1318 = vsub.f32 %v1316, %v1317
        %v1319 = vand.u32 %v1318, 4294901760
        %1320 = vmatpush1.msra.mxu0 %v1319
        %1321 = vmatprep.subr.mxu0 0.0
        %v1322 = vand.u32 %v454, 4294901760
        %v1323 = vsub.f32 %v454, %v1322
        %v1324 = vand.u32 %v1323, 4294901760
        %v1325 = vsub.f32 %v1323, %v1324
        %v1326 = vand.u32 %v1325, 4294901760
        %1327 = vmatpush1.msra.mxu0 %v1326
        %1328 = vmatprep.subr.mxu0 0.0
        %v1329 = vand.u32 %v453, 4294901760
        %v1330 = vsub.f32 %v453, %v1329
        %v1331 = vand.u32 %v1330, 4294901760
        %v1332 = vsub.f32 %v1330, %v1331
        %v1333 = vand.u32 %v1332, 4294901760
        %1334 = vmatpush1.msra.mxu0 %v1333
        %1335 = vmatprep.subr.mxu0 0.0
        %v1336 = vand.u32 %v452, 4294901760
        %v1337 = vsub.f32 %v452, %v1336
        %v1338 = vand.u32 %v1337, 4294901760
        %v1339 = vsub.f32 %v1337, %v1338
        %v1340 = vand.u32 %v1339, 4294901760
        %1341 = vmatpush1.msra.mxu0 %v1340
        %1342 = vmatprep.subr.mxu0 0.0
        %v1343 = vand.u32 %v451, 4294901760
        %v1344 = vsub.f32 %v451, %v1343
        %v1345 = vand.u32 %v1344, 4294901760
        %v1346 = vsub.f32 %v1344, %v1345
        %v1347 = vand.u32 %v1346, 4294901760
        %1348 = vmatpush1.msra.mxu0 %v1347
        %1349 = vmatprep.subr.mxu0 0.0
        %v1350 = vand.u32 %v450, 4294901760
        %v1351 = vsub.f32 %v450, %v1350
        %v1352 = vand.u32 %v1351, 4294901760
        %v1353 = vsub.f32 %v1351, %v1352
        %v1354 = vand.u32 %v1353, 4294901760
        %1355 = vmatpush1.msra.mxu0 %v1354
        %1356 = vmatprep.subr.mxu0 0.0
        %v1357 = vand.u32 %v481, 4294901760
        %v1358 = vsub.f32 %v481, %v1357
        %v1359 = vand.u32 %v1358, 4294901760
        %v1360 = vsub.f32 %v1358, %v1359
        %v1361 = vand.u32 %v1360, 4294901760
        %1362 = vmatpush2.msra.mxu0 %v1361
        %1363 = vmatprep.subr.mxu0 0.0
        %v1364 = vand.u32 %v480, 4294901760
        %v1365 = vsub.f32 %v480, %v1364
        %v1366 = vand.u32 %v1365, 4294901760
        %v1367 = vsub.f32 %v1365, %v1366
        %v1368 = vand.u32 %v1367, 4294901760
        %1369 = vmatpush2.msra.mxu0 %v1368
        %1370 = vmatprep.subr.mxu0 0.0
        %v1371 = vand.u32 %v479, 4294901760
        %v1372 = vsub.f32 %v479, %v1371
        %v1373 = vand.u32 %v1372, 4294901760
        %v1374 = vsub.f32 %v1372, %v1373
        %v1375 = vand.u32 %v1374, 4294901760
        %1376 = vmatpush2.msra.mxu0 %v1375
        %1377 = vmatprep.subr.mxu0 0.0
        %v1378 = vand.u32 %v478, 4294901760
        %v1379 = vsub.f32 %v478, %v1378
        %v1380 = vand.u32 %v1379, 4294901760
        %v1381 = vsub.f32 %v1379, %v1380
        %v1382 = vand.u32 %v1381, 4294901760
        %1383 = vmatpush2.msra.mxu0 %v1382
        %1384 = vmatprep.subr.mxu0 0.0
        %v1385 = vand.u32 %v477, 4294901760
        %v1386 = vsub.f32 %v477, %v1385
        %v1387 = vand.u32 %v1386, 4294901760
        %v1388 = vsub.f32 %v1386, %v1387
        %v1389 = vand.u32 %v1388, 4294901760
        %1390 = vmatpush2.msra.mxu0 %v1389
        %1391 = vmatprep.subr.mxu0 0.0
        %v1392 = vand.u32 %v476, 4294901760
        %v1393 = vsub.f32 %v476, %v1392
        %v1394 = vand.u32 %v1393, 4294901760
        %v1395 = vsub.f32 %v1393, %v1394
        %v1396 = vand.u32 %v1395, 4294901760
        %1397 = vmatpush2.msra.mxu0 %v1396
        %1398 = vmatprep.subr.mxu0 0.0
        %v1399 = vand.u32 %v475, 4294901760
        %v1400 = vsub.f32 %v475, %v1399
        %v1401 = vand.u32 %v1400, 4294901760
        %v1402 = vsub.f32 %v1400, %v1401
        %v1403 = vand.u32 %v1402, 4294901760
        %1404 = vmatpush2.msra.mxu0 %v1403
        %1405 = vmatprep.subr.mxu0 0.0
        %v1406 = vand.u32 %v474, 4294901760
        %v1407 = vsub.f32 %v474, %v1406
        %v1408 = vand.u32 %v1407, 4294901760
        %v1409 = vsub.f32 %v1407, %v1408
        %v1410 = vand.u32 %v1409, 4294901760
        %1411 = vmatpush2.msra.mxu0 %v1410
        %1412 = vmatprep.subr.mxu0 0.0
        %v1413 = vand.u32 %v473, 4294901760
        %v1414 = vsub.f32 %v473, %v1413
        %v1415 = vand.u32 %v1414, 4294901760
        %v1416 = vsub.f32 %v1414, %v1415
        %v1417 = vand.u32 %v1416, 4294901760
        %1418 = vmatpush2.msra.mxu0 %v1417
        %1419 = vmatprep.subr.mxu0 0.0
        %v1420 = vand.u32 %v472, 4294901760
        %v1421 = vsub.f32 %v472, %v1420
        %v1422 = vand.u32 %v1421, 4294901760
        %v1423 = vsub.f32 %v1421, %v1422
        %v1424 = vand.u32 %v1423, 4294901760
        %1425 = vmatpush2.msra.mxu0 %v1424
        %1426 = vmatprep.subr.mxu0 0.0
        %v1427 = vand.u32 %v471, 4294901760
        %v1428 = vsub.f32 %v471, %v1427
        %v1429 = vand.u32 %v1428, 4294901760
        %v1430 = vsub.f32 %v1428, %v1429
        %v1431 = vand.u32 %v1430, 4294901760
        %1432 = vmatpush2.msra.mxu0 %v1431
        %1433 = vmatprep.subr.mxu0 0.0
        %v1434 = vand.u32 %v470, 4294901760
        %v1435 = vsub.f32 %v470, %v1434
        %v1436 = vand.u32 %v1435, 4294901760
        %v1437 = vsub.f32 %v1435, %v1436
        %v1438 = vand.u32 %v1437, 4294901760
        %1439 = vmatpush2.msra.mxu0 %v1438
        %1440 = vmatprep.subr.mxu0 0.0
        %v1441 = vand.u32 %v469, 4294901760
        %v1442 = vsub.f32 %v469, %v1441
        %v1443 = vand.u32 %v1442, 4294901760
        %v1444 = vsub.f32 %v1442, %v1443
        %v1445 = vand.u32 %v1444, 4294901760
        %1446 = vmatpush2.msra.mxu0 %v1445
        %1447 = vmatprep.subr.mxu0 0.0
        %v1448 = vand.u32 %v468, 4294901760
        %v1449 = vsub.f32 %v468, %v1448
        %v1450 = vand.u32 %v1449, 4294901760
        %v1451 = vsub.f32 %v1449, %v1450
        %v1452 = vand.u32 %v1451, 4294901760
        %1453 = vmatpush2.msra.mxu0 %v1452
        %1454 = vmatprep.subr.mxu0 0.0
        %v1455 = vand.u32 %v467, 4294901760
        %v1456 = vsub.f32 %v467, %v1455
        %v1457 = vand.u32 %v1456, 4294901760
        %v1458 = vsub.f32 %v1456, %v1457
        %v1459 = vand.u32 %v1458, 4294901760
        %1460 = vmatpush2.msra.mxu0 %v1459
        %1461 = vmatprep.subr.mxu0 0.0
        %v1462 = vand.u32 %v466, 4294901760
        %v1463 = vsub.f32 %v466, %v1462
        %v1464 = vand.u32 %v1463, 4294901760
        %v1465 = vsub.f32 %v1463, %v1464
        %v1466 = vand.u32 %v1465, 4294901760
        %1467 = vmatpush2.msra.mxu0 %v1466
        %v1468 = vand.u32 %v1108, 4294901760
        %1469 = vmatprep.mubr.f32.mxu0 %v1468
        %v1470 = vand.u32 %v1106, 4294901760
        %1471 = vmatmul.mubr.f32.gmra.mxu0 %v1470
        %v1472 = vpop.f32.mrf.mxu0
        %v1473 = vadd.f32 %v1226, %v1472
        %v1474 = vpop.f32.mrf.mxu0
        %v1475 = vand.u32 %v1115, 4294901760
        %1476 = vmatprep.mubr.f32.mxu0 %v1475
        %v1477 = vand.u32 %v1113, 4294901760
        %1478 = vmatmul.mubr.f32.gmra.mxu0 %v1477
        %v1479 = vpop.f32.mrf.mxu0
        %v1480 = vadd.f32 %v1241, %v1479
        %v1481 = vpop.f32.mrf.mxu0
        %1482 = vdwg.mxu0
        %1483 = vmatprep.subr.mxu0 0.0
        %v1484 = vand.u32 %v465, 4294901760
        %v1485 = vsub.f32 %v465, %v1484
        %1486 = vmatpush1.msra.mxu0 %v1485
        %1487 = vmatprep.subr.mxu0 0.0
        %v1488 = vand.u32 %v464, 4294901760
        %v1489 = vsub.f32 %v464, %v1488
        %1490 = vmatpush1.msra.mxu0 %v1489
        %1491 = vmatprep.subr.mxu0 0.0
        %v1492 = vand.u32 %v463, 4294901760
        %v1493 = vsub.f32 %v463, %v1492
        %1494 = vmatpush1.msra.mxu0 %v1493
        %1495 = vmatprep.subr.mxu0 0.0
        %v1496 = vand.u32 %v462, 4294901760
        %v1497 = vsub.f32 %v462, %v1496
        %1498 = vmatpush1.msra.mxu0 %v1497
        %1499 = vmatprep.subr.mxu0 0.0
        %v1500 = vand.u32 %v461, 4294901760
        %v1501 = vsub.f32 %v461, %v1500
        %1502 = vmatpush1.msra.mxu0 %v1501
        %1503 = vmatprep.subr.mxu0 0.0
        %v1504 = vand.u32 %v460, 4294901760
        %v1505 = vsub.f32 %v460, %v1504
        %1506 = vmatpush1.msra.mxu0 %v1505
        %1507 = vmatprep.subr.mxu0 0.0
        %v1508 = vand.u32 %v459, 4294901760
        %v1509 = vsub.f32 %v459, %v1508
        %1510 = vmatpush1.msra.mxu0 %v1509
        %1511 = vmatprep.subr.mxu0 0.0
        %v1512 = vand.u32 %v458, 4294901760
        %v1513 = vsub.f32 %v458, %v1512
        %1514 = vmatpush1.msra.mxu0 %v1513
        %1515 = vmatprep.subr.mxu0 0.0
        %v1516 = vand.u32 %v457, 4294901760
        %v1517 = vsub.f32 %v457, %v1516
        %1518 = vmatpush1.msra.mxu0 %v1517
        %1519 = vmatprep.subr.mxu0 0.0
        %v1520 = vand.u32 %v456, 4294901760
        %v1521 = vsub.f32 %v456, %v1520
        %1522 = vmatpush1.msra.mxu0 %v1521
        %1523 = vmatprep.subr.mxu0 0.0
        %v1524 = vand.u32 %v455, 4294901760
        %v1525 = vsub.f32 %v455, %v1524
        %1526 = vmatpush1.msra.mxu0 %v1525
        %1527 = vmatprep.subr.mxu0 0.0
        %v1528 = vand.u32 %v454, 4294901760
        %v1529 = vsub.f32 %v454, %v1528
        %1530 = vmatpush1.msra.mxu0 %v1529
        %1531 = vmatprep.subr.mxu0 0.0
        %v1532 = vand.u32 %v453, 4294901760
        %v1533 = vsub.f32 %v453, %v1532
        %1534 = vmatpush1.msra.mxu0 %v1533
        %1535 = vmatprep.subr.mxu0 0.0
        %v1536 = vand.u32 %v452, 4294901760
        %v1537 = vsub.f32 %v452, %v1536
        %1538 = vmatpush1.msra.mxu0 %v1537
        %1539 = vmatprep.subr.mxu0 0.0
        %v1540 = vand.u32 %v451, 4294901760
        %v1541 = vsub.f32 %v451, %v1540
        %1542 = vmatpush1.msra.mxu0 %v1541
        %1543 = vmatprep.subr.mxu0 0.0
        %v1544 = vand.u32 %v450, 4294901760
        %v1545 = vsub.f32 %v450, %v1544
        %1546 = vmatpush1.msra.mxu0 %v1545
        %1547 = vmatprep.subr.mxu0 0.0
        %v1548 = vand.u32 %v481, 4294901760
        %v1549 = vsub.f32 %v481, %v1548
        %1550 = vmatpush2.msra.mxu0 %v1549
        %1551 = vmatprep.subr.mxu0 0.0
        %v1552 = vand.u32 %v480, 4294901760
        %v1553 = vsub.f32 %v480, %v1552
        %1554 = vmatpush2.msra.mxu0 %v1553
        %1555 = vmatprep.subr.mxu0 0.0
        %v1556 = vand.u32 %v479, 4294901760
        %v1557 = vsub.f32 %v479, %v1556
        %1558 = vmatpush2.msra.mxu0 %v1557
        %1559 = vmatprep.subr.mxu0 0.0
        %v1560 = vand.u32 %v478, 4294901760
        %v1561 = vsub.f32 %v478, %v1560
        %1562 = vmatpush2.msra.mxu0 %v1561
        %1563 = vmatprep.subr.mxu0 0.0
        %v1564 = vand.u32 %v477, 4294901760
        %v1565 = vsub.f32 %v477, %v1564
        %1566 = vmatpush2.msra.mxu0 %v1565
        %1567 = vmatprep.subr.mxu0 0.0
        %v1568 = vand.u32 %v476, 4294901760
        %v1569 = vsub.f32 %v476, %v1568
        %1570 = vmatpush2.msra.mxu0 %v1569
        %1571 = vmatprep.subr.mxu0 0.0
        %v1572 = vand.u32 %v475, 4294901760
        %v1573 = vsub.f32 %v475, %v1572
        %1574 = vmatpush2.msra.mxu0 %v1573
        %1575 = vmatprep.subr.mxu0 0.0
        %v1576 = vand.u32 %v474, 4294901760
        %v1577 = vsub.f32 %v474, %v1576
        %1578 = vmatpush2.msra.mxu0 %v1577
        %1579 = vmatprep.subr.mxu0 0.0
        %v1580 = vand.u32 %v473, 4294901760
        %v1581 = vsub.f32 %v473, %v1580
        %1582 = vmatpush2.msra.mxu0 %v1581
        %1583 = vmatprep.subr.mxu0 0.0
        %v1584 = vand.u32 %v472, 4294901760
        %v1585 = vsub.f32 %v472, %v1584
        %1586 = vmatpush2.msra.mxu0 %v1585
        %1587 = vmatprep.subr.mxu0 0.0
        %v1588 = vand.u32 %v471, 4294901760
        %v1589 = vsub.f32 %v471, %v1588
        %1590 = vmatpush2.msra.mxu0 %v1589
        %1591 = vmatprep.subr.mxu0 0.0
        %v1592 = vand.u32 %v470, 4294901760
        %v1593 = vsub.f32 %v470, %v1592
        %1594 = vmatpush2.msra.mxu0 %v1593
        %1595 = vmatprep.subr.mxu0 0.0
        %v1596 = vand.u32 %v469, 4294901760
        %v1597 = vsub.f32 %v469, %v1596
        %1598 = vmatpush2.msra.mxu0 %v1597
        %1599 = vmatprep.subr.mxu0 0.0
        %v1600 = vand.u32 %v468, 4294901760
        %v1601 = vsub.f32 %v468, %v1600
        %1602 = vmatpush2.msra.mxu0 %v1601
        %1603 = vmatprep.subr.mxu0 0.0
        %v1604 = vand.u32 %v467, 4294901760
        %v1605 = vsub.f32 %v467, %v1604
        %1606 = vmatpush2.msra.mxu0 %v1605
        %1607 = vmatprep.subr.mxu0 0.0
        %v1608 = vand.u32 %v466, 4294901760
        %v1609 = vsub.f32 %v466, %v1608
        %1610 = vmatpush2.msra.mxu0 %v1609
        %v1611 = vand.u32 %v1108, 4294901760
        %v1612 = vsub.f32 %v1108, %v1611
        %1613 = vmatprep.mubr.f32.mxu0 %v1612
        %v1614 = vand.u32 %v1106, 4294901760
        %v1615 = vsub.f32 %v1106, %v1614
        %1616 = vmatmul.mubr.f32.gmra.mxu0 %v1615
        %v1617 = vpop.f32.mrf.mxu0
        %v1618 = vadd.f32 %v1473, %v1617
        %v1619 = vpop.f32.mrf.mxu0
        %v1620 = vand.u32 %v1115, 4294901760
        %v1621 = vsub.f32 %v1115, %v1620
        %1622 = vmatprep.mubr.f32.mxu0 %v1621
        %v1623 = vand.u32 %v1113, 4294901760
        %v1624 = vsub.f32 %v1113, %v1623
        %1625 = vmatmul.mubr.f32.gmra.mxu0 %v1624
        %v1626 = vpop.f32.mrf.mxu0
        %v1627 = vadd.f32 %v1480, %v1626
        %v1628 = vpop.f32.mrf.mxu0
        %1629 = vdwg.mxu0
        %1630 = vmatprep.subr.mxu0 0.0
        %v1631 = vand.u32 %v465, 4294901760
        %1632 = vmatpush1.msra.mxu0 %v1631
        %1633 = vmatprep.subr.mxu0 0.0
        %v1634 = vand.u32 %v464, 4294901760
        %1635 = vmatpush1.msra.mxu0 %v1634
        %1636 = vmatprep.subr.mxu0 0.0
        %v1637 = vand.u32 %v463, 4294901760
        %1638 = vmatpush1.msra.mxu0 %v1637
        %1639 = vmatprep.subr.mxu0 0.0
        %v1640 = vand.u32 %v462, 4294901760
        %1641 = vmatpush1.msra.mxu0 %v1640
        %1642 = vmatprep.subr.mxu0 0.0
        %v1643 = vand.u32 %v461, 4294901760
        %1644 = vmatpush1.msra.mxu0 %v1643
        %1645 = vmatprep.subr.mxu0 0.0
        %v1646 = vand.u32 %v460, 4294901760
        %1647 = vmatpush1.msra.mxu0 %v1646
        %1648 = vmatprep.subr.mxu0 0.0
        %v1649 = vand.u32 %v459, 4294901760
        %1650 = vmatpush1.msra.mxu0 %v1649
        %1651 = vmatprep.subr.mxu0 0.0
        %v1652 = vand.u32 %v458, 4294901760
        %1653 = vmatpush1.msra.mxu0 %v1652
        %1654 = vmatprep.subr.mxu0 0.0
        %v1655 = vand.u32 %v457, 4294901760
        %1656 = vmatpush1.msra.mxu0 %v1655
        %1657 = vmatprep.subr.mxu0 0.0
        %v1658 = vand.u32 %v456, 4294901760
        %1659 = vmatpush1.msra.mxu0 %v1658
        %1660 = vmatprep.subr.mxu0 0.0
        %v1661 = vand.u32 %v455, 4294901760
        %1662 = vmatpush1.msra.mxu0 %v1661
        %1663 = vmatprep.subr.mxu0 0.0
        %v1664 = vand.u32 %v454, 4294901760
        %1665 = vmatpush1.msra.mxu0 %v1664
        %1666 = vmatprep.subr.mxu0 0.0
        %v1667 = vand.u32 %v453, 4294901760
        %1668 = vmatpush1.msra.mxu0 %v1667
        %1669 = vmatprep.subr.mxu0 0.0
        %v1670 = vand.u32 %v452, 4294901760
        %1671 = vmatpush1.msra.mxu0 %v1670
        %1672 = vmatprep.subr.mxu0 0.0
        %v1673 = vand.u32 %v451, 4294901760
        %1674 = vmatpush1.msra.mxu0 %v1673
        %1675 = vmatprep.subr.mxu0 0.0
        %v1676 = vand.u32 %v450, 4294901760
        %1677 = vmatpush1.msra.mxu0 %v1676
        %1678 = vmatprep.subr.mxu0 0.0
        %v1679 = vand.u32 %v481, 4294901760
        %1680 = vmatpush2.msra.mxu0 %v1679
        %1681 = vmatprep.subr.mxu0 0.0
        %v1682 = vand.u32 %v480, 4294901760
        %1683 = vmatpush2.msra.mxu0 %v1682
        %1684 = vmatprep.subr.mxu0 0.0
        %v1685 = vand.u32 %v479, 4294901760
        %1686 = vmatpush2.msra.mxu0 %v1685
        %1687 = vmatprep.subr.mxu0 0.0
        %v1688 = vand.u32 %v478, 4294901760
        %1689 = vmatpush2.msra.mxu0 %v1688
        %1690 = vmatprep.subr.mxu0 0.0
        %v1691 = vand.u32 %v477, 4294901760
        %1692 = vmatpush2.msra.mxu0 %v1691
        %1693 = vmatprep.subr.mxu0 0.0
        %v1694 = vand.u32 %v476, 4294901760
        %1695 = vmatpush2.msra.mxu0 %v1694
        %1696 = vmatprep.subr.mxu0 0.0
        %v1697 = vand.u32 %v475, 4294901760
        %1698 = vmatpush2.msra.mxu0 %v1697
        %1699 = vmatprep.subr.mxu0 0.0
        %v1700 = vand.u32 %v474, 4294901760
        %1701 = vmatpush2.msra.mxu0 %v1700
        %1702 = vmatprep.subr.mxu0 0.0
        %v1703 = vand.u32 %v473, 4294901760
        %1704 = vmatpush2.msra.mxu0 %v1703
        %1705 = vmatprep.subr.mxu0 0.0
        %v1706 = vand.u32 %v472, 4294901760
        %1707 = vmatpush2.msra.mxu0 %v1706
        %1708 = vmatprep.subr.mxu0 0.0
        %v1709 = vand.u32 %v471, 4294901760
        %1710 = vmatpush2.msra.mxu0 %v1709
        %1711 = vmatprep.subr.mxu0 0.0
        %v1712 = vand.u32 %v470, 4294901760
        %1713 = vmatpush2.msra.mxu0 %v1712
        %1714 = vmatprep.subr.mxu0 0.0
        %v1715 = vand.u32 %v469, 4294901760
        %1716 = vmatpush2.msra.mxu0 %v1715
        %1717 = vmatprep.subr.mxu0 0.0
        %v1718 = vand.u32 %v468, 4294901760
        %1719 = vmatpush2.msra.mxu0 %v1718
        %1720 = vmatprep.subr.mxu0 0.0
        %v1721 = vand.u32 %v467, 4294901760
        %1722 = vmatpush2.msra.mxu0 %v1721
        %1723 = vmatprep.subr.mxu0 0.0
        %v1724 = vand.u32 %v466, 4294901760
        %1725 = vmatpush2.msra.mxu0 %v1724
        %v1726 = vand.u32 %v1108, 4294901760
        %v1727 = vsub.f32 %v1108, %v1726
        %v1728 = vand.u32 %v1727, 4294901760
        %1729 = vmatprep.mubr.f32.mxu0 %v1728
        %v1730 = vand.u32 %v1106, 4294901760
        %v1731 = vsub.f32 %v1106, %v1730
        %v1732 = vand.u32 %v1731, 4294901760
        %1733 = vmatmul.mubr.f32.gmra.mxu0 %v1732
        %v1734 = vpop.f32.mrf.mxu0
        %v1735 = vadd.f32 %v1618, %v1734
        %v1736 = vpop.f32.mrf.mxu0
        %v1737 = vand.u32 %v1115, 4294901760
        %v1738 = vsub.f32 %v1115, %v1737
        %v1739 = vand.u32 %v1738, 4294901760
        %1740 = vmatprep.mubr.f32.mxu0 %v1739
        %v1741 = vand.u32 %v1113, 4294901760
        %v1742 = vsub.f32 %v1113, %v1741
        %v1743 = vand.u32 %v1742, 4294901760
        %1744 = vmatmul.mubr.f32.gmra.mxu0 %v1743
        %v1745 = vpop.f32.mrf.mxu0
        %v1746 = vadd.f32 %v1627, %v1745
        %v1747 = vpop.f32.mrf.mxu0
        %1748 = vdwg.mxu0
        %1749 = vmatprep.subr.mxu0 0.0
        %v1750 = vand.u32 %v465, 4294901760
        %v1751 = vsub.f32 %v465, %v1750
        %v1752 = vand.u32 %v1751, 4294901760
        %1753 = vmatpush1.msra.mxu0 %v1752
        %1754 = vmatprep.subr.mxu0 0.0
        %v1755 = vand.u32 %v464, 4294901760
        %v1756 = vsub.f32 %v464, %v1755
        %v1757 = vand.u32 %v1756, 4294901760
        %1758 = vmatpush1.msra.mxu0 %v1757
        %1759 = vmatprep.subr.mxu0 0.0
        %v1760 = vand.u32 %v463, 4294901760
        %v1761 = vsub.f32 %v463, %v1760
        %v1762 = vand.u32 %v1761, 4294901760
        %1763 = vmatpush1.msra.mxu0 %v1762
        %1764 = vmatprep.subr.mxu0 0.0
        %v1765 = vand.u32 %v462, 4294901760
        %v1766 = vsub.f32 %v462, %v1765
        %v1767 = vand.u32 %v1766, 4294901760
        %1768 = vmatpush1.msra.mxu0 %v1767
        %1769 = vmatprep.subr.mxu0 0.0
        %v1770 = vand.u32 %v461, 4294901760
        %v1771 = vsub.f32 %v461, %v1770
        %v1772 = vand.u32 %v1771, 4294901760
        %1773 = vmatpush1.msra.mxu0 %v1772
        %1774 = vmatprep.subr.mxu0 0.0
        %v1775 = vand.u32 %v460, 4294901760
        %v1776 = vsub.f32 %v460, %v1775
        %v1777 = vand.u32 %v1776, 4294901760
        %1778 = vmatpush1.msra.mxu0 %v1777
        %1779 = vmatprep.subr.mxu0 0.0
        %v1780 = vand.u32 %v459, 4294901760
        %v1781 = vsub.f32 %v459, %v1780
        %v1782 = vand.u32 %v1781, 4294901760
        %1783 = vmatpush1.msra.mxu0 %v1782
        %1784 = vmatprep.subr.mxu0 0.0
        %v1785 = vand.u32 %v458, 4294901760
        %v1786 = vsub.f32 %v458, %v1785
        %v1787 = vand.u32 %v1786, 4294901760
        %1788 = vmatpush1.msra.mxu0 %v1787
        %1789 = vmatprep.subr.mxu0 0.0
        %v1790 = vand.u32 %v457, 4294901760
        %v1791 = vsub.f32 %v457, %v1790
        %v1792 = vand.u32 %v1791, 4294901760
        %1793 = vmatpush1.msra.mxu0 %v1792
        %1794 = vmatprep.subr.mxu0 0.0
        %v1795 = vand.u32 %v456, 4294901760
        %v1796 = vsub.f32 %v456, %v1795
        %v1797 = vand.u32 %v1796, 4294901760
        %1798 = vmatpush1.msra.mxu0 %v1797
        %1799 = vmatprep.subr.mxu0 0.0
        %v1800 = vand.u32 %v455, 4294901760
        %v1801 = vsub.f32 %v455, %v1800
        %v1802 = vand.u32 %v1801, 4294901760
        %1803 = vmatpush1.msra.mxu0 %v1802
        %1804 = vmatprep.subr.mxu0 0.0
        %v1805 = vand.u32 %v454, 4294901760
        %v1806 = vsub.f32 %v454, %v1805
        %v1807 = vand.u32 %v1806, 4294901760
        %1808 = vmatpush1.msra.mxu0 %v1807
        %1809 = vmatprep.subr.mxu0 0.0
        %v1810 = vand.u32 %v453, 4294901760
        %v1811 = vsub.f32 %v453, %v1810
        %v1812 = vand.u32 %v1811, 4294901760
        %1813 = vmatpush1.msra.mxu0 %v1812
        %1814 = vmatprep.subr.mxu0 0.0
        %v1815 = vand.u32 %v452, 4294901760
        %v1816 = vsub.f32 %v452, %v1815
        %v1817 = vand.u32 %v1816, 4294901760
        %1818 = vmatpush1.msra.mxu0 %v1817
        %1819 = vmatprep.subr.mxu0 0.0
        %v1820 = vand.u32 %v451, 4294901760
        %v1821 = vsub.f32 %v451, %v1820
        %v1822 = vand.u32 %v1821, 4294901760
        %1823 = vmatpush1.msra.mxu0 %v1822
        %1824 = vmatprep.subr.mxu0 0.0
        %v1825 = vand.u32 %v450, 4294901760
        %v1826 = vsub.f32 %v450, %v1825
        %v1827 = vand.u32 %v1826, 4294901760
        %1828 = vmatpush1.msra.mxu0 %v1827
        %1829 = vmatprep.subr.mxu0 0.0
        %v1830 = vand.u32 %v481, 4294901760
        %v1831 = vsub.f32 %v481, %v1830
        %v1832 = vand.u32 %v1831, 4294901760
        %1833 = vmatpush2.msra.mxu0 %v1832
        %1834 = vmatprep.subr.mxu0 0.0
        %v1835 = vand.u32 %v480, 4294901760
        %v1836 = vsub.f32 %v480, %v1835
        %v1837 = vand.u32 %v1836, 4294901760
        %1838 = vmatpush2.msra.mxu0 %v1837
        %1839 = vmatprep.subr.mxu0 0.0
        %v1840 = vand.u32 %v479, 4294901760
        %v1841 = vsub.f32 %v479, %v1840
        %v1842 = vand.u32 %v1841, 4294901760
        %1843 = vmatpush2.msra.mxu0 %v1842
        %1844 = vmatprep.subr.mxu0 0.0
        %v1845 = vand.u32 %v478, 4294901760
        %v1846 = vsub.f32 %v478, %v1845
        %v1847 = vand.u32 %v1846, 4294901760
        %1848 = vmatpush2.msra.mxu0 %v1847
        %1849 = vmatprep.subr.mxu0 0.0
        %v1850 = vand.u32 %v477, 4294901760
        %v1851 = vsub.f32 %v477, %v1850
        %v1852 = vand.u32 %v1851, 4294901760
        %1853 = vmatpush2.msra.mxu0 %v1852
        %1854 = vmatprep.subr.mxu0 0.0
        %v1855 = vand.u32 %v476, 4294901760
        %v1856 = vsub.f32 %v476, %v1855
        %v1857 = vand.u32 %v1856, 4294901760
        %1858 = vmatpush2.msra.mxu0 %v1857
        %1859 = vmatprep.subr.mxu0 0.0
        %v1860 = vand.u32 %v475, 4294901760
        %v1861 = vsub.f32 %v475, %v1860
        %v1862 = vand.u32 %v1861, 4294901760
        %1863 = vmatpush2.msra.mxu0 %v1862
        %1864 = vmatprep.subr.mxu0 0.0
        %v1865 = vand.u32 %v474, 4294901760
        %v1866 = vsub.f32 %v474, %v1865
        %v1867 = vand.u32 %v1866, 4294901760
        %1868 = vmatpush2.msra.mxu0 %v1867
        %1869 = vmatprep.subr.mxu0 0.0
        %v1870 = vand.u32 %v473, 4294901760
        %v1871 = vsub.f32 %v473, %v1870
        %v1872 = vand.u32 %v1871, 4294901760
        %1873 = vmatpush2.msra.mxu0 %v1872
        %1874 = vmatprep.subr.mxu0 0.0
        %v1875 = vand.u32 %v472, 4294901760
        %v1876 = vsub.f32 %v472, %v1875
        %v1877 = vand.u32 %v1876, 4294901760
        %1878 = vmatpush2.msra.mxu0 %v1877
        %1879 = vmatprep.subr.mxu0 0.0
        %v1880 = vand.u32 %v471, 4294901760
        %v1881 = vsub.f32 %v471, %v1880
        %v1882 = vand.u32 %v1881, 4294901760
        %1883 = vmatpush2.msra.mxu0 %v1882
        %1884 = vmatprep.subr.mxu0 0.0
        %v1885 = vand.u32 %v470, 4294901760
        %v1886 = vsub.f32 %v470, %v1885
        %v1887 = vand.u32 %v1886, 4294901760
        %1888 = vmatpush2.msra.mxu0 %v1887
        %1889 = vmatprep.subr.mxu0 0.0
        %v1890 = vand.u32 %v469, 4294901760
        %v1891 = vsub.f32 %v469, %v1890
        %v1892 = vand.u32 %v1891, 4294901760
        %1893 = vmatpush2.msra.mxu0 %v1892
        %1894 = vmatprep.subr.mxu0 0.0
        %v1895 = vand.u32 %v468, 4294901760
        %v1896 = vsub.f32 %v468, %v1895
        %v1897 = vand.u32 %v1896, 4294901760
        %1898 = vmatpush2.msra.mxu0 %v1897
        %1899 = vmatprep.subr.mxu0 0.0
        %v1900 = vand.u32 %v467, 4294901760
        %v1901 = vsub.f32 %v467, %v1900
        %v1902 = vand.u32 %v1901, 4294901760
        %1903 = vmatpush2.msra.mxu0 %v1902
        %1904 = vmatprep.subr.mxu0 0.0
        %v1905 = vand.u32 %v466, 4294901760
        %v1906 = vsub.f32 %v466, %v1905
        %v1907 = vand.u32 %v1906, 4294901760
        %1908 = vmatpush2.msra.mxu0 %v1907
        %v1909 = vand.u32 %v1108, 4294901760
        %1910 = vmatprep.mubr.f32.mxu0 %v1909
        %v1911 = vand.u32 %v1106, 4294901760
        %1912 = vmatmul.mubr.f32.gmra.mxu0 %v1911
        %v1913 = vpop.f32.mrf.mxu0
        %v1914 = vadd.f32 %v1735, %v1913
        %v1915 = vpop.f32.mrf.mxu0
        %v1916 = vand.u32 %v1115, 4294901760
        %1917 = vmatprep.mubr.f32.mxu0 %v1916
        %v1918 = vand.u32 %v1113, 4294901760
        %1919 = vmatmul.mubr.f32.gmra.mxu0 %v1918
        %v1920 = vpop.f32.mrf.mxu0
        %v1921 = vadd.f32 %v1746, %v1920
        %v1922 = vpop.f32.mrf.mxu0
        %1923 = vdwg.mxu0
        %1924 = vmatprep.subr.mxu0 0.0
        %v1925 = vand.u32 %v465, 4294901760
        %1926 = vmatpush1.msra.mxu0 %v1925
        %1927 = vmatprep.subr.mxu0 0.0
        %v1928 = vand.u32 %v464, 4294901760
        %1929 = vmatpush1.msra.mxu0 %v1928
        %1930 = vmatprep.subr.mxu0 0.0
        %v1931 = vand.u32 %v463, 4294901760
        %1932 = vmatpush1.msra.mxu0 %v1931
        %1933 = vmatprep.subr.mxu0 0.0
        %v1934 = vand.u32 %v462, 4294901760
        %1935 = vmatpush1.msra.mxu0 %v1934
        %1936 = vmatprep.subr.mxu0 0.0
        %v1937 = vand.u32 %v461, 4294901760
        %1938 = vmatpush1.msra.mxu0 %v1937
        %1939 = vmatprep.subr.mxu0 0.0
        %v1940 = vand.u32 %v460, 4294901760
        %1941 = vmatpush1.msra.mxu0 %v1940
        %1942 = vmatprep.subr.mxu0 0.0
        %v1943 = vand.u32 %v459, 4294901760
        %1944 = vmatpush1.msra.mxu0 %v1943
        %1945 = vmatprep.subr.mxu0 0.0
        %v1946 = vand.u32 %v458, 4294901760
        %1947 = vmatpush1.msra.mxu0 %v1946
        %1948 = vmatprep.subr.mxu0 0.0
        %v1949 = vand.u32 %v457, 4294901760
        %1950 = vmatpush1.msra.mxu0 %v1949
        %1951 = vmatprep.subr.mxu0 0.0
        %v1952 = vand.u32 %v456, 4294901760
        %1953 = vmatpush1.msra.mxu0 %v1952
        %1954 = vmatprep.subr.mxu0 0.0
        %v1955 = vand.u32 %v455, 4294901760
        %1956 = vmatpush1.msra.mxu0 %v1955
        %1957 = vmatprep.subr.mxu0 0.0
        %v1958 = vand.u32 %v454, 4294901760
        %1959 = vmatpush1.msra.mxu0 %v1958
        %1960 = vmatprep.subr.mxu0 0.0
        %v1961 = vand.u32 %v453, 4294901760
        %1962 = vmatpush1.msra.mxu0 %v1961
        %1963 = vmatprep.subr.mxu0 0.0
        %v1964 = vand.u32 %v452, 4294901760
        %1965 = vmatpush1.msra.mxu0 %v1964
        %1966 = vmatprep.subr.mxu0 0.0
        %v1967 = vand.u32 %v451, 4294901760
        %1968 = vmatpush1.msra.mxu0 %v1967
        %1969 = vmatprep.subr.mxu0 0.0
        %v1970 = vand.u32 %v450, 4294901760
        %1971 = vmatpush1.msra.mxu0 %v1970
        %1972 = vmatprep.subr.mxu0 0.0
        %v1973 = vand.u32 %v481, 4294901760
        %1974 = vmatpush2.msra.mxu0 %v1973
        %1975 = vmatprep.subr.mxu0 0.0
        %v1976 = vand.u32 %v480, 4294901760
        %1977 = vmatpush2.msra.mxu0 %v1976
        %1978 = vmatprep.subr.mxu0 0.0
        %v1979 = vand.u32 %v479, 4294901760
        %1980 = vmatpush2.msra.mxu0 %v1979
        %1981 = vmatprep.subr.mxu0 0.0
        %v1982 = vand.u32 %v478, 4294901760
        %1983 = vmatpush2.msra.mxu0 %v1982
        %1984 = vmatprep.subr.mxu0 0.0
        %v1985 = vand.u32 %v477, 4294901760
        %1986 = vmatpush2.msra.mxu0 %v1985
        %1987 = vmatprep.subr.mxu0 0.0
        %v1988 = vand.u32 %v476, 4294901760
        %1989 = vmatpush2.msra.mxu0 %v1988
        %1990 = vmatprep.subr.mxu0 0.0
        %v1991 = vand.u32 %v475, 4294901760
        %1992 = vmatpush2.msra.mxu0 %v1991
        %1993 = vmatprep.subr.mxu0 0.0
        %v1994 = vand.u32 %v474, 4294901760
        %1995 = vmatpush2.msra.mxu0 %v1994
        %1996 = vmatprep.subr.mxu0 0.0
        %v1997 = vand.u32 %v473, 4294901760
        %1998 = vmatpush2.msra.mxu0 %v1997
        %1999 = vmatprep.subr.mxu0 0.0
        %v2000 = vand.u32 %v472, 4294901760
        %2001 = vmatpush2.msra.mxu0 %v2000
        %2002 = vmatprep.subr.mxu0 0.0
        %v2003 = vand.u32 %v471, 4294901760
        %2004 = vmatpush2.msra.mxu0 %v2003
        %2005 = vmatprep.subr.mxu0 0.0
        %v2006 = vand.u32 %v470, 4294901760
        %2007 = vmatpush2.msra.mxu0 %v2006
        %2008 = vmatprep.subr.mxu0 0.0
        %v2009 = vand.u32 %v469, 4294901760
        %2010 = vmatpush2.msra.mxu0 %v2009
        %2011 = vmatprep.subr.mxu0 0.0
        %v2012 = vand.u32 %v468, 4294901760
        %2013 = vmatpush2.msra.mxu0 %v2012
        %2014 = vmatprep.subr.mxu0 0.0
        %v2015 = vand.u32 %v467, 4294901760
        %2016 = vmatpush2.msra.mxu0 %v2015
        %2017 = vmatprep.subr.mxu0 0.0
        %v2018 = vand.u32 %v466, 4294901760
        %2019 = vmatpush2.msra.mxu0 %v2018
        %v2020 = vand.u32 %v1108, 4294901760
        %2021 = vmatprep.mubr.f32.mxu0 %v2020
        %v2022 = vand.u32 %v1106, 4294901760
        %2023 = vmatmul.mubr.f32.gmra.mxu0 %v2022
        %v2024 = vpop.f32.mrf.mxu0
        %v2025 = vadd.f32 %v1914, %v2024
        %v2026 = vpop.f32.mrf.mxu0
        %v2027 = vand.u32 %v1115, 4294901760
        %2028 = vmatprep.mubr.f32.mxu0 %v2027
        %v2029 = vand.u32 %v1113, 4294901760
        %2030 = vmatmul.mubr.f32.gmra.mxu0 %v2029
        %v2031 = vpop.f32.mrf.mxu0
        %v2032 = vadd.f32 %v1921, %v2031
        %v2033 = vpop.f32.mrf.mxu0
        %2034 = vdwg.mxu0
        %2035 = vmatprep.subr.mxu0 0.0
        %2036 = vmatpush1.msra.mxu0 0.0
        %2037 = vmatprep.subr.mxu0 0.0
        %2038 = vmatpush1.msra.mxu0 0.0
        %2039 = vmatprep.subr.mxu0 0.0
        %2040 = vmatpush1.msra.mxu0 0.0
        %2041 = vmatprep.subr.mxu0 0.0
        %2042 = vmatpush1.msra.mxu0 0.0
        %2043 = vmatprep.subr.mxu0 0.0
        %2044 = vmatpush1.msra.mxu0 0.0
        %2045 = vmatprep.subr.mxu0 0.0
        %2046 = vmatpush1.msra.mxu0 0.0
        %2047 = vmatprep.subr.mxu0 0.0
        %2048 = vmatpush1.msra.mxu0 0.0
        %2049 = vmatprep.subr.mxu0 0.0
        %2050 = vmatpush1.msra.mxu0 0.0
        %2051 = vmatprep.subr.mxu0 0.0
        %2052 = vmatpush1.msra.mxu0 0.0
        %2053 = vmatprep.subr.mxu0 0.0
        %2054 = vmatpush1.msra.mxu0 0.0
        %2055 = vmatprep.subr.mxu0 0.0
        %2056 = vmatpush1.msra.mxu0 0.0
        %2057 = vmatprep.subr.mxu0 0.0
        %2058 = vmatpush1.msra.mxu0 0.0
        %v2059 = vand.u32 %v447, 4294901760
        %2060 = vmatprep.subr.mxu0 %v2059
        %v2061 = vand.u32 %v446, 4294901760
        %2062 = vmatpush1.msra.mxu0 %v2061
        %v2063 = vand.u32 %v445, 4294901760
        %2064 = vmatprep.subr.mxu0 %v2063
        %v2065 = vand.u32 %v444, 4294901760
        %2066 = vmatpush1.msra.mxu0 %v2065
        %v2067 = vand.u32 %v443, 4294901760
        %2068 = vmatprep.subr.mxu0 %v2067
        %v2069 = vand.u32 %v442, 4294901760
        %2070 = vmatpush1.msra.mxu0 %v2069
        %v2071 = vand.u32 %v441, 4294901760
        %2072 = vmatprep.subr.mxu0 %v2071
        %v2073 = vand.u32 %v440, 4294901760
        %2074 = vmatpush1.msra.mxu0 %v2073
        %2075 = vmatprep.subr.mxu0 0.0
        %2076 = vmatpush2.msra.mxu0 0.0
        %2077 = vmatprep.subr.mxu0 0.0
        %2078 = vmatpush2.msra.mxu0 0.0
        %2079 = vmatprep.subr.mxu0 0.0
        %2080 = vmatpush2.msra.mxu0 0.0
        %2081 = vmatprep.subr.mxu0 0.0
        %2082 = vmatpush2.msra.mxu0 0.0
        %2083 = vmatprep.subr.mxu0 0.0
        %2084 = vmatpush2.msra.mxu0 0.0
        %2085 = vmatprep.subr.mxu0 0.0
        %2086 = vmatpush2.msra.mxu0 0.0
        %2087 = vmatprep.subr.mxu0 0.0
        %2088 = vmatpush2.msra.mxu0 0.0
        %2089 = vmatprep.subr.mxu0 0.0
        %2090 = vmatpush2.msra.mxu0 0.0
        %2091 = vmatprep.subr.mxu0 0.0
        %2092 = vmatpush2.msra.mxu0 0.0
        %2093 = vmatprep.subr.mxu0 0.0
        %2094 = vmatpush2.msra.mxu0 0.0
        %2095 = vmatprep.subr.mxu0 0.0
        %2096 = vmatpush2.msra.mxu0 0.0
        %2097 = vmatprep.subr.mxu0 0.0
        %2098 = vmatpush2.msra.mxu0 0.0
        %2099 = vmatprep.subr.mxu0 0.0
        %2100 = vmatpush2.msra.mxu0 0.0
        %2101 = vmatprep.subr.mxu0 0.0
        %2102 = vmatpush2.msra.mxu0 0.0
        %2103 = vmatprep.subr.mxu0 0.0
        %2104 = vmatpush2.msra.mxu0 0.0
        %2105 = vmatprep.subr.mxu0 0.0
        %2106 = vmatpush2.msra.mxu0 0.0
        %2107 = vmatprep.mubr.f32.mxu0 0.0
        %v2108 = vand.u32 %v520, 4294901760
        %v2109 = vsub.f32 %v520, %v2108
        %v2110 = vand.u32 %v2109, 4294901760
        %v2111 = vsub.f32 %v2109, %v2110
        %v2112 = vand.u32 %v2111, 4294901760
        %2113 = vmatmul.mubr.f32.gmra.mxu0 %v2112
        %v2114 = vpop.f32.mrf.mxu0
        %v2115 = vadd.f32 0.0, %v2114
        %v2116 = vpop.f32.mrf.mxu0
        %v2117 = vadd.f32 0.0, %v2116
        %2118 = vmatprep.mubr.f32.mxu0 0.0
        %v2119 = vand.u32 %v523, 4294901760
        %v2120 = vsub.f32 %v523, %v2119
        %v2121 = vand.u32 %v2120, 4294901760
        %v2122 = vsub.f32 %v2120, %v2121
        %v2123 = vand.u32 %v2122, 4294901760
        %2124 = vmatmul.mubr.f32.gmra.mxu0 %v2123
        %v2125 = vpop.f32.mrf.mxu0
        %v2126 = vadd.f32 0.0, %v2125
        %v2127 = vpop.f32.mrf.mxu0
        %v2128 = vadd.f32 0.0, %v2127
        %2129 = vdwg.mxu0
        %2130 = vmatprep.subr.mxu0 0.0
        %2131 = vmatpush1.msra.mxu0 0.0
        %2132 = vmatprep.subr.mxu0 0.0
        %2133 = vmatpush1.msra.mxu0 0.0
        %2134 = vmatprep.subr.mxu0 0.0
        %2135 = vmatpush1.msra.mxu0 0.0
        %2136 = vmatprep.subr.mxu0 0.0
        %2137 = vmatpush1.msra.mxu0 0.0
        %2138 = vmatprep.subr.mxu0 0.0
        %2139 = vmatpush1.msra.mxu0 0.0
        %2140 = vmatprep.subr.mxu0 0.0
        %2141 = vmatpush1.msra.mxu0 0.0
        %2142 = vmatprep.subr.mxu0 0.0
        %2143 = vmatpush1.msra.mxu0 0.0
        %2144 = vmatprep.subr.mxu0 0.0
        %2145 = vmatpush1.msra.mxu0 0.0
        %2146 = vmatprep.subr.mxu0 0.0
        %2147 = vmatpush1.msra.mxu0 0.0
        %2148 = vmatprep.subr.mxu0 0.0
        %2149 = vmatpush1.msra.mxu0 0.0
        %2150 = vmatprep.subr.mxu0 0.0
        %2151 = vmatpush1.msra.mxu0 0.0
        %2152 = vmatprep.subr.mxu0 0.0
        %2153 = vmatpush1.msra.mxu0 0.0
        %v2154 = vand.u32 %v447, 4294901760
        %v2155 = vsub.f32 %v447, %v2154
        %v2156 = vand.u32 %v2155, 4294901760
        %v2157 = vsub.f32 %v2155, %v2156
        %v2158 = vand.u32 %v2157, 4294901760
        %2159 = vmatprep.subr.mxu0 %v2158
        %v2160 = vand.u32 %v446, 4294901760
        %v2161 = vsub.f32 %v446, %v2160
        %v2162 = vand.u32 %v2161, 4294901760
        %v2163 = vsub.f32 %v2161, %v2162
        %v2164 = vand.u32 %v2163, 4294901760
        %2165 = vmatpush1.msra.mxu0 %v2164
        %v2166 = vand.u32 %v445, 4294901760
        %v2167 = vsub.f32 %v445, %v2166
        %v2168 = vand.u32 %v2167, 4294901760
        %v2169 = vsub.f32 %v2167, %v2168
        %v2170 = vand.u32 %v2169, 4294901760
        %2171 = vmatprep.subr.mxu0 %v2170
        %v2172 = vand.u32 %v444, 4294901760
        %v2173 = vsub.f32 %v444, %v2172
        %v2174 = vand.u32 %v2173, 4294901760
        %v2175 = vsub.f32 %v2173, %v2174
        %v2176 = vand.u32 %v2175, 4294901760
        %2177 = vmatpush1.msra.mxu0 %v2176
        %v2178 = vand.u32 %v443, 4294901760
        %v2179 = vsub.f32 %v443, %v2178
        %v2180 = vand.u32 %v2179, 4294901760
        %v2181 = vsub.f32 %v2179, %v2180
        %v2182 = vand.u32 %v2181, 4294901760
        %2183 = vmatprep.subr.mxu0 %v2182
        %v2184 = vand.u32 %v442, 4294901760
        %v2185 = vsub.f32 %v442, %v2184
        %v2186 = vand.u32 %v2185, 4294901760
        %v2187 = vsub.f32 %v2185, %v2186
        %v2188 = vand.u32 %v2187, 4294901760
        %2189 = vmatpush1.msra.mxu0 %v2188
        %v2190 = vand.u32 %v441, 4294901760
        %v2191 = vsub.f32 %v441, %v2190
        %v2192 = vand.u32 %v2191, 4294901760
        %v2193 = vsub.f32 %v2191, %v2192
        %v2194 = vand.u32 %v2193, 4294901760
        %2195 = vmatprep.subr.mxu0 %v2194
        %v2196 = vand.u32 %v440, 4294901760
        %v2197 = vsub.f32 %v440, %v2196
        %v2198 = vand.u32 %v2197, 4294901760
        %v2199 = vsub.f32 %v2197, %v2198
        %v2200 = vand.u32 %v2199, 4294901760
        %2201 = vmatpush1.msra.mxu0 %v2200
        %2202 = vmatprep.subr.mxu0 0.0
        %2203 = vmatpush2.msra.mxu0 0.0
        %2204 = vmatprep.subr.mxu0 0.0
        %2205 = vmatpush2.msra.mxu0 0.0
        %2206 = vmatprep.subr.mxu0 0.0
        %2207 = vmatpush2.msra.mxu0 0.0
        %2208 = vmatprep.subr.mxu0 0.0
        %2209 = vmatpush2.msra.mxu0 0.0
        %2210 = vmatprep.subr.mxu0 0.0
        %2211 = vmatpush2.msra.mxu0 0.0
        %2212 = vmatprep.subr.mxu0 0.0
        %2213 = vmatpush2.msra.mxu0 0.0
        %2214 = vmatprep.subr.mxu0 0.0
        %2215 = vmatpush2.msra.mxu0 0.0
        %2216 = vmatprep.subr.mxu0 0.0
        %2217 = vmatpush2.msra.mxu0 0.0
        %2218 = vmatprep.subr.mxu0 0.0
        %2219 = vmatpush2.msra.mxu0 0.0
        %2220 = vmatprep.subr.mxu0 0.0
        %2221 = vmatpush2.msra.mxu0 0.0
        %2222 = vmatprep.subr.mxu0 0.0
        %2223 = vmatpush2.msra.mxu0 0.0
        %2224 = vmatprep.subr.mxu0 0.0
        %2225 = vmatpush2.msra.mxu0 0.0
        %2226 = vmatprep.subr.mxu0 0.0
        %2227 = vmatpush2.msra.mxu0 0.0
        %2228 = vmatprep.subr.mxu0 0.0
        %2229 = vmatpush2.msra.mxu0 0.0
        %2230 = vmatprep.subr.mxu0 0.0
        %2231 = vmatpush2.msra.mxu0 0.0
        %2232 = vmatprep.subr.mxu0 0.0
        %2233 = vmatpush2.msra.mxu0 0.0
        %2234 = vmatprep.mubr.f32.mxu0 0.0
        %v2235 = vand.u32 %v520, 4294901760
        %2236 = vmatmul.mubr.f32.gmra.mxu0 %v2235
        %v2237 = vpop.f32.mrf.mxu0
        %v2238 = vadd.f32 %v2115, %v2237
        %v2239 = vpop.f32.mrf.mxu0
        %v2240 = vadd.f32 %v2117, %v2239
        %2241 = vmatprep.mubr.f32.mxu0 0.0
        %v2242 = vand.u32 %v523, 4294901760
        %2243 = vmatmul.mubr.f32.gmra.mxu0 %v2242
        %v2244 = vpop.f32.mrf.mxu0
        %v2245 = vadd.f32 %v2126, %v2244
        %v2246 = vpop.f32.mrf.mxu0
        %v2247 = vadd.f32 %v2128, %v2246
        %2248 = vdwg.mxu0
        %2249 = vmatprep.subr.mxu0 0.0
        %2250 = vmatpush1.msra.mxu0 0.0
        %2251 = vmatprep.subr.mxu0 0.0
        %2252 = vmatpush1.msra.mxu0 0.0
        %2253 = vmatprep.subr.mxu0 0.0
        %2254 = vmatpush1.msra.mxu0 0.0
        %2255 = vmatprep.subr.mxu0 0.0
        %2256 = vmatpush1.msra.mxu0 0.0
        %2257 = vmatprep.subr.mxu0 0.0
        %2258 = vmatpush1.msra.mxu0 0.0
        %2259 = vmatprep.subr.mxu0 0.0
        %2260 = vmatpush1.msra.mxu0 0.0
        %2261 = vmatprep.subr.mxu0 0.0
        %2262 = vmatpush1.msra.mxu0 0.0
        %2263 = vmatprep.subr.mxu0 0.0
        %2264 = vmatpush1.msra.mxu0 0.0
        %2265 = vmatprep.subr.mxu0 0.0
        %2266 = vmatpush1.msra.mxu0 0.0
        %2267 = vmatprep.subr.mxu0 0.0
        %2268 = vmatpush1.msra.mxu0 0.0
        %2269 = vmatprep.subr.mxu0 0.0
        %2270 = vmatpush1.msra.mxu0 0.0
        %2271 = vmatprep.subr.mxu0 0.0
        %2272 = vmatpush1.msra.mxu0 0.0
        %v2273 = vand.u32 %v447, 4294901760
        %v2274 = vsub.f32 %v447, %v2273
        %2275 = vmatprep.subr.mxu0 %v2274
        %v2276 = vand.u32 %v446, 4294901760
        %v2277 = vsub.f32 %v446, %v2276
        %2278 = vmatpush1.msra.mxu0 %v2277
        %v2279 = vand.u32 %v445, 4294901760
        %v2280 = vsub.f32 %v445, %v2279
        %2281 = vmatprep.subr.mxu0 %v2280
        %v2282 = vand.u32 %v444, 4294901760
        %v2283 = vsub.f32 %v444, %v2282
        %2284 = vmatpush1.msra.mxu0 %v2283
        %v2285 = vand.u32 %v443, 4294901760
        %v2286 = vsub.f32 %v443, %v2285
        %2287 = vmatprep.subr.mxu0 %v2286
        %v2288 = vand.u32 %v442, 4294901760
        %v2289 = vsub.f32 %v442, %v2288
        %2290 = vmatpush1.msra.mxu0 %v2289
        %v2291 = vand.u32 %v441, 4294901760
        %v2292 = vsub.f32 %v441, %v2291
        %2293 = vmatprep.subr.mxu0 %v2292
        %v2294 = vand.u32 %v440, 4294901760
        %v2295 = vsub.f32 %v440, %v2294
        %2296 = vmatpush1.msra.mxu0 %v2295
        %2297 = vmatprep.subr.mxu0 0.0
        %2298 = vmatpush2.msra.mxu0 0.0
        %2299 = vmatprep.subr.mxu0 0.0
        %2300 = vmatpush2.msra.mxu0 0.0
        %2301 = vmatprep.subr.mxu0 0.0
        %2302 = vmatpush2.msra.mxu0 0.0
        %2303 = vmatprep.subr.mxu0 0.0
        %2304 = vmatpush2.msra.mxu0 0.0
        %2305 = vmatprep.subr.mxu0 0.0
        %2306 = vmatpush2.msra.mxu0 0.0
        %2307 = vmatprep.subr.mxu0 0.0
        %2308 = vmatpush2.msra.mxu0 0.0
        %2309 = vmatprep.subr.mxu0 0.0
        %2310 = vmatpush2.msra.mxu0 0.0
        %2311 = vmatprep.subr.mxu0 0.0
        %2312 = vmatpush2.msra.mxu0 0.0
        %2313 = vmatprep.subr.mxu0 0.0
        %2314 = vmatpush2.msra.mxu0 0.0
        %2315 = vmatprep.subr.mxu0 0.0
        %2316 = vmatpush2.msra.mxu0 0.0
        %2317 = vmatprep.subr.mxu0 0.0
        %2318 = vmatpush2.msra.mxu0 0.0
        %2319 = vmatprep.subr.mxu0 0.0
        %2320 = vmatpush2.msra.mxu0 0.0
        %2321 = vmatprep.subr.mxu0 0.0
        %2322 = vmatpush2.msra.mxu0 0.0
        %2323 = vmatprep.subr.mxu0 0.0
        %2324 = vmatpush2.msra.mxu0 0.0
        %2325 = vmatprep.subr.mxu0 0.0
        %2326 = vmatpush2.msra.mxu0 0.0
        %2327 = vmatprep.subr.mxu0 0.0
        %2328 = vmatpush2.msra.mxu0 0.0
        %2329 = vmatprep.mubr.f32.mxu0 0.0
        %v2330 = vand.u32 %v520, 4294901760
        %v2331 = vsub.f32 %v520, %v2330
        %2332 = vmatmul.mubr.f32.gmra.mxu0 %v2331
        %v2333 = vpop.f32.mrf.mxu0
        %v2334 = vadd.f32 %v2238, %v2333
        %v2335 = vpop.f32.mrf.mxu0
        %v2336 = vadd.f32 %v2240, %v2335
        %2337 = vmatprep.mubr.f32.mxu0 0.0
        %v2338 = vand.u32 %v523, 4294901760
        %v2339 = vsub.f32 %v523, %v2338
        %2340 = vmatmul.mubr.f32.gmra.mxu0 %v2339
        %v2341 = vpop.f32.mrf.mxu0
        %v2342 = vadd.f32 %v2245, %v2341
        %v2343 = vpop.f32.mrf.mxu0
        %v2344 = vadd.f32 %v2247, %v2343
        %2345 = vdwg.mxu0
        %2346 = vmatprep.subr.mxu0 0.0
        %2347 = vmatpush1.msra.mxu0 0.0
        %2348 = vmatprep.subr.mxu0 0.0
        %2349 = vmatpush1.msra.mxu0 0.0
        %2350 = vmatprep.subr.mxu0 0.0
        %2351 = vmatpush1.msra.mxu0 0.0
        %2352 = vmatprep.subr.mxu0 0.0
        %2353 = vmatpush1.msra.mxu0 0.0
        %2354 = vmatprep.subr.mxu0 0.0
        %2355 = vmatpush1.msra.mxu0 0.0
        %2356 = vmatprep.subr.mxu0 0.0
        %2357 = vmatpush1.msra.mxu0 0.0
        %2358 = vmatprep.subr.mxu0 0.0
        %2359 = vmatpush1.msra.mxu0 0.0
        %2360 = vmatprep.subr.mxu0 0.0
        %2361 = vmatpush1.msra.mxu0 0.0
        %2362 = vmatprep.subr.mxu0 0.0
        %2363 = vmatpush1.msra.mxu0 0.0
        %2364 = vmatprep.subr.mxu0 0.0
        %2365 = vmatpush1.msra.mxu0 0.0
        %2366 = vmatprep.subr.mxu0 0.0
        %2367 = vmatpush1.msra.mxu0 0.0
        %2368 = vmatprep.subr.mxu0 0.0
        %2369 = vmatpush1.msra.mxu0 0.0
        %v2370 = vand.u32 %v447, 4294901760
        %2371 = vmatprep.subr.mxu0 %v2370
        %v2372 = vand.u32 %v446, 4294901760
        %2373 = vmatpush1.msra.mxu0 %v2372
        %v2374 = vand.u32 %v445, 4294901760
        %2375 = vmatprep.subr.mxu0 %v2374
        %v2376 = vand.u32 %v444, 4294901760
        %2377 = vmatpush1.msra.mxu0 %v2376
        %v2378 = vand.u32 %v443, 4294901760
        %2379 = vmatprep.subr.mxu0 %v2378
        %v2380 = vand.u32 %v442, 4294901760
        %2381 = vmatpush1.msra.mxu0 %v2380
        %v2382 = vand.u32 %v441, 4294901760
        %2383 = vmatprep.subr.mxu0 %v2382
        %v2384 = vand.u32 %v440, 4294901760
        %2385 = vmatpush1.msra.mxu0 %v2384
        %2386 = vmatprep.subr.mxu0 0.0
        %2387 = vmatpush2.msra.mxu0 0.0
        %2388 = vmatprep.subr.mxu0 0.0
        %2389 = vmatpush2.msra.mxu0 0.0
        %2390 = vmatprep.subr.mxu0 0.0
        %2391 = vmatpush2.msra.mxu0 0.0
        %2392 = vmatprep.subr.mxu0 0.0
        %2393 = vmatpush2.msra.mxu0 0.0
        %2394 = vmatprep.subr.mxu0 0.0
        %2395 = vmatpush2.msra.mxu0 0.0
        %2396 = vmatprep.subr.mxu0 0.0
        %2397 = vmatpush2.msra.mxu0 0.0
        %2398 = vmatprep.subr.mxu0 0.0
        %2399 = vmatpush2.msra.mxu0 0.0
        %2400 = vmatprep.subr.mxu0 0.0
        %2401 = vmatpush2.msra.mxu0 0.0
        %2402 = vmatprep.subr.mxu0 0.0
        %2403 = vmatpush2.msra.mxu0 0.0
        %2404 = vmatprep.subr.mxu0 0.0
        %2405 = vmatpush2.msra.mxu0 0.0
        %2406 = vmatprep.subr.mxu0 0.0
        %2407 = vmatpush2.msra.mxu0 0.0
        %2408 = vmatprep.subr.mxu0 0.0
        %2409 = vmatpush2.msra.mxu0 0.0
        %2410 = vmatprep.subr.mxu0 0.0
        %2411 = vmatpush2.msra.mxu0 0.0
        %2412 = vmatprep.subr.mxu0 0.0
        %2413 = vmatpush2.msra.mxu0 0.0
        %2414 = vmatprep.subr.mxu0 0.0
        %2415 = vmatpush2.msra.mxu0 0.0
        %2416 = vmatprep.subr.mxu0 0.0
        %2417 = vmatpush2.msra.mxu0 0.0
        %2418 = vmatprep.mubr.f32.mxu0 0.0
        %v2419 = vand.u32 %v520, 4294901760
        %v2420 = vsub.f32 %v520, %v2419
        %v2421 = vand.u32 %v2420, 4294901760
        %2422 = vmatmul.mubr.f32.gmra.mxu0 %v2421
        %v2423 = vpop.f32.mrf.mxu0
        %v2424 = vadd.f32 %v2334, %v2423
        %v2425 = vpop.f32.mrf.mxu0
        %v2426 = vadd.f32 %v2336, %v2425
        %2427 = vmatprep.mubr.f32.mxu0 0.0
        %v2428 = vand.u32 %v523, 4294901760
        %v2429 = vsub.f32 %v523, %v2428
        %v2430 = vand.u32 %v2429, 4294901760
        %2431 = vmatmul.mubr.f32.gmra.mxu0 %v2430
        %v2432 = vpop.f32.mrf.mxu0
        %v2433 = vadd.f32 %v2342, %v2432
        %v2434 = vpop.f32.mrf.mxu0
        %v2435 = vadd.f32 %v2344, %v2434
        %2436 = vdwg.mxu0
        %2437 = vmatprep.subr.mxu0 0.0
        %2438 = vmatpush1.msra.mxu0 0.0
        %2439 = vmatprep.subr.mxu0 0.0
        %2440 = vmatpush1.msra.mxu0 0.0
        %2441 = vmatprep.subr.mxu0 0.0
        %2442 = vmatpush1.msra.mxu0 0.0
        %2443 = vmatprep.subr.mxu0 0.0
        %2444 = vmatpush1.msra.mxu0 0.0
        %2445 = vmatprep.subr.mxu0 0.0
        %2446 = vmatpush1.msra.mxu0 0.0
        %2447 = vmatprep.subr.mxu0 0.0
        %2448 = vmatpush1.msra.mxu0 0.0
        %2449 = vmatprep.subr.mxu0 0.0
        %2450 = vmatpush1.msra.mxu0 0.0
        %2451 = vmatprep.subr.mxu0 0.0
        %2452 = vmatpush1.msra.mxu0 0.0
        %2453 = vmatprep.subr.mxu0 0.0
        %2454 = vmatpush1.msra.mxu0 0.0
        %2455 = vmatprep.subr.mxu0 0.0
        %2456 = vmatpush1.msra.mxu0 0.0
        %2457 = vmatprep.subr.mxu0 0.0
        %2458 = vmatpush1.msra.mxu0 0.0
        %2459 = vmatprep.subr.mxu0 0.0
        %2460 = vmatpush1.msra.mxu0 0.0
        %v2461 = vand.u32 %v447, 4294901760
        %v2462 = vsub.f32 %v447, %v2461
        %v2463 = vand.u32 %v2462, 4294901760
        %2464 = vmatprep.subr.mxu0 %v2463
        %v2465 = vand.u32 %v446, 4294901760
        %v2466 = vsub.f32 %v446, %v2465
        %v2467 = vand.u32 %v2466, 4294901760
        %2468 = vmatpush1.msra.mxu0 %v2467
        %v2469 = vand.u32 %v445, 4294901760
        %v2470 = vsub.f32 %v445, %v2469
        %v2471 = vand.u32 %v2470, 4294901760
        %2472 = vmatprep.subr.mxu0 %v2471
        %v2473 = vand.u32 %v444, 4294901760
        %v2474 = vsub.f32 %v444, %v2473
        %v2475 = vand.u32 %v2474, 4294901760
        %2476 = vmatpush1.msra.mxu0 %v2475
        %v2477 = vand.u32 %v443, 4294901760
        %v2478 = vsub.f32 %v443, %v2477
        %v2479 = vand.u32 %v2478, 4294901760
        %2480 = vmatprep.subr.mxu0 %v2479
        %v2481 = vand.u32 %v442, 4294901760
        %v2482 = vsub.f32 %v442, %v2481
        %v2483 = vand.u32 %v2482, 4294901760
        %2484 = vmatpush1.msra.mxu0 %v2483
        %v2485 = vand.u32 %v441, 4294901760
        %v2486 = vsub.f32 %v441, %v2485
        %v2487 = vand.u32 %v2486, 4294901760
        %2488 = vmatprep.subr.mxu0 %v2487
        %v2489 = vand.u32 %v440, 4294901760
        %v2490 = vsub.f32 %v440, %v2489
        %v2491 = vand.u32 %v2490, 4294901760
        %2492 = vmatpush1.msra.mxu0 %v2491
        %2493 = vmatprep.subr.mxu0 0.0
        %2494 = vmatpush2.msra.mxu0 0.0
        %2495 = vmatprep.subr.mxu0 0.0
        %2496 = vmatpush2.msra.mxu0 0.0
        %2497 = vmatprep.subr.mxu0 0.0
        %2498 = vmatpush2.msra.mxu0 0.0
        %2499 = vmatprep.subr.mxu0 0.0
        %2500 = vmatpush2.msra.mxu0 0.0
        %2501 = vmatprep.subr.mxu0 0.0
        %2502 = vmatpush2.msra.mxu0 0.0
        %2503 = vmatprep.subr.mxu0 0.0
        %2504 = vmatpush2.msra.mxu0 0.0
        %2505 = vmatprep.subr.mxu0 0.0
        %2506 = vmatpush2.msra.mxu0 0.0
        %2507 = vmatprep.subr.mxu0 0.0
        %2508 = vmatpush2.msra.mxu0 0.0
        %2509 = vmatprep.subr.mxu0 0.0
        %2510 = vmatpush2.msra.mxu0 0.0
        %2511 = vmatprep.subr.mxu0 0.0
        %2512 = vmatpush2.msra.mxu0 0.0
        %2513 = vmatprep.subr.mxu0 0.0
        %2514 = vmatpush2.msra.mxu0 0.0
        %2515 = vmatprep.subr.mxu0 0.0
        %2516 = vmatpush2.msra.mxu0 0.0
        %2517 = vmatprep.subr.mxu0 0.0
        %2518 = vmatpush2.msra.mxu0 0.0
        %2519 = vmatprep.subr.mxu0 0.0
        %2520 = vmatpush2.msra.mxu0 0.0
        %2521 = vmatprep.subr.mxu0 0.0
        %2522 = vmatpush2.msra.mxu0 0.0
        %2523 = vmatprep.subr.mxu0 0.0
        %2524 = vmatpush2.msra.mxu0 0.0
        %2525 = vmatprep.mubr.f32.mxu0 0.0
        %v2526 = vand.u32 %v520, 4294901760
        %2527 = vmatmul.mubr.f32.gmra.mxu0 %v2526
        %v2528 = vpop.f32.mrf.mxu0
        %v2529 = vadd.f32 %v2424, %v2528
        %v2530 = vpop.f32.mrf.mxu0
        %v2531 = vadd.f32 %v2426, %v2530
        %2532 = vmatprep.mubr.f32.mxu0 0.0
        %v2533 = vand.u32 %v523, 4294901760
        %2534 = vmatmul.mubr.f32.gmra.mxu0 %v2533
        %v2535 = vpop.f32.mrf.mxu0
        %v2536 = vadd.f32 %v2433, %v2535
        %v2537 = vpop.f32.mrf.mxu0
        %v2538 = vadd.f32 %v2435, %v2537
        %2539 = vdwg.mxu0
        %2540 = vmatprep.subr.mxu0 0.0
        %2541 = vmatpush1.msra.mxu0 0.0
        %2542 = vmatprep.subr.mxu0 0.0
        %2543 = vmatpush1.msra.mxu0 0.0
        %2544 = vmatprep.subr.mxu0 0.0
        %2545 = vmatpush1.msra.mxu0 0.0
        %2546 = vmatprep.subr.mxu0 0.0
        %2547 = vmatpush1.msra.mxu0 0.0
        %2548 = vmatprep.subr.mxu0 0.0
        %2549 = vmatpush1.msra.mxu0 0.0
        %2550 = vmatprep.subr.mxu0 0.0
        %2551 = vmatpush1.msra.mxu0 0.0
        %2552 = vmatprep.subr.mxu0 0.0
        %2553 = vmatpush1.msra.mxu0 0.0
        %2554 = vmatprep.subr.mxu0 0.0
        %2555 = vmatpush1.msra.mxu0 0.0
        %2556 = vmatprep.subr.mxu0 0.0
        %2557 = vmatpush1.msra.mxu0 0.0
        %2558 = vmatprep.subr.mxu0 0.0
        %2559 = vmatpush1.msra.mxu0 0.0
        %2560 = vmatprep.subr.mxu0 0.0
        %2561 = vmatpush1.msra.mxu0 0.0
        %2562 = vmatprep.subr.mxu0 0.0
        %2563 = vmatpush1.msra.mxu0 0.0
        %v2564 = vand.u32 %v447, 4294901760
        %2565 = vmatprep.subr.mxu0 %v2564
        %v2566 = vand.u32 %v446, 4294901760
        %2567 = vmatpush1.msra.mxu0 %v2566
        %v2568 = vand.u32 %v445, 4294901760
        %2569 = vmatprep.subr.mxu0 %v2568
        %v2570 = vand.u32 %v444, 4294901760
        %2571 = vmatpush1.msra.mxu0 %v2570
        %v2572 = vand.u32 %v443, 4294901760
        %2573 = vmatprep.subr.mxu0 %v2572
        %v2574 = vand.u32 %v442, 4294901760
        %2575 = vmatpush1.msra.mxu0 %v2574
        %v2576 = vand.u32 %v441, 4294901760
        %2577 = vmatprep.subr.mxu0 %v2576
        %v2578 = vand.u32 %v440, 4294901760
        %2579 = vmatpush1.msra.mxu0 %v2578
        %2580 = vmatprep.subr.mxu0 0.0
        %2581 = vmatpush2.msra.mxu0 0.0
        %2582 = vmatprep.subr.mxu0 0.0
        %2583 = vmatpush2.msra.mxu0 0.0
        %2584 = vmatprep.subr.mxu0 0.0
        %2585 = vmatpush2.msra.mxu0 0.0
        %2586 = vmatprep.subr.mxu0 0.0
        %2587 = vmatpush2.msra.mxu0 0.0
        %2588 = vmatprep.subr.mxu0 0.0
        %2589 = vmatpush2.msra.mxu0 0.0
        %2590 = vmatprep.subr.mxu0 0.0
        %2591 = vmatpush2.msra.mxu0 0.0
        %2592 = vmatprep.subr.mxu0 0.0
        %2593 = vmatpush2.msra.mxu0 0.0
        %2594 = vmatprep.subr.mxu0 0.0
        %2595 = vmatpush2.msra.mxu0 0.0
        %2596 = vmatprep.subr.mxu0 0.0
        %2597 = vmatpush2.msra.mxu0 0.0
        %2598 = vmatprep.subr.mxu0 0.0
        %2599 = vmatpush2.msra.mxu0 0.0
        %2600 = vmatprep.subr.mxu0 0.0
        %2601 = vmatpush2.msra.mxu0 0.0
        %2602 = vmatprep.subr.mxu0 0.0
        %2603 = vmatpush2.msra.mxu0 0.0
        %2604 = vmatprep.subr.mxu0 0.0
        %2605 = vmatpush2.msra.mxu0 0.0
        %2606 = vmatprep.subr.mxu0 0.0
        %2607 = vmatpush2.msra.mxu0 0.0
        %2608 = vmatprep.subr.mxu0 0.0
        %2609 = vmatpush2.msra.mxu0 0.0
        %2610 = vmatprep.subr.mxu0 0.0
        %2611 = vmatpush2.msra.mxu0 0.0
        %2612 = vmatprep.mubr.f32.mxu0 0.0
        %v2613 = vand.u32 %v520, 4294901760
        %2614 = vmatmul.mubr.f32.gmra.mxu0 %v2613
        %v2615 = vpop.f32.mrf.mxu0
        %v2616 = vadd.f32 %v2529, %v2615
        %v2617 = vpop.f32.mrf.mxu0
        %v2618 = vadd.f32 %v2531, %v2617
        %2619 = vmatprep.mubr.f32.mxu0 0.0
        %v2620 = vand.u32 %v523, 4294901760
        %2621 = vmatmul.mubr.f32.gmra.mxu0 %v2620
        %v2622 = vpop.f32.mrf.mxu0
        %v2623 = vadd.f32 %v2536, %v2622
        %v2624 = vpop.f32.mrf.mxu0
        %v2625 = vadd.f32 %v2538, %v2624
        %2626 = vdwg.mxu0
        %2627 = vmatprep.subr.mxu0 0.0
        %v2628 = vand.u32 %v465, 4294901760
        %2629 = vmatpush1.msra.mxu0 %v2628
        %2630 = vmatprep.subr.mxu0 0.0
        %v2631 = vand.u32 %v464, 4294901760
        %2632 = vmatpush1.msra.mxu0 %v2631
        %2633 = vmatprep.subr.mxu0 0.0
        %v2634 = vand.u32 %v463, 4294901760
        %2635 = vmatpush1.msra.mxu0 %v2634
        %2636 = vmatprep.subr.mxu0 0.0
        %v2637 = vand.u32 %v462, 4294901760
        %2638 = vmatpush1.msra.mxu0 %v2637
        %2639 = vmatprep.subr.mxu0 0.0
        %v2640 = vand.u32 %v461, 4294901760
        %2641 = vmatpush1.msra.mxu0 %v2640
        %2642 = vmatprep.subr.mxu0 0.0
        %v2643 = vand.u32 %v460, 4294901760
        %2644 = vmatpush1.msra.mxu0 %v2643
        %2645 = vmatprep.subr.mxu0 0.0
        %v2646 = vand.u32 %v459, 4294901760
        %2647 = vmatpush1.msra.mxu0 %v2646
        %2648 = vmatprep.subr.mxu0 0.0
        %v2649 = vand.u32 %v458, 4294901760
        %2650 = vmatpush1.msra.mxu0 %v2649
        %2651 = vmatprep.subr.mxu0 0.0
        %v2652 = vand.u32 %v457, 4294901760
        %2653 = vmatpush1.msra.mxu0 %v2652
        %2654 = vmatprep.subr.mxu0 0.0
        %v2655 = vand.u32 %v456, 4294901760
        %2656 = vmatpush1.msra.mxu0 %v2655
        %2657 = vmatprep.subr.mxu0 0.0
        %v2658 = vand.u32 %v455, 4294901760
        %2659 = vmatpush1.msra.mxu0 %v2658
        %2660 = vmatprep.subr.mxu0 0.0
        %v2661 = vand.u32 %v454, 4294901760
        %2662 = vmatpush1.msra.mxu0 %v2661
        %2663 = vmatprep.subr.mxu0 0.0
        %v2664 = vand.u32 %v453, 4294901760
        %2665 = vmatpush1.msra.mxu0 %v2664
        %2666 = vmatprep.subr.mxu0 0.0
        %v2667 = vand.u32 %v452, 4294901760
        %2668 = vmatpush1.msra.mxu0 %v2667
        %2669 = vmatprep.subr.mxu0 0.0
        %v2670 = vand.u32 %v451, 4294901760
        %2671 = vmatpush1.msra.mxu0 %v2670
        %2672 = vmatprep.subr.mxu0 0.0
        %v2673 = vand.u32 %v450, 4294901760
        %2674 = vmatpush1.msra.mxu0 %v2673
        %2675 = vmatprep.subr.mxu0 0.0
        %v2676 = vand.u32 %v481, 4294901760
        %2677 = vmatpush2.msra.mxu0 %v2676
        %2678 = vmatprep.subr.mxu0 0.0
        %v2679 = vand.u32 %v480, 4294901760
        %2680 = vmatpush2.msra.mxu0 %v2679
        %2681 = vmatprep.subr.mxu0 0.0
        %v2682 = vand.u32 %v479, 4294901760
        %2683 = vmatpush2.msra.mxu0 %v2682
        %2684 = vmatprep.subr.mxu0 0.0
        %v2685 = vand.u32 %v478, 4294901760
        %2686 = vmatpush2.msra.mxu0 %v2685
        %2687 = vmatprep.subr.mxu0 0.0
        %v2688 = vand.u32 %v477, 4294901760
        %2689 = vmatpush2.msra.mxu0 %v2688
        %2690 = vmatprep.subr.mxu0 0.0
        %v2691 = vand.u32 %v476, 4294901760
        %2692 = vmatpush2.msra.mxu0 %v2691
        %2693 = vmatprep.subr.mxu0 0.0
        %v2694 = vand.u32 %v475, 4294901760
        %2695 = vmatpush2.msra.mxu0 %v2694
        %2696 = vmatprep.subr.mxu0 0.0
        %v2697 = vand.u32 %v474, 4294901760
        %2698 = vmatpush2.msra.mxu0 %v2697
        %2699 = vmatprep.subr.mxu0 0.0
        %v2700 = vand.u32 %v473, 4294901760
        %2701 = vmatpush2.msra.mxu0 %v2700
        %2702 = vmatprep.subr.mxu0 0.0
        %v2703 = vand.u32 %v472, 4294901760
        %2704 = vmatpush2.msra.mxu0 %v2703
        %2705 = vmatprep.subr.mxu0 0.0
        %v2706 = vand.u32 %v471, 4294901760
        %2707 = vmatpush2.msra.mxu0 %v2706
        %2708 = vmatprep.subr.mxu0 0.0
        %v2709 = vand.u32 %v470, 4294901760
        %2710 = vmatpush2.msra.mxu0 %v2709
        %2711 = vmatprep.subr.mxu0 0.0
        %v2712 = vand.u32 %v469, 4294901760
        %2713 = vmatpush2.msra.mxu0 %v2712
        %2714 = vmatprep.subr.mxu0 0.0
        %v2715 = vand.u32 %v468, 4294901760
        %2716 = vmatpush2.msra.mxu0 %v2715
        %2717 = vmatprep.subr.mxu0 0.0
        %v2718 = vand.u32 %v467, 4294901760
        %2719 = vmatpush2.msra.mxu0 %v2718
        %2720 = vmatprep.subr.mxu0 0.0
        %v2721 = vand.u32 %v466, 4294901760
        %2722 = vmatpush2.msra.mxu0 %v2721
        %v2723 = vand.u32 %v2618, 4294901760
        %v2724 = vsub.f32 %v2618, %v2723
        %v2725 = vand.u32 %v2724, 4294901760
        %v2726 = vsub.f32 %v2724, %v2725
        %v2727 = vand.u32 %v2726, 4294901760
        %2728 = vmatprep.mubr.f32.mxu0 %v2727
        %v2729 = vand.u32 %v2616, 4294901760
        %v2730 = vsub.f32 %v2616, %v2729
        %v2731 = vand.u32 %v2730, 4294901760
        %v2732 = vsub.f32 %v2730, %v2731
        %v2733 = vand.u32 %v2732, 4294901760
        %2734 = vmatmul.mubr.f32.gmra.mxu0 %v2733
        %v2735 = vpop.f32.mrf.mxu0
        %v2736 = vadd.f32 0.0, %v2735
        %v2737 = vpop.f32.mrf.mxu0
        %v2738 = vand.u32 %v2625, 4294901760
        %v2739 = vsub.f32 %v2625, %v2738
        %v2740 = vand.u32 %v2739, 4294901760
        %v2741 = vsub.f32 %v2739, %v2740
        %v2742 = vand.u32 %v2741, 4294901760
        %2743 = vmatprep.mubr.f32.mxu0 %v2742
        %v2744 = vand.u32 %v2623, 4294901760
        %v2745 = vsub.f32 %v2623, %v2744
        %v2746 = vand.u32 %v2745, 4294901760
        %v2747 = vsub.f32 %v2745, %v2746
        %v2748 = vand.u32 %v2747, 4294901760
        %2749 = vmatmul.mubr.f32.gmra.mxu0 %v2748
        %v2750 = vpop.f32.mrf.mxu0
        %v2751 = vadd.f32 0.0, %v2750
        %v2752 = vpop.f32.mrf.mxu0
        %2753 = vdwg.mxu0
        %2754 = vmatprep.subr.mxu0 0.0
        %v2755 = vand.u32 %v465, 4294901760
        %v2756 = vsub.f32 %v465, %v2755
        %v2757 = vand.u32 %v2756, 4294901760
        %v2758 = vsub.f32 %v2756, %v2757
        %v2759 = vand.u32 %v2758, 4294901760
        %2760 = vmatpush1.msra.mxu0 %v2759
        %2761 = vmatprep.subr.mxu0 0.0
        %v2762 = vand.u32 %v464, 4294901760
        %v2763 = vsub.f32 %v464, %v2762
        %v2764 = vand.u32 %v2763, 4294901760
        %v2765 = vsub.f32 %v2763, %v2764
        %v2766 = vand.u32 %v2765, 4294901760
        %2767 = vmatpush1.msra.mxu0 %v2766
        %2768 = vmatprep.subr.mxu0 0.0
        %v2769 = vand.u32 %v463, 4294901760
        %v2770 = vsub.f32 %v463, %v2769
        %v2771 = vand.u32 %v2770, 4294901760
        %v2772 = vsub.f32 %v2770, %v2771
        %v2773 = vand.u32 %v2772, 4294901760
        %2774 = vmatpush1.msra.mxu0 %v2773
        %2775 = vmatprep.subr.mxu0 0.0
        %v2776 = vand.u32 %v462, 4294901760
        %v2777 = vsub.f32 %v462, %v2776
        %v2778 = vand.u32 %v2777, 4294901760
        %v2779 = vsub.f32 %v2777, %v2778
        %v2780 = vand.u32 %v2779, 4294901760
        %2781 = vmatpush1.msra.mxu0 %v2780
        %2782 = vmatprep.subr.mxu0 0.0
        %v2783 = vand.u32 %v461, 4294901760
        %v2784 = vsub.f32 %v461, %v2783
        %v2785 = vand.u32 %v2784, 4294901760
        %v2786 = vsub.f32 %v2784, %v2785
        %v2787 = vand.u32 %v2786, 4294901760
        %2788 = vmatpush1.msra.mxu0 %v2787
        %2789 = vmatprep.subr.mxu0 0.0
        %v2790 = vand.u32 %v460, 4294901760
        %v2791 = vsub.f32 %v460, %v2790
        %v2792 = vand.u32 %v2791, 4294901760
        %v2793 = vsub.f32 %v2791, %v2792
        %v2794 = vand.u32 %v2793, 4294901760
        %2795 = vmatpush1.msra.mxu0 %v2794
        %2796 = vmatprep.subr.mxu0 0.0
        %v2797 = vand.u32 %v459, 4294901760
        %v2798 = vsub.f32 %v459, %v2797
        %v2799 = vand.u32 %v2798, 4294901760
        %v2800 = vsub.f32 %v2798, %v2799
        %v2801 = vand.u32 %v2800, 4294901760
        %2802 = vmatpush1.msra.mxu0 %v2801
        %2803 = vmatprep.subr.mxu0 0.0
        %v2804 = vand.u32 %v458, 4294901760
        %v2805 = vsub.f32 %v458, %v2804
        %v2806 = vand.u32 %v2805, 4294901760
        %v2807 = vsub.f32 %v2805, %v2806
        %v2808 = vand.u32 %v2807, 4294901760
        %2809 = vmatpush1.msra.mxu0 %v2808
        %2810 = vmatprep.subr.mxu0 0.0
        %v2811 = vand.u32 %v457, 4294901760
        %v2812 = vsub.f32 %v457, %v2811
        %v2813 = vand.u32 %v2812, 4294901760
        %v2814 = vsub.f32 %v2812, %v2813
        %v2815 = vand.u32 %v2814, 4294901760
        %2816 = vmatpush1.msra.mxu0 %v2815
        %2817 = vmatprep.subr.mxu0 0.0
        %v2818 = vand.u32 %v456, 4294901760
        %v2819 = vsub.f32 %v456, %v2818
        %v2820 = vand.u32 %v2819, 4294901760
        %v2821 = vsub.f32 %v2819, %v2820
        %v2822 = vand.u32 %v2821, 4294901760
        %2823 = vmatpush1.msra.mxu0 %v2822
        %2824 = vmatprep.subr.mxu0 0.0
        %v2825 = vand.u32 %v455, 4294901760
        %v2826 = vsub.f32 %v455, %v2825
        %v2827 = vand.u32 %v2826, 4294901760
        %v2828 = vsub.f32 %v2826, %v2827
        %v2829 = vand.u32 %v2828, 4294901760
        %2830 = vmatpush1.msra.mxu0 %v2829
        %2831 = vmatprep.subr.mxu0 0.0
        %v2832 = vand.u32 %v454, 4294901760
        %v2833 = vsub.f32 %v454, %v2832
        %v2834 = vand.u32 %v2833, 4294901760
        %v2835 = vsub.f32 %v2833, %v2834
        %v2836 = vand.u32 %v2835, 4294901760
        %2837 = vmatpush1.msra.mxu0 %v2836
        %2838 = vmatprep.subr.mxu0 0.0
        %v2839 = vand.u32 %v453, 4294901760
        %v2840 = vsub.f32 %v453, %v2839
        %v2841 = vand.u32 %v2840, 4294901760
        %v2842 = vsub.f32 %v2840, %v2841
        %v2843 = vand.u32 %v2842, 4294901760
        %2844 = vmatpush1.msra.mxu0 %v2843
        %2845 = vmatprep.subr.mxu0 0.0
        %v2846 = vand.u32 %v452, 4294901760
        %v2847 = vsub.f32 %v452, %v2846
        %v2848 = vand.u32 %v2847, 4294901760
        %v2849 = vsub.f32 %v2847, %v2848
        %v2850 = vand.u32 %v2849, 4294901760
        %2851 = vmatpush1.msra.mxu0 %v2850
        %2852 = vmatprep.subr.mxu0 0.0
        %v2853 = vand.u32 %v451, 4294901760
        %v2854 = vsub.f32 %v451, %v2853
        %v2855 = vand.u32 %v2854, 4294901760
        %v2856 = vsub.f32 %v2854, %v2855
        %v2857 = vand.u32 %v2856, 4294901760
        %2858 = vmatpush1.msra.mxu0 %v2857
        %2859 = vmatprep.subr.mxu0 0.0
        %v2860 = vand.u32 %v450, 4294901760
        %v2861 = vsub.f32 %v450, %v2860
        %v2862 = vand.u32 %v2861, 4294901760
        %v2863 = vsub.f32 %v2861, %v2862
        %v2864 = vand.u32 %v2863, 4294901760
        %2865 = vmatpush1.msra.mxu0 %v2864
        %2866 = vmatprep.subr.mxu0 0.0
        %v2867 = vand.u32 %v481, 4294901760
        %v2868 = vsub.f32 %v481, %v2867
        %v2869 = vand.u32 %v2868, 4294901760
        %v2870 = vsub.f32 %v2868, %v2869
        %v2871 = vand.u32 %v2870, 4294901760
        %2872 = vmatpush2.msra.mxu0 %v2871
        %2873 = vmatprep.subr.mxu0 0.0
        %v2874 = vand.u32 %v480, 4294901760
        %v2875 = vsub.f32 %v480, %v2874
        %v2876 = vand.u32 %v2875, 4294901760
        %v2877 = vsub.f32 %v2875, %v2876
        %v2878 = vand.u32 %v2877, 4294901760
        %2879 = vmatpush2.msra.mxu0 %v2878
        %2880 = vmatprep.subr.mxu0 0.0
        %v2881 = vand.u32 %v479, 4294901760
        %v2882 = vsub.f32 %v479, %v2881
        %v2883 = vand.u32 %v2882, 4294901760
        %v2884 = vsub.f32 %v2882, %v2883
        %v2885 = vand.u32 %v2884, 4294901760
        %2886 = vmatpush2.msra.mxu0 %v2885
        %2887 = vmatprep.subr.mxu0 0.0
        %v2888 = vand.u32 %v478, 4294901760
        %v2889 = vsub.f32 %v478, %v2888
        %v2890 = vand.u32 %v2889, 4294901760
        %v2891 = vsub.f32 %v2889, %v2890
        %v2892 = vand.u32 %v2891, 4294901760
        %2893 = vmatpush2.msra.mxu0 %v2892
        %2894 = vmatprep.subr.mxu0 0.0
        %v2895 = vand.u32 %v477, 4294901760
        %v2896 = vsub.f32 %v477, %v2895
        %v2897 = vand.u32 %v2896, 4294901760
        %v2898 = vsub.f32 %v2896, %v2897
        %v2899 = vand.u32 %v2898, 4294901760
        %2900 = vmatpush2.msra.mxu0 %v2899
        %2901 = vmatprep.subr.mxu0 0.0
        %v2902 = vand.u32 %v476, 4294901760
        %v2903 = vsub.f32 %v476, %v2902
        %v2904 = vand.u32 %v2903, 4294901760
        %v2905 = vsub.f32 %v2903, %v2904
        %v2906 = vand.u32 %v2905, 4294901760
        %2907 = vmatpush2.msra.mxu0 %v2906
        %2908 = vmatprep.subr.mxu0 0.0
        %v2909 = vand.u32 %v475, 4294901760
        %v2910 = vsub.f32 %v475, %v2909
        %v2911 = vand.u32 %v2910, 4294901760
        %v2912 = vsub.f32 %v2910, %v2911
        %v2913 = vand.u32 %v2912, 4294901760
        %2914 = vmatpush2.msra.mxu0 %v2913
        %2915 = vmatprep.subr.mxu0 0.0
        %v2916 = vand.u32 %v474, 4294901760
        %v2917 = vsub.f32 %v474, %v2916
        %v2918 = vand.u32 %v2917, 4294901760
        %v2919 = vsub.f32 %v2917, %v2918
        %v2920 = vand.u32 %v2919, 4294901760
        %2921 = vmatpush2.msra.mxu0 %v2920
        %2922 = vmatprep.subr.mxu0 0.0
        %v2923 = vand.u32 %v473, 4294901760
        %v2924 = vsub.f32 %v473, %v2923
        %v2925 = vand.u32 %v2924, 4294901760
        %v2926 = vsub.f32 %v2924, %v2925
        %v2927 = vand.u32 %v2926, 4294901760
        %2928 = vmatpush2.msra.mxu0 %v2927
        %2929 = vmatprep.subr.mxu0 0.0
        %v2930 = vand.u32 %v472, 4294901760
        %v2931 = vsub.f32 %v472, %v2930
        %v2932 = vand.u32 %v2931, 4294901760
        %v2933 = vsub.f32 %v2931, %v2932
        %v2934 = vand.u32 %v2933, 4294901760
        %2935 = vmatpush2.msra.mxu0 %v2934
        %2936 = vmatprep.subr.mxu0 0.0
        %v2937 = vand.u32 %v471, 4294901760
        %v2938 = vsub.f32 %v471, %v2937
        %v2939 = vand.u32 %v2938, 4294901760
        %v2940 = vsub.f32 %v2938, %v2939
        %v2941 = vand.u32 %v2940, 4294901760
        %2942 = vmatpush2.msra.mxu0 %v2941
        %2943 = vmatprep.subr.mxu0 0.0
        %v2944 = vand.u32 %v470, 4294901760
        %v2945 = vsub.f32 %v470, %v2944
        %v2946 = vand.u32 %v2945, 4294901760
        %v2947 = vsub.f32 %v2945, %v2946
        %v2948 = vand.u32 %v2947, 4294901760
        %2949 = vmatpush2.msra.mxu0 %v2948
        %2950 = vmatprep.subr.mxu0 0.0
        %v2951 = vand.u32 %v469, 4294901760
        %v2952 = vsub.f32 %v469, %v2951
        %v2953 = vand.u32 %v2952, 4294901760
        %v2954 = vsub.f32 %v2952, %v2953
        %v2955 = vand.u32 %v2954, 4294901760
        %2956 = vmatpush2.msra.mxu0 %v2955
        %2957 = vmatprep.subr.mxu0 0.0
        %v2958 = vand.u32 %v468, 4294901760
        %v2959 = vsub.f32 %v468, %v2958
        %v2960 = vand.u32 %v2959, 4294901760
        %v2961 = vsub.f32 %v2959, %v2960
        %v2962 = vand.u32 %v2961, 4294901760
        %2963 = vmatpush2.msra.mxu0 %v2962
        %2964 = vmatprep.subr.mxu0 0.0
        %v2965 = vand.u32 %v467, 4294901760
        %v2966 = vsub.f32 %v467, %v2965
        %v2967 = vand.u32 %v2966, 4294901760
        %v2968 = vsub.f32 %v2966, %v2967
        %v2969 = vand.u32 %v2968, 4294901760
        %2970 = vmatpush2.msra.mxu0 %v2969
        %2971 = vmatprep.subr.mxu0 0.0
        %v2972 = vand.u32 %v466, 4294901760
        %v2973 = vsub.f32 %v466, %v2972
        %v2974 = vand.u32 %v2973, 4294901760
        %v2975 = vsub.f32 %v2973, %v2974
        %v2976 = vand.u32 %v2975, 4294901760
        %2977 = vmatpush2.msra.mxu0 %v2976
        %v2978 = vand.u32 %v2618, 4294901760
        %2979 = vmatprep.mubr.f32.mxu0 %v2978
        %v2980 = vand.u32 %v2616, 4294901760
        %2981 = vmatmul.mubr.f32.gmra.mxu0 %v2980
        %v2982 = vpop.f32.mrf.mxu0
        %v2983 = vadd.f32 %v2736, %v2982
        %v2984 = vpop.f32.mrf.mxu0
        %v2985 = vand.u32 %v2625, 4294901760
        %2986 = vmatprep.mubr.f32.mxu0 %v2985
        %v2987 = vand.u32 %v2623, 4294901760
        %2988 = vmatmul.mubr.f32.gmra.mxu0 %v2987
        %v2989 = vpop.f32.mrf.mxu0
        %v2990 = vadd.f32 %v2751, %v2989
        %v2991 = vpop.f32.mrf.mxu0
        %2992 = vdwg.mxu0
        %2993 = vmatprep.subr.mxu0 0.0
        %v2994 = vand.u32 %v465, 4294901760
        %v2995 = vsub.f32 %v465, %v2994
        %2996 = vmatpush1.msra.mxu0 %v2995
        %2997 = vmatprep.subr.mxu0 0.0
        %v2998 = vand.u32 %v464, 4294901760
        %v2999 = vsub.f32 %v464, %v2998
        %3000 = vmatpush1.msra.mxu0 %v2999
        %3001 = vmatprep.subr.mxu0 0.0
        %v3002 = vand.u32 %v463, 4294901760
        %v3003 = vsub.f32 %v463, %v3002
        %3004 = vmatpush1.msra.mxu0 %v3003
        %3005 = vmatprep.subr.mxu0 0.0
        %v3006 = vand.u32 %v462, 4294901760
        %v3007 = vsub.f32 %v462, %v3006
        %3008 = vmatpush1.msra.mxu0 %v3007
        %3009 = vmatprep.subr.mxu0 0.0
        %v3010 = vand.u32 %v461, 4294901760
        %v3011 = vsub.f32 %v461, %v3010
        %3012 = vmatpush1.msra.mxu0 %v3011
        %3013 = vmatprep.subr.mxu0 0.0
        %v3014 = vand.u32 %v460, 4294901760
        %v3015 = vsub.f32 %v460, %v3014
        %3016 = vmatpush1.msra.mxu0 %v3015
        %3017 = vmatprep.subr.mxu0 0.0
        %v3018 = vand.u32 %v459, 4294901760
        %v3019 = vsub.f32 %v459, %v3018
        %3020 = vmatpush1.msra.mxu0 %v3019
        %3021 = vmatprep.subr.mxu0 0.0
        %v3022 = vand.u32 %v458, 4294901760
        %v3023 = vsub.f32 %v458, %v3022
        %3024 = vmatpush1.msra.mxu0 %v3023
        %3025 = vmatprep.subr.mxu0 0.0
        %v3026 = vand.u32 %v457, 4294901760
        %v3027 = vsub.f32 %v457, %v3026
        %3028 = vmatpush1.msra.mxu0 %v3027
        %3029 = vmatprep.subr.mxu0 0.0
        %v3030 = vand.u32 %v456, 4294901760
        %v3031 = vsub.f32 %v456, %v3030
        %3032 = vmatpush1.msra.mxu0 %v3031
        %3033 = vmatprep.subr.mxu0 0.0
        %v3034 = vand.u32 %v455, 4294901760
        %v3035 = vsub.f32 %v455, %v3034
        %3036 = vmatpush1.msra.mxu0 %v3035
        %3037 = vmatprep.subr.mxu0 0.0
        %v3038 = vand.u32 %v454, 4294901760
        %v3039 = vsub.f32 %v454, %v3038
        %3040 = vmatpush1.msra.mxu0 %v3039
        %3041 = vmatprep.subr.mxu0 0.0
        %v3042 = vand.u32 %v453, 4294901760
        %v3043 = vsub.f32 %v453, %v3042
        %3044 = vmatpush1.msra.mxu0 %v3043
        %3045 = vmatprep.subr.mxu0 0.0
        %v3046 = vand.u32 %v452, 4294901760
        %v3047 = vsub.f32 %v452, %v3046
        %3048 = vmatpush1.msra.mxu0 %v3047
        %3049 = vmatprep.subr.mxu0 0.0
        %v3050 = vand.u32 %v451, 4294901760
        %v3051 = vsub.f32 %v451, %v3050
        %3052 = vmatpush1.msra.mxu0 %v3051
        %3053 = vmatprep.subr.mxu0 0.0
        %v3054 = vand.u32 %v450, 4294901760
        %v3055 = vsub.f32 %v450, %v3054
        %3056 = vmatpush1.msra.mxu0 %v3055
        %3057 = vmatprep.subr.mxu0 0.0
        %v3058 = vand.u32 %v481, 4294901760
        %v3059 = vsub.f32 %v481, %v3058
        %3060 = vmatpush2.msra.mxu0 %v3059
        %3061 = vmatprep.subr.mxu0 0.0
        %v3062 = vand.u32 %v480, 4294901760
        %v3063 = vsub.f32 %v480, %v3062
        %3064 = vmatpush2.msra.mxu0 %v3063
        %3065 = vmatprep.subr.mxu0 0.0
        %v3066 = vand.u32 %v479, 4294901760
        %v3067 = vsub.f32 %v479, %v3066
        %3068 = vmatpush2.msra.mxu0 %v3067
        %3069 = vmatprep.subr.mxu0 0.0
        %v3070 = vand.u32 %v478, 4294901760
        %v3071 = vsub.f32 %v478, %v3070
        %3072 = vmatpush2.msra.mxu0 %v3071
        %3073 = vmatprep.subr.mxu0 0.0
        %v3074 = vand.u32 %v477, 4294901760
        %v3075 = vsub.f32 %v477, %v3074
        %3076 = vmatpush2.msra.mxu0 %v3075
        %3077 = vmatprep.subr.mxu0 0.0
        %v3078 = vand.u32 %v476, 4294901760
        %v3079 = vsub.f32 %v476, %v3078
        %3080 = vmatpush2.msra.mxu0 %v3079
        %3081 = vmatprep.subr.mxu0 0.0
        %v3082 = vand.u32 %v475, 4294901760
        %v3083 = vsub.f32 %v475, %v3082
        %3084 = vmatpush2.msra.mxu0 %v3083
        %3085 = vmatprep.subr.mxu0 0.0
        %v3086 = vand.u32 %v474, 4294901760
        %v3087 = vsub.f32 %v474, %v3086
        %3088 = vmatpush2.msra.mxu0 %v3087
        %3089 = vmatprep.subr.mxu0 0.0
        %v3090 = vand.u32 %v473, 4294901760
        %v3091 = vsub.f32 %v473, %v3090
        %3092 = vmatpush2.msra.mxu0 %v3091
        %3093 = vmatprep.subr.mxu0 0.0
        %v3094 = vand.u32 %v472, 4294901760
        %v3095 = vsub.f32 %v472, %v3094
        %3096 = vmatpush2.msra.mxu0 %v3095
        %3097 = vmatprep.subr.mxu0 0.0
        %v3098 = vand.u32 %v471, 4294901760
        %v3099 = vsub.f32 %v471, %v3098
        %3100 = vmatpush2.msra.mxu0 %v3099
        %3101 = vmatprep.subr.mxu0 0.0
        %v3102 = vand.u32 %v470, 4294901760
        %v3103 = vsub.f32 %v470, %v3102
        %3104 = vmatpush2.msra.mxu0 %v3103
        %3105 = vmatprep.subr.mxu0 0.0
        %v3106 = vand.u32 %v469, 4294901760
        %v3107 = vsub.f32 %v469, %v3106
        %3108 = vmatpush2.msra.mxu0 %v3107
        %3109 = vmatprep.subr.mxu0 0.0
        %v3110 = vand.u32 %v468, 4294901760
        %v3111 = vsub.f32 %v468, %v3110
        %3112 = vmatpush2.msra.mxu0 %v3111
        %3113 = vmatprep.subr.mxu0 0.0
        %v3114 = vand.u32 %v467, 4294901760
        %v3115 = vsub.f32 %v467, %v3114
        %3116 = vmatpush2.msra.mxu0 %v3115
        %3117 = vmatprep.subr.mxu0 0.0
        %v3118 = vand.u32 %v466, 4294901760
        %v3119 = vsub.f32 %v466, %v3118
        %3120 = vmatpush2.msra.mxu0 %v3119
        %v3121 = vand.u32 %v2618, 4294901760
        %v3122 = vsub.f32 %v2618, %v3121
        %3123 = vmatprep.mubr.f32.mxu0 %v3122
        %v3124 = vand.u32 %v2616, 4294901760
        %v3125 = vsub.f32 %v2616, %v3124
        %3126 = vmatmul.mubr.f32.gmra.mxu0 %v3125
        %v3127 = vpop.f32.mrf.mxu0
        %v3128 = vadd.f32 %v2983, %v3127
        %v3129 = vpop.f32.mrf.mxu0
        %v3130 = vand.u32 %v2625, 4294901760
        %v3131 = vsub.f32 %v2625, %v3130
        %3132 = vmatprep.mubr.f32.mxu0 %v3131
        %v3133 = vand.u32 %v2623, 4294901760
        %v3134 = vsub.f32 %v2623, %v3133
        %3135 = vmatmul.mubr.f32.gmra.mxu0 %v3134
        %v3136 = vpop.f32.mrf.mxu0
        %v3137 = vadd.f32 %v2990, %v3136
        %v3138 = vpop.f32.mrf.mxu0
        %3139 = vdwg.mxu0
        %3140 = vmatprep.subr.mxu0 0.0
        %v3141 = vand.u32 %v465, 4294901760
        %3142 = vmatpush1.msra.mxu0 %v3141
        %3143 = vmatprep.subr.mxu0 0.0
        %v3144 = vand.u32 %v464, 4294901760
        %3145 = vmatpush1.msra.mxu0 %v3144
        %3146 = vmatprep.subr.mxu0 0.0
        %v3147 = vand.u32 %v463, 4294901760
        %3148 = vmatpush1.msra.mxu0 %v3147
        %3149 = vmatprep.subr.mxu0 0.0
        %v3150 = vand.u32 %v462, 4294901760
        %3151 = vmatpush1.msra.mxu0 %v3150
        %3152 = vmatprep.subr.mxu0 0.0
        %v3153 = vand.u32 %v461, 4294901760
        %3154 = vmatpush1.msra.mxu0 %v3153
        %3155 = vmatprep.subr.mxu0 0.0
        %v3156 = vand.u32 %v460, 4294901760
        %3157 = vmatpush1.msra.mxu0 %v3156
        %3158 = vmatprep.subr.mxu0 0.0
        %v3159 = vand.u32 %v459, 4294901760
        %3160 = vmatpush1.msra.mxu0 %v3159
        %3161 = vmatprep.subr.mxu0 0.0
        %v3162 = vand.u32 %v458, 4294901760
        %3163 = vmatpush1.msra.mxu0 %v3162
        %3164 = vmatprep.subr.mxu0 0.0
        %v3165 = vand.u32 %v457, 4294901760
        %3166 = vmatpush1.msra.mxu0 %v3165
        %3167 = vmatprep.subr.mxu0 0.0
        %v3168 = vand.u32 %v456, 4294901760
        %3169 = vmatpush1.msra.mxu0 %v3168
        %3170 = vmatprep.subr.mxu0 0.0
        %v3171 = vand.u32 %v455, 4294901760
        %3172 = vmatpush1.msra.mxu0 %v3171
        %3173 = vmatprep.subr.mxu0 0.0
        %v3174 = vand.u32 %v454, 4294901760
        %3175 = vmatpush1.msra.mxu0 %v3174
        %3176 = vmatprep.subr.mxu0 0.0
        %v3177 = vand.u32 %v453, 4294901760
        %3178 = vmatpush1.msra.mxu0 %v3177
        %3179 = vmatprep.subr.mxu0 0.0
        %v3180 = vand.u32 %v452, 4294901760
        %3181 = vmatpush1.msra.mxu0 %v3180
        %3182 = vmatprep.subr.mxu0 0.0
        %v3183 = vand.u32 %v451, 4294901760
        %3184 = vmatpush1.msra.mxu0 %v3183
        %3185 = vmatprep.subr.mxu0 0.0
        %v3186 = vand.u32 %v450, 4294901760
        %3187 = vmatpush1.msra.mxu0 %v3186
        %3188 = vmatprep.subr.mxu0 0.0
        %v3189 = vand.u32 %v481, 4294901760
        %3190 = vmatpush2.msra.mxu0 %v3189
        %3191 = vmatprep.subr.mxu0 0.0
        %v3192 = vand.u32 %v480, 4294901760
        %3193 = vmatpush2.msra.mxu0 %v3192
        %3194 = vmatprep.subr.mxu0 0.0
        %v3195 = vand.u32 %v479, 4294901760
        %3196 = vmatpush2.msra.mxu0 %v3195
        %3197 = vmatprep.subr.mxu0 0.0
        %v3198 = vand.u32 %v478, 4294901760
        %3199 = vmatpush2.msra.mxu0 %v3198
        %3200 = vmatprep.subr.mxu0 0.0
        %v3201 = vand.u32 %v477, 4294901760
        %3202 = vmatpush2.msra.mxu0 %v3201
        %3203 = vmatprep.subr.mxu0 0.0
        %v3204 = vand.u32 %v476, 4294901760
        %3205 = vmatpush2.msra.mxu0 %v3204
        %3206 = vmatprep.subr.mxu0 0.0
        %v3207 = vand.u32 %v475, 4294901760
        %3208 = vmatpush2.msra.mxu0 %v3207
        %3209 = vmatprep.subr.mxu0 0.0
        %v3210 = vand.u32 %v474, 4294901760
        %3211 = vmatpush2.msra.mxu0 %v3210
        %3212 = vmatprep.subr.mxu0 0.0
        %v3213 = vand.u32 %v473, 4294901760
        %3214 = vmatpush2.msra.mxu0 %v3213
        %3215 = vmatprep.subr.mxu0 0.0
        %v3216 = vand.u32 %v472, 4294901760
        %3217 = vmatpush2.msra.mxu0 %v3216
        %3218 = vmatprep.subr.mxu0 0.0
        %v3219 = vand.u32 %v471, 4294901760
        %3220 = vmatpush2.msra.mxu0 %v3219
        %3221 = vmatprep.subr.mxu0 0.0
        %v3222 = vand.u32 %v470, 4294901760
        %3223 = vmatpush2.msra.mxu0 %v3222
        %3224 = vmatprep.subr.mxu0 0.0
        %v3225 = vand.u32 %v469, 4294901760
        %3226 = vmatpush2.msra.mxu0 %v3225
        %3227 = vmatprep.subr.mxu0 0.0
        %v3228 = vand.u32 %v468, 4294901760
        %3229 = vmatpush2.msra.mxu0 %v3228
        %3230 = vmatprep.subr.mxu0 0.0
        %v3231 = vand.u32 %v467, 4294901760
        %3232 = vmatpush2.msra.mxu0 %v3231
        %3233 = vmatprep.subr.mxu0 0.0
        %v3234 = vand.u32 %v466, 4294901760
        %3235 = vmatpush2.msra.mxu0 %v3234
        %v3236 = vand.u32 %v2618, 4294901760
        %v3237 = vsub.f32 %v2618, %v3236
        %v3238 = vand.u32 %v3237, 4294901760
        %3239 = vmatprep.mubr.f32.mxu0 %v3238
        %v3240 = vand.u32 %v2616, 4294901760
        %v3241 = vsub.f32 %v2616, %v3240
        %v3242 = vand.u32 %v3241, 4294901760
        %3243 = vmatmul.mubr.f32.gmra.mxu0 %v3242
        %v3244 = vpop.f32.mrf.mxu0
        %v3245 = vadd.f32 %v3128, %v3244
        %v3246 = vpop.f32.mrf.mxu0
        %v3247 = vand.u32 %v2625, 4294901760
        %v3248 = vsub.f32 %v2625, %v3247
        %v3249 = vand.u32 %v3248, 4294901760
        %3250 = vmatprep.mubr.f32.mxu0 %v3249
        %v3251 = vand.u32 %v2623, 4294901760
        %v3252 = vsub.f32 %v2623, %v3251
        %v3253 = vand.u32 %v3252, 4294901760
        %3254 = vmatmul.mubr.f32.gmra.mxu0 %v3253
        %v3255 = vpop.f32.mrf.mxu0
        %v3256 = vadd.f32 %v3137, %v3255
        %v3257 = vpop.f32.mrf.mxu0
        %3258 = vdwg.mxu0
        %3259 = vmatprep.subr.mxu0 0.0
        %v3260 = vand.u32 %v465, 4294901760
        %v3261 = vsub.f32 %v465, %v3260
        %v3262 = vand.u32 %v3261, 4294901760
        %3263 = vmatpush1.msra.mxu0 %v3262
        %3264 = vmatprep.subr.mxu0 0.0
        %v3265 = vand.u32 %v464, 4294901760
        %v3266 = vsub.f32 %v464, %v3265
        %v3267 = vand.u32 %v3266, 4294901760
        %3268 = vmatpush1.msra.mxu0 %v3267
        %3269 = vmatprep.subr.mxu0 0.0
        %v3270 = vand.u32 %v463, 4294901760
        %v3271 = vsub.f32 %v463, %v3270
        %v3272 = vand.u32 %v3271, 4294901760
        %3273 = vmatpush1.msra.mxu0 %v3272
        %3274 = vmatprep.subr.mxu0 0.0
        %v3275 = vand.u32 %v462, 4294901760
        %v3276 = vsub.f32 %v462, %v3275
        %v3277 = vand.u32 %v3276, 4294901760
        %3278 = vmatpush1.msra.mxu0 %v3277
        %3279 = vmatprep.subr.mxu0 0.0
        %v3280 = vand.u32 %v461, 4294901760
        %v3281 = vsub.f32 %v461, %v3280
        %v3282 = vand.u32 %v3281, 4294901760
        %3283 = vmatpush1.msra.mxu0 %v3282
        %3284 = vmatprep.subr.mxu0 0.0
        %v3285 = vand.u32 %v460, 4294901760
        %v3286 = vsub.f32 %v460, %v3285
        %v3287 = vand.u32 %v3286, 4294901760
        %3288 = vmatpush1.msra.mxu0 %v3287
        %3289 = vmatprep.subr.mxu0 0.0
        %v3290 = vand.u32 %v459, 4294901760
        %v3291 = vsub.f32 %v459, %v3290
        %v3292 = vand.u32 %v3291, 4294901760
        %3293 = vmatpush1.msra.mxu0 %v3292
        %3294 = vmatprep.subr.mxu0 0.0
        %v3295 = vand.u32 %v458, 4294901760
        %v3296 = vsub.f32 %v458, %v3295
        %v3297 = vand.u32 %v3296, 4294901760
        %3298 = vmatpush1.msra.mxu0 %v3297
        %3299 = vmatprep.subr.mxu0 0.0
        %v3300 = vand.u32 %v457, 4294901760
        %v3301 = vsub.f32 %v457, %v3300
        %v3302 = vand.u32 %v3301, 4294901760
        %3303 = vmatpush1.msra.mxu0 %v3302
        %3304 = vmatprep.subr.mxu0 0.0
        %v3305 = vand.u32 %v456, 4294901760
        %v3306 = vsub.f32 %v456, %v3305
        %v3307 = vand.u32 %v3306, 4294901760
        %3308 = vmatpush1.msra.mxu0 %v3307
        %3309 = vmatprep.subr.mxu0 0.0
        %v3310 = vand.u32 %v455, 4294901760
        %v3311 = vsub.f32 %v455, %v3310
        %v3312 = vand.u32 %v3311, 4294901760
        %3313 = vmatpush1.msra.mxu0 %v3312
        %3314 = vmatprep.subr.mxu0 0.0
        %v3315 = vand.u32 %v454, 4294901760
        %v3316 = vsub.f32 %v454, %v3315
        %v3317 = vand.u32 %v3316, 4294901760
        %3318 = vmatpush1.msra.mxu0 %v3317
        %3319 = vmatprep.subr.mxu0 0.0
        %v3320 = vand.u32 %v453, 4294901760
        %v3321 = vsub.f32 %v453, %v3320
        %v3322 = vand.u32 %v3321, 4294901760
        %3323 = vmatpush1.msra.mxu0 %v3322
        %3324 = vmatprep.subr.mxu0 0.0
        %v3325 = vand.u32 %v452, 4294901760
        %v3326 = vsub.f32 %v452, %v3325
        %v3327 = vand.u32 %v3326, 4294901760
        %3328 = vmatpush1.msra.mxu0 %v3327
        %3329 = vmatprep.subr.mxu0 0.0
        %v3330 = vand.u32 %v451, 4294901760
        %v3331 = vsub.f32 %v451, %v3330
        %v3332 = vand.u32 %v3331, 4294901760
        %3333 = vmatpush1.msra.mxu0 %v3332
        %3334 = vmatprep.subr.mxu0 0.0
        %v3335 = vand.u32 %v450, 4294901760
        %v3336 = vsub.f32 %v450, %v3335
        %v3337 = vand.u32 %v3336, 4294901760
        %3338 = vmatpush1.msra.mxu0 %v3337
        %3339 = vmatprep.subr.mxu0 0.0
        %v3340 = vand.u32 %v481, 4294901760
        %v3341 = vsub.f32 %v481, %v3340
        %v3342 = vand.u32 %v3341, 4294901760
        %3343 = vmatpush2.msra.mxu0 %v3342
        %3344 = vmatprep.subr.mxu0 0.0
        %v3345 = vand.u32 %v480, 4294901760
        %v3346 = vsub.f32 %v480, %v3345
        %v3347 = vand.u32 %v3346, 4294901760
        %3348 = vmatpush2.msra.mxu0 %v3347
        %3349 = vmatprep.subr.mxu0 0.0
        %v3350 = vand.u32 %v479, 4294901760
        %v3351 = vsub.f32 %v479, %v3350
        %v3352 = vand.u32 %v3351, 4294901760
        %3353 = vmatpush2.msra.mxu0 %v3352
        %3354 = vmatprep.subr.mxu0 0.0
        %v3355 = vand.u32 %v478, 4294901760
        %v3356 = vsub.f32 %v478, %v3355
        %v3357 = vand.u32 %v3356, 4294901760
        %3358 = vmatpush2.msra.mxu0 %v3357
        %3359 = vmatprep.subr.mxu0 0.0
        %v3360 = vand.u32 %v477, 4294901760
        %v3361 = vsub.f32 %v477, %v3360
        %v3362 = vand.u32 %v3361, 4294901760
        %3363 = vmatpush2.msra.mxu0 %v3362
        %3364 = vmatprep.subr.mxu0 0.0
        %v3365 = vand.u32 %v476, 4294901760
        %v3366 = vsub.f32 %v476, %v3365
        %v3367 = vand.u32 %v3366, 4294901760
        %3368 = vmatpush2.msra.mxu0 %v3367
        %3369 = vmatprep.subr.mxu0 0.0
        %v3370 = vand.u32 %v475, 4294901760
        %v3371 = vsub.f32 %v475, %v3370
        %v3372 = vand.u32 %v3371, 4294901760
        %3373 = vmatpush2.msra.mxu0 %v3372
        %3374 = vmatprep.subr.mxu0 0.0
        %v3375 = vand.u32 %v474, 4294901760
        %v3376 = vsub.f32 %v474, %v3375
        %v3377 = vand.u32 %v3376, 4294901760
        %3378 = vmatpush2.msra.mxu0 %v3377
        %3379 = vmatprep.subr.mxu0 0.0
        %v3380 = vand.u32 %v473, 4294901760
        %v3381 = vsub.f32 %v473, %v3380
        %v3382 = vand.u32 %v3381, 4294901760
        %3383 = vmatpush2.msra.mxu0 %v3382
        %3384 = vmatprep.subr.mxu0 0.0
        %v3385 = vand.u32 %v472, 4294901760
        %v3386 = vsub.f32 %v472, %v3385
        %v3387 = vand.u32 %v3386, 4294901760
        %3388 = vmatpush2.msra.mxu0 %v3387
        %3389 = vmatprep.subr.mxu0 0.0
        %v3390 = vand.u32 %v471, 4294901760
        %v3391 = vsub.f32 %v471, %v3390
        %v3392 = vand.u32 %v3391, 4294901760
        %3393 = vmatpush2.msra.mxu0 %v3392
        %3394 = vmatprep.subr.mxu0 0.0
        %v3395 = vand.u32 %v470, 4294901760
        %v3396 = vsub.f32 %v470, %v3395
        %v3397 = vand.u32 %v3396, 4294901760
        %3398 = vmatpush2.msra.mxu0 %v3397
        %3399 = vmatprep.subr.mxu0 0.0
        %v3400 = vand.u32 %v469, 4294901760
        %v3401 = vsub.f32 %v469, %v3400
        %v3402 = vand.u32 %v3401, 4294901760
        %3403 = vmatpush2.msra.mxu0 %v3402
        %3404 = vmatprep.subr.mxu0 0.0
        %v3405 = vand.u32 %v468, 4294901760
        %v3406 = vsub.f32 %v468, %v3405
        %v3407 = vand.u32 %v3406, 4294901760
        %3408 = vmatpush2.msra.mxu0 %v3407
        %3409 = vmatprep.subr.mxu0 0.0
        %v3410 = vand.u32 %v467, 4294901760
        %v3411 = vsub.f32 %v467, %v3410
        %v3412 = vand.u32 %v3411, 4294901760
        %3413 = vmatpush2.msra.mxu0 %v3412
        %3414 = vmatprep.subr.mxu0 0.0
        %v3415 = vand.u32 %v466, 4294901760
        %v3416 = vsub.f32 %v466, %v3415
        %v3417 = vand.u32 %v3416, 4294901760
        %3418 = vmatpush2.msra.mxu0 %v3417
        %v3419 = vand.u32 %v2618, 4294901760
        %3420 = vmatprep.mubr.f32.mxu0 %v3419
        %v3421 = vand.u32 %v2616, 4294901760
        %3422 = vmatmul.mubr.f32.gmra.mxu0 %v3421
        %v3423 = vpop.f32.mrf.mxu0
        %v3424 = vadd.f32 %v3245, %v3423
        %v3425 = vpop.f32.mrf.mxu0
        %v3426 = vand.u32 %v2625, 4294901760
        %3427 = vmatprep.mubr.f32.mxu0 %v3426
        %v3428 = vand.u32 %v2623, 4294901760
        %3429 = vmatmul.mubr.f32.gmra.mxu0 %v3428
        %v3430 = vpop.f32.mrf.mxu0
        %v3431 = vadd.f32 %v3256, %v3430
        %v3432 = vpop.f32.mrf.mxu0
        %3433 = vdwg.mxu0
        %3434 = vmatprep.subr.mxu0 0.0
        %v3435 = vand.u32 %v465, 4294901760
        %3436 = vmatpush1.msra.mxu0 %v3435
        %3437 = vmatprep.subr.mxu0 0.0
        %v3438 = vand.u32 %v464, 4294901760
        %3439 = vmatpush1.msra.mxu0 %v3438
        %3440 = vmatprep.subr.mxu0 0.0
        %v3441 = vand.u32 %v463, 4294901760
        %3442 = vmatpush1.msra.mxu0 %v3441
        %3443 = vmatprep.subr.mxu0 0.0
        %v3444 = vand.u32 %v462, 4294901760
        %3445 = vmatpush1.msra.mxu0 %v3444
        %3446 = vmatprep.subr.mxu0 0.0
        %v3447 = vand.u32 %v461, 4294901760
        %3448 = vmatpush1.msra.mxu0 %v3447
        %3449 = vmatprep.subr.mxu0 0.0
        %v3450 = vand.u32 %v460, 4294901760
        %3451 = vmatpush1.msra.mxu0 %v3450
        %3452 = vmatprep.subr.mxu0 0.0
        %v3453 = vand.u32 %v459, 4294901760
        %3454 = vmatpush1.msra.mxu0 %v3453
        %3455 = vmatprep.subr.mxu0 0.0
        %v3456 = vand.u32 %v458, 4294901760
        %3457 = vmatpush1.msra.mxu0 %v3456
        %3458 = vmatprep.subr.mxu0 0.0
        %v3459 = vand.u32 %v457, 4294901760
        %3460 = vmatpush1.msra.mxu0 %v3459
        %3461 = vmatprep.subr.mxu0 0.0
        %v3462 = vand.u32 %v456, 4294901760
        %3463 = vmatpush1.msra.mxu0 %v3462
        %3464 = vmatprep.subr.mxu0 0.0
        %v3465 = vand.u32 %v455, 4294901760
        %3466 = vmatpush1.msra.mxu0 %v3465
        %3467 = vmatprep.subr.mxu0 0.0
        %v3468 = vand.u32 %v454, 4294901760
        %3469 = vmatpush1.msra.mxu0 %v3468
        %3470 = vmatprep.subr.mxu0 0.0
        %v3471 = vand.u32 %v453, 4294901760
        %3472 = vmatpush1.msra.mxu0 %v3471
        %3473 = vmatprep.subr.mxu0 0.0
        %v3474 = vand.u32 %v452, 4294901760
        %3475 = vmatpush1.msra.mxu0 %v3474
        %3476 = vmatprep.subr.mxu0 0.0
        %v3477 = vand.u32 %v451, 4294901760
        %3478 = vmatpush1.msra.mxu0 %v3477
        %3479 = vmatprep.subr.mxu0 0.0
        %v3480 = vand.u32 %v450, 4294901760
        %3481 = vmatpush1.msra.mxu0 %v3480
        %3482 = vmatprep.subr.mxu0 0.0
        %v3483 = vand.u32 %v481, 4294901760
        %3484 = vmatpush2.msra.mxu0 %v3483
        %3485 = vmatprep.subr.mxu0 0.0
        %v3486 = vand.u32 %v480, 4294901760
        %3487 = vmatpush2.msra.mxu0 %v3486
        %3488 = vmatprep.subr.mxu0 0.0
        %v3489 = vand.u32 %v479, 4294901760
        %3490 = vmatpush2.msra.mxu0 %v3489
        %3491 = vmatprep.subr.mxu0 0.0
        %v3492 = vand.u32 %v478, 4294901760
        %3493 = vmatpush2.msra.mxu0 %v3492
        %3494 = vmatprep.subr.mxu0 0.0
        %v3495 = vand.u32 %v477, 4294901760
        %3496 = vmatpush2.msra.mxu0 %v3495
        %3497 = vmatprep.subr.mxu0 0.0
        %v3498 = vand.u32 %v476, 4294901760
        %3499 = vmatpush2.msra.mxu0 %v3498
        %3500 = vmatprep.subr.mxu0 0.0
        %v3501 = vand.u32 %v475, 4294901760
        %3502 = vmatpush2.msra.mxu0 %v3501
        %3503 = vmatprep.subr.mxu0 0.0
        %v3504 = vand.u32 %v474, 4294901760
        %3505 = vmatpush2.msra.mxu0 %v3504
        %3506 = vmatprep.subr.mxu0 0.0
        %v3507 = vand.u32 %v473, 4294901760
        %3508 = vmatpush2.msra.mxu0 %v3507
        %3509 = vmatprep.subr.mxu0 0.0
        %v3510 = vand.u32 %v472, 4294901760
        %3511 = vmatpush2.msra.mxu0 %v3510
        %3512 = vmatprep.subr.mxu0 0.0
        %v3513 = vand.u32 %v471, 4294901760
        %3514 = vmatpush2.msra.mxu0 %v3513
        %3515 = vmatprep.subr.mxu0 0.0
        %v3516 = vand.u32 %v470, 4294901760
        %3517 = vmatpush2.msra.mxu0 %v3516
        %3518 = vmatprep.subr.mxu0 0.0
        %v3519 = vand.u32 %v469, 4294901760
        %3520 = vmatpush2.msra.mxu0 %v3519
        %3521 = vmatprep.subr.mxu0 0.0
        %v3522 = vand.u32 %v468, 4294901760
        %3523 = vmatpush2.msra.mxu0 %v3522
        %3524 = vmatprep.subr.mxu0 0.0
        %v3525 = vand.u32 %v467, 4294901760
        %3526 = vmatpush2.msra.mxu0 %v3525
        %3527 = vmatprep.subr.mxu0 0.0
        %v3528 = vand.u32 %v466, 4294901760
        %3529 = vmatpush2.msra.mxu0 %v3528
        %v3530 = vand.u32 %v2618, 4294901760
        %3531 = vmatprep.mubr.f32.mxu0 %v3530
        %v3532 = vand.u32 %v2616, 4294901760
        %3533 = vmatmul.mubr.f32.gmra.mxu0 %v3532
        %v3534 = vpop.f32.mrf.mxu0
        %v3535 = vadd.f32 %v3424, %v3534
        %v3536 = vpop.f32.mrf.mxu0
        %v3537 = vand.u32 %v2625, 4294901760
        %3538 = vmatprep.mubr.f32.mxu0 %v3537
        %v3539 = vand.u32 %v2623, 4294901760
        %3540 = vmatmul.mubr.f32.gmra.mxu0 %v3539
        %v3541 = vpop.f32.mrf.mxu0
        %v3542 = vadd.f32 %v3431, %v3541
        %v3543 = vpop.f32.mrf.mxu0
        %3544 = vdwg.mxu0
        %3545 = vst [vmem:[%s422] sm:$0xff] %v2025
        %3546 = vst [vmem:[%s422 + $0x8] sm:$0xff] %v2032
        %3547 = vst [vmem:[%s427] sm:$0xff] %v3535
        %3548 = vst [vmem:[%s427 + $0x8] sm:$0xff] %v3542
        %v3549 = vand.u32 %v517, 4294901760
        %3550 = vmatprep.subr.mxu0 %v3549
        %v3551 = vand.u32 %v516, 4294901760
        %3552 = vmatpush1.msra.mxu0 %v3551
        %v3553 = vand.u32 %v515, 4294901760
        %3554 = vmatprep.subr.mxu0 %v3553
        %v3555 = vand.u32 %v514, 4294901760
        %3556 = vmatpush1.msra.mxu0 %v3555
        %v3557 = vand.u32 %v513, 4294901760
        %3558 = vmatprep.subr.mxu0 %v3557
        %v3559 = vand.u32 %v512, 4294901760
        %3560 = vmatpush1.msra.mxu0 %v3559
        %v3561 = vand.u32 %v511, 4294901760
        %3562 = vmatprep.subr.mxu0 %v3561
        %v3563 = vand.u32 %v510, 4294901760
        %3564 = vmatpush1.msra.mxu0 %v3563
        %v3565 = vand.u32 %v509, 4294901760
        %3566 = vmatprep.subr.mxu0 %v3565
        %v3567 = vand.u32 %v508, 4294901760
        %3568 = vmatpush1.msra.mxu0 %v3567
        %v3569 = vand.u32 %v507, 4294901760
        %3570 = vmatprep.subr.mxu0 %v3569
        %v3571 = vand.u32 %v506, 4294901760
        %3572 = vmatpush1.msra.mxu0 %v3571
        %v3573 = vand.u32 %v505, 4294901760
        %3574 = vmatprep.subr.mxu0 %v3573
        %v3575 = vand.u32 %v504, 4294901760
        %3576 = vmatpush1.msra.mxu0 %v3575
        %v3577 = vand.u32 %v503, 4294901760
        %3578 = vmatprep.subr.mxu0 %v3577
        %v3579 = vand.u32 %v502, 4294901760
        %3580 = vmatpush1.msra.mxu0 %v3579
        %v3581 = vand.u32 %v501, 4294901760
        %3582 = vmatprep.subr.mxu0 %v3581
        %v3583 = vand.u32 %v500, 4294901760
        %3584 = vmatpush1.msra.mxu0 %v3583
        %v3585 = vand.u32 %v499, 4294901760
        %3586 = vmatprep.subr.mxu0 %v3585
        %v3587 = vand.u32 %v498, 4294901760
        %3588 = vmatpush1.msra.mxu0 %v3587
        %v3589 = vand.u32 %v497, 4294901760
        %3590 = vmatprep.subr.mxu0 %v3589
        %v3591 = vand.u32 %v496, 4294901760
        %3592 = vmatpush1.msra.mxu0 %v3591
        %v3593 = vand.u32 %v495, 4294901760
        %3594 = vmatprep.subr.mxu0 %v3593
        %v3595 = vand.u32 %v494, 4294901760
        %3596 = vmatpush1.msra.mxu0 %v3595
        %v3597 = vand.u32 %v493, 4294901760
        %3598 = vmatprep.subr.mxu0 %v3597
        %v3599 = vand.u32 %v492, 4294901760
        %3600 = vmatpush1.msra.mxu0 %v3599
        %v3601 = vand.u32 %v491, 4294901760
        %3602 = vmatprep.subr.mxu0 %v3601
        %v3603 = vand.u32 %v490, 4294901760
        %3604 = vmatpush1.msra.mxu0 %v3603
        %v3605 = vand.u32 %v489, 4294901760
        %3606 = vmatprep.subr.mxu0 %v3605
        %v3607 = vand.u32 %v488, 4294901760
        %3608 = vmatpush1.msra.mxu0 %v3607
        %v3609 = vand.u32 %v487, 4294901760
        %3610 = vmatprep.subr.mxu0 %v3609
        %v3611 = vand.u32 %v486, 4294901760
        %3612 = vmatpush1.msra.mxu0 %v3611
        %3613 = vmatprep.subr.mxu0 0.0
        %3614 = vmatpush2.msra.mxu0 0.0
        %3615 = vmatprep.subr.mxu0 0.0
        %3616 = vmatpush2.msra.mxu0 0.0
        %3617 = vmatprep.subr.mxu0 0.0
        %3618 = vmatpush2.msra.mxu0 0.0
        %3619 = vmatprep.subr.mxu0 0.0
        %3620 = vmatpush2.msra.mxu0 0.0
        %3621 = vmatprep.subr.mxu0 0.0
        %3622 = vmatpush2.msra.mxu0 0.0
        %3623 = vmatprep.subr.mxu0 0.0
        %3624 = vmatpush2.msra.mxu0 0.0
        %3625 = vmatprep.subr.mxu0 0.0
        %3626 = vmatpush2.msra.mxu0 0.0
        %3627 = vmatprep.subr.mxu0 0.0
        %3628 = vmatpush2.msra.mxu0 0.0
        %3629 = vmatprep.subr.mxu0 0.0
        %3630 = vmatpush2.msra.mxu0 0.0
        %3631 = vmatprep.subr.mxu0 0.0
        %3632 = vmatpush2.msra.mxu0 0.0
        %3633 = vmatprep.subr.mxu0 0.0
        %3634 = vmatpush2.msra.mxu0 0.0
        %3635 = vmatprep.subr.mxu0 0.0
        %3636 = vmatpush2.msra.mxu0 0.0
        %3637 = vmatprep.subr.mxu0 0.0
        %3638 = vmatpush2.msra.mxu0 0.0
        %3639 = vmatprep.subr.mxu0 0.0
        %3640 = vmatpush2.msra.mxu0 0.0
        %3641 = vmatprep.subr.mxu0 0.0
        %3642 = vmatpush2.msra.mxu0 0.0
        %3643 = vmatprep.subr.mxu0 0.0
        %3644 = vmatpush2.msra.mxu0 0.0
        %3645 = vmatprep.mubr.f32.mxu0 0.0
        %v3646 = vand.u32 %v2025, 4294901760
        %v3647 = vsub.f32 %v2025, %v3646
        %v3648 = vand.u32 %v3647, 4294901760
        %v3649 = vsub.f32 %v3647, %v3648
        %v3650 = vand.u32 %v3649, 4294901760
        %3651 = vmatmul.mubr.f32.gmra.mxu0 %v3650
        %v3652 = vpop.f32.mrf.mxu0
        %v3653 = vadd.f32 0.0, %v3652
        %v3654 = vpop.f32.mrf.mxu0
        %v3655 = vadd.f32 0.0, %v3654
        %3656 = vmatprep.mubr.f32.mxu0 0.0
        %v3657 = vand.u32 %v2032, 4294901760
        %v3658 = vsub.f32 %v2032, %v3657
        %v3659 = vand.u32 %v3658, 4294901760
        %v3660 = vsub.f32 %v3658, %v3659
        %v3661 = vand.u32 %v3660, 4294901760
        %3662 = vmatmul.mubr.f32.gmra.mxu0 %v3661
        %v3663 = vpop.f32.mrf.mxu0
        %v3664 = vadd.f32 0.0, %v3663
        %v3665 = vpop.f32.mrf.mxu0
        %v3666 = vadd.f32 0.0, %v3665
        %3667 = vdwg.mxu0
        %v3668 = vand.u32 %v517, 4294901760
        %v3669 = vsub.f32 %v517, %v3668
        %v3670 = vand.u32 %v3669, 4294901760
        %v3671 = vsub.f32 %v3669, %v3670
        %v3672 = vand.u32 %v3671, 4294901760
        %3673 = vmatprep.subr.mxu0 %v3672
        %v3674 = vand.u32 %v516, 4294901760
        %v3675 = vsub.f32 %v516, %v3674
        %v3676 = vand.u32 %v3675, 4294901760
        %v3677 = vsub.f32 %v3675, %v3676
        %v3678 = vand.u32 %v3677, 4294901760
        %3679 = vmatpush1.msra.mxu0 %v3678
        %v3680 = vand.u32 %v515, 4294901760
        %v3681 = vsub.f32 %v515, %v3680
        %v3682 = vand.u32 %v3681, 4294901760
        %v3683 = vsub.f32 %v3681, %v3682
        %v3684 = vand.u32 %v3683, 4294901760
        %3685 = vmatprep.subr.mxu0 %v3684
        %v3686 = vand.u32 %v514, 4294901760
        %v3687 = vsub.f32 %v514, %v3686
        %v3688 = vand.u32 %v3687, 4294901760
        %v3689 = vsub.f32 %v3687, %v3688
        %v3690 = vand.u32 %v3689, 4294901760
        %3691 = vmatpush1.msra.mxu0 %v3690
        %v3692 = vand.u32 %v513, 4294901760
        %v3693 = vsub.f32 %v513, %v3692
        %v3694 = vand.u32 %v3693, 4294901760
        %v3695 = vsub.f32 %v3693, %v3694
        %v3696 = vand.u32 %v3695, 4294901760
        %3697 = vmatprep.subr.mxu0 %v3696
        %v3698 = vand.u32 %v512, 4294901760
        %v3699 = vsub.f32 %v512, %v3698
        %v3700 = vand.u32 %v3699, 4294901760
        %v3701 = vsub.f32 %v3699, %v3700
        %v3702 = vand.u32 %v3701, 4294901760
        %3703 = vmatpush1.msra.mxu0 %v3702
        %v3704 = vand.u32 %v511, 4294901760
        %v3705 = vsub.f32 %v511, %v3704
        %v3706 = vand.u32 %v3705, 4294901760
        %v3707 = vsub.f32 %v3705, %v3706
        %v3708 = vand.u32 %v3707, 4294901760
        %3709 = vmatprep.subr.mxu0 %v3708
        %v3710 = vand.u32 %v510, 4294901760
        %v3711 = vsub.f32 %v510, %v3710
        %v3712 = vand.u32 %v3711, 4294901760
        %v3713 = vsub.f32 %v3711, %v3712
        %v3714 = vand.u32 %v3713, 4294901760
        %3715 = vmatpush1.msra.mxu0 %v3714
        %v3716 = vand.u32 %v509, 4294901760
        %v3717 = vsub.f32 %v509, %v3716
        %v3718 = vand.u32 %v3717, 4294901760
        %v3719 = vsub.f32 %v3717, %v3718
        %v3720 = vand.u32 %v3719, 4294901760
        %3721 = vmatprep.subr.mxu0 %v3720
        %v3722 = vand.u32 %v508, 4294901760
        %v3723 = vsub.f32 %v508, %v3722
        %v3724 = vand.u32 %v3723, 4294901760
        %v3725 = vsub.f32 %v3723, %v3724
        %v3726 = vand.u32 %v3725, 4294901760
        %3727 = vmatpush1.msra.mxu0 %v3726
        %v3728 = vand.u32 %v507, 4294901760
        %v3729 = vsub.f32 %v507, %v3728
        %v3730 = vand.u32 %v3729, 4294901760
        %v3731 = vsub.f32 %v3729, %v3730
        %v3732 = vand.u32 %v3731, 4294901760
        %3733 = vmatprep.subr.mxu0 %v3732
        %v3734 = vand.u32 %v506, 4294901760
        %v3735 = vsub.f32 %v506, %v3734
        %v3736 = vand.u32 %v3735, 4294901760
        %v3737 = vsub.f32 %v3735, %v3736
        %v3738 = vand.u32 %v3737, 4294901760
        %3739 = vmatpush1.msra.mxu0 %v3738
        %v3740 = vand.u32 %v505, 4294901760
        %v3741 = vsub.f32 %v505, %v3740
        %v3742 = vand.u32 %v3741, 4294901760
        %v3743 = vsub.f32 %v3741, %v3742
        %v3744 = vand.u32 %v3743, 4294901760
        %3745 = vmatprep.subr.mxu0 %v3744
        %v3746 = vand.u32 %v504, 4294901760
        %v3747 = vsub.f32 %v504, %v3746
        %v3748 = vand.u32 %v3747, 4294901760
        %v3749 = vsub.f32 %v3747, %v3748
        %v3750 = vand.u32 %v3749, 4294901760
        %3751 = vmatpush1.msra.mxu0 %v3750
        %v3752 = vand.u32 %v503, 4294901760
        %v3753 = vsub.f32 %v503, %v3752
        %v3754 = vand.u32 %v3753, 4294901760
        %v3755 = vsub.f32 %v3753, %v3754
        %v3756 = vand.u32 %v3755, 4294901760
        %3757 = vmatprep.subr.mxu0 %v3756
        %v3758 = vand.u32 %v502, 4294901760
        %v3759 = vsub.f32 %v502, %v3758
        %v3760 = vand.u32 %v3759, 4294901760
        %v3761 = vsub.f32 %v3759, %v3760
        %v3762 = vand.u32 %v3761, 4294901760
        %3763 = vmatpush1.msra.mxu0 %v3762
        %v3764 = vand.u32 %v501, 4294901760
        %v3765 = vsub.f32 %v501, %v3764
        %v3766 = vand.u32 %v3765, 4294901760
        %v3767 = vsub.f32 %v3765, %v3766
        %v3768 = vand.u32 %v3767, 4294901760
        %3769 = vmatprep.subr.mxu0 %v3768
        %v3770 = vand.u32 %v500, 4294901760
        %v3771 = vsub.f32 %v500, %v3770
        %v3772 = vand.u32 %v3771, 4294901760
        %v3773 = vsub.f32 %v3771, %v3772
        %v3774 = vand.u32 %v3773, 4294901760
        %3775 = vmatpush1.msra.mxu0 %v3774
        %v3776 = vand.u32 %v499, 4294901760
        %v3777 = vsub.f32 %v499, %v3776
        %v3778 = vand.u32 %v3777, 4294901760
        %v3779 = vsub.f32 %v3777, %v3778
        %v3780 = vand.u32 %v3779, 4294901760
        %3781 = vmatprep.subr.mxu0 %v3780
        %v3782 = vand.u32 %v498, 4294901760
        %v3783 = vsub.f32 %v498, %v3782
        %v3784 = vand.u32 %v3783, 4294901760
        %v3785 = vsub.f32 %v3783, %v3784
        %v3786 = vand.u32 %v3785, 4294901760
        %3787 = vmatpush1.msra.mxu0 %v3786
        %v3788 = vand.u32 %v497, 4294901760
        %v3789 = vsub.f32 %v497, %v3788
        %v3790 = vand.u32 %v3789, 4294901760
        %v3791 = vsub.f32 %v3789, %v3790
        %v3792 = vand.u32 %v3791, 4294901760
        %3793 = vmatprep.subr.mxu0 %v3792
        %v3794 = vand.u32 %v496, 4294901760
        %v3795 = vsub.f32 %v496, %v3794
        %v3796 = vand.u32 %v3795, 4294901760
        %v3797 = vsub.f32 %v3795, %v3796
        %v3798 = vand.u32 %v3797, 4294901760
        %3799 = vmatpush1.msra.mxu0 %v3798
        %v3800 = vand.u32 %v495, 4294901760
        %v3801 = vsub.f32 %v495, %v3800
        %v3802 = vand.u32 %v3801, 4294901760
        %v3803 = vsub.f32 %v3801, %v3802
        %v3804 = vand.u32 %v3803, 4294901760
        %3805 = vmatprep.subr.mxu0 %v3804
        %v3806 = vand.u32 %v494, 4294901760
        %v3807 = vsub.f32 %v494, %v3806
        %v3808 = vand.u32 %v3807, 4294901760
        %v3809 = vsub.f32 %v3807, %v3808
        %v3810 = vand.u32 %v3809, 4294901760
        %3811 = vmatpush1.msra.mxu0 %v3810
        %v3812 = vand.u32 %v493, 4294901760
        %v3813 = vsub.f32 %v493, %v3812
        %v3814 = vand.u32 %v3813, 4294901760
        %v3815 = vsub.f32 %v3813, %v3814
        %v3816 = vand.u32 %v3815, 4294901760
        %3817 = vmatprep.subr.mxu0 %v3816
        %v3818 = vand.u32 %v492, 4294901760
        %v3819 = vsub.f32 %v492, %v3818
        %v3820 = vand.u32 %v3819, 4294901760
        %v3821 = vsub.f32 %v3819, %v3820
        %v3822 = vand.u32 %v3821, 4294901760
        %3823 = vmatpush1.msra.mxu0 %v3822
        %v3824 = vand.u32 %v491, 4294901760
        %v3825 = vsub.f32 %v491, %v3824
        %v3826 = vand.u32 %v3825, 4294901760
        %v3827 = vsub.f32 %v3825, %v3826
        %v3828 = vand.u32 %v3827, 4294901760
        %3829 = vmatprep.subr.mxu0 %v3828
        %v3830 = vand.u32 %v490, 4294901760
        %v3831 = vsub.f32 %v490, %v3830
        %v3832 = vand.u32 %v3831, 4294901760
        %v3833 = vsub.f32 %v3831, %v3832
        %v3834 = vand.u32 %v3833, 4294901760
        %3835 = vmatpush1.msra.mxu0 %v3834
        %v3836 = vand.u32 %v489, 4294901760
        %v3837 = vsub.f32 %v489, %v3836
        %v3838 = vand.u32 %v3837, 4294901760
        %v3839 = vsub.f32 %v3837, %v3838
        %v3840 = vand.u32 %v3839, 4294901760
        %3841 = vmatprep.subr.mxu0 %v3840
        %v3842 = vand.u32 %v488, 4294901760
        %v3843 = vsub.f32 %v488, %v3842
        %v3844 = vand.u32 %v3843, 4294901760
        %v3845 = vsub.f32 %v3843, %v3844
        %v3846 = vand.u32 %v3845, 4294901760
        %3847 = vmatpush1.msra.mxu0 %v3846
        %v3848 = vand.u32 %v487, 4294901760
        %v3849 = vsub.f32 %v487, %v3848
        %v3850 = vand.u32 %v3849, 4294901760
        %v3851 = vsub.f32 %v3849, %v3850
        %v3852 = vand.u32 %v3851, 4294901760
        %3853 = vmatprep.subr.mxu0 %v3852
        %v3854 = vand.u32 %v486, 4294901760
        %v3855 = vsub.f32 %v486, %v3854
        %v3856 = vand.u32 %v3855, 4294901760
        %v3857 = vsub.f32 %v3855, %v3856
        %v3858 = vand.u32 %v3857, 4294901760
        %3859 = vmatpush1.msra.mxu0 %v3858
        %3860 = vmatprep.subr.mxu0 0.0
        %3861 = vmatpush2.msra.mxu0 0.0
        %3862 = vmatprep.subr.mxu0 0.0
        %3863 = vmatpush2.msra.mxu0 0.0
        %3864 = vmatprep.subr.mxu0 0.0
        %3865 = vmatpush2.msra.mxu0 0.0
        %3866 = vmatprep.subr.mxu0 0.0
        %3867 = vmatpush2.msra.mxu0 0.0
        %3868 = vmatprep.subr.mxu0 0.0
        %3869 = vmatpush2.msra.mxu0 0.0
        %3870 = vmatprep.subr.mxu0 0.0
        %3871 = vmatpush2.msra.mxu0 0.0
        %3872 = vmatprep.subr.mxu0 0.0
        %3873 = vmatpush2.msra.mxu0 0.0
        %3874 = vmatprep.subr.mxu0 0.0
        %3875 = vmatpush2.msra.mxu0 0.0
        %3876 = vmatprep.subr.mxu0 0.0
        %3877 = vmatpush2.msra.mxu0 0.0
        %3878 = vmatprep.subr.mxu0 0.0
        %3879 = vmatpush2.msra.mxu0 0.0
        %3880 = vmatprep.subr.mxu0 0.0
        %3881 = vmatpush2.msra.mxu0 0.0
        %3882 = vmatprep.subr.mxu0 0.0
        %3883 = vmatpush2.msra.mxu0 0.0
        %3884 = vmatprep.subr.mxu0 0.0
        %3885 = vmatpush2.msra.mxu0 0.0
        %3886 = vmatprep.subr.mxu0 0.0
        %3887 = vmatpush2.msra.mxu0 0.0
        %3888 = vmatprep.subr.mxu0 0.0
        %3889 = vmatpush2.msra.mxu0 0.0
        %3890 = vmatprep.subr.mxu0 0.0
        %3891 = vmatpush2.msra.mxu0 0.0
        %3892 = vmatprep.mubr.f32.mxu0 0.0
        %v3893 = vand.u32 %v2025, 4294901760
        %3894 = vmatmul.mubr.f32.gmra.mxu0 %v3893
        %v3895 = vpop.f32.mrf.mxu0
        %v3896 = vadd.f32 %v3653, %v3895
        %v3897 = vpop.f32.mrf.mxu0
        %v3898 = vadd.f32 %v3655, %v3897
        %3899 = vmatprep.mubr.f32.mxu0 0.0
        %v3900 = vand.u32 %v2032, 4294901760
        %3901 = vmatmul.mubr.f32.gmra.mxu0 %v3900
        %v3902 = vpop.f32.mrf.mxu0
        %v3903 = vadd.f32 %v3664, %v3902
        %v3904 = vpop.f32.mrf.mxu0
        %v3905 = vadd.f32 %v3666, %v3904
        %3906 = vdwg.mxu0
        %v3907 = vand.u32 %v517, 4294901760
        %v3908 = vsub.f32 %v517, %v3907
        %3909 = vmatprep.subr.mxu0 %v3908
        %v3910 = vand.u32 %v516, 4294901760
        %v3911 = vsub.f32 %v516, %v3910
        %3912 = vmatpush1.msra.mxu0 %v3911
        %v3913 = vand.u32 %v515, 4294901760
        %v3914 = vsub.f32 %v515, %v3913
        %3915 = vmatprep.subr.mxu0 %v3914
        %v3916 = vand.u32 %v514, 4294901760
        %v3917 = vsub.f32 %v514, %v3916
        %3918 = vmatpush1.msra.mxu0 %v3917
        %v3919 = vand.u32 %v513, 4294901760
        %v3920 = vsub.f32 %v513, %v3919
        %3921 = vmatprep.subr.mxu0 %v3920
        %v3922 = vand.u32 %v512, 4294901760
        %v3923 = vsub.f32 %v512, %v3922
        %3924 = vmatpush1.msra.mxu0 %v3923
        %v3925 = vand.u32 %v511, 4294901760
        %v3926 = vsub.f32 %v511, %v3925
        %3927 = vmatprep.subr.mxu0 %v3926
        %v3928 = vand.u32 %v510, 4294901760
        %v3929 = vsub.f32 %v510, %v3928
        %3930 = vmatpush1.msra.mxu0 %v3929
        %v3931 = vand.u32 %v509, 4294901760
        %v3932 = vsub.f32 %v509, %v3931
        %3933 = vmatprep.subr.mxu0 %v3932
        %v3934 = vand.u32 %v508, 4294901760
        %v3935 = vsub.f32 %v508, %v3934
        %3936 = vmatpush1.msra.mxu0 %v3935
        %v3937 = vand.u32 %v507, 4294901760
        %v3938 = vsub.f32 %v507, %v3937
        %3939 = vmatprep.subr.mxu0 %v3938
        %v3940 = vand.u32 %v506, 4294901760
        %v3941 = vsub.f32 %v506, %v3940
        %3942 = vmatpush1.msra.mxu0 %v3941
        %v3943 = vand.u32 %v505, 4294901760
        %v3944 = vsub.f32 %v505, %v3943
        %3945 = vmatprep.subr.mxu0 %v3944
        %v3946 = vand.u32 %v504, 4294901760
        %v3947 = vsub.f32 %v504, %v3946
        %3948 = vmatpush1.msra.mxu0 %v3947
        %v3949 = vand.u32 %v503, 4294901760
        %v3950 = vsub.f32 %v503, %v3949
        %3951 = vmatprep.subr.mxu0 %v3950
        %v3952 = vand.u32 %v502, 4294901760
        %v3953 = vsub.f32 %v502, %v3952
        %3954 = vmatpush1.msra.mxu0 %v3953
        %v3955 = vand.u32 %v501, 4294901760
        %v3956 = vsub.f32 %v501, %v3955
        %3957 = vmatprep.subr.mxu0 %v3956
        %v3958 = vand.u32 %v500, 4294901760
        %v3959 = vsub.f32 %v500, %v3958
        %3960 = vmatpush1.msra.mxu0 %v3959
        %v3961 = vand.u32 %v499, 4294901760
        %v3962 = vsub.f32 %v499, %v3961
        %3963 = vmatprep.subr.mxu0 %v3962
        %v3964 = vand.u32 %v498, 4294901760
        %v3965 = vsub.f32 %v498, %v3964
        %3966 = vmatpush1.msra.mxu0 %v3965
        %v3967 = vand.u32 %v497, 4294901760
        %v3968 = vsub.f32 %v497, %v3967
        %3969 = vmatprep.subr.mxu0 %v3968
        %v3970 = vand.u32 %v496, 4294901760
        %v3971 = vsub.f32 %v496, %v3970
        %3972 = vmatpush1.msra.mxu0 %v3971
        %v3973 = vand.u32 %v495, 4294901760
        %v3974 = vsub.f32 %v495, %v3973
        %3975 = vmatprep.subr.mxu0 %v3974
        %v3976 = vand.u32 %v494, 4294901760
        %v3977 = vsub.f32 %v494, %v3976
        %3978 = vmatpush1.msra.mxu0 %v3977
        %v3979 = vand.u32 %v493, 4294901760
        %v3980 = vsub.f32 %v493, %v3979
        %3981 = vmatprep.subr.mxu0 %v3980
        %v3982 = vand.u32 %v492, 4294901760
        %v3983 = vsub.f32 %v492, %v3982
        %3984 = vmatpush1.msra.mxu0 %v3983
        %v3985 = vand.u32 %v491, 4294901760
        %v3986 = vsub.f32 %v491, %v3985
        %3987 = vmatprep.subr.mxu0 %v3986
        %v3988 = vand.u32 %v490, 4294901760
        %v3989 = vsub.f32 %v490, %v3988
        %3990 = vmatpush1.msra.mxu0 %v3989
        %v3991 = vand.u32 %v489, 4294901760
        %v3992 = vsub.f32 %v489, %v3991
        %3993 = vmatprep.subr.mxu0 %v3992
        %v3994 = vand.u32 %v488, 4294901760
        %v3995 = vsub.f32 %v488, %v3994
        %3996 = vmatpush1.msra.mxu0 %v3995
        %v3997 = vand.u32 %v487, 4294901760
        %v3998 = vsub.f32 %v487, %v3997
        %3999 = vmatprep.subr.mxu0 %v3998
        %v4000 = vand.u32 %v486, 4294901760
        %v4001 = vsub.f32 %v486, %v4000
        %4002 = vmatpush1.msra.mxu0 %v4001
        %4003 = vmatprep.subr.mxu0 0.0
        %4004 = vmatpush2.msra.mxu0 0.0
        %4005 = vmatprep.subr.mxu0 0.0
        %4006 = vmatpush2.msra.mxu0 0.0
        %4007 = vmatprep.subr.mxu0 0.0
        %4008 = vmatpush2.msra.mxu0 0.0
        %4009 = vmatprep.subr.mxu0 0.0
        %4010 = vmatpush2.msra.mxu0 0.0
        %4011 = vmatprep.subr.mxu0 0.0
        %4012 = vmatpush2.msra.mxu0 0.0
        %4013 = vmatprep.subr.mxu0 0.0
        %4014 = vmatpush2.msra.mxu0 0.0
        %4015 = vmatprep.subr.mxu0 0.0
        %4016 = vmatpush2.msra.mxu0 0.0
        %4017 = vmatprep.subr.mxu0 0.0
        %4018 = vmatpush2.msra.mxu0 0.0
        %4019 = vmatprep.subr.mxu0 0.0
        %4020 = vmatpush2.msra.mxu0 0.0
        %4021 = vmatprep.subr.mxu0 0.0
        %4022 = vmatpush2.msra.mxu0 0.0
        %4023 = vmatprep.subr.mxu0 0.0
        %4024 = vmatpush2.msra.mxu0 0.0
        %4025 = vmatprep.subr.mxu0 0.0
        %4026 = vmatpush2.msra.mxu0 0.0
        %4027 = vmatprep.subr.mxu0 0.0
        %4028 = vmatpush2.msra.mxu0 0.0
        %4029 = vmatprep.subr.mxu0 0.0
        %4030 = vmatpush2.msra.mxu0 0.0
        %4031 = vmatprep.subr.mxu0 0.0
        %4032 = vmatpush2.msra.mxu0 0.0
        %4033 = vmatprep.subr.mxu0 0.0
        %4034 = vmatpush2.msra.mxu0 0.0
        %4035 = vmatprep.mubr.f32.mxu0 0.0
        %v4036 = vand.u32 %v2025, 4294901760
        %v4037 = vsub.f32 %v2025, %v4036
        %4038 = vmatmul.mubr.f32.gmra.mxu0 %v4037
        %v4039 = vpop.f32.mrf.mxu0
        %v4040 = vadd.f32 %v3896, %v4039
        %v4041 = vpop.f32.mrf.mxu0
        %v4042 = vadd.f32 %v3898, %v4041
        %4043 = vmatprep.mubr.f32.mxu0 0.0
        %v4044 = vand.u32 %v2032, 4294901760
        %v4045 = vsub.f32 %v2032, %v4044
        %4046 = vmatmul.mubr.f32.gmra.mxu0 %v4045
        %v4047 = vpop.f32.mrf.mxu0
        %v4048 = vadd.f32 %v3903, %v4047
        %v4049 = vpop.f32.mrf.mxu0
        %v4050 = vadd.f32 %v3905, %v4049
        %4051 = vdwg.mxu0
        %v4052 = vand.u32 %v517, 4294901760
        %4053 = vmatprep.subr.mxu0 %v4052
        %v4054 = vand.u32 %v516, 4294901760
        %4055 = vmatpush1.msra.mxu0 %v4054
        %v4056 = vand.u32 %v515, 4294901760
        %4057 = vmatprep.subr.mxu0 %v4056
        %v4058 = vand.u32 %v514, 4294901760
        %4059 = vmatpush1.msra.mxu0 %v4058
        %v4060 = vand.u32 %v513, 4294901760
        %4061 = vmatprep.subr.mxu0 %v4060
        %v4062 = vand.u32 %v512, 4294901760
        %4063 = vmatpush1.msra.mxu0 %v4062
        %v4064 = vand.u32 %v511, 4294901760
        %4065 = vmatprep.subr.mxu0 %v4064
        %v4066 = vand.u32 %v510, 4294901760
        %4067 = vmatpush1.msra.mxu0 %v4066
        %v4068 = vand.u32 %v509, 4294901760
        %4069 = vmatprep.subr.mxu0 %v4068
        %v4070 = vand.u32 %v508, 4294901760
        %4071 = vmatpush1.msra.mxu0 %v4070
        %v4072 = vand.u32 %v507, 4294901760
        %4073 = vmatprep.subr.mxu0 %v4072
        %v4074 = vand.u32 %v506, 4294901760
        %4075 = vmatpush1.msra.mxu0 %v4074
        %v4076 = vand.u32 %v505, 4294901760
        %4077 = vmatprep.subr.mxu0 %v4076
        %v4078 = vand.u32 %v504, 4294901760
        %4079 = vmatpush1.msra.mxu0 %v4078
        %v4080 = vand.u32 %v503, 4294901760
        %4081 = vmatprep.subr.mxu0 %v4080
        %v4082 = vand.u32 %v502, 4294901760
        %4083 = vmatpush1.msra.mxu0 %v4082
        %v4084 = vand.u32 %v501, 4294901760
        %4085 = vmatprep.subr.mxu0 %v4084
        %v4086 = vand.u32 %v500, 4294901760
        %4087 = vmatpush1.msra.mxu0 %v4086
        %v4088 = vand.u32 %v499, 4294901760
        %4089 = vmatprep.subr.mxu0 %v4088
        %v4090 = vand.u32 %v498, 4294901760
        %4091 = vmatpush1.msra.mxu0 %v4090
        %v4092 = vand.u32 %v497, 4294901760
        %4093 = vmatprep.subr.mxu0 %v4092
        %v4094 = vand.u32 %v496, 4294901760
        %4095 = vmatpush1.msra.mxu0 %v4094
        %v4096 = vand.u32 %v495, 4294901760
        %4097 = vmatprep.subr.mxu0 %v4096
        %v4098 = vand.u32 %v494, 4294901760
        %4099 = vmatpush1.msra.mxu0 %v4098
        %v4100 = vand.u32 %v493, 4294901760
        %4101 = vmatprep.subr.mxu0 %v4100
        %v4102 = vand.u32 %v492, 4294901760
        %4103 = vmatpush1.msra.mxu0 %v4102
        %v4104 = vand.u32 %v491, 4294901760
        %4105 = vmatprep.subr.mxu0 %v4104
        %v4106 = vand.u32 %v490, 4294901760
        %4107 = vmatpush1.msra.mxu0 %v4106
        %v4108 = vand.u32 %v489, 4294901760
        %4109 = vmatprep.subr.mxu0 %v4108
        %v4110 = vand.u32 %v488, 4294901760
        %4111 = vmatpush1.msra.mxu0 %v4110
        %v4112 = vand.u32 %v487, 4294901760
        %4113 = vmatprep.subr.mxu0 %v4112
        %v4114 = vand.u32 %v486, 4294901760
        %4115 = vmatpush1.msra.mxu0 %v4114
        %4116 = vmatprep.subr.mxu0 0.0
        %4117 = vmatpush2.msra.mxu0 0.0
        %4118 = vmatprep.subr.mxu0 0.0
        %4119 = vmatpush2.msra.mxu0 0.0
        %4120 = vmatprep.subr.mxu0 0.0
        %4121 = vmatpush2.msra.mxu0 0.0
        %4122 = vmatprep.subr.mxu0 0.0
        %4123 = vmatpush2.msra.mxu0 0.0
        %4124 = vmatprep.subr.mxu0 0.0
        %4125 = vmatpush2.msra.mxu0 0.0
        %4126 = vmatprep.subr.mxu0 0.0
        %4127 = vmatpush2.msra.mxu0 0.0
        %4128 = vmatprep.subr.mxu0 0.0
        %4129 = vmatpush2.msra.mxu0 0.0
        %4130 = vmatprep.subr.mxu0 0.0
        %4131 = vmatpush2.msra.mxu0 0.0
        %4132 = vmatprep.subr.mxu0 0.0
        %4133 = vmatpush2.msra.mxu0 0.0
        %4134 = vmatprep.subr.mxu0 0.0
        %4135 = vmatpush2.msra.mxu0 0.0
        %4136 = vmatprep.subr.mxu0 0.0
        %4137 = vmatpush2.msra.mxu0 0.0
        %4138 = vmatprep.subr.mxu0 0.0
        %4139 = vmatpush2.msra.mxu0 0.0
        %4140 = vmatprep.subr.mxu0 0.0
        %4141 = vmatpush2.msra.mxu0 0.0
        %4142 = vmatprep.subr.mxu0 0.0
        %4143 = vmatpush2.msra.mxu0 0.0
        %4144 = vmatprep.subr.mxu0 0.0
        %4145 = vmatpush2.msra.mxu0 0.0
        %4146 = vmatprep.subr.mxu0 0.0
        %4147 = vmatpush2.msra.mxu0 0.0
        %4148 = vmatprep.mubr.f32.mxu0 0.0
        %v4149 = vand.u32 %v2025, 4294901760
        %v4150 = vsub.f32 %v2025, %v4149
        %v4151 = vand.u32 %v4150, 4294901760
        %4152 = vmatmul.mubr.f32.gmra.mxu0 %v4151
        %v4153 = vpop.f32.mrf.mxu0
        %v4154 = vadd.f32 %v4040, %v4153
        %v4155 = vpop.f32.mrf.mxu0
        %v4156 = vadd.f32 %v4042, %v4155
        %4157 = vmatprep.mubr.f32.mxu0 0.0
        %v4158 = vand.u32 %v2032, 4294901760
        %v4159 = vsub.f32 %v2032, %v4158
        %v4160 = vand.u32 %v4159, 4294901760
        %4161 = vmatmul.mubr.f32.gmra.mxu0 %v4160
        %v4162 = vpop.f32.mrf.mxu0
        %v4163 = vadd.f32 %v4048, %v4162
        %v4164 = vpop.f32.mrf.mxu0
        %v4165 = vadd.f32 %v4050, %v4164
        %4166 = vdwg.mxu0
        %v4167 = vand.u32 %v517, 4294901760
        %v4168 = vsub.f32 %v517, %v4167
        %v4169 = vand.u32 %v4168, 4294901760
        %4170 = vmatprep.subr.mxu0 %v4169
        %v4171 = vand.u32 %v516, 4294901760
        %v4172 = vsub.f32 %v516, %v4171
        %v4173 = vand.u32 %v4172, 4294901760
        %4174 = vmatpush1.msra.mxu0 %v4173
        %v4175 = vand.u32 %v515, 4294901760
        %v4176 = vsub.f32 %v515, %v4175
        %v4177 = vand.u32 %v4176, 4294901760
        %4178 = vmatprep.subr.mxu0 %v4177
        %v4179 = vand.u32 %v514, 4294901760
        %v4180 = vsub.f32 %v514, %v4179
        %v4181 = vand.u32 %v4180, 4294901760
        %4182 = vmatpush1.msra.mxu0 %v4181
        %v4183 = vand.u32 %v513, 4294901760
        %v4184 = vsub.f32 %v513, %v4183
        %v4185 = vand.u32 %v4184, 4294901760
        %4186 = vmatprep.subr.mxu0 %v4185
        %v4187 = vand.u32 %v512, 4294901760
        %v4188 = vsub.f32 %v512, %v4187
        %v4189 = vand.u32 %v4188, 4294901760
        %4190 = vmatpush1.msra.mxu0 %v4189
        %v4191 = vand.u32 %v511, 4294901760
        %v4192 = vsub.f32 %v511, %v4191
        %v4193 = vand.u32 %v4192, 4294901760
        %4194 = vmatprep.subr.mxu0 %v4193
        %v4195 = vand.u32 %v510, 4294901760
        %v4196 = vsub.f32 %v510, %v4195
        %v4197 = vand.u32 %v4196, 4294901760
        %4198 = vmatpush1.msra.mxu0 %v4197
        %v4199 = vand.u32 %v509, 4294901760
        %v4200 = vsub.f32 %v509, %v4199
        %v4201 = vand.u32 %v4200, 4294901760
        %4202 = vmatprep.subr.mxu0 %v4201
        %v4203 = vand.u32 %v508, 4294901760
        %v4204 = vsub.f32 %v508, %v4203
        %v4205 = vand.u32 %v4204, 4294901760
        %4206 = vmatpush1.msra.mxu0 %v4205
        %v4207 = vand.u32 %v507, 4294901760
        %v4208 = vsub.f32 %v507, %v4207
        %v4209 = vand.u32 %v4208, 4294901760
        %4210 = vmatprep.subr.mxu0 %v4209
        %v4211 = vand.u32 %v506, 4294901760
        %v4212 = vsub.f32 %v506, %v4211
        %v4213 = vand.u32 %v4212, 4294901760
        %4214 = vmatpush1.msra.mxu0 %v4213
        %v4215 = vand.u32 %v505, 4294901760
        %v4216 = vsub.f32 %v505, %v4215
        %v4217 = vand.u32 %v4216, 4294901760
        %4218 = vmatprep.subr.mxu0 %v4217
        %v4219 = vand.u32 %v504, 4294901760
        %v4220 = vsub.f32 %v504, %v4219
        %v4221 = vand.u32 %v4220, 4294901760
        %4222 = vmatpush1.msra.mxu0 %v4221
        %v4223 = vand.u32 %v503, 4294901760
        %v4224 = vsub.f32 %v503, %v4223
        %v4225 = vand.u32 %v4224, 4294901760
        %4226 = vmatprep.subr.mxu0 %v4225
        %v4227 = vand.u32 %v502, 4294901760
        %v4228 = vsub.f32 %v502, %v4227
        %v4229 = vand.u32 %v4228, 4294901760
        %4230 = vmatpush1.msra.mxu0 %v4229
        %v4231 = vand.u32 %v501, 4294901760
        %v4232 = vsub.f32 %v501, %v4231
        %v4233 = vand.u32 %v4232, 4294901760
        %4234 = vmatprep.subr.mxu0 %v4233
        %v4235 = vand.u32 %v500, 4294901760
        %v4236 = vsub.f32 %v500, %v4235
        %v4237 = vand.u32 %v4236, 4294901760
        %4238 = vmatpush1.msra.mxu0 %v4237
        %v4239 = vand.u32 %v499, 4294901760
        %v4240 = vsub.f32 %v499, %v4239
        %v4241 = vand.u32 %v4240, 4294901760
        %4242 = vmatprep.subr.mxu0 %v4241
        %v4243 = vand.u32 %v498, 4294901760
        %v4244 = vsub.f32 %v498, %v4243
        %v4245 = vand.u32 %v4244, 4294901760
        %4246 = vmatpush1.msra.mxu0 %v4245
        %v4247 = vand.u32 %v497, 4294901760
        %v4248 = vsub.f32 %v497, %v4247
        %v4249 = vand.u32 %v4248, 4294901760
        %4250 = vmatprep.subr.mxu0 %v4249
        %v4251 = vand.u32 %v496, 4294901760
        %v4252 = vsub.f32 %v496, %v4251
        %v4253 = vand.u32 %v4252, 4294901760
        %4254 = vmatpush1.msra.mxu0 %v4253
        %v4255 = vand.u32 %v495, 4294901760
        %v4256 = vsub.f32 %v495, %v4255
        %v4257 = vand.u32 %v4256, 4294901760
        %4258 = vmatprep.subr.mxu0 %v4257
        %v4259 = vand.u32 %v494, 4294901760
        %v4260 = vsub.f32 %v494, %v4259
        %v4261 = vand.u32 %v4260, 4294901760
        %4262 = vmatpush1.msra.mxu0 %v4261
        %v4263 = vand.u32 %v493, 4294901760
        %v4264 = vsub.f32 %v493, %v4263
        %v4265 = vand.u32 %v4264, 4294901760
        %4266 = vmatprep.subr.mxu0 %v4265
        %v4267 = vand.u32 %v492, 4294901760
        %v4268 = vsub.f32 %v492, %v4267
        %v4269 = vand.u32 %v4268, 4294901760
        %4270 = vmatpush1.msra.mxu0 %v4269
        %v4271 = vand.u32 %v491, 4294901760
        %v4272 = vsub.f32 %v491, %v4271
        %v4273 = vand.u32 %v4272, 4294901760
        %4274 = vmatprep.subr.mxu0 %v4273
        %v4275 = vand.u32 %v490, 4294901760
        %v4276 = vsub.f32 %v490, %v4275
        %v4277 = vand.u32 %v4276, 4294901760
        %4278 = vmatpush1.msra.mxu0 %v4277
        %v4279 = vand.u32 %v489, 4294901760
        %v4280 = vsub.f32 %v489, %v4279
        %v4281 = vand.u32 %v4280, 4294901760
        %4282 = vmatprep.subr.mxu0 %v4281
        %v4283 = vand.u32 %v488, 4294901760
        %v4284 = vsub.f32 %v488, %v4283
        %v4285 = vand.u32 %v4284, 4294901760
        %4286 = vmatpush1.msra.mxu0 %v4285
        %v4287 = vand.u32 %v487, 4294901760
        %v4288 = vsub.f32 %v487, %v4287
        %v4289 = vand.u32 %v4288, 4294901760
        %4290 = vmatprep.subr.mxu0 %v4289
        %v4291 = vand.u32 %v486, 4294901760
        %v4292 = vsub.f32 %v486, %v4291
        %v4293 = vand.u32 %v4292, 4294901760
        %4294 = vmatpush1.msra.mxu0 %v4293
        %4295 = vmatprep.subr.mxu0 0.0
        %4296 = vmatpush2.msra.mxu0 0.0
        %4297 = vmatprep.subr.mxu0 0.0
        %4298 = vmatpush2.msra.mxu0 0.0
        %4299 = vmatprep.subr.mxu0 0.0
        %4300 = vmatpush2.msra.mxu0 0.0
        %4301 = vmatprep.subr.mxu0 0.0
        %4302 = vmatpush2.msra.mxu0 0.0
        %4303 = vmatprep.subr.mxu0 0.0
        %4304 = vmatpush2.msra.mxu0 0.0
        %4305 = vmatprep.subr.mxu0 0.0
        %4306 = vmatpush2.msra.mxu0 0.0
        %4307 = vmatprep.subr.mxu0 0.0
        %4308 = vmatpush2.msra.mxu0 0.0
        %4309 = vmatprep.subr.mxu0 0.0
        %4310 = vmatpush2.msra.mxu0 0.0
        %4311 = vmatprep.subr.mxu0 0.0
        %4312 = vmatpush2.msra.mxu0 0.0
        %4313 = vmatprep.subr.mxu0 0.0
        %4314 = vmatpush2.msra.mxu0 0.0
        %4315 = vmatprep.subr.mxu0 0.0
        %4316 = vmatpush2.msra.mxu0 0.0
        %4317 = vmatprep.subr.mxu0 0.0
        %4318 = vmatpush2.msra.mxu0 0.0
        %4319 = vmatprep.subr.mxu0 0.0
        %4320 = vmatpush2.msra.mxu0 0.0
        %4321 = vmatprep.subr.mxu0 0.0
        %4322 = vmatpush2.msra.mxu0 0.0
        %4323 = vmatprep.subr.mxu0 0.0
        %4324 = vmatpush2.msra.mxu0 0.0
        %4325 = vmatprep.subr.mxu0 0.0
        %4326 = vmatpush2.msra.mxu0 0.0
        %4327 = vmatprep.mubr.f32.mxu0 0.0
        %v4328 = vand.u32 %v2025, 4294901760
        %4329 = vmatmul.mubr.f32.gmra.mxu0 %v4328
        %v4330 = vpop.f32.mrf.mxu0
        %v4331 = vadd.f32 %v4154, %v4330
        %v4332 = vpop.f32.mrf.mxu0
        %v4333 = vadd.f32 %v4156, %v4332
        %4334 = vmatprep.mubr.f32.mxu0 0.0
        %v4335 = vand.u32 %v2032, 4294901760
        %4336 = vmatmul.mubr.f32.gmra.mxu0 %v4335
        %v4337 = vpop.f32.mrf.mxu0
        %v4338 = vadd.f32 %v4163, %v4337
        %v4339 = vpop.f32.mrf.mxu0
        %v4340 = vadd.f32 %v4165, %v4339
        %4341 = vdwg.mxu0
        %v4342 = vand.u32 %v517, 4294901760
        %4343 = vmatprep.subr.mxu0 %v4342
        %v4344 = vand.u32 %v516, 4294901760
        %4345 = vmatpush1.msra.mxu0 %v4344
        %v4346 = vand.u32 %v515, 4294901760
        %4347 = vmatprep.subr.mxu0 %v4346
        %v4348 = vand.u32 %v514, 4294901760
        %4349 = vmatpush1.msra.mxu0 %v4348
        %v4350 = vand.u32 %v513, 4294901760
        %4351 = vmatprep.subr.mxu0 %v4350
        %v4352 = vand.u32 %v512, 4294901760
        %4353 = vmatpush1.msra.mxu0 %v4352
        %v4354 = vand.u32 %v511, 4294901760
        %4355 = vmatprep.subr.mxu0 %v4354
        %v4356 = vand.u32 %v510, 4294901760
        %4357 = vmatpush1.msra.mxu0 %v4356
        %v4358 = vand.u32 %v509, 4294901760
        %4359 = vmatprep.subr.mxu0 %v4358
        %v4360 = vand.u32 %v508, 4294901760
        %4361 = vmatpush1.msra.mxu0 %v4360
        %v4362 = vand.u32 %v507, 4294901760
        %4363 = vmatprep.subr.mxu0 %v4362
        %v4364 = vand.u32 %v506, 4294901760
        %4365 = vmatpush1.msra.mxu0 %v4364
        %v4366 = vand.u32 %v505, 4294901760
        %4367 = vmatprep.subr.mxu0 %v4366
        %v4368 = vand.u32 %v504, 4294901760
        %4369 = vmatpush1.msra.mxu0 %v4368
        %v4370 = vand.u32 %v503, 4294901760
        %4371 = vmatprep.subr.mxu0 %v4370
        %v4372 = vand.u32 %v502, 4294901760
        %4373 = vmatpush1.msra.mxu0 %v4372
        %v4374 = vand.u32 %v501, 4294901760
        %4375 = vmatprep.subr.mxu0 %v4374
        %v4376 = vand.u32 %v500, 4294901760
        %4377 = vmatpush1.msra.mxu0 %v4376
        %v4378 = vand.u32 %v499, 4294901760
        %4379 = vmatprep.subr.mxu0 %v4378
        %v4380 = vand.u32 %v498, 4294901760
        %4381 = vmatpush1.msra.mxu0 %v4380
        %v4382 = vand.u32 %v497, 4294901760
        %4383 = vmatprep.subr.mxu0 %v4382
        %v4384 = vand.u32 %v496, 4294901760
        %4385 = vmatpush1.msra.mxu0 %v4384
        %v4386 = vand.u32 %v495, 4294901760
        %4387 = vmatprep.subr.mxu0 %v4386
        %v4388 = vand.u32 %v494, 4294901760
        %4389 = vmatpush1.msra.mxu0 %v4388
        %v4390 = vand.u32 %v493, 4294901760
        %4391 = vmatprep.subr.mxu0 %v4390
        %v4392 = vand.u32 %v492, 4294901760
        %4393 = vmatpush1.msra.mxu0 %v4392
        %v4394 = vand.u32 %v491, 4294901760
        %4395 = vmatprep.subr.mxu0 %v4394
        %v4396 = vand.u32 %v490, 4294901760
        %4397 = vmatpush1.msra.mxu0 %v4396
        %v4398 = vand.u32 %v489, 4294901760
        %4399 = vmatprep.subr.mxu0 %v4398
        %v4400 = vand.u32 %v488, 4294901760
        %4401 = vmatpush1.msra.mxu0 %v4400
        %v4402 = vand.u32 %v487, 4294901760
        %4403 = vmatprep.subr.mxu0 %v4402
        %v4404 = vand.u32 %v486, 4294901760
        %4405 = vmatpush1.msra.mxu0 %v4404
        %4406 = vmatprep.subr.mxu0 0.0
        %4407 = vmatpush2.msra.mxu0 0.0
        %4408 = vmatprep.subr.mxu0 0.0
        %4409 = vmatpush2.msra.mxu0 0.0
        %4410 = vmatprep.subr.mxu0 0.0
        %4411 = vmatpush2.msra.mxu0 0.0
        %4412 = vmatprep.subr.mxu0 0.0
        %4413 = vmatpush2.msra.mxu0 0.0
        %4414 = vmatprep.subr.mxu0 0.0
        %4415 = vmatpush2.msra.mxu0 0.0
        %4416 = vmatprep.subr.mxu0 0.0
        %4417 = vmatpush2.msra.mxu0 0.0
        %4418 = vmatprep.subr.mxu0 0.0
        %4419 = vmatpush2.msra.mxu0 0.0
        %4420 = vmatprep.subr.mxu0 0.0
        %4421 = vmatpush2.msra.mxu0 0.0
        %4422 = vmatprep.subr.mxu0 0.0
        %4423 = vmatpush2.msra.mxu0 0.0
        %4424 = vmatprep.subr.mxu0 0.0
        %4425 = vmatpush2.msra.mxu0 0.0
        %4426 = vmatprep.subr.mxu0 0.0
        %4427 = vmatpush2.msra.mxu0 0.0
        %4428 = vmatprep.subr.mxu0 0.0
        %4429 = vmatpush2.msra.mxu0 0.0
        %4430 = vmatprep.subr.mxu0 0.0
        %4431 = vmatpush2.msra.mxu0 0.0
        %4432 = vmatprep.subr.mxu0 0.0
        %4433 = vmatpush2.msra.mxu0 0.0
        %4434 = vmatprep.subr.mxu0 0.0
        %4435 = vmatpush2.msra.mxu0 0.0
        %4436 = vmatprep.subr.mxu0 0.0
        %4437 = vmatpush2.msra.mxu0 0.0
        %4438 = vmatprep.mubr.f32.mxu0 0.0
        %v4439 = vand.u32 %v2025, 4294901760
        %4440 = vmatmul.mubr.f32.gmra.mxu0 %v4439
        %v4441 = vpop.f32.mrf.mxu0
        %v4442 = vadd.f32 %v4331, %v4441
        %v4443 = vpop.f32.mrf.mxu0
        %v4444 = vadd.f32 %v4333, %v4443
        %4445 = vmatprep.mubr.f32.mxu0 0.0
        %v4446 = vand.u32 %v2032, 4294901760
        %4447 = vmatmul.mubr.f32.gmra.mxu0 %v4446
        %v4448 = vpop.f32.mrf.mxu0
        %v4449 = vadd.f32 %v4338, %v4448
        %v4450 = vpop.f32.mrf.mxu0
        %v4451 = vadd.f32 %v4340, %v4450
        %4452 = vdwg.mxu0
        %vm4453 = vcmask 130048
        %v4455 = vsel %vm4453, %v482, 0
        %v4458 = vsel %vm4453, %v483, 0
        %v4461 = vsel %vm4453, %v484, 0
        %v4464 = vsel %vm4453, %v485, 0
        %4466 = vmatprep.subr.mxu0 0.0
        %4467 = vmatpush1.msra.mxu0 0.0
        %4468 = vmatprep.subr.mxu0 0.0
        %4469 = vmatpush1.msra.mxu0 0.0
        %4470 = vmatprep.subr.mxu0 0.0
        %4471 = vmatpush1.msra.mxu0 0.0
        %4472 = vmatprep.subr.mxu0 0.0
        %4473 = vmatpush1.msra.mxu0 0.0
        %4474 = vmatprep.subr.mxu0 0.0
        %4475 = vmatpush1.msra.mxu0 0.0
        %4476 = vmatprep.subr.mxu0 0.0
        %4477 = vmatpush1.msra.mxu0 0.0
        %4478 = vmatprep.subr.mxu0 0.0
        %4479 = vmatpush1.msra.mxu0 0.0
        %4480 = vmatprep.subr.mxu0 0.0
        %4481 = vmatpush1.msra.mxu0 0.0
        %4482 = vmatprep.subr.mxu0 0.0
        %4483 = vmatpush1.msra.mxu0 0.0
        %4484 = vmatprep.subr.mxu0 0.0
        %4485 = vmatpush1.msra.mxu0 0.0
        %4486 = vmatprep.subr.mxu0 0.0
        %4487 = vmatpush1.msra.mxu0 0.0
        %4488 = vmatprep.subr.mxu0 0.0
        %4489 = vmatpush1.msra.mxu0 0.0
        %4490 = vmatprep.subr.mxu0 0.0
        %4491 = vmatpush1.msra.mxu0 0.0
        %4492 = vmatprep.subr.mxu0 0.0
        %4493 = vmatpush1.msra.mxu0 0.0
        %v4494 = vand.u32 %v4451, 4294901760
        %4495 = vmatprep.subr.mxu0 %v4494
        %v4496 = vand.u32 %v4449, 4294901760
        %4497 = vmatpush1.msra.mxu0 %v4496
        %v4498 = vand.u32 %v4444, 4294901760
        %4499 = vmatprep.subr.mxu0 %v4498
        %v4500 = vand.u32 %v4442, 4294901760
        %4501 = vmatpush1.msra.mxu0 %v4500
        %4502 = vmatprep.subr.mxu0 0.0
        %4503 = vmatpush2.msra.mxu0 0.0
        %4504 = vmatprep.subr.mxu0 0.0
        %4505 = vmatpush2.msra.mxu0 0.0
        %4506 = vmatprep.subr.mxu0 0.0
        %4507 = vmatpush2.msra.mxu0 0.0
        %4508 = vmatprep.subr.mxu0 0.0
        %4509 = vmatpush2.msra.mxu0 0.0
        %4510 = vmatprep.subr.mxu0 0.0
        %4511 = vmatpush2.msra.mxu0 0.0
        %4512 = vmatprep.subr.mxu0 0.0
        %4513 = vmatpush2.msra.mxu0 0.0
        %4514 = vmatprep.subr.mxu0 0.0
        %4515 = vmatpush2.msra.mxu0 0.0
        %4516 = vmatprep.subr.mxu0 0.0
        %4517 = vmatpush2.msra.mxu0 0.0
        %4518 = vmatprep.subr.mxu0 0.0
        %4519 = vmatpush2.msra.mxu0 0.0
        %4520 = vmatprep.subr.mxu0 0.0
        %4521 = vmatpush2.msra.mxu0 0.0
        %4522 = vmatprep.subr.mxu0 0.0
        %4523 = vmatpush2.msra.mxu0 0.0
        %4524 = vmatprep.subr.mxu0 0.0
        %4525 = vmatpush2.msra.mxu0 0.0
        %4526 = vmatprep.subr.mxu0 0.0
        %4527 = vmatpush2.msra.mxu0 0.0
        %4528 = vmatprep.subr.mxu0 0.0
        %4529 = vmatpush2.msra.mxu0 0.0
        %4530 = vmatprep.subr.mxu0 0.0
        %4531 = vmatpush2.msra.mxu0 0.0
        %4532 = vmatprep.subr.mxu0 0.0
        %4533 = vmatpush2.msra.mxu0 0.0
        %4534 = vmatprep.mubr.f32.mxu0 0.0
        %v4535 = vand.u32 %v4455, 4294901760
        %v4536 = vsub.f32 %v4455, %v4535
        %v4537 = vand.u32 %v4536, 4294901760
        %v4538 = vsub.f32 %v4536, %v4537
        %v4539 = vand.u32 %v4538, 4294901760
        %4540 = vmatmul.mubr.f32.gmra.mxu0 %v4539
        %v4541 = vpop.f32.mrf.mxu0
        %v4542 = vadd.f32 0.0, %v4541
        %v4543 = vpop.f32.mrf.mxu0
        %v4544 = vadd.f32 0.0, %v4543
        %4545 = vmatprep.mubr.f32.mxu0 0.0
        %v4546 = vand.u32 %v4458, 4294901760
        %v4547 = vsub.f32 %v4458, %v4546
        %v4548 = vand.u32 %v4547, 4294901760
        %v4549 = vsub.f32 %v4547, %v4548
        %v4550 = vand.u32 %v4549, 4294901760
        %4551 = vmatmul.mubr.f32.gmra.mxu0 %v4550
        %v4552 = vpop.f32.mrf.mxu0
        %v4553 = vadd.f32 0.0, %v4552
        %v4554 = vpop.f32.mrf.mxu0
        %v4555 = vadd.f32 0.0, %v4554
        %4556 = vmatprep.mubr.f32.mxu0 0.0
        %v4557 = vand.u32 %v4461, 4294901760
        %v4558 = vsub.f32 %v4461, %v4557
        %v4559 = vand.u32 %v4558, 4294901760
        %v4560 = vsub.f32 %v4558, %v4559
        %v4561 = vand.u32 %v4560, 4294901760
        %4562 = vmatmul.mubr.f32.gmra.mxu0 %v4561
        %v4563 = vpop.f32.mrf.mxu0
        %v4564 = vadd.f32 0.0, %v4563
        %v4565 = vpop.f32.mrf.mxu0
        %v4566 = vadd.f32 0.0, %v4565
        %4567 = vmatprep.mubr.f32.mxu0 0.0
        %v4568 = vand.u32 %v4464, 4294901760
        %v4569 = vsub.f32 %v4464, %v4568
        %v4570 = vand.u32 %v4569, 4294901760
        %v4571 = vsub.f32 %v4569, %v4570
        %v4572 = vand.u32 %v4571, 4294901760
        %4573 = vmatmul.mubr.f32.gmra.mxu0 %v4572
        %v4574 = vpop.f32.mrf.mxu0
        %v4575 = vadd.f32 0.0, %v4574
        %v4576 = vpop.f32.mrf.mxu0
        %v4577 = vadd.f32 0.0, %v4576
        %4578 = vdwg.mxu0
        %4579 = vmatprep.subr.mxu0 0.0
        %4580 = vmatpush1.msra.mxu0 0.0
        %4581 = vmatprep.subr.mxu0 0.0
        %4582 = vmatpush1.msra.mxu0 0.0
        %4583 = vmatprep.subr.mxu0 0.0
        %4584 = vmatpush1.msra.mxu0 0.0
        %4585 = vmatprep.subr.mxu0 0.0
        %4586 = vmatpush1.msra.mxu0 0.0
        %4587 = vmatprep.subr.mxu0 0.0
        %4588 = vmatpush1.msra.mxu0 0.0
        %4589 = vmatprep.subr.mxu0 0.0
        %4590 = vmatpush1.msra.mxu0 0.0
        %4591 = vmatprep.subr.mxu0 0.0
        %4592 = vmatpush1.msra.mxu0 0.0
        %4593 = vmatprep.subr.mxu0 0.0
        %4594 = vmatpush1.msra.mxu0 0.0
        %4595 = vmatprep.subr.mxu0 0.0
        %4596 = vmatpush1.msra.mxu0 0.0
        %4597 = vmatprep.subr.mxu0 0.0
        %4598 = vmatpush1.msra.mxu0 0.0
        %4599 = vmatprep.subr.mxu0 0.0
        %4600 = vmatpush1.msra.mxu0 0.0
        %4601 = vmatprep.subr.mxu0 0.0
        %4602 = vmatpush1.msra.mxu0 0.0
        %4603 = vmatprep.subr.mxu0 0.0
        %4604 = vmatpush1.msra.mxu0 0.0
        %4605 = vmatprep.subr.mxu0 0.0
        %4606 = vmatpush1.msra.mxu0 0.0
        %v4607 = vand.u32 %v4451, 4294901760
        %v4608 = vsub.f32 %v4451, %v4607
        %v4609 = vand.u32 %v4608, 4294901760
        %v4610 = vsub.f32 %v4608, %v4609
        %v4611 = vand.u32 %v4610, 4294901760
        %4612 = vmatprep.subr.mxu0 %v4611
        %v4613 = vand.u32 %v4449, 4294901760
        %v4614 = vsub.f32 %v4449, %v4613
        %v4615 = vand.u32 %v4614, 4294901760
        %v4616 = vsub.f32 %v4614, %v4615
        %v4617 = vand.u32 %v4616, 4294901760
        %4618 = vmatpush1.msra.mxu0 %v4617
        %v4619 = vand.u32 %v4444, 4294901760
        %v4620 = vsub.f32 %v4444, %v4619
        %v4621 = vand.u32 %v4620, 4294901760
        %v4622 = vsub.f32 %v4620, %v4621
        %v4623 = vand.u32 %v4622, 4294901760
        %4624 = vmatprep.subr.mxu0 %v4623
        %v4625 = vand.u32 %v4442, 4294901760
        %v4626 = vsub.f32 %v4442, %v4625
        %v4627 = vand.u32 %v4626, 4294901760
        %v4628 = vsub.f32 %v4626, %v4627
        %v4629 = vand.u32 %v4628, 4294901760
        %4630 = vmatpush1.msra.mxu0 %v4629
        %4631 = vmatprep.subr.mxu0 0.0
        %4632 = vmatpush2.msra.mxu0 0.0
        %4633 = vmatprep.subr.mxu0 0.0
        %4634 = vmatpush2.msra.mxu0 0.0
        %4635 = vmatprep.subr.mxu0 0.0
        %4636 = vmatpush2.msra.mxu0 0.0
        %4637 = vmatprep.subr.mxu0 0.0
        %4638 = vmatpush2.msra.mxu0 0.0
        %4639 = vmatprep.subr.mxu0 0.0
        %4640 = vmatpush2.msra.mxu0 0.0
        %4641 = vmatprep.subr.mxu0 0.0
        %4642 = vmatpush2.msra.mxu0 0.0
        %4643 = vmatprep.subr.mxu0 0.0
        %4644 = vmatpush2.msra.mxu0 0.0
        %4645 = vmatprep.subr.mxu0 0.0
        %4646 = vmatpush2.msra.mxu0 0.0
        %4647 = vmatprep.subr.mxu0 0.0
        %4648 = vmatpush2.msra.mxu0 0.0
        %4649 = vmatprep.subr.mxu0 0.0
        %4650 = vmatpush2.msra.mxu0 0.0
        %4651 = vmatprep.subr.mxu0 0.0
        %4652 = vmatpush2.msra.mxu0 0.0
        %4653 = vmatprep.subr.mxu0 0.0
        %4654 = vmatpush2.msra.mxu0 0.0
        %4655 = vmatprep.subr.mxu0 0.0
        %4656 = vmatpush2.msra.mxu0 0.0
        %4657 = vmatprep.subr.mxu0 0.0
        %4658 = vmatpush2.msra.mxu0 0.0
        %4659 = vmatprep.subr.mxu0 0.0
        %4660 = vmatpush2.msra.mxu0 0.0
        %4661 = vmatprep.subr.mxu0 0.0
        %4662 = vmatpush2.msra.mxu0 0.0
        %4663 = vmatprep.mubr.f32.mxu0 0.0
        %v4664 = vand.u32 %v4455, 4294901760
        %4665 = vmatmul.mubr.f32.gmra.mxu0 %v4664
        %v4666 = vpop.f32.mrf.mxu0
        %v4667 = vadd.f32 %v4542, %v4666
        %v4668 = vpop.f32.mrf.mxu0
        %v4669 = vadd.f32 %v4544, %v4668
        %4670 = vmatprep.mubr.f32.mxu0 0.0
        %v4671 = vand.u32 %v4458, 4294901760
        %4672 = vmatmul.mubr.f32.gmra.mxu0 %v4671
        %v4673 = vpop.f32.mrf.mxu0
        %v4674 = vadd.f32 %v4553, %v4673
        %v4675 = vpop.f32.mrf.mxu0
        %v4676 = vadd.f32 %v4555, %v4675
        %4677 = vmatprep.mubr.f32.mxu0 0.0
        %v4678 = vand.u32 %v4461, 4294901760
        %4679 = vmatmul.mubr.f32.gmra.mxu0 %v4678
        %v4680 = vpop.f32.mrf.mxu0
        %v4681 = vadd.f32 %v4564, %v4680
        %v4682 = vpop.f32.mrf.mxu0
        %v4683 = vadd.f32 %v4566, %v4682
        %4684 = vmatprep.mubr.f32.mxu0 0.0
        %v4685 = vand.u32 %v4464, 4294901760
        %4686 = vmatmul.mubr.f32.gmra.mxu0 %v4685
        %v4687 = vpop.f32.mrf.mxu0
        %v4688 = vadd.f32 %v4575, %v4687
        %v4689 = vpop.f32.mrf.mxu0
        %v4690 = vadd.f32 %v4577, %v4689
        %4691 = vdwg.mxu0
        %4692 = vmatprep.subr.mxu0 0.0
        %4693 = vmatpush1.msra.mxu0 0.0
        %4694 = vmatprep.subr.mxu0 0.0
        %4695 = vmatpush1.msra.mxu0 0.0
        %4696 = vmatprep.subr.mxu0 0.0
        %4697 = vmatpush1.msra.mxu0 0.0
        %4698 = vmatprep.subr.mxu0 0.0
        %4699 = vmatpush1.msra.mxu0 0.0
        %4700 = vmatprep.subr.mxu0 0.0
        %4701 = vmatpush1.msra.mxu0 0.0
        %4702 = vmatprep.subr.mxu0 0.0
        %4703 = vmatpush1.msra.mxu0 0.0
        %4704 = vmatprep.subr.mxu0 0.0
        %4705 = vmatpush1.msra.mxu0 0.0
        %4706 = vmatprep.subr.mxu0 0.0
        %4707 = vmatpush1.msra.mxu0 0.0
        %4708 = vmatprep.subr.mxu0 0.0
        %4709 = vmatpush1.msra.mxu0 0.0
        %4710 = vmatprep.subr.mxu0 0.0
        %4711 = vmatpush1.msra.mxu0 0.0
        %4712 = vmatprep.subr.mxu0 0.0
        %4713 = vmatpush1.msra.mxu0 0.0
        %4714 = vmatprep.subr.mxu0 0.0
        %4715 = vmatpush1.msra.mxu0 0.0
        %4716 = vmatprep.subr.mxu0 0.0
        %4717 = vmatpush1.msra.mxu0 0.0
        %4718 = vmatprep.subr.mxu0 0.0
        %4719 = vmatpush1.msra.mxu0 0.0
        %v4720 = vand.u32 %v4451, 4294901760
        %v4721 = vsub.f32 %v4451, %v4720
        %4722 = vmatprep.subr.mxu0 %v4721
        %v4723 = vand.u32 %v4449, 4294901760
        %v4724 = vsub.f32 %v4449, %v4723
        %4725 = vmatpush1.msra.mxu0 %v4724
        %v4726 = vand.u32 %v4444, 4294901760
        %v4727 = vsub.f32 %v4444, %v4726
        %4728 = vmatprep.subr.mxu0 %v4727
        %v4729 = vand.u32 %v4442, 4294901760
        %v4730 = vsub.f32 %v4442, %v4729
        %4731 = vmatpush1.msra.mxu0 %v4730
        %4732 = vmatprep.subr.mxu0 0.0
        %4733 = vmatpush2.msra.mxu0 0.0
        %4734 = vmatprep.subr.mxu0 0.0
        %4735 = vmatpush2.msra.mxu0 0.0
        %4736 = vmatprep.subr.mxu0 0.0
        %4737 = vmatpush2.msra.mxu0 0.0
        %4738 = vmatprep.subr.mxu0 0.0
        %4739 = vmatpush2.msra.mxu0 0.0
        %4740 = vmatprep.subr.mxu0 0.0
        %4741 = vmatpush2.msra.mxu0 0.0
        %4742 = vmatprep.subr.mxu0 0.0
        %4743 = vmatpush2.msra.mxu0 0.0
        %4744 = vmatprep.subr.mxu0 0.0
        %4745 = vmatpush2.msra.mxu0 0.0
        %4746 = vmatprep.subr.mxu0 0.0
        %4747 = vmatpush2.msra.mxu0 0.0
        %4748 = vmatprep.subr.mxu0 0.0
        %4749 = vmatpush2.msra.mxu0 0.0
        %4750 = vmatprep.subr.mxu0 0.0
        %4751 = vmatpush2.msra.mxu0 0.0
        %4752 = vmatprep.subr.mxu0 0.0
        %4753 = vmatpush2.msra.mxu0 0.0
        %4754 = vmatprep.subr.mxu0 0.0
        %4755 = vmatpush2.msra.mxu0 0.0
        %4756 = vmatprep.subr.mxu0 0.0
        %4757 = vmatpush2.msra.mxu0 0.0
        %4758 = vmatprep.subr.mxu0 0.0
        %4759 = vmatpush2.msra.mxu0 0.0
        %4760 = vmatprep.subr.mxu0 0.0
        %4761 = vmatpush2.msra.mxu0 0.0
        %4762 = vmatprep.subr.mxu0 0.0
        %4763 = vmatpush2.msra.mxu0 0.0
        %4764 = vmatprep.mubr.f32.mxu0 0.0
        %v4765 = vand.u32 %v4455, 4294901760
        %v4766 = vsub.f32 %v4455, %v4765
        %4767 = vmatmul.mubr.f32.gmra.mxu0 %v4766
        %v4768 = vpop.f32.mrf.mxu0
        %v4769 = vadd.f32 %v4667, %v4768
        %v4770 = vpop.f32.mrf.mxu0
        %v4771 = vadd.f32 %v4669, %v4770
        %4772 = vmatprep.mubr.f32.mxu0 0.0
        %v4773 = vand.u32 %v4458, 4294901760
        %v4774 = vsub.f32 %v4458, %v4773
        %4775 = vmatmul.mubr.f32.gmra.mxu0 %v4774
        %v4776 = vpop.f32.mrf.mxu0
        %v4777 = vadd.f32 %v4674, %v4776
        %v4778 = vpop.f32.mrf.mxu0
        %v4779 = vadd.f32 %v4676, %v4778
        %4780 = vmatprep.mubr.f32.mxu0 0.0
        %v4781 = vand.u32 %v4461, 4294901760
        %v4782 = vsub.f32 %v4461, %v4781
        %4783 = vmatmul.mubr.f32.gmra.mxu0 %v4782
        %v4784 = vpop.f32.mrf.mxu0
        %v4785 = vadd.f32 %v4681, %v4784
        %v4786 = vpop.f32.mrf.mxu0
        %v4787 = vadd.f32 %v4683, %v4786
        %4788 = vmatprep.mubr.f32.mxu0 0.0
        %v4789 = vand.u32 %v4464, 4294901760
        %v4790 = vsub.f32 %v4464, %v4789
        %4791 = vmatmul.mubr.f32.gmra.mxu0 %v4790
        %v4792 = vpop.f32.mrf.mxu0
        %v4793 = vadd.f32 %v4688, %v4792
        %v4794 = vpop.f32.mrf.mxu0
        %v4795 = vadd.f32 %v4690, %v4794
        %4796 = vdwg.mxu0
        %4797 = vmatprep.subr.mxu0 0.0
        %4798 = vmatpush1.msra.mxu0 0.0
        %4799 = vmatprep.subr.mxu0 0.0
        %4800 = vmatpush1.msra.mxu0 0.0
        %4801 = vmatprep.subr.mxu0 0.0
        %4802 = vmatpush1.msra.mxu0 0.0
        %4803 = vmatprep.subr.mxu0 0.0
        %4804 = vmatpush1.msra.mxu0 0.0
        %4805 = vmatprep.subr.mxu0 0.0
        %4806 = vmatpush1.msra.mxu0 0.0
        %4807 = vmatprep.subr.mxu0 0.0
        %4808 = vmatpush1.msra.mxu0 0.0
        %4809 = vmatprep.subr.mxu0 0.0
        %4810 = vmatpush1.msra.mxu0 0.0
        %4811 = vmatprep.subr.mxu0 0.0
        %4812 = vmatpush1.msra.mxu0 0.0
        %4813 = vmatprep.subr.mxu0 0.0
        %4814 = vmatpush1.msra.mxu0 0.0
        %4815 = vmatprep.subr.mxu0 0.0
        %4816 = vmatpush1.msra.mxu0 0.0
        %4817 = vmatprep.subr.mxu0 0.0
        %4818 = vmatpush1.msra.mxu0 0.0
        %4819 = vmatprep.subr.mxu0 0.0
        %4820 = vmatpush1.msra.mxu0 0.0
        %4821 = vmatprep.subr.mxu0 0.0
        %4822 = vmatpush1.msra.mxu0 0.0
        %4823 = vmatprep.subr.mxu0 0.0
        %4824 = vmatpush1.msra.mxu0 0.0
        %v4825 = vand.u32 %v4451, 4294901760
        %4826 = vmatprep.subr.mxu0 %v4825
        %v4827 = vand.u32 %v4449, 4294901760
        %4828 = vmatpush1.msra.mxu0 %v4827
        %v4829 = vand.u32 %v4444, 4294901760
        %4830 = vmatprep.subr.mxu0 %v4829
        %v4831 = vand.u32 %v4442, 4294901760
        %4832 = vmatpush1.msra.mxu0 %v4831
        %4833 = vmatprep.subr.mxu0 0.0
        %4834 = vmatpush2.msra.mxu0 0.0
        %4835 = vmatprep.subr.mxu0 0.0
        %4836 = vmatpush2.msra.mxu0 0.0
        %4837 = vmatprep.subr.mxu0 0.0
        %4838 = vmatpush2.msra.mxu0 0.0
        %4839 = vmatprep.subr.mxu0 0.0
        %4840 = vmatpush2.msra.mxu0 0.0
        %4841 = vmatprep.subr.mxu0 0.0
        %4842 = vmatpush2.msra.mxu0 0.0
        %4843 = vmatprep.subr.mxu0 0.0
        %4844 = vmatpush2.msra.mxu0 0.0
        %4845 = vmatprep.subr.mxu0 0.0
        %4846 = vmatpush2.msra.mxu0 0.0
        %4847 = vmatprep.subr.mxu0 0.0
        %4848 = vmatpush2.msra.mxu0 0.0
        %4849 = vmatprep.subr.mxu0 0.0
        %4850 = vmatpush2.msra.mxu0 0.0
        %4851 = vmatprep.subr.mxu0 0.0
        %4852 = vmatpush2.msra.mxu0 0.0
        %4853 = vmatprep.subr.mxu0 0.0
        %4854 = vmatpush2.msra.mxu0 0.0
        %4855 = vmatprep.subr.mxu0 0.0
        %4856 = vmatpush2.msra.mxu0 0.0
        %4857 = vmatprep.subr.mxu0 0.0
        %4858 = vmatpush2.msra.mxu0 0.0
        %4859 = vmatprep.subr.mxu0 0.0
        %4860 = vmatpush2.msra.mxu0 0.0
        %4861 = vmatprep.subr.mxu0 0.0
        %4862 = vmatpush2.msra.mxu0 0.0
        %4863 = vmatprep.subr.mxu0 0.0
        %4864 = vmatpush2.msra.mxu0 0.0
        %4865 = vmatprep.mubr.f32.mxu0 0.0
        %v4866 = vand.u32 %v4455, 4294901760
        %v4867 = vsub.f32 %v4455, %v4866
        %v4868 = vand.u32 %v4867, 4294901760
        %4869 = vmatmul.mubr.f32.gmra.mxu0 %v4868
        %v4870 = vpop.f32.mrf.mxu0
        %v4871 = vadd.f32 %v4769, %v4870
        %v4872 = vpop.f32.mrf.mxu0
        %v4873 = vadd.f32 %v4771, %v4872
        %4874 = vmatprep.mubr.f32.mxu0 0.0
        %v4875 = vand.u32 %v4458, 4294901760
        %v4876 = vsub.f32 %v4458, %v4875
        %v4877 = vand.u32 %v4876, 4294901760
        %4878 = vmatmul.mubr.f32.gmra.mxu0 %v4877
        %v4879 = vpop.f32.mrf.mxu0
        %v4880 = vadd.f32 %v4777, %v4879
        %v4881 = vpop.f32.mrf.mxu0
        %v4882 = vadd.f32 %v4779, %v4881
        %4883 = vmatprep.mubr.f32.mxu0 0.0
        %v4884 = vand.u32 %v4461, 4294901760
        %v4885 = vsub.f32 %v4461, %v4884
        %v4886 = vand.u32 %v4885, 4294901760
        %4887 = vmatmul.mubr.f32.gmra.mxu0 %v4886
        %v4888 = vpop.f32.mrf.mxu0
        %v4889 = vadd.f32 %v4785, %v4888
        %v4890 = vpop.f32.mrf.mxu0
        %v4891 = vadd.f32 %v4787, %v4890
        %4892 = vmatprep.mubr.f32.mxu0 0.0
        %v4893 = vand.u32 %v4464, 4294901760
        %v4894 = vsub.f32 %v4464, %v4893
        %v4895 = vand.u32 %v4894, 4294901760
        %4896 = vmatmul.mubr.f32.gmra.mxu0 %v4895
        %v4897 = vpop.f32.mrf.mxu0
        %v4898 = vadd.f32 %v4793, %v4897
        %v4899 = vpop.f32.mrf.mxu0
        %v4900 = vadd.f32 %v4795, %v4899
        %4901 = vdwg.mxu0
        %4902 = vmatprep.subr.mxu0 0.0
        %4903 = vmatpush1.msra.mxu0 0.0
        %4904 = vmatprep.subr.mxu0 0.0
        %4905 = vmatpush1.msra.mxu0 0.0
        %4906 = vmatprep.subr.mxu0 0.0
        %4907 = vmatpush1.msra.mxu0 0.0
        %4908 = vmatprep.subr.mxu0 0.0
        %4909 = vmatpush1.msra.mxu0 0.0
        %4910 = vmatprep.subr.mxu0 0.0
        %4911 = vmatpush1.msra.mxu0 0.0
        %4912 = vmatprep.subr.mxu0 0.0
        %4913 = vmatpush1.msra.mxu0 0.0
        %4914 = vmatprep.subr.mxu0 0.0
        %4915 = vmatpush1.msra.mxu0 0.0
        %4916 = vmatprep.subr.mxu0 0.0
        %4917 = vmatpush1.msra.mxu0 0.0
        %4918 = vmatprep.subr.mxu0 0.0
        %4919 = vmatpush1.msra.mxu0 0.0
        %4920 = vmatprep.subr.mxu0 0.0
        %4921 = vmatpush1.msra.mxu0 0.0
        %4922 = vmatprep.subr.mxu0 0.0
        %4923 = vmatpush1.msra.mxu0 0.0
        %4924 = vmatprep.subr.mxu0 0.0
        %4925 = vmatpush1.msra.mxu0 0.0
        %4926 = vmatprep.subr.mxu0 0.0
        %4927 = vmatpush1.msra.mxu0 0.0
        %4928 = vmatprep.subr.mxu0 0.0
        %4929 = vmatpush1.msra.mxu0 0.0
        %v4930 = vand.u32 %v4451, 4294901760
        %v4931 = vsub.f32 %v4451, %v4930
        %v4932 = vand.u32 %v4931, 4294901760
        %4933 = vmatprep.subr.mxu0 %v4932
        %v4934 = vand.u32 %v4449, 4294901760
        %v4935 = vsub.f32 %v4449, %v4934
        %v4936 = vand.u32 %v4935, 4294901760
        %4937 = vmatpush1.msra.mxu0 %v4936
        %v4938 = vand.u32 %v4444, 4294901760
        %v4939 = vsub.f32 %v4444, %v4938
        %v4940 = vand.u32 %v4939, 4294901760
        %4941 = vmatprep.subr.mxu0 %v4940
        %v4942 = vand.u32 %v4442, 4294901760
        %v4943 = vsub.f32 %v4442, %v4942
        %v4944 = vand.u32 %v4943, 4294901760
        %4945 = vmatpush1.msra.mxu0 %v4944
        %4946 = vmatprep.subr.mxu0 0.0
        %4947 = vmatpush2.msra.mxu0 0.0
        %4948 = vmatprep.subr.mxu0 0.0
        %4949 = vmatpush2.msra.mxu0 0.0
        %4950 = vmatprep.subr.mxu0 0.0
        %4951 = vmatpush2.msra.mxu0 0.0
        %4952 = vmatprep.subr.mxu0 0.0
        %4953 = vmatpush2.msra.mxu0 0.0
        %4954 = vmatprep.subr.mxu0 0.0
        %4955 = vmatpush2.msra.mxu0 0.0
        %4956 = vmatprep.subr.mxu0 0.0
        %4957 = vmatpush2.msra.mxu0 0.0
        %4958 = vmatprep.subr.mxu0 0.0
        %4959 = vmatpush2.msra.mxu0 0.0
        %4960 = vmatprep.subr.mxu0 0.0
        %4961 = vmatpush2.msra.mxu0 0.0
        %4962 = vmatprep.subr.mxu0 0.0
        %4963 = vmatpush2.msra.mxu0 0.0
        %4964 = vmatprep.subr.mxu0 0.0
        %4965 = vmatpush2.msra.mxu0 0.0
        %4966 = vmatprep.subr.mxu0 0.0
        %4967 = vmatpush2.msra.mxu0 0.0
        %4968 = vmatprep.subr.mxu0 0.0
        %4969 = vmatpush2.msra.mxu0 0.0
        %4970 = vmatprep.subr.mxu0 0.0
        %4971 = vmatpush2.msra.mxu0 0.0
        %4972 = vmatprep.subr.mxu0 0.0
        %4973 = vmatpush2.msra.mxu0 0.0
        %4974 = vmatprep.subr.mxu0 0.0
        %4975 = vmatpush2.msra.mxu0 0.0
        %4976 = vmatprep.subr.mxu0 0.0
        %4977 = vmatpush2.msra.mxu0 0.0
        %4978 = vmatprep.mubr.f32.mxu0 0.0
        %v4979 = vand.u32 %v4455, 4294901760
        %4980 = vmatmul.mubr.f32.gmra.mxu0 %v4979
        %v4981 = vpop.f32.mrf.mxu0
        %v4982 = vadd.f32 %v4871, %v4981
        %v4983 = vpop.f32.mrf.mxu0
        %v4984 = vadd.f32 %v4873, %v4983
        %4985 = vmatprep.mubr.f32.mxu0 0.0
        %v4986 = vand.u32 %v4458, 4294901760
        %4987 = vmatmul.mubr.f32.gmra.mxu0 %v4986
        %v4988 = vpop.f32.mrf.mxu0
        %v4989 = vadd.f32 %v4880, %v4988
        %v4990 = vpop.f32.mrf.mxu0
        %v4991 = vadd.f32 %v4882, %v4990
        %4992 = vmatprep.mubr.f32.mxu0 0.0
        %v4993 = vand.u32 %v4461, 4294901760
        %4994 = vmatmul.mubr.f32.gmra.mxu0 %v4993
        %v4995 = vpop.f32.mrf.mxu0
        %v4996 = vadd.f32 %v4889, %v4995
        %v4997 = vpop.f32.mrf.mxu0
        %v4998 = vadd.f32 %v4891, %v4997
        %4999 = vmatprep.mubr.f32.mxu0 0.0
        %v5000 = vand.u32 %v4464, 4294901760
        %5001 = vmatmul.mubr.f32.gmra.mxu0 %v5000
        %v5002 = vpop.f32.mrf.mxu0
        %v5003 = vadd.f32 %v4898, %v5002
        %v5004 = vpop.f32.mrf.mxu0
        %v5005 = vadd.f32 %v4900, %v5004
        %5006 = vdwg.mxu0
        %5007 = vmatprep.subr.mxu0 0.0
        %5008 = vmatpush1.msra.mxu0 0.0
        %5009 = vmatprep.subr.mxu0 0.0
        %5010 = vmatpush1.msra.mxu0 0.0
        %5011 = vmatprep.subr.mxu0 0.0
        %5012 = vmatpush1.msra.mxu0 0.0
        %5013 = vmatprep.subr.mxu0 0.0
        %5014 = vmatpush1.msra.mxu0 0.0
        %5015 = vmatprep.subr.mxu0 0.0
        %5016 = vmatpush1.msra.mxu0 0.0
        %5017 = vmatprep.subr.mxu0 0.0
        %5018 = vmatpush1.msra.mxu0 0.0
        %5019 = vmatprep.subr.mxu0 0.0
        %5020 = vmatpush1.msra.mxu0 0.0
        %5021 = vmatprep.subr.mxu0 0.0
        %5022 = vmatpush1.msra.mxu0 0.0
        %5023 = vmatprep.subr.mxu0 0.0
        %5024 = vmatpush1.msra.mxu0 0.0
        %5025 = vmatprep.subr.mxu0 0.0
        %5026 = vmatpush1.msra.mxu0 0.0
        %5027 = vmatprep.subr.mxu0 0.0
        %5028 = vmatpush1.msra.mxu0 0.0
        %5029 = vmatprep.subr.mxu0 0.0
        %5030 = vmatpush1.msra.mxu0 0.0
        %5031 = vmatprep.subr.mxu0 0.0
        %5032 = vmatpush1.msra.mxu0 0.0
        %5033 = vmatprep.subr.mxu0 0.0
        %5034 = vmatpush1.msra.mxu0 0.0
        %v5035 = vand.u32 %v4451, 4294901760
        %5036 = vmatprep.subr.mxu0 %v5035
        %v5037 = vand.u32 %v4449, 4294901760
        %5038 = vmatpush1.msra.mxu0 %v5037
        %v5039 = vand.u32 %v4444, 4294901760
        %5040 = vmatprep.subr.mxu0 %v5039
        %v5041 = vand.u32 %v4442, 4294901760
        %5042 = vmatpush1.msra.mxu0 %v5041
        %5043 = vmatprep.subr.mxu0 0.0
        %5044 = vmatpush2.msra.mxu0 0.0
        %5045 = vmatprep.subr.mxu0 0.0
        %5046 = vmatpush2.msra.mxu0 0.0
        %5047 = vmatprep.subr.mxu0 0.0
        %5048 = vmatpush2.msra.mxu0 0.0
        %5049 = vmatprep.subr.mxu0 0.0
        %5050 = vmatpush2.msra.mxu0 0.0
        %5051 = vmatprep.subr.mxu0 0.0
        %5052 = vmatpush2.msra.mxu0 0.0
        %5053 = vmatprep.subr.mxu0 0.0
        %5054 = vmatpush2.msra.mxu0 0.0
        %5055 = vmatprep.subr.mxu0 0.0
        %5056 = vmatpush2.msra.mxu0 0.0
        %5057 = vmatprep.subr.mxu0 0.0
        %5058 = vmatpush2.msra.mxu0 0.0
        %5059 = vmatprep.subr.mxu0 0.0
        %5060 = vmatpush2.msra.mxu0 0.0
        %5061 = vmatprep.subr.mxu0 0.0
        %5062 = vmatpush2.msra.mxu0 0.0
        %5063 = vmatprep.subr.mxu0 0.0
        %5064 = vmatpush2.msra.mxu0 0.0
        %5065 = vmatprep.subr.mxu0 0.0
        %5066 = vmatpush2.msra.mxu0 0.0
        %5067 = vmatprep.subr.mxu0 0.0
        %5068 = vmatpush2.msra.mxu0 0.0
        %5069 = vmatprep.subr.mxu0 0.0
        %5070 = vmatpush2.msra.mxu0 0.0
        %5071 = vmatprep.subr.mxu0 0.0
        %5072 = vmatpush2.msra.mxu0 0.0
        %5073 = vmatprep.subr.mxu0 0.0
        %5074 = vmatpush2.msra.mxu0 0.0
        %5075 = vmatprep.mubr.f32.mxu0 0.0
        %v5076 = vand.u32 %v4455, 4294901760
        %5077 = vmatmul.mubr.f32.gmra.mxu0 %v5076
        %v5078 = vpop.f32.mrf.mxu0
        %v5079 = vadd.f32 %v4982, %v5078
        %v5080 = vpop.f32.mrf.mxu0
        %v5081 = vadd.f32 %v4984, %v5080
        %5082 = vmatprep.mubr.f32.mxu0 0.0
        %v5083 = vand.u32 %v4458, 4294901760
        %5084 = vmatmul.mubr.f32.gmra.mxu0 %v5083
        %v5085 = vpop.f32.mrf.mxu0
        %v5086 = vadd.f32 %v4989, %v5085
        %v5087 = vpop.f32.mrf.mxu0
        %v5088 = vadd.f32 %v4991, %v5087
        %5089 = vmatprep.mubr.f32.mxu0 0.0
        %v5090 = vand.u32 %v4461, 4294901760
        %5091 = vmatmul.mubr.f32.gmra.mxu0 %v5090
        %v5092 = vpop.f32.mrf.mxu0
        %v5093 = vadd.f32 %v4996, %v5092
        %v5094 = vpop.f32.mrf.mxu0
        %v5095 = vadd.f32 %v4998, %v5094
        %5096 = vmatprep.mubr.f32.mxu0 0.0
        %v5097 = vand.u32 %v4464, 4294901760
        %5098 = vmatmul.mubr.f32.gmra.mxu0 %v5097
        %v5099 = vpop.f32.mrf.mxu0
        %v5100 = vadd.f32 %v5003, %v5099
        %v5101 = vpop.f32.mrf.mxu0
        %v5102 = vadd.f32 %v5005, %v5101
        %5103 = vdwg.mxu0
        %v5104 = vsub.f32 %v432, %v5079
        %v5105 = vsub.f32 %v433, %v5081
        %v5106 = vsub.f32 %v434, %v5086
        %v5107 = vsub.f32 %v435, %v5088
        %v5108 = vsub.f32 %v436, %v5093
        %v5109 = vsub.f32 %v437, %v5095
        %v5110 = vsub.f32 %v438, %v5100
        %v5111 = vsub.f32 %v439, %v5102
        %v5112 = vand.u32 2147483647, %v5104
        %v5113 = vand.u32 2147483647, %v5105
        %v5114 = vand.u32 2147483647, %v5106
        %v5115 = vand.u32 2147483647, %v5107
        %v5116 = vand.u32 2147483647, %v5108
        %v5117 = vand.u32 2147483647, %v5109
        %v5118 = vand.u32 2147483647, %v5110
        %v5119 = vand.u32 2147483647, %v5111
        %v5120 = vlaneseq
        %v5121 = vand.u32 %v5120, 127
        %v5122 = vadd.s32 %v5121, 128
        %vm5123 = vcmp.ge.s32.totalorder %v5121, 1
        %vm5124 = vcmp.ge.s32.totalorder %v5122, 1
        %5125 = vrot.lane.b32.xlu0 %v5112, 1
        %v5126 = vpop.permute.xlu0 %5125
        %5127 = vrot.lane.b32.xlu0 %v5114, 1
        %v5128 = vpop.permute.xlu0 %5127
        %5129 = vrot.lane.b32.xlu0 %v5116, 1
        %v5130 = vpop.permute.xlu0 %5129
        %5131 = vrot.lane.b32.xlu0 %v5118, 1
        %v5132 = vpop.permute.xlu0 %5131
        %5133 = vrot.lane.b32.xlu0 %v5113, 1
        %v5134 = vpop.permute.xlu0 %5133
        %5135 = vrot.lane.b32.xlu0 %v5115, 1
        %v5136 = vpop.permute.xlu0 %5135
        %5137 = vrot.lane.b32.xlu0 %v5117, 1
        %v5138 = vpop.permute.xlu0 %5137
        %5139 = vrot.lane.b32.xlu0 %v5119, 1
        %v5140 = vpop.permute.xlu0 %5139
        %vm5141 = vcmp.lt.s32.totalorder %v5121, 1
        %v5142 = vsel %vm5141, %v5126, %v5134
        %v5143 = vsel %vm5141, %v5128, %v5136
        %v5144 = vsel %vm5141, %v5130, %v5138
        %v5145 = vsel %vm5141, %v5132, %v5140
        %v5146 = vsel %vm5141, %v5134, %v5126
        %v5147 = vsel %vm5141, %v5136, %v5128
        %v5148 = vsel %vm5141, %v5138, %v5130
        %v5149 = vsel %vm5141, %v5140, %v5132
        %v5150 = vsel %vm5123, %v5146, 0.0
        %v5151 = vsel %vm5124, %v5142, 0.0
        %v5152 = vsel %vm5123, %v5147, 0.0
        %v5153 = vsel %vm5124, %v5143, 0.0
        %v5154 = vsel %vm5123, %v5148, 0.0
        %v5155 = vsel %vm5124, %v5144, 0.0
        %v5156 = vsel %vm5123, %v5149, 0.0
        %v5157 = vsel %vm5124, %v5145, 0.0
        %vm5158 = vcmp.lt.s32.totalorder %v5121, 255
        %vm5159 = vcmp.lt.s32.totalorder %v5122, 255
        %5160 = vrot.lane.b32.xlu0 %v5112, 127
        %v5161 = vpop.permute.xlu0 %5160
        %5162 = vrot.lane.b32.xlu0 %v5114, 127
        %v5163 = vpop.permute.xlu0 %5162
        %5164 = vrot.lane.b32.xlu0 %v5116, 127
        %v5165 = vpop.permute.xlu0 %5164
        %5166 = vrot.lane.b32.xlu0 %v5118, 127
        %v5167 = vpop.permute.xlu0 %5166
        %5168 = vrot.lane.b32.xlu0 %v5113, 127
        %v5169 = vpop.permute.xlu0 %5168
        %5170 = vrot.lane.b32.xlu0 %v5115, 127
        %v5171 = vpop.permute.xlu0 %5170
        %5172 = vrot.lane.b32.xlu0 %v5117, 127
        %v5173 = vpop.permute.xlu0 %5172
        %5174 = vrot.lane.b32.xlu0 %v5119, 127
        %v5175 = vpop.permute.xlu0 %5174
        %vm5176 = vcmp.lt.s32.totalorder %v5121, 127
        %v5177 = vsel %vm5176, %v5161, %v5169
        %v5178 = vsel %vm5176, %v5163, %v5171
        %v5179 = vsel %vm5176, %v5165, %v5173
        %v5180 = vsel %vm5176, %v5167, %v5175
        %v5181 = vsel %vm5176, %v5169, %v5161
        %v5182 = vsel %vm5176, %v5171, %v5163
        %v5183 = vsel %vm5176, %v5173, %v5165
        %v5184 = vsel %vm5176, %v5175, %v5167
        %v5185 = vsel %vm5158, %v5177, 0.0
        %v5186 = vsel %vm5159, %v5181, 0.0
        %v5187 = vsel %vm5158, %v5178, 0.0
        %v5188 = vsel %vm5159, %v5182, 0.0
        %v5189 = vsel %vm5158, %v5179, 0.0
        %v5190 = vsel %vm5159, %v5183, 0.0
        %v5191 = vsel %vm5158, %v5180, 0.0
        %v5192 = vsel %vm5159, %v5184, 0.0
        %v5193 = vadd.f32 %v5150, %v5185
        %v5194 = vadd.f32 %v5151, %v5186
        %v5195 = vadd.f32 %v5152, %v5187
        %v5196 = vadd.f32 %v5153, %v5188
        %v5197 = vadd.f32 %v5154, %v5189
        %v5198 = vadd.f32 %v5155, %v5190
        %v5199 = vadd.f32 %v5156, %v5191
        %v5200 = vadd.f32 %v5157, %v5192
        %vm5201 = vcmp.ge.s32.totalorder %v5121, 2
        %vm5202 = vcmp.ge.s32.totalorder %v5122, 2
        %5203 = vrot.lane.b32.xlu0 %v5112, 2
        %v5204 = vpop.permute.xlu0 %5203
        %5205 = vrot.lane.b32.xlu0 %v5114, 2
        %v5206 = vpop.permute.xlu0 %5205
        %5207 = vrot.lane.b32.xlu0 %v5116, 2
        %v5208 = vpop.permute.xlu0 %5207
        %5209 = vrot.lane.b32.xlu0 %v5118, 2
        %v5210 = vpop.permute.xlu0 %5209
        %5211 = vrot.lane.b32.xlu0 %v5113, 2
        %v5212 = vpop.permute.xlu0 %5211
        %5213 = vrot.lane.b32.xlu0 %v5115, 2
        %v5214 = vpop.permute.xlu0 %5213
        %5215 = vrot.lane.b32.xlu0 %v5117, 2
        %v5216 = vpop.permute.xlu0 %5215
        %5217 = vrot.lane.b32.xlu0 %v5119, 2
        %v5218 = vpop.permute.xlu0 %5217
        %vm5219 = vcmp.lt.s32.totalorder %v5121, 2
        %v5220 = vsel %vm5219, %v5204, %v5212
        %v5221 = vsel %vm5219, %v5206, %v5214
        %v5222 = vsel %vm5219, %v5208, %v5216
        %v5223 = vsel %vm5219, %v5210, %v5218
        %v5224 = vsel %vm5219, %v5212, %v5204
        %v5225 = vsel %vm5219, %v5214, %v5206
        %v5226 = vsel %vm5219, %v5216, %v5208
        %v5227 = vsel %vm5219, %v5218, %v5210
        %v5228 = vsel %vm5201, %v5224, 0.0
        %v5229 = vsel %vm5202, %v5220, 0.0
        %v5230 = vsel %vm5201, %v5225, 0.0
        %v5231 = vsel %vm5202, %v5221, 0.0
        %v5232 = vsel %vm5201, %v5226, 0.0
        %v5233 = vsel %vm5202, %v5222, 0.0
        %v5234 = vsel %vm5201, %v5227, 0.0
        %v5235 = vsel %vm5202, %v5223, 0.0
        %vm5236 = vcmp.lt.s32.totalorder %v5121, 254
        %vm5237 = vcmp.lt.s32.totalorder %v5122, 254
        %5238 = vrot.lane.b32.xlu0 %v5112, 126
        %v5239 = vpop.permute.xlu0 %5238
        %5240 = vrot.lane.b32.xlu0 %v5114, 126
        %v5241 = vpop.permute.xlu0 %5240
        %5242 = vrot.lane.b32.xlu0 %v5116, 126
        %v5243 = vpop.permute.xlu0 %5242
        %5244 = vrot.lane.b32.xlu0 %v5118, 126
        %v5245 = vpop.permute.xlu0 %5244
        %5246 = vrot.lane.b32.xlu0 %v5113, 126
        %v5247 = vpop.permute.xlu0 %5246
        %5248 = vrot.lane.b32.xlu0 %v5115, 126
        %v5249 = vpop.permute.xlu0 %5248
        %5250 = vrot.lane.b32.xlu0 %v5117, 126
        %v5251 = vpop.permute.xlu0 %5250
        %5252 = vrot.lane.b32.xlu0 %v5119, 126
        %v5253 = vpop.permute.xlu0 %5252
        %vm5254 = vcmp.lt.s32.totalorder %v5121, 126
        %v5255 = vsel %vm5254, %v5239, %v5247
        %v5256 = vsel %vm5254, %v5241, %v5249
        %v5257 = vsel %vm5254, %v5243, %v5251
        %v5258 = vsel %vm5254, %v5245, %v5253
        %v5259 = vsel %vm5254, %v5247, %v5239
        %v5260 = vsel %vm5254, %v5249, %v5241
        %v5261 = vsel %vm5254, %v5251, %v5243
        %v5262 = vsel %vm5254, %v5253, %v5245
        %v5263 = vsel %vm5236, %v5255, 0.0
        %v5264 = vsel %vm5237, %v5259, 0.0
        %v5265 = vsel %vm5236, %v5256, 0.0
        %v5266 = vsel %vm5237, %v5260, 0.0
        %v5267 = vsel %vm5236, %v5257, 0.0
        %v5268 = vsel %vm5237, %v5261, 0.0
        %v5269 = vsel %vm5236, %v5258, 0.0
        %v5270 = vsel %vm5237, %v5262, 0.0
        %v5271 = vadd.f32 %v5228, %v5263
        %v5272 = vadd.f32 %v5229, %v5264
        %v5273 = vadd.f32 %v5230, %v5265
        %v5274 = vadd.f32 %v5231, %v5266
        %v5275 = vadd.f32 %v5232, %v5267
        %v5276 = vadd.f32 %v5233, %v5268
        %v5277 = vadd.f32 %v5234, %v5269
        %v5278 = vadd.f32 %v5235, %v5270
        %v5279 = vadd.f32 %v5112, %v5271
        %v5280 = vadd.f32 %v5113, %v5272
        %v5281 = vadd.f32 %v5114, %v5273
        %v5282 = vadd.f32 %v5115, %v5274
        %v5283 = vadd.f32 %v5116, %v5275
        %v5284 = vadd.f32 %v5117, %v5276
        %v5285 = vadd.f32 %v5118, %v5277
        %v5286 = vadd.f32 %v5119, %v5278
        %v5287 = vmul.f32 %v5279, 0.05
        %v5288 = vmul.f32 %v5280, 0.05
        %v5289 = vmul.f32 %v5281, 0.05
        %v5290 = vmul.f32 %v5282, 0.05
        %v5291 = vmul.f32 %v5283, 0.05
        %v5292 = vmul.f32 %v5284, 0.05
        %v5293 = vmul.f32 %v5285, 0.05
        %v5294 = vmul.f32 %v5286, 0.05
        %v5295 = vmul.f32 %v5193, 0.04
        %v5296 = vmul.f32 %v5194, 0.04
        %v5297 = vmul.f32 %v5195, 0.04
        %v5298 = vmul.f32 %v5196, 0.04
        %v5299 = vmul.f32 %v5197, 0.04
        %v5300 = vmul.f32 %v5198, 0.04
        %v5301 = vmul.f32 %v5199, 0.04
        %v5302 = vmul.f32 %v5200, 0.04
        %v5303 = vadd.f32 %v5287, %v5295
        %v5304 = vadd.f32 %v5288, %v5296
        %v5305 = vadd.f32 %v5289, %v5297
        %v5306 = vadd.f32 %v5290, %v5298
        %v5307 = vadd.f32 %v5291, %v5299
        %v5308 = vadd.f32 %v5292, %v5300
        %v5309 = vadd.f32 %v5293, %v5301
        %v5310 = vadd.f32 %v5294, %v5302
        %v5311 = vmul.f32 %v5279, 0.04
        %v5312 = vmul.f32 %v5280, 0.04
        %v5313 = vmul.f32 %v5281, 0.04
        %v5314 = vmul.f32 %v5282, 0.04
        %v5315 = vmul.f32 %v5283, 0.04
        %v5316 = vmul.f32 %v5284, 0.04
        %v5317 = vmul.f32 %v5285, 0.04
        %v5318 = vmul.f32 %v5286, 0.04
        %v5319 = vmul.f32 %v5193, 0.03
        %v5320 = vmul.f32 %v5194, 0.03
        %v5321 = vmul.f32 %v5195, 0.03
        %v5322 = vmul.f32 %v5196, 0.03
        %v5323 = vmul.f32 %v5197, 0.03
        %v5324 = vmul.f32 %v5198, 0.03
        %v5325 = vmul.f32 %v5199, 0.03
        %v5326 = vmul.f32 %v5200, 0.03
        %v5327 = vadd.f32 %v5311, %v5319
        %v5328 = vadd.f32 %v5312, %v5320
        %v5329 = vadd.f32 %v5313, %v5321
        %v5330 = vadd.f32 %v5314, %v5322
        %v5331 = vadd.f32 %v5315, %v5323
        %v5332 = vadd.f32 %v5316, %v5324
        %v5333 = vadd.f32 %v5317, %v5325
        %v5334 = vadd.f32 %v5318, %v5326
        %v5335 = vmul.f32 %v5112, 0.05
        %v5336 = vmul.f32 %v5113, 0.05
        %v5337 = vmul.f32 %v5114, 0.05
        %v5338 = vmul.f32 %v5115, 0.05
        %v5339 = vmul.f32 %v5116, 0.05
        %v5340 = vmul.f32 %v5117, 0.05
        %v5341 = vmul.f32 %v5118, 0.05
        %v5342 = vmul.f32 %v5119, 0.05
        %v5343 = vadd.f32 %v5193, %v5271
        %v5344 = vadd.f32 %v5194, %v5272
        %v5345 = vadd.f32 %v5195, %v5273
        %v5346 = vadd.f32 %v5196, %v5274
        %v5347 = vadd.f32 %v5197, %v5275
        %v5348 = vadd.f32 %v5198, %v5276
        %v5349 = vadd.f32 %v5199, %v5277
        %v5350 = vadd.f32 %v5200, %v5278
        %v5351 = vmul.f32 %v5343, 0.04
        %v5352 = vmul.f32 %v5344, 0.04
        %v5353 = vmul.f32 %v5345, 0.04
        %v5354 = vmul.f32 %v5346, 0.04
        %v5355 = vmul.f32 %v5347, 0.04
        %v5356 = vmul.f32 %v5348, 0.04
        %v5357 = vmul.f32 %v5349, 0.04
        %v5358 = vmul.f32 %v5350, 0.04
        %v5359 = vadd.f32 %v5335, %v5351
        %v5360 = vadd.f32 %v5336, %v5352
        %v5361 = vadd.f32 %v5337, %v5353
        %v5362 = vadd.f32 %v5338, %v5354
        %v5363 = vadd.f32 %v5339, %v5355
        %v5364 = vadd.f32 %v5340, %v5356
        %v5365 = vadd.f32 %v5341, %v5357
        %v5366 = vadd.f32 %v5342, %v5358
        %v5367 = vlaneseq
        %v5368 = vshrl.u32 %v5367, 7
        %v5369 = vadd.s32 %v5368, 8
        %v5370 = vadd.s32 %v5368, 16
        %v5371 = vadd.s32 %v5368, 24
        %vm5372 = vcmp.ge.s32.totalorder %v5368, 1
        %vm5373 = vcmp.ge.s32.totalorder %v5369, 1
        %vm5374 = vcmp.ge.s32.totalorder %v5370, 1
        %vm5375 = vcmp.ge.s32.totalorder %v5371, 1
        %v5376 = vrot.slane %v5327, 7
        %v5377 = vrot.slane %v5328, 7
        %v5378 = vrot.slane %v5329, 7
        %v5379 = vrot.slane %v5330, 7
        %v5380 = vrot.slane %v5331, 7
        %v5381 = vrot.slane %v5332, 7
        %v5382 = vrot.slane %v5333, 7
        %v5383 = vrot.slane %v5334, 7
        %vm5384 = vcmp.lt.s32.totalorder %v5368, 1
        %v5385 = vsel %vm5384, %v5380, %v5382
        %v5386 = vsel %vm5384, %v5381, %v5383
        %v5387 = vsel %vm5384, %v5378, %v5380
        %v5388 = vsel %vm5384, %v5379, %v5381
        %v5389 = vsel %vm5384, %v5376, %v5378
        %v5390 = vsel %vm5384, %v5377, %v5379
        %v5391 = vsel %vm5384, %v5382, %v5376
        %v5392 = vsel %vm5384, %v5383, %v5377
        %v5393 = vsel %vm5372, %v5391, 0.0
        %v5394 = vsel %vm5372, %v5392, 0.0
        %v5395 = vsel %vm5373, %v5389, 0.0
        %v5396 = vsel %vm5373, %v5390, 0.0
        %v5397 = vsel %vm5374, %v5387, 0.0
        %v5398 = vsel %vm5374, %v5388, 0.0
        %v5399 = vsel %vm5375, %v5385, 0.0
        %v5400 = vsel %vm5375, %v5386, 0.0
        %v5401 = vadd.f32 %v5303, %v5393
        %v5402 = vadd.f32 %v5304, %v5394
        %v5403 = vadd.f32 %v5305, %v5395
        %v5404 = vadd.f32 %v5306, %v5396
        %v5405 = vadd.f32 %v5307, %v5397
        %v5406 = vadd.f32 %v5308, %v5398
        %v5407 = vadd.f32 %v5309, %v5399
        %v5408 = vadd.f32 %v5310, %v5400
        %vm5409 = vcmp.lt.s32.totalorder %v5368, 31
        %vm5410 = vcmp.lt.s32.totalorder %v5369, 31
        %vm5411 = vcmp.lt.s32.totalorder %v5370, 31
        %vm5412 = vcmp.lt.s32.totalorder %v5371, 31
        %v5413 = vrot.slane %v5327, 1
        %v5414 = vrot.slane %v5328, 1
        %v5415 = vrot.slane %v5329, 1
        %v5416 = vrot.slane %v5330, 1
        %v5417 = vrot.slane %v5331, 1
        %v5418 = vrot.slane %v5332, 1
        %v5419 = vrot.slane %v5333, 1
        %v5420 = vrot.slane %v5334, 1
        %vm5421 = vcmp.lt.s32.totalorder %v5368, 7
        %v5422 = vsel %vm5421, %v5417, %v5419
        %v5423 = vsel %vm5421, %v5418, %v5420
        %v5424 = vsel %vm5421, %v5415, %v5417
        %v5425 = vsel %vm5421, %v5416, %v5418
        %v5426 = vsel %vm5421, %v5413, %v5415
        %v5427 = vsel %vm5421, %v5414, %v5416
        %v5428 = vsel %vm5421, %v5419, %v5413
        %v5429 = vsel %vm5421, %v5420, %v5414
        %v5430 = vsel %vm5409, %v5426, 0.0
        %v5431 = vsel %vm5409, %v5427, 0.0
        %v5432 = vsel %vm5410, %v5424, 0.0
        %v5433 = vsel %vm5410, %v5425, 0.0
        %v5434 = vsel %vm5411, %v5422, 0.0
        %v5435 = vsel %vm5411, %v5423, 0.0
        %v5436 = vsel %vm5412, %v5428, 0.0
        %v5437 = vsel %vm5412, %v5429, 0.0
        %v5438 = vadd.f32 %v5401, %v5430
        %v5439 = vadd.f32 %v5402, %v5431
        %v5440 = vadd.f32 %v5403, %v5432
        %v5441 = vadd.f32 %v5404, %v5433
        %v5442 = vadd.f32 %v5405, %v5434
        %v5443 = vadd.f32 %v5406, %v5435
        %v5444 = vadd.f32 %v5407, %v5436
        %v5445 = vadd.f32 %v5408, %v5437
        %vm5446 = vcmp.ge.s32.totalorder %v5368, 2
        %vm5447 = vcmp.ge.s32.totalorder %v5369, 2
        %vm5448 = vcmp.ge.s32.totalorder %v5370, 2
        %vm5449 = vcmp.ge.s32.totalorder %v5371, 2
        %v5450 = vrot.slane %v5359, 6
        %v5451 = vrot.slane %v5360, 6
        %v5452 = vrot.slane %v5361, 6
        %v5453 = vrot.slane %v5362, 6
        %v5454 = vrot.slane %v5363, 6
        %v5455 = vrot.slane %v5364, 6
        %v5456 = vrot.slane %v5365, 6
        %v5457 = vrot.slane %v5366, 6
        %vm5458 = vcmp.lt.s32.totalorder %v5368, 2
        %v5459 = vsel %vm5458, %v5454, %v5456
        %v5460 = vsel %vm5458, %v5455, %v5457
        %v5461 = vsel %vm5458, %v5452, %v5454
        %v5462 = vsel %vm5458, %v5453, %v5455
        %v5463 = vsel %vm5458, %v5450, %v5452
        %v5464 = vsel %vm5458, %v5451, %v5453
        %v5465 = vsel %vm5458, %v5456, %v5450
        %v5466 = vsel %vm5458, %v5457, %v5451
        %v5467 = vsel %vm5446, %v5465, 0.0
        %v5468 = vsel %vm5446, %v5466, 0.0
        %v5469 = vsel %vm5447, %v5463, 0.0
        %v5470 = vsel %vm5447, %v5464, 0.0
        %v5471 = vsel %vm5448, %v5461, 0.0
        %v5472 = vsel %vm5448, %v5462, 0.0
        %v5473 = vsel %vm5449, %v5459, 0.0
        %v5474 = vsel %vm5449, %v5460, 0.0
        %v5475 = vadd.f32 %v5438, %v5467
        %v5476 = vadd.f32 %v5439, %v5468
        %v5477 = vadd.f32 %v5440, %v5469
        %v5478 = vadd.f32 %v5441, %v5470
        %v5479 = vadd.f32 %v5442, %v5471
        %v5480 = vadd.f32 %v5443, %v5472
        %v5481 = vadd.f32 %v5444, %v5473
        %v5482 = vadd.f32 %v5445, %v5474
        %vm5483 = vcmp.lt.s32.totalorder %v5368, 30
        %vm5484 = vcmp.lt.s32.totalorder %v5369, 30
        %vm5485 = vcmp.lt.s32.totalorder %v5370, 30
        %vm5486 = vcmp.lt.s32.totalorder %v5371, 30
        %v5487 = vrot.slane %v5359, 2
        %v5488 = vrot.slane %v5360, 2
        %v5489 = vrot.slane %v5361, 2
        %v5490 = vrot.slane %v5362, 2
        %v5491 = vrot.slane %v5363, 2
        %v5492 = vrot.slane %v5364, 2
        %v5493 = vrot.slane %v5365, 2
        %v5494 = vrot.slane %v5366, 2
        %vm5495 = vcmp.lt.s32.totalorder %v5368, 6
        %v5496 = vsel %vm5495, %v5491, %v5493
        %v5497 = vsel %vm5495, %v5492, %v5494
        %v5498 = vsel %vm5495, %v5489, %v5491
        %v5499 = vsel %vm5495, %v5490, %v5492
        %v5500 = vsel %vm5495, %v5487, %v5489
        %v5501 = vsel %vm5495, %v5488, %v5490
        %v5502 = vsel %vm5495, %v5493, %v5487
        %v5503 = vsel %vm5495, %v5494, %v5488
        %v5504 = vsel %vm5483, %v5500, 0.0
        %v5505 = vsel %vm5483, %v5501, 0.0
        %v5506 = vsel %vm5484, %v5498, 0.0
        %v5507 = vsel %vm5484, %v5499, 0.0
        %v5508 = vsel %vm5485, %v5496, 0.0
        %v5509 = vsel %vm5485, %v5497, 0.0
        %v5510 = vsel %vm5486, %v5502, 0.0
        %v5511 = vsel %vm5486, %v5503, 0.0
        %v5512 = vadd.f32 %v5475, %v5504
        %v5513 = vadd.f32 %v5476, %v5505
        %v5514 = vadd.f32 %v5477, %v5506
        %v5515 = vadd.f32 %v5478, %v5507
        %v5516 = vadd.f32 %v5479, %v5508
        %v5517 = vadd.f32 %v5480, %v5509
        %v5518 = vadd.f32 %v5481, %v5510
        %v5519 = vadd.f32 %v5482, %v5511
        %v5520 = vadd.f32 %v5512, %v5513
        %v5521 = vadd.f32 %v5520, %v5514
        %v5522 = vadd.f32 %v5521, %v5515
        %v5523 = vadd.f32 %v5522, %v5516
        %v5524 = vadd.f32 %v5523, %v5517
        %v5525 = vadd.f32 %v5524, %v5518
        %v5526 = vadd.f32 %v5525, %v5519
        %5527 = vadd.xlane.f32.xlu0 %v5526
        %v5528 = vpop.xlane.xlu0 %5527
        %v5529 = vrot.slane %v5528, 4
        %v5530 = vadd.f32 %v5528, %v5529
        %v5531 = vrot.slane %v5530, 2
        %v5532 = vadd.f32 %v5530, %v5531
        %v5533 = vrot.slane %v5532, 1
        %v5534 = vadd.f32 %v5532, %v5533
        %s5535 = vtos %v5534
        %v5536 = vrcp.pop 8192.0
        %s5537 = vtos %v5536
        %s5538 = smul.f32 %s5535, %s5537
        %v5539 = vstv %s5538
        %v5540 = vadd.f32 %v5512, %v5539
        %v5541 = vadd.f32 %v5513, %v5539
        %v5542 = vadd.f32 %v5514, %v5539
        %v5543 = vadd.f32 %v5515, %v5539
        %v5544 = vadd.f32 %v5516, %v5539
        %v5545 = vadd.f32 %v5517, %v5539
        %v5546 = vadd.f32 %v5518, %v5539
        %v5547 = vadd.f32 %v5519, %v5539
        %v5548 = vrcp.pop %v5540
        %v5549 = vrcp.pop %v5541
        %v5550 = vrcp.pop %v5542
        %v5551 = vrcp.pop %v5543
        %v5552 = vrcp.pop %v5544
        %v5553 = vrcp.pop %v5545
        %v5554 = vrcp.pop %v5546
        %v5555 = vrcp.pop %v5547
        %v5556 = vmul.f32 %v5104, %v5548
        %v5557 = vmul.f32 %v5105, %v5549
        %v5558 = vmul.f32 %v5106, %v5550
        %v5559 = vmul.f32 %v5107, %v5551
        %v5560 = vmul.f32 %v5108, %v5552
        %v5561 = vmul.f32 %v5109, %v5553
        %v5562 = vmul.f32 %v5110, %v5554
        %v5563 = vmul.f32 %v5111, %v5555
        %v5564 = vsub.f32 %v440, %v5079
        %v5565 = vsub.f32 %v441, %v5081
        %v5566 = vsub.f32 %v442, %v5086
        %v5567 = vsub.f32 %v443, %v5088
        %v5568 = vsub.f32 %v444, %v5093
        %v5569 = vsub.f32 %v445, %v5095
        %v5570 = vsub.f32 %v446, %v5100
        %v5571 = vsub.f32 %v447, %v5102
        %v5572 = vand.u32 2147483647, %v5564
        %v5573 = vand.u32 2147483647, %v5565
        %v5574 = vand.u32 2147483647, %v5566
        %v5575 = vand.u32 2147483647, %v5567
        %v5576 = vand.u32 2147483647, %v5568
        %v5577 = vand.u32 2147483647, %v5569
        %v5578 = vand.u32 2147483647, %v5570
        %v5579 = vand.u32 2147483647, %v5571
        %5580 = vrot.lane.b32.xlu0 %v5572, 1
        %v5581 = vpop.permute.xlu0 %5580
        %5582 = vrot.lane.b32.xlu0 %v5574, 1
        %v5583 = vpop.permute.xlu0 %5582
        %5584 = vrot.lane.b32.xlu0 %v5576, 1
        %v5585 = vpop.permute.xlu0 %5584
        %5586 = vrot.lane.b32.xlu0 %v5578, 1
        %v5587 = vpop.permute.xlu0 %5586
        %5588 = vrot.lane.b32.xlu0 %v5573, 1
        %v5589 = vpop.permute.xlu0 %5588
        %5590 = vrot.lane.b32.xlu0 %v5575, 1
        %v5591 = vpop.permute.xlu0 %5590
        %5592 = vrot.lane.b32.xlu0 %v5577, 1
        %v5593 = vpop.permute.xlu0 %5592
        %5594 = vrot.lane.b32.xlu0 %v5579, 1
        %v5595 = vpop.permute.xlu0 %5594
        %v5596 = vsel %vm5141, %v5581, %v5589
        %v5597 = vsel %vm5141, %v5583, %v5591
        %v5598 = vsel %vm5141, %v5585, %v5593
        %v5599 = vsel %vm5141, %v5587, %v5595
        %v5600 = vsel %vm5141, %v5589, %v5581
        %v5601 = vsel %vm5141, %v5591, %v5583
        %v5602 = vsel %vm5141, %v5593, %v5585
        %v5603 = vsel %vm5141, %v5595, %v5587
        %v5604 = vsel %vm5123, %v5600, 0.0
        %v5605 = vsel %vm5124, %v5596, 0.0
        %v5606 = vsel %vm5123, %v5601, 0.0
        %v5607 = vsel %vm5124, %v5597, 0.0
        %v5608 = vsel %vm5123, %v5602, 0.0
        %v5609 = vsel %vm5124, %v5598, 0.0
        %v5610 = vsel %vm5123, %v5603, 0.0
        %v5611 = vsel %vm5124, %v5599, 0.0
        %5612 = vrot.lane.b32.xlu0 %v5572, 127
        %v5613 = vpop.permute.xlu0 %5612
        %5614 = vrot.lane.b32.xlu0 %v5574, 127
        %v5615 = vpop.permute.xlu0 %5614
        %5616 = vrot.lane.b32.xlu0 %v5576, 127
        %v5617 = vpop.permute.xlu0 %5616
        %5618 = vrot.lane.b32.xlu0 %v5578, 127
        %v5619 = vpop.permute.xlu0 %5618
        %5620 = vrot.lane.b32.xlu0 %v5573, 127
        %v5621 = vpop.permute.xlu0 %5620
        %5622 = vrot.lane.b32.xlu0 %v5575, 127
        %v5623 = vpop.permute.xlu0 %5622
        %5624 = vrot.lane.b32.xlu0 %v5577, 127
        %v5625 = vpop.permute.xlu0 %5624
        %5626 = vrot.lane.b32.xlu0 %v5579, 127
        %v5627 = vpop.permute.xlu0 %5626
        %v5628 = vsel %vm5176, %v5613, %v5621
        %v5629 = vsel %vm5176, %v5615, %v5623
        %v5630 = vsel %vm5176, %v5617, %v5625
        %v5631 = vsel %vm5176, %v5619, %v5627
        %v5632 = vsel %vm5176, %v5621, %v5613
        %v5633 = vsel %vm5176, %v5623, %v5615
        %v5634 = vsel %vm5176, %v5625, %v5617
        %v5635 = vsel %vm5176, %v5627, %v5619
        %v5636 = vsel %vm5158, %v5628, 0.0
        %v5637 = vsel %vm5159, %v5632, 0.0
        %v5638 = vsel %vm5158, %v5629, 0.0
        %v5639 = vsel %vm5159, %v5633, 0.0
        %v5640 = vsel %vm5158, %v5630, 0.0
        %v5641 = vsel %vm5159, %v5634, 0.0
        %v5642 = vsel %vm5158, %v5631, 0.0
        %v5643 = vsel %vm5159, %v5635, 0.0
        %v5644 = vadd.f32 %v5604, %v5636
        %v5645 = vadd.f32 %v5605, %v5637
        %v5646 = vadd.f32 %v5606, %v5638
        %v5647 = vadd.f32 %v5607, %v5639
        %v5648 = vadd.f32 %v5608, %v5640
        %v5649 = vadd.f32 %v5609, %v5641
        %v5650 = vadd.f32 %v5610, %v5642
        %v5651 = vadd.f32 %v5611, %v5643
        %5652 = vrot.lane.b32.xlu0 %v5572, 2
        %v5653 = vpop.permute.xlu0 %5652
        %5654 = vrot.lane.b32.xlu0 %v5574, 2
        %v5655 = vpop.permute.xlu0 %5654
        %5656 = vrot.lane.b32.xlu0 %v5576, 2
        %v5657 = vpop.permute.xlu0 %5656
        %5658 = vrot.lane.b32.xlu0 %v5578, 2
        %v5659 = vpop.permute.xlu0 %5658
        %5660 = vrot.lane.b32.xlu0 %v5573, 2
        %v5661 = vpop.permute.xlu0 %5660
        %5662 = vrot.lane.b32.xlu0 %v5575, 2
        %v5663 = vpop.permute.xlu0 %5662
        %5664 = vrot.lane.b32.xlu0 %v5577, 2
        %v5665 = vpop.permute.xlu0 %5664
        %5666 = vrot.lane.b32.xlu0 %v5579, 2
        %v5667 = vpop.permute.xlu0 %5666
        %v5668 = vsel %vm5219, %v5653, %v5661
        %v5669 = vsel %vm5219, %v5655, %v5663
        %v5670 = vsel %vm5219, %v5657, %v5665
        %v5671 = vsel %vm5219, %v5659, %v5667
        %v5672 = vsel %vm5219, %v5661, %v5653
        %v5673 = vsel %vm5219, %v5663, %v5655
        %v5674 = vsel %vm5219, %v5665, %v5657
        %v5675 = vsel %vm5219, %v5667, %v5659
        %v5676 = vsel %vm5201, %v5672, 0.0
        %v5677 = vsel %vm5202, %v5668, 0.0
        %v5678 = vsel %vm5201, %v5673, 0.0
        %v5679 = vsel %vm5202, %v5669, 0.0
        %v5680 = vsel %vm5201, %v5674, 0.0
        %v5681 = vsel %vm5202, %v5670, 0.0
        %v5682 = vsel %vm5201, %v5675, 0.0
        %v5683 = vsel %vm5202, %v5671, 0.0
        %5684 = vrot.lane.b32.xlu0 %v5572, 126
        %v5685 = vpop.permute.xlu0 %5684
        %5686 = vrot.lane.b32.xlu0 %v5574, 126
        %v5687 = vpop.permute.xlu0 %5686
        %5688 = vrot.lane.b32.xlu0 %v5576, 126
        %v5689 = vpop.permute.xlu0 %5688
        %5690 = vrot.lane.b32.xlu0 %v5578, 126
        %v5691 = vpop.permute.xlu0 %5690
        %5692 = vrot.lane.b32.xlu0 %v5573, 126
        %v5693 = vpop.permute.xlu0 %5692
        %5694 = vrot.lane.b32.xlu0 %v5575, 126
        %v5695 = vpop.permute.xlu0 %5694
        %5696 = vrot.lane.b32.xlu0 %v5577, 126
        %v5697 = vpop.permute.xlu0 %5696
        %5698 = vrot.lane.b32.xlu0 %v5579, 126
        %v5699 = vpop.permute.xlu0 %5698
        %v5700 = vsel %vm5254, %v5685, %v5693
        %v5701 = vsel %vm5254, %v5687, %v5695
        %v5702 = vsel %vm5254, %v5689, %v5697
        %v5703 = vsel %vm5254, %v5691, %v5699
        %v5704 = vsel %vm5254, %v5693, %v5685
        %v5705 = vsel %vm5254, %v5695, %v5687
        %v5706 = vsel %vm5254, %v5697, %v5689
        %v5707 = vsel %vm5254, %v5699, %v5691
        %v5708 = vsel %vm5236, %v5700, 0.0
        %v5709 = vsel %vm5237, %v5704, 0.0
        %v5710 = vsel %vm5236, %v5701, 0.0
        %v5711 = vsel %vm5237, %v5705, 0.0
        %v5712 = vsel %vm5236, %v5702, 0.0
        %v5713 = vsel %vm5237, %v5706, 0.0
        %v5714 = vsel %vm5236, %v5703, 0.0
        %v5715 = vsel %vm5237, %v5707, 0.0
        %v5716 = vadd.f32 %v5676, %v5708
        %v5717 = vadd.f32 %v5677, %v5709
        %v5718 = vadd.f32 %v5678, %v5710
        %v5719 = vadd.f32 %v5679, %v5711
        %v5720 = vadd.f32 %v5680, %v5712
        %v5721 = vadd.f32 %v5681, %v5713
        %v5722 = vadd.f32 %v5682, %v5714
        %v5723 = vadd.f32 %v5683, %v5715
        %v5724 = vadd.f32 %v5572, %v5716
        %v5725 = vadd.f32 %v5573, %v5717
        %v5726 = vadd.f32 %v5574, %v5718
        %v5727 = vadd.f32 %v5575, %v5719
        %v5728 = vadd.f32 %v5576, %v5720
        %v5729 = vadd.f32 %v5577, %v5721
        %v5730 = vadd.f32 %v5578, %v5722
        %v5731 = vadd.f32 %v5579, %v5723
        %v5732 = vmul.f32 %v5724, 0.05
        %v5733 = vmul.f32 %v5725, 0.05
        %v5734 = vmul.f32 %v5726, 0.05
        %v5735 = vmul.f32 %v5727, 0.05
        %v5736 = vmul.f32 %v5728, 0.05
        %v5737 = vmul.f32 %v5729, 0.05
        %v5738 = vmul.f32 %v5730, 0.05
        %v5739 = vmul.f32 %v5731, 0.05
        %v5740 = vmul.f32 %v5644, 0.04
        %v5741 = vmul.f32 %v5645, 0.04
        %v5742 = vmul.f32 %v5646, 0.04
        %v5743 = vmul.f32 %v5647, 0.04
        %v5744 = vmul.f32 %v5648, 0.04
        %v5745 = vmul.f32 %v5649, 0.04
        %v5746 = vmul.f32 %v5650, 0.04
        %v5747 = vmul.f32 %v5651, 0.04
        %v5748 = vadd.f32 %v5732, %v5740
        %v5749 = vadd.f32 %v5733, %v5741
        %v5750 = vadd.f32 %v5734, %v5742
        %v5751 = vadd.f32 %v5735, %v5743
        %v5752 = vadd.f32 %v5736, %v5744
        %v5753 = vadd.f32 %v5737, %v5745
        %v5754 = vadd.f32 %v5738, %v5746
        %v5755 = vadd.f32 %v5739, %v5747
        %v5756 = vmul.f32 %v5724, 0.04
        %v5757 = vmul.f32 %v5725, 0.04
        %v5758 = vmul.f32 %v5726, 0.04
        %v5759 = vmul.f32 %v5727, 0.04
        %v5760 = vmul.f32 %v5728, 0.04
        %v5761 = vmul.f32 %v5729, 0.04
        %v5762 = vmul.f32 %v5730, 0.04
        %v5763 = vmul.f32 %v5731, 0.04
        %v5764 = vmul.f32 %v5644, 0.03
        %v5765 = vmul.f32 %v5645, 0.03
        %v5766 = vmul.f32 %v5646, 0.03
        %v5767 = vmul.f32 %v5647, 0.03
        %v5768 = vmul.f32 %v5648, 0.03
        %v5769 = vmul.f32 %v5649, 0.03
        %v5770 = vmul.f32 %v5650, 0.03
        %v5771 = vmul.f32 %v5651, 0.03
        %v5772 = vadd.f32 %v5756, %v5764
        %v5773 = vadd.f32 %v5757, %v5765
        %v5774 = vadd.f32 %v5758, %v5766
        %v5775 = vadd.f32 %v5759, %v5767
        %v5776 = vadd.f32 %v5760, %v5768
        %v5777 = vadd.f32 %v5761, %v5769
        %v5778 = vadd.f32 %v5762, %v5770
        %v5779 = vadd.f32 %v5763, %v5771
        %v5780 = vmul.f32 %v5572, 0.05
        %v5781 = vmul.f32 %v5573, 0.05
        %v5782 = vmul.f32 %v5574, 0.05
        %v5783 = vmul.f32 %v5575, 0.05
        %v5784 = vmul.f32 %v5576, 0.05
        %v5785 = vmul.f32 %v5577, 0.05
        %v5786 = vmul.f32 %v5578, 0.05
        %v5787 = vmul.f32 %v5579, 0.05
        %v5788 = vadd.f32 %v5644, %v5716
        %v5789 = vadd.f32 %v5645, %v5717
        %v5790 = vadd.f32 %v5646, %v5718
        %v5791 = vadd.f32 %v5647, %v5719
        %v5792 = vadd.f32 %v5648, %v5720
        %v5793 = vadd.f32 %v5649, %v5721
        %v5794 = vadd.f32 %v5650, %v5722
        %v5795 = vadd.f32 %v5651, %v5723
        %v5796 = vmul.f32 %v5788, 0.04
        %v5797 = vmul.f32 %v5789, 0.04
        %v5798 = vmul.f32 %v5790, 0.04
        %v5799 = vmul.f32 %v5791, 0.04
        %v5800 = vmul.f32 %v5792, 0.04
        %v5801 = vmul.f32 %v5793, 0.04
        %v5802 = vmul.f32 %v5794, 0.04
        %v5803 = vmul.f32 %v5795, 0.04
        %v5804 = vadd.f32 %v5780, %v5796
        %v5805 = vadd.f32 %v5781, %v5797
        %v5806 = vadd.f32 %v5782, %v5798
        %v5807 = vadd.f32 %v5783, %v5799
        %v5808 = vadd.f32 %v5784, %v5800
        %v5809 = vadd.f32 %v5785, %v5801
        %v5810 = vadd.f32 %v5786, %v5802
        %v5811 = vadd.f32 %v5787, %v5803
        %v5812 = vrot.slane %v5772, 7
        %v5813 = vrot.slane %v5773, 7
        %v5814 = vrot.slane %v5774, 7
        %v5815 = vrot.slane %v5775, 7
        %v5816 = vrot.slane %v5776, 7
        %v5817 = vrot.slane %v5777, 7
        %v5818 = vrot.slane %v5778, 7
        %v5819 = vrot.slane %v5779, 7
        %v5820 = vsel %vm5384, %v5816, %v5818
        %v5821 = vsel %vm5384, %v5817, %v5819
        %v5822 = vsel %vm5384, %v5814, %v5816
        %v5823 = vsel %vm5384, %v5815, %v5817
        %v5824 = vsel %vm5384, %v5812, %v5814
        %v5825 = vsel %vm5384, %v5813, %v5815
        %v5826 = vsel %vm5384, %v5818, %v5812
        %v5827 = vsel %vm5384, %v5819, %v5813
        %v5828 = vsel %vm5372, %v5826, 0.0
        %v5829 = vsel %vm5372, %v5827, 0.0
        %v5830 = vsel %vm5373, %v5824, 0.0
        %v5831 = vsel %vm5373, %v5825, 0.0
        %v5832 = vsel %vm5374, %v5822, 0.0
        %v5833 = vsel %vm5374, %v5823, 0.0
        %v5834 = vsel %vm5375, %v5820, 0.0
        %v5835 = vsel %vm5375, %v5821, 0.0
        %v5836 = vadd.f32 %v5748, %v5828
        %v5837 = vadd.f32 %v5749, %v5829
        %v5838 = vadd.f32 %v5750, %v5830
        %v5839 = vadd.f32 %v5751, %v5831
        %v5840 = vadd.f32 %v5752, %v5832
        %v5841 = vadd.f32 %v5753, %v5833
        %v5842 = vadd.f32 %v5754, %v5834
        %v5843 = vadd.f32 %v5755, %v5835
        %v5844 = vrot.slane %v5772, 1
        %v5845 = vrot.slane %v5773, 1
        %v5846 = vrot.slane %v5774, 1
        %v5847 = vrot.slane %v5775, 1
        %v5848 = vrot.slane %v5776, 1
        %v5849 = vrot.slane %v5777, 1
        %v5850 = vrot.slane %v5778, 1
        %v5851 = vrot.slane %v5779, 1
        %v5852 = vsel %vm5421, %v5848, %v5850
        %v5853 = vsel %vm5421, %v5849, %v5851
        %v5854 = vsel %vm5421, %v5846, %v5848
        %v5855 = vsel %vm5421, %v5847, %v5849
        %v5856 = vsel %vm5421, %v5844, %v5846
        %v5857 = vsel %vm5421, %v5845, %v5847
        %v5858 = vsel %vm5421, %v5850, %v5844
        %v5859 = vsel %vm5421, %v5851, %v5845
        %v5860 = vsel %vm5409, %v5856, 0.0
        %v5861 = vsel %vm5409, %v5857, 0.0
        %v5862 = vsel %vm5410, %v5854, 0.0
        %v5863 = vsel %vm5410, %v5855, 0.0
        %v5864 = vsel %vm5411, %v5852, 0.0
        %v5865 = vsel %vm5411, %v5853, 0.0
        %v5866 = vsel %vm5412, %v5858, 0.0
        %v5867 = vsel %vm5412, %v5859, 0.0
        %v5868 = vadd.f32 %v5836, %v5860
        %v5869 = vadd.f32 %v5837, %v5861
        %v5870 = vadd.f32 %v5838, %v5862
        %v5871 = vadd.f32 %v5839, %v5863
        %v5872 = vadd.f32 %v5840, %v5864
        %v5873 = vadd.f32 %v5841, %v5865
        %v5874 = vadd.f32 %v5842, %v5866
        %v5875 = vadd.f32 %v5843, %v5867
        %v5876 = vrot.slane %v5804, 6
        %v5877 = vrot.slane %v5805, 6
        %v5878 = vrot.slane %v5806, 6
        %v5879 = vrot.slane %v5807, 6
        %v5880 = vrot.slane %v5808, 6
        %v5881 = vrot.slane %v5809, 6
        %v5882 = vrot.slane %v5810, 6
        %v5883 = vrot.slane %v5811, 6
        %v5884 = vsel %vm5458, %v5880, %v5882
        %v5885 = vsel %vm5458, %v5881, %v5883
        %v5886 = vsel %vm5458, %v5878, %v5880
        %v5887 = vsel %vm5458, %v5879, %v5881
        %v5888 = vsel %vm5458, %v5876, %v5878
        %v5889 = vsel %vm5458, %v5877, %v5879
        %v5890 = vsel %vm5458, %v5882, %v5876
        %v5891 = vsel %vm5458, %v5883, %v5877
        %v5892 = vsel %vm5446, %v5890, 0.0
        %v5893 = vsel %vm5446, %v5891, 0.0
        %v5894 = vsel %vm5447, %v5888, 0.0
        %v5895 = vsel %vm5447, %v5889, 0.0
        %v5896 = vsel %vm5448, %v5886, 0.0
        %v5897 = vsel %vm5448, %v5887, 0.0
        %v5898 = vsel %vm5449, %v5884, 0.0
        %v5899 = vsel %vm5449, %v5885, 0.0
        %v5900 = vadd.f32 %v5868, %v5892
        %v5901 = vadd.f32 %v5869, %v5893
        %v5902 = vadd.f32 %v5870, %v5894
        %v5903 = vadd.f32 %v5871, %v5895
        %v5904 = vadd.f32 %v5872, %v5896
        %v5905 = vadd.f32 %v5873, %v5897
        %v5906 = vadd.f32 %v5874, %v5898
        %v5907 = vadd.f32 %v5875, %v5899
        %v5908 = vrot.slane %v5804, 2
        %v5909 = vrot.slane %v5805, 2
        %v5910 = vrot.slane %v5806, 2
        %v5911 = vrot.slane %v5807, 2
        %v5912 = vrot.slane %v5808, 2
        %v5913 = vrot.slane %v5809, 2
        %v5914 = vrot.slane %v5810, 2
        %v5915 = vrot.slane %v5811, 2
        %v5916 = vsel %vm5495, %v5912, %v5914
        %v5917 = vsel %vm5495, %v5913, %v5915
        %v5918 = vsel %vm5495, %v5910, %v5912
        %v5919 = vsel %vm5495, %v5911, %v5913
        %v5920 = vsel %vm5495, %v5908, %v5910
        %v5921 = vsel %vm5495, %v5909, %v5911
        %v5922 = vsel %vm5495, %v5914, %v5908
        %v5923 = vsel %vm5495, %v5915, %v5909
        %v5924 = vsel %vm5483, %v5920, 0.0
        %v5925 = vsel %vm5483, %v5921, 0.0
        %v5926 = vsel %vm5484, %v5918, 0.0
        %v5927 = vsel %vm5484, %v5919, 0.0
        %v5928 = vsel %vm5485, %v5916, 0.0
        %v5929 = vsel %vm5485, %v5917, 0.0
        %v5930 = vsel %vm5486, %v5922, 0.0
        %v5931 = vsel %vm5486, %v5923, 0.0
        %v5932 = vadd.f32 %v5900, %v5924
        %v5933 = vadd.f32 %v5901, %v5925
        %v5934 = vadd.f32 %v5902, %v5926
        %v5935 = vadd.f32 %v5903, %v5927
        %v5936 = vadd.f32 %v5904, %v5928
        %v5937 = vadd.f32 %v5905, %v5929
        %v5938 = vadd.f32 %v5906, %v5930
        %v5939 = vadd.f32 %v5907, %v5931
        %v5940 = vadd.f32 %v5932, %v5933
        %v5941 = vadd.f32 %v5940, %v5934
        %v5942 = vadd.f32 %v5941, %v5935
        %v5943 = vadd.f32 %v5942, %v5936
        %v5944 = vadd.f32 %v5943, %v5937
        %v5945 = vadd.f32 %v5944, %v5938
        %v5946 = vadd.f32 %v5945, %v5939
        %5947 = vadd.xlane.f32.xlu0 %v5946
        %v5948 = vpop.xlane.xlu0 %5947
        %v5949 = vrot.slane %v5948, 4
        %v5950 = vadd.f32 %v5948, %v5949
        %v5951 = vrot.slane %v5950, 2
        %v5952 = vadd.f32 %v5950, %v5951
        %v5953 = vrot.slane %v5952, 1
        %v5954 = vadd.f32 %v5952, %v5953
        %s5955 = vtos %v5954
        %v5956 = vrcp.pop 8192.0
        %s5957 = vtos %v5956
        %s5958 = smul.f32 %s5955, %s5957
        %v5959 = vstv %s5958
        %v5960 = vadd.f32 %v5932, %v5959
        %v5961 = vadd.f32 %v5933, %v5959
        %v5962 = vadd.f32 %v5934, %v5959
        %v5963 = vadd.f32 %v5935, %v5959
        %v5964 = vadd.f32 %v5936, %v5959
        %v5965 = vadd.f32 %v5937, %v5959
        %v5966 = vadd.f32 %v5938, %v5959
        %v5967 = vadd.f32 %v5939, %v5959
        %v5968 = vrcp.pop %v5960
        %v5969 = vrcp.pop %v5961
        %v5970 = vrcp.pop %v5962
        %v5971 = vrcp.pop %v5963
        %v5972 = vrcp.pop %v5964
        %v5973 = vrcp.pop %v5965
        %v5974 = vrcp.pop %v5966
        %v5975 = vrcp.pop %v5967
        %v5976 = vmul.f32 %v5564, %v5968
        %v5977 = vmul.f32 %v5565, %v5969
        %v5978 = vmul.f32 %v5566, %v5970
        %v5979 = vmul.f32 %v5567, %v5971
        %v5980 = vmul.f32 %v5568, %v5972
        %v5981 = vmul.f32 %v5569, %v5973
        %v5982 = vmul.f32 %v5570, %v5974
        %v5983 = vmul.f32 %v5571, %v5975
        %v5984 = vsub.f32 %v5556, %v5976
        %v5985 = vsub.f32 %v5557, %v5977
        %v5986 = vsub.f32 %v5558, %v5978
        %v5987 = vsub.f32 %v5559, %v5979
        %v5988 = vsub.f32 %v5560, %v5980
        %v5989 = vsub.f32 %v5561, %v5981
        %v5990 = vsub.f32 %v5562, %v5982
        %v5991 = vsub.f32 %v5563, %v5983
        %v5992 = vmul.f32 %v5984, %v5984
        %v5993 = vmul.f32 %v5985, %v5985
        %v5994 = vmul.f32 %v5986, %v5986
        %v5995 = vmul.f32 %v5987, %v5987
        %v5996 = vmul.f32 %v5988, %v5988
        %v5997 = vmul.f32 %v5989, %v5989
        %v5998 = vmul.f32 %v5990, %v5990
        %v5999 = vmul.f32 %v5991, %v5991
        %v6000 = vadd.f32 %v5992, %v5993
        %v6001 = vadd.f32 %v6000, %v5994
        %v6002 = vadd.f32 %v6001, %v5995
        %v6003 = vadd.f32 %v6002, %v5996
        %v6004 = vadd.f32 %v6003, %v5997
        %v6005 = vadd.f32 %v6004, %v5998
        %v6006 = vadd.f32 %v6005, %v5999
        %6007 = vadd.xlane.f32.xlu0 %v6006
        %v6008 = vpop.xlane.xlu0 %6007
        %v6009 = vrot.slane %v6008, 4
        %v6010 = vadd.f32 %v6008, %v6009
        %v6011 = vrot.slane %v6010, 2
        %v6012 = vadd.f32 %v6010, %v6011
        %v6013 = vrot.slane %v6012, 1
        %v6014 = vadd.f32 %v6012, %v6013
        %s6015 = vtos %v6014
        %v6016 = vstv %s6015
        %6017 = vst [vmem:[%s431] sm:$0xff] %v6016
        %p6018 = scmp.lt.s32.totalorder %s27, 1
        %s6019 = scalar_select %p6018, %s27, 1
        %s6020 = smul.addr %s6019, 2
        %s6021 = smul.addr %s6020, 8
        %s6022 = scalar_lea.vmem %s6, %s6021
        %p6023 = scmp.lt.s32.totalorder %s27, 1
        %s6024 = scalar_select %p6023, %s27, 1
        %s6025 = smul.addr %s6024, 2
        %s6026 = smul.addr %s6025, 8
        %s6027 = scalar_lea.vmem %s7, %s6026
        %p6028 = scmp.lt.s32.totalorder %s27, 1
        %s6029 = scalar_select %p6028, %s27, 1
        %s6030 = smul.addr %s6029, 8
        %s6031 = scalar_lea.vmem %s8, %s6030
        // Predicated region
        $region65: #{nlp_distance_loss.2} parent=43 // pred_check
          %p6032 = pneg %p181
        $region66: #{nlp_distance_loss.2} parent=43 // pred_check_branch
          %6034 = sbr.rel (%p6032) target = $region68
        $region67: #{nlp_distance_loss.2} parent=43 // pred_region
          _
        $region68: #{nlp_distance_loss.2} parent=43 // pred_fallthru
          _
        // Predicated region
        $region69: #{nlp_distance_loss.2} parent=43 // pred_check
          %p6035 = pneg %p207
        $region70: #{nlp_distance_loss.2} parent=43 // pred_check_branch
          %6037 = sbr.rel (%p6035) target = $region72
        $region71: #{nlp_distance_loss.2} parent=43 // pred_region
          _
        $region72: #{nlp_distance_loss.2} parent=43 // pred_fallthru
          _
        // Predicated region
        $region73: #{nlp_distance_loss.2} parent=43 // pred_check
          %p6038 = pneg %p233
        $region74: #{nlp_distance_loss.2} parent=43 // pred_check_branch
          %6040 = sbr.rel (%p6038) target = $region76
        $region75: #{nlp_distance_loss.2} parent=43 // pred_region
          _
        $region76: #{nlp_distance_loss.2} parent=43 // pred_fallthru
          _
      $region44: #{nlp_distance_loss.2} parent=5 // pred_fallthru
        _
      %p6041 = scmp.le.s32.totalorder 2, %s22
      // Predicated region
      $region77: #{nlp_distance_loss.2} parent=5 // pred_check
        %p6042 = pneg %p6041
      $region78: #{nlp_distance_loss.2} parent=5 // pred_check_branch
        %6044 = sbr.rel (%p6042) target = $region80
      $region79: #{nlp_distance_loss.2} parent=5 // pred_region
        %s6045 = ssub.s32 %s22, 2
        // Predicated region
        $region81: #{nlp_distance_loss.2} parent=79 // pred_check
          %p6046 = pneg %p187
        $region82: #{nlp_distance_loss.2} parent=79 // pred_check_branch
          %6048 = sbr.rel (%p6046) target = $region84
        $region83: #{nlp_distance_loss.2} parent=79 // pred_region
          %p6049 = scmp.lt.s32.totalorder %s28, 1
          %s6050 = scalar_select %p6049, %s28, 1
          %s6051 = smul.addr %s6050, 2
          %s6052 = smul.addr %s6051, 8
          %s6053 = scalar_lea.vmem %s6, %s6052
        $region84: #{nlp_distance_loss.2} parent=79 // pred_fallthru
          _
        // Predicated region
        $region85: #{nlp_distance_loss.2} parent=79 // pred_check
          %p6054 = pneg %p213
        $region86: #{nlp_distance_loss.2} parent=79 // pred_check_branch
          %6056 = sbr.rel (%p6054) target = $region88
        $region87: #{nlp_distance_loss.2} parent=79 // pred_region
          %p6057 = scmp.lt.s32.totalorder %s28, 1
          %s6058 = scalar_select %p6057, %s28, 1
          %s6059 = smul.addr %s6058, 2
          %s6060 = smul.addr %s6059, 8
          %s6061 = scalar_lea.vmem %s7, %s6060
        $region88: #{nlp_distance_loss.2} parent=79 // pred_fallthru
          _
        // Predicated region
        $region89: #{nlp_distance_loss.2} parent=79 // pred_check
          %p6062 = pneg %p239
        $region90: #{nlp_distance_loss.2} parent=79 // pred_check_branch
          %6064 = sbr.rel (%p6062) target = $region92
        $region91: #{nlp_distance_loss.2} parent=79 // pred_region
          %p6065 = scmp.lt.s32.totalorder %s28, 1
          %s6066 = scalar_select %p6065, %s28, 1
          %s6067 = smul.addr %s6066, 8
          %s6068 = scalar_lea.vmem %s8, %s6067
        $region92: #{nlp_distance_loss.2} parent=79 // pred_fallthru
          _
      $region80: #{nlp_distance_loss.2} parent=5 // pred_fallthru
        _
    $region6: #{nlp_distance_loss.2} parent=1 // loop_footer
      %s26 = sadd.s32 1, %s22
    $region7: #{nlp_distance_loss.2} parent=1 // loop_footer_branch
      %21 = sbr.rel target = $region3
    $region8: #{nlp_distance_loss.2} parent=1 // loop_exit
      _
    %6069 = vsyncpa [#allocation3], 1
    %s6070 = scalar_lea.sflag [#allocation3], 1
    %6071 = vsyncpa %s6070, 1
    %6072 = vsyncpa [#allocation5], 1
    %s6073 = scalar_lea.sflag [#allocation5], 1
    %6074 = vsyncpa %s6073, 1
    %6075 = vsyncpa [#allocation8], 1

</llo_original>
